<compile_context>
chip_gen: v5e
topology: v5e:2x2
jax: 0.10.0
libtpu: 0.0.40
codegen_flags: <defaults>
</compile_context>

<pallas_src>
import functools

import jax
import jax.numpy as jnp
from jax import lax
from jax.experimental import pallas as pl
from jax.experimental.pallas import tpu as pltpu

LANE = 128


# ----------------------------- small helpers -------------------------------

def _round_up(x, m):
    return (x + m - 1) // m * m


def _pad2(a, r, c):
    return jnp.pad(a, ((0, r - a.shape[0]), (0, c - a.shape[1])))


def _pad_vec(a, c):
    return jnp.pad(a, ((0, c - a.shape[0]),))


@functools.lru_cache(maxsize=None)
def _vmem_limit_bytes():
    # Generation-aware scoped-VMEM budget: ~3/4 of physical VMEM
    # (v5e/v6e: 128 MiB -> 96 MiB, v7x: 64 MiB -> 48 MiB).  Falls back to the
    # conservative v7x number when the query is unavailable.
    try:
        cap = int(pltpu.get_tpu_info().vmem_capacity_bytes)
    except Exception:
        cap = 64 * 1024 * 1024
    return max((cap * 3) // 4, 32 * 1024 * 1024)


def _pick_band_rows(hgt, wid, cin_p, cout_p, budget_bytes):
    """Largest band height (in image rows) that divides H, keeps the flattened
    band sublane-aligned (or covers the whole image), and fits kernel B's VMEM
    footprint (f32 haloed buffer + bf16 im2col slab + f32 accumulator +
    double-buffered pipeline blocks)."""
    def footprint(r):
        band = r * wid
        halo = (r + 2) * wid
        return ((halo + 16) * cin_p * 4          # f32 haloed center buffer
                + halo * 3 * cin_p * 2           # bf16 im2col slab
                + band * cout_p * 4              # f32 accumulator scratch
                + 2 * band * cout_p * 2          # double-buffered bf16 output
                + 2 * hgt * wid * cin_p * 2      # double-buffered bf16 image
                + 2 * 9 * cin_p * cout_p * 2)    # double-buffered conv2 weight
    cands = [r for r in range(hgt, 0, -1)
             if hgt % r == 0 and ((r * wid) % 8 == 0 or r == hgt)]
    for r in cands:
        if footprint(r) <= budget_bytes:
            return r
    return cands[-1] if cands else hgt


def _fold_stats(sum_parts, sq_parts, count, gamma_p, beta_p, eps):
    # Reduce per-tile partial sums into folded BN scale/bias.
    # NOTE: variance via E[x^2] - E[x]^2 from f32 partial sums; fine at these
    # activation scales (see review) but would need centered sums if the
    # activations grew very large-mean.
    c = sum_parts.shape[-1]
    s = jnp.sum(sum_parts.reshape(-1, c), axis=0)
    q = jnp.sum(sq_parts.reshape(-1, c), axis=0)
    mean = s / count
    var = jnp.maximum(q / count - mean * mean, 0.0)
    scale = gamma_p / jnp.sqrt(var + eps)
    bias = beta_p - mean * scale
    return scale[None], bias[None]


# ------------------------- Pallas kernels (hot path) ------------------------

def column_stats(x2d, tm, vmem_limit):
    """One fused pass over x producing per-tile column sum and sum^2 (bn1)."""
    m, c = x2d.shape
    gm = pl.cdiv(m, tm)

    def kernel(x_ref, sum_ref, sq_ref):
        row = pl.program_id(0) * tm + lax.broadcasted_iota(jnp.int32, (tm, 1), 0)
        xv = jnp.where(row < m, x_ref[...], 0.0)
        sum_ref[...] = jnp.sum(xv, axis=0, keepdims=True)
        sq_ref[...] = jnp.sum(xv * xv, axis=0, keepdims=True)

    return pl.pallas_call(
        kernel,
        out_shape=(jax.ShapeDtypeStruct((gm, 1, c), jnp.float32),
                   jax.ShapeDtypeStruct((gm, 1, c), jnp.float32)),
        grid_spec=pltpu.PrefetchScalarGridSpec(
            num_scalar_prefetch=0,
            grid=(gm,),
            in_specs=[pl.BlockSpec((tm, c), lambda i: (i, 0))],
            out_specs=(pl.BlockSpec((None, 1, c), lambda i: (i, 0, 0)),
                       pl.BlockSpec((None, 1, c), lambda i: (i, 0, 0)))),
        compiler_params=pltpu.CompilerParams(
            dimension_semantics=("parallel",),
            vmem_limit_bytes=vmem_limit),
    )(x2d)


def bn_relu_conv1x1_stats(x2d, scale, bias, w_bf16, tm, vmem_limit):
    """relu(x*scale+bias) @ W  (folded BN + ReLU + 1x1 conv) -> bf16 output,
    plus per-tile f32 sum / sum^2 of the pre-rounding result (next BN stats)."""
    m, cin_p = x2d.shape
    cout_p = w_bf16.shape[1]
    gm = pl.cdiv(m, tm)

    def kernel(x_ref, s_ref, b_ref, w_ref, o_ref, sum_ref, sq_ref):
        h = jnp.maximum(x_ref[...] * s_ref[...] + b_ref[...], 0.0)
        y = jnp.dot(h.astype(jnp.bfloat16), w_ref[...],
                    preferred_element_type=jnp.float32)
        o_ref[...] = y.astype(jnp.bfloat16)
        # Mask rows past the real M (ragged last tile) out of the statistics.
        row = pl.program_id(0) * tm + lax.broadcasted_iota(jnp.int32, (tm, 1), 0)
        yv = jnp.where(row < m, y, 0.0)
        sum_ref[...] = jnp.sum(yv, axis=0, keepdims=True)
        sq_ref[...] = jnp.sum(yv * yv, axis=0, keepdims=True)

    return pl.pallas_call(
        kernel,
        out_shape=(jax.ShapeDtypeStruct((m, cout_p), jnp.bfloat16),
                   jax.ShapeDtypeStruct((gm, 1, cout_p), jnp.float32),
                   jax.ShapeDtypeStruct((gm, 1, cout_p), jnp.float32)),
        grid_spec=pltpu.PrefetchScalarGridSpec(
            num_scalar_prefetch=0,
            grid=(gm,),
            in_specs=[pl.BlockSpec((tm, cin_p), lambda i: (i, 0)),
                      pl.BlockSpec((1, cin_p), lambda i: (0, 0)),
                      pl.BlockSpec((1, cin_p), lambda i: (0, 0)),
                      pl.BlockSpec((cin_p, cout_p), lambda i: (0, 0))],
            out_specs=(pl.BlockSpec((tm, cout_p), lambda i: (i, 0)),
                       pl.BlockSpec((None, 1, cout_p), lambda i: (i, 0, 0)),
                       pl.BlockSpec((None, 1, cout_p), lambda i: (i, 0, 0)))),
        compiler_params=pltpu.CompilerParams(
            dimension_semantics=("parallel",),
            vmem_limit_bytes=vmem_limit),
    )(x2d, scale, bias, w_bf16)


def bn_relu_conv1x1_residual(y2d, scale, bias, w_bf16, resid, tm, vmem_limit):
    """relu(y*scale+bias) @ W + residual (folded BN + ReLU + 1x1 conv + add)."""
    m, cin_p = y2d.shape
    cout_p = w_bf16.shape[1]
    gm = pl.cdiv(m, tm)

    def kernel(y_ref, s_ref, b_ref, w_ref, r_ref, o_ref):
        h = jnp.maximum(y_ref[...] * s_ref[...] + b_ref[...], 0.0)
        o_ref[...] = (jnp.dot(h.astype(jnp.bfloat16), w_ref[...],
                              preferred_element_type=jnp.float32)
                      + r_ref[...])

    return pl.pallas_call(
        kernel,
        out_shape=jax.ShapeDtypeStruct((m, cout_p), jnp.float32),
        grid_spec=pltpu.PrefetchScalarGridSpec(
            num_scalar_prefetch=0,
            grid=(gm,),
            in_specs=[pl.BlockSpec((tm, cin_p), lambda i: (i, 0)),
                      pl.BlockSpec((1, cin_p), lambda i: (0, 0)),
                      pl.BlockSpec((1, cin_p), lambda i: (0, 0)),
                      pl.BlockSpec((cin_p, cout_p), lambda i: (0, 0)),
                      pl.BlockSpec((tm, cout_p), lambda i: (i, 0))],
            out_specs=pl.BlockSpec((tm, cout_p), lambda i: (i, 0))),
        compiler_params=pltpu.CompilerParams(
            dimension_semantics=("parallel",),
            vmem_limit_bytes=vmem_limit),
    )(y2d, scale, bias, w_bf16, resid)


def bn_relu_conv3x3_stats(y3d, scale, bias, w_cat, hgt, wid, band_rows,
                          vmem_limit):
    """Fused bn2+relu2 + 3x3 conv (stride 1, pad 1) + per-band sum / sum^2.

    y3d:   (N, H*W, Cin_p) bf16 activation, whole image as one VMEM block.
    w_cat: (3, 3*Cin_p, Cout_p) bf16; K-axis order is [dx=0 | dx=1 | dx=2]
           channels, matching the im2col slab's lane layout.

    Grid = (N, H // band_rows).  Per band:
      1. bn2+relu2 into an f32 vertically-haloed buffer (zero halos = the
         conv's zero padding, applied after ReLU; guard rows are zeroed so the
         shifted reads below never touch uninitialized memory),
      2. build the +/-1 column-shifted, edge-masked copies ONCE and write all
         three lane blocks of a bf16 im2col slab (single cast per block),
      3. three MXU matmuls (one per dy) with K = 3*Cin_p accumulated into a
         VMEM f32 scratch, stats from the f32 result, bf16 store of y2.
    """
    n, hw, cin_p = y3d.shape
    cout_p = w_cat.shape[2]
    n_bands = hgt // band_rows
    band = band_rows * wid
    halo = (band_rows + 2) * wid
    guard = 8

    def kernel(y_ref, s_ref, b_ref, w_ref, o_ref, sum_ref, sq_ref,
               hbuf, slab, acc):
        rb = pl.program_id(1)
        r0 = rb * band_rows
        s = s_ref[...]
        t = b_ref[...]

        # --- fused bn2 + relu2 into the haloed f32 buffer ---------------------
        start = r0 * wid
        top_src = jnp.maximum(r0 - 1, 0) * wid
        bot_src = jnp.minimum(r0 + band_rows, hgt - 1) * wid
        if band % 8 == 0:
            start = pl.multiple_of(start, 8)
        if wid % 8 == 0:
            top_src = pl.multiple_of(top_src, 8)
            bot_src = pl.multiple_of(bot_src, 8)
        h_mid = jnp.maximum(y_ref[pl.ds(start, band), :] * s + t, 0.0)
        h_top = jnp.maximum(y_ref[pl.ds(top_src, wid), :] * s + t, 0.0)
        h_bot = jnp.maximum(y_ref[pl.ds(bot_src, wid), :] * s + t, 0.0)

        zrow = jnp.zeros((1, cin_p), jnp.float32)
        hbuf[pl.ds(guard - 1, 1), :] = zrow          # row read by the -1 shift
        hbuf[pl.ds(guard + halo, 1), :] = zrow       # row read by the +1 shift
        hbuf[pl.ds(guard, wid), :] = jnp.where(rb > 0, h_top, 0.0)
        hbuf[pl.ds(guard + wid, band), :] = h_mid
        hbuf[pl.ds(guard + wid + band, wid), :] = (
            jnp.where(rb < n_bands - 1, h_bot, 0.0))

        # --- hoisted dx = -1 / +1 shifts + edge-column masks (once per band) --
        col = lax.broadcasted_iota(jnp.int32, (halo, 1), 0) % wid
        hv = hbuf[pl.ds(guard, halo), :]
        hm1 = jnp.where(col != 0, hbuf[pl.ds(guard - 1, halo), :], 0.0)
        hp1 = jnp.where(col != wid - 1, hbuf[pl.ds(guard + 1, halo), :], 0.0)

        # bf16 im2col slab: lanes = [dx=0 | dx=1 | dx=2] channels (one cast each)
        slab[:, :cin_p] = hm1.astype(jnp.bfloat16)
        slab[:, cin_p:2 * cin_p] = hv.astype(jnp.bfloat16)
        slab[:, 2 * cin_p:] = hp1.astype(jnp.bfloat16)

        # --- 3 MXU matmuls (K = 3*Cin_p), f32 accumulation in VMEM scratch ----
        for dy in range(3):
            a = slab[dy * wid:dy * wid + band, :]
            part = jnp.dot(a, w_ref[dy], preferred_element_type=jnp.float32)
            if dy == 0:
                acc[...] = part
            else:
                acc[...] += part

        y2 = acc[...]
        sum_ref[...] = jnp.sum(y2, axis=0, keepdims=True)
        sq_ref[...] = jnp.sum(y2 * y2, axis=0, keepdims=True)
        o_ref[...] = y2.astype(jnp.bfloat16)

    return pl.pallas_call(
        kernel,
        out_shape=(jax.ShapeDtypeStruct((n, hw, cout_p), jnp.bfloat16),
                   jax.ShapeDtypeStruct((n, n_bands, 1, cout_p), jnp.float32),
                   jax.ShapeDtypeStruct((n, n_bands, 1, cout_p), jnp.float32)),
        grid_spec=pltpu.PrefetchScalarGridSpec(
            num_scalar_prefetch=0,
            grid=(n, n_bands),
            in_specs=[pl.BlockSpec((None, hw, cin_p), lambda bi, rb: (bi, 0, 0)),
                      pl.BlockSpec((1, cin_p), lambda bi, rb: (0, 0)),
                      pl.BlockSpec((1, cin_p), lambda bi, rb: (0, 0)),
                      pl.BlockSpec((3, 3 * cin_p, cout_p),
                                   lambda bi, rb: (0, 0, 0))],
            out_specs=(pl.BlockSpec((None, band, cout_p),
                                    lambda bi, rb: (bi, rb, 0)),
                       pl.BlockSpec((None, None, 1, cout_p),
                                    lambda bi, rb: (bi, rb, 0, 0)),
                       pl.BlockSpec((None, None, 1, cout_p),
                                    lambda bi, rb: (bi, rb, 0, 0))),
            scratch_shapes=[pltpu.VMEM((guard + halo + guard, cin_p),
                                       jnp.float32),
                            pltpu.VMEM((halo, 3 * cin_p), jnp.bfloat16),
                            pltpu.VMEM((band, cout_p), jnp.float32)]),
        compiler_params=pltpu.CompilerParams(
            dimension_semantics=("parallel", "parallel"),
            vmem_limit_bytes=vmem_limit),
    )(y3d, scale, bias, w_cat)


# ------------------------------- JAX wrapper --------------------------------

def bottleneck_v2_forward(x_nchw, w1, w2, w3, g1, b1, g2, b2, g3, b3, eps=1e-5):
    n, cin, hgt, wid = x_nchw.shape
    planes = w1.shape[0]
    cout = w3.shape[0]
    assert cout == cin  # downsample=None -> residual add needs matching channels
    m = n * hgt * wid
    cin_p = _round_up(cin, LANE)
    mid_p = _round_up(planes, LANE)

    vmem_limit = _vmem_limit_bytes()
    tm = 1024 if vmem_limit > 64 * 1024 * 1024 else 512   # generation-aware tile
    tm = m if m <= tm else tm

    # NCHW -> flattened NHWC rows (lanes = channels), channels zero-padded only
    # when needed.  TODO(synk): in a full ResNet-V2 network this transpose (and
    # the inverse at the end) would be hoisted out of the block and done once
    # per network; the boundary here stays NCHW to match the PyTorch module.
    x2d = jnp.transpose(x_nchw, (0, 2, 3, 1)).reshape(m, cin)
    x2dp = x2d if cin == cin_p else jnp.pad(x2d, ((0, 0), (0, cin_p - cin)))

    # Weights: OIHW -> (in, out) / (ky, 3*in, out); bf16 operands for the MXU.
    w1p = _pad2(jnp.transpose(w1[:, :, 0, 0]), cin_p, mid_p).astype(jnp.bfloat16)
    w2t = jnp.transpose(w2, (2, 3, 1, 0))                       # (ky, kx, in, out)
    w2p = jnp.pad(w2t, ((0, 0), (0, 0),
                        (0, mid_p - planes), (0, mid_p - planes)))
    w2cat = w2p.reshape(3, 3 * mid_p, mid_p).astype(jnp.bfloat16)
    w3p = _pad2(jnp.transpose(w3[:, :, 0, 0]), mid_p, cin_p).astype(jnp.bfloat16)

    # bn1 batch statistics: one fused Pallas pass over x (sum and sum^2 together)
    # TODO(synk): BatchNorm running-stat (momentum) buffer updates are stateful
    # training bookkeeping and are not part of this functional forward.
    x_sum, x_sq = column_stats(x2dp, tm, vmem_limit)
    s1p, t1p = _fold_stats(x_sum, x_sq, m, _pad_vec(g1, cin_p),
                           _pad_vec(b1, cin_p), eps)

    # bn1 + relu1 + conv1 (1x1), emitting bn2's batch-stat partial sums
    y1, y1_sum, y1_sq = bn_relu_conv1x1_stats(x2dp, s1p, t1p, w1p, tm, vmem_limit)
    s2p, t2p = _fold_stats(y1_sum, y1_sq, m, _pad_vec(g2, mid_p),
                           _pad_vec(b2, mid_p), eps)

    # bn2 + relu2 + conv2 (3x3, pad 1), emitting bn3's batch-stat partial sums
    band_rows = _pick_band_rows(hgt, wid, mid_p, mid_p, int(vmem_limit * 0.6))
    y2_3d, y2_sum, y2_sq = bn_relu_conv3x3_stats(
        y1.reshape(n, hgt * wid, mid_p), s2p, t2p, w2cat, hgt, wid, band_rows,
        vmem_limit)
    s3p, t3p = _fold_stats(y2_sum, y2_sq, m, _pad_vec(g3, mid_p),
                           _pad_vec(b3, mid_p), eps)

    # bn3 + relu3 + conv3 (1x1) + residual add
    out2d = bn_relu_conv1x1_residual(y2_3d.reshape(m, mid_p), s3p, t3p, w3p,
                                     x2dp, tm, vmem_limit)
    out2d = out2d if cin == cin_p else out2d[:, :cin]
    out = out2d.reshape(n, hgt, wid, cin)
    return jnp.transpose(out, (0, 3, 1, 2))


# ---------------- pure-JAX reference (NCHW, PyTorch semantics) --------------

def ref_forward(x, w1, w2, w3, g1, b1, g2, b2, g3, b3, eps=1e-5,
                conv_dtype=jnp.float32):
    def bn(v, g, b):
        mean = v.mean(axis=(0, 2, 3), keepdims=True)
        var = v.var(axis=(0, 2, 3), keepdims=True)
        return ((v - mean) / jnp.sqrt(var + eps)
                * g.reshape(1, -1, 1, 1) + b.reshape(1, -1, 1, 1))

    def conv(v, w, pad):
        return lax.conv_general_dilated(
            v.astype(conv_dtype), w.astype(conv_dtype), (1, 1), pad,
            dimension_numbers=('NCHW', 'OIHW', 'NCHW'),
            preferred_element_type=jnp.float32,
            precision=lax.Precision.HIGHEST)

    out = jax.nn.relu(bn(x, g1, b1))
    residual = x
    out = conv(out, w1, 'VALID')
    out = jax.nn.relu(bn(out, g2, b2))
    out = conv(out, w2, ((1, 1), (1, 1)))
    out = jax.nn.relu(bn(out, g3, b3))
    out = conv(out, w3, 'VALID')
    return out + residual


if __name__ == "__main__":
    key = jax.random.PRNGKey(0)
    kx, k1, k2, k3 = jax.random.split(key, 4)

    # inplanes must equal planes*expansion since downsample=None
    n, inplanes, hgt, wid = 2, 16, 16, 16
    planes = inplanes // 4

    x = jax.random.normal(kx, (n, inplanes, hgt, wid), jnp.float32)
    w1 = 0.2 * jax.random.normal(k1, (planes, inplanes, 1, 1), jnp.float32)
    w2 = 0.2 * jax.random.normal(k2, (planes, planes, 3, 3), jnp.float32)
    w3 = 0.2 * jax.random.normal(k3, (planes * 4, planes, 1, 1), jnp.float32)
    g1, b1 = jnp.ones((inplanes,), jnp.float32), jnp.zeros((inplanes,), jnp.float32)
    g2, b2 = jnp.ones((planes,), jnp.float32), jnp.zeros((planes,), jnp.float32)
    g3, b3 = jnp.ones((planes,), jnp.float32), jnp.zeros((planes,), jnp.float32)

    out = jax.jit(bottleneck_v2_forward)(x, w1, w2, w3, g1, b1, g2, b2, g3, b3)
    out = jax.block_until_ready(out)
    assert out.shape == (n, inplanes, hgt, wid)

    # Check vs a reference with matching (bf16) matmul-operand precision (the
    # kernel also stores y1/y2 intermediates in bf16, hence the slightly looser
    # bound than a pure f32 pipeline), and a loose sanity bound vs full f32.
    ref_bf16 = ref_forward(x, w1, w2, w3, g1, b1, g2, b2, g3, b3,
                           conv_dtype=jnp.bfloat16)
    ref_f32 = ref_forward(x, w1, w2, w3, g1, b1, g2, b2, g3, b3)
    err_m = float(jnp.max(jnp.abs(out - ref_bf16)))
    err_f = float(jnp.max(jnp.abs(out - ref_f32)))
    assert jnp.allclose(out, ref_bf16, atol=4e-2, rtol=4e-2), err_m
    assert jnp.allclose(out, ref_f32, atol=2.5e-1, rtol=2.5e-1), err_f
    print("KERNEL_OK")
</pallas_src>

<mosaic_0001>
module attributes {stable_mosaic.version = 11 : i64} {
  func.func @kernel(%arg0: i32, %arg1: memref<512x128xf32, #tpu.memory_space<vmem>>, %arg2: memref<1x1x128xf32, #tpu.memory_space<vmem>>, %arg3: memref<1x1x128xf32, #tpu.memory_space<vmem>>) attributes {dimension_semantics = [#tpu.dimension_semantics<parallel>], iteration_bounds = array<i64: 1>, scalar_prefetch = 0 : i64, scratch_operands = 0 : i64, tpu.core_type = #tpu.core_type<tc>, window_params = [{transform_indices = @transform_0, window_bounds = array<i64: 512, 128>}, {transform_indices = @transform_1, window_bounds = array<i64: 1, 1, 128>}, {transform_indices = @transform_2, window_bounds = array<i64: 1, 1, 128>}]} {
    %c512_i32 = arith.constant 512 : i32
    %0 = arith.muli %arg0, %c512_i32 : i32
    %1 = tpu.iota {dimensions = array<i32: 0>} : vector<512x1xi32>
    %2 = vector.broadcast %0 : i32 to vector<512x1xi32>
    %3 = arith.addi %2, %1 : vector<512x1xi32>
    %c512_i32_0 = arith.constant 512 : i32
    %4 = vector.broadcast %c512_i32_0 : i32 to vector<512x1xi32>
    %5 = arith.cmpi slt, %3, %4 : vector<512x1xi32>
    %c0 = arith.constant 0 : index
    %c0_1 = arith.constant 0 : index
    %6 = vector.load %arg1[%c0, %c0_1] : memref<512x128xf32, #tpu.memory_space<vmem>>, vector<512x128xf32>
    %cst = arith.constant 0.000000e+00 : f32
    %7 = vector.shape_cast %5 : vector<512x1xi1> to vector<512x1xi1>
    %8 = vector.broadcast %7 : vector<512x1xi1> to vector<512x128xi1>
    %9 = vector.broadcast %cst : f32 to vector<512x128xf32>
    %10 = arith.select %8, %6, %9 : vector<512x128xi1>, vector<512x128xf32>
    %cst_2 = arith.constant dense<0.000000e+00> : vector<128xf32>
    %11 = vector.multi_reduction <add>, %10, %cst_2 [0] : vector<512x128xf32> to vector<128xf32>
    %12 = vector.shape_cast %11 : vector<128xf32> to vector<1x128xf32>
    %c0_3 = arith.constant 0 : index
    %c0_4 = arith.constant 0 : index
    %c0_5 = arith.constant 0 : index
    %13 = vector.load %arg2[%c0_3, %c0_4, %c0_5] : memref<1x1x128xf32, #tpu.memory_space<vmem>>, vector<1x1x128xf32>
    %14 = vector.shape_cast %13 : vector<1x1x128xf32> to vector<1x128xf32>
    %15 = vector.shape_cast %12 : vector<1x128xf32> to vector<1x1x128xf32>
    tpu.vector_store %arg2[%c0_3, %c0_4, %c0_5], %15 {strides = array<i32>} : memref<1x1x128xf32, #tpu.memory_space<vmem>>, vector<1x1x128xf32>,
    %16 = arith.mulf %10, %10 : vector<512x128xf32>
    %cst_6 = arith.constant dense<0.000000e+00> : vector<128xf32>
    %17 = vector.multi_reduction <add>, %16, %cst_6 [0] : vector<512x128xf32> to vector<128xf32>
    %18 = vector.shape_cast %17 : vector<128xf32> to vector<1x128xf32>
    %c0_7 = arith.constant 0 : index
    %c0_8 = arith.constant 0 : index
    %c0_9 = arith.constant 0 : index
    %19 = vector.load %arg3[%c0_7, %c0_8, %c0_9] : memref<1x1x128xf32, #tpu.memory_space<vmem>>, vector<1x1x128xf32>
    %20 = vector.shape_cast %19 : vector<1x1x128xf32> to vector<1x128xf32>
    %21 = vector.shape_cast %18 : vector<1x128xf32> to vector<1x1x128xf32>
    tpu.vector_store %arg3[%c0_7, %c0_8, %c0_9], %21 {strides = array<i32>} : memref<1x1x128xf32, #tpu.memory_space<vmem>>, vector<1x1x128xf32>,
    return
  }
  func.func @transform_0(%arg0: i32) -> (i32, i32) {
    %c0_i32 = arith.constant 0 : i32
    %c0_i32_0 = arith.constant 0 : i32
    return %arg0, %c0_i32 : i32, i32
  }
  func.func @transform_1(%arg0: i32) -> (i32, i32, i32) {
    %c0_i32 = arith.constant 0 : i32
    %c0_i32_0 = arith.constant 0 : i32
    %c0_i32_1 = arith.constant 0 : i32
    return %arg0, %c0_i32, %c0_i32_0 : i32, i32, i32
  }
  func.func @transform_2(%arg0: i32) -> (i32, i32, i32) {
    %c0_i32 = arith.constant 0 : i32
    %c0_i32_0 = arith.constant 0 : i32
    %c0_i32_1 = arith.constant 0 : i32
    return %arg0, %c0_i32, %c0_i32_0 : i32, i32, i32
  }
}

module attributes {stable_mosaic.version = 11 : i64} {
  func.func @kernel(%arg0: i32, %arg1: memref<512x128xf32, #tpu.memory_space<vmem>>, %arg2: memref<1x128xf32, #tpu.memory_space<vmem>>, %arg3: memref<1x128xf32, #tpu.memory_space<vmem>>, %arg4: memref<128x128xbf16, #tpu.memory_space<vmem>>, %arg5: memref<512x128xbf16, #tpu.memory_space<vmem>>, %arg6: memref<1x1x128xf32, #tpu.memory_space<vmem>>, %arg7: memref<1x1x128xf32, #tpu.memory_space<vmem>>) attributes {dimension_semantics = [#tpu.dimension_semantics<parallel>], iteration_bounds = array<i64: 1>, scalar_prefetch = 0 : i64, scratch_operands = 0 : i64, tpu.core_type = #tpu.core_type<tc>, window_params = [{transform_indices = @transform_0, window_bounds = array<i64: 512, 128>}, {pipeline_mode = #tpu.pipeline_mode<synchronous>, transform_indices = @transform_1, window_bounds = array<i64: 1, 128>}, {pipeline_mode = #tpu.pipeline_mode<synchronous>, transform_indices = @transform_2, window_bounds = array<i64: 1, 128>}, {pipeline_mode = #tpu.pipeline_mode<synchronous>, transform_indices = @transform_3, window_bounds = array<i64: 128, 128>}, {transform_indices = @transform_4, window_bounds = array<i64: 512, 128>}, {transform_indices = @transform_5, window_bounds = array<i64: 1, 1, 128>}, {transform_indices = @transform_6, window_bounds = array<i64: 1, 1, 128>}]} {
    %c0 = arith.constant 0 : index
    %c0_0 = arith.constant 0 : index
    %0 = vector.load %arg1[%c0, %c0_0] : memref<512x128xf32, #tpu.memory_space<vmem>>, vector<512x128xf32>
    %c0_1 = arith.constant 0 : index
    %c0_2 = arith.constant 0 : index
    %1 = vector.load %arg2[%c0_1, %c0_2] : memref<1x128xf32, #tpu.memory_space<vmem>>, vector<1x128xf32>
    %2 = vector.broadcast %1 : vector<1x128xf32> to vector<512x128xf32>
    %3 = arith.mulf %0, %2 : vector<512x128xf32>
    %c0_3 = arith.constant 0 : index
    %c0_4 = arith.constant 0 : index
    %4 = vector.load %arg3[%c0_3, %c0_4] : memref<1x128xf32, #tpu.memory_space<vmem>>, vector<1x128xf32>
    %5 = vector.broadcast %4 : vector<1x128xf32> to vector<512x128xf32>
    %6 = arith.addf %3, %5 : vector<512x128xf32>
    %cst = arith.constant 0.000000e+00 : f32
    %7 = vector.broadcast %cst : f32 to vector<512x128xf32>
    %8 = arith.maximumf %6, %7 : vector<512x128xf32>
    %9 = arith.truncf %8 : vector<512x128xf32> to vector<512x128xbf16>
    %c0_5 = arith.constant 0 : index
    %c0_6 = arith.constant 0 : index
    %10 = vector.load %arg4[%c0_5, %c0_6] : memref<128x128xbf16, #tpu.memory_space<vmem>>, vector<128x128xbf16>
    %cst_7 = arith.constant dense<0.000000e+00> : vector<512x128xf32>
    %11 = tpu.matmul %9, %10, %cst_7 {dimension_numbers = #tpu.dot_dimension_numbers<[1], [0], [0], [1], [0, 0, 1, 1], [], []>} : vector<512x128xbf16>, vector<128x128xbf16>, vector<512x128xf32> -> vector<512x128xf32>
    %12 = arith.truncf %11 : vector<512x128xf32> to vector<512x128xbf16>
    %c0_8 = arith.constant 0 : index
    %c0_9 = arith.constant 0 : index
    %13 = vector.load %arg5[%c0_8, %c0_9] : memref<512x128xbf16, #tpu.memory_space<vmem>>, vector<512x128xbf16>
    tpu.vector_store %arg5[%c0_8, %c0_9], %12 {strides = array<i32>} : memref<512x128xbf16, #tpu.memory_space<vmem>>, vector<512x128xbf16>,
    %c512_i32 = arith.constant 512 : i32
    %14 = arith.muli %arg0, %c512_i32 : i32
    %15 = tpu.iota {dimensions = array<i32: 0>} : vector<512x1xi32>
    %16 = vector.broadcast %14 : i32 to vector<512x1xi32>
    %17 = arith.addi %16, %15 : vector<512x1xi32>
    %c512_i32_10 = arith.constant 512 : i32
    %18 = vector.broadcast %c512_i32_10 : i32 to vector<512x1xi32>
    %19 = arith.cmpi slt, %17, %18 : vector<512x1xi32>
    %cst_11 = arith.constant 0.000000e+00 : f32
    %20 = vector.shape_cast %19 : vector<512x1xi1> to vector<512x1xi1>
    %21 = vector.broadcast %20 : vector<512x1xi1> to vector<512x128xi1>
    %22 = vector.broadcast %cst_11 : f32 to vector<512x128xf32>
    %23 = arith.select %21, %11, %22 : vector<512x128xi1>, vector<512x128xf32>
    %cst_12 = arith.constant dense<0.000000e+00> : vector<128xf32>
    %24 = vector.multi_reduction <add>, %23, %cst_12 [0] : vector<512x128xf32> to vector<128xf32>
    %25 = vector.shape_cast %24 : vector<128xf32> to vector<1x128xf32>
    %c0_13 = arith.constant 0 : index
    %c0_14 = arith.constant 0 : index
    %c0_15 = arith.constant 0 : index
    %26 = vector.load %arg6[%c0_13, %c0_14, %c0_15] : memref<1x1x128xf32, #tpu.memory_space<vmem>>, vector<1x1x128xf32>
    %27 = vector.shape_cast %26 : vector<1x1x128xf32> to vector<1x128xf32>
    %28 = vector.shape_cast %25 : vector<1x128xf32> to vector<1x1x128xf32>
    tpu.vector_store %arg6[%c0_13, %c0_14, %c0_15], %28 {strides = array<i32>} : memref<1x1x128xf32, #tpu.memory_space<vmem>>, vector<1x1x128xf32>,
    %29 = arith.mulf %23, %23 : vector<512x128xf32>
    %cst_16 = arith.constant dense<0.000000e+00> : vector<128xf32>
    %30 = vector.multi_reduction <add>, %29, %cst_16 [0] : vector<512x128xf32> to vector<128xf32>
    %31 = vector.shape_cast %30 : vector<128xf32> to vector<1x128xf32>
    %c0_17 = arith.constant 0 : index
    %c0_18 = arith.constant 0 : index
    %c0_19 = arith.constant 0 : index
    %32 = vector.load %arg7[%c0_17, %c0_18, %c0_19] : memref<1x1x128xf32, #tpu.memory_space<vmem>>, vector<1x1x128xf32>
    %33 = vector.shape_cast %32 : vector<1x1x128xf32> to vector<1x128xf32>
    %34 = vector.shape_cast %31 : vector<1x128xf32> to vector<1x1x128xf32>
    tpu.vector_store %arg7[%c0_17, %c0_18, %c0_19], %34 {strides = array<i32>} : memref<1x1x128xf32, #tpu.memory_space<vmem>>, vector<1x1x128xf32>,
    return
  }
  func.func @transform_0(%arg0: i32) -> (i32, i32) {
    %c0_i32 = arith.constant 0 : i32
    %c0_i32_0 = arith.constant 0 : i32
    return %arg0, %c0_i32 : i32, i32
  }
  func.func @transform_1(%arg0: i32) -> (i32, i32) {
    %c0_i32 = arith.constant 0 : i32
    %c0_i32_0 = arith.constant 0 : i32
    %c0_i32_1 = arith.constant 0 : i32
    return %c0_i32, %c0_i32_0 : i32, i32
  }
  func.func @transform_2(%arg0: i32) -> (i32, i32) {
    %c0_i32 = arith.constant 0 : i32
    %c0_i32_0 = arith.constant 0 : i32
    %c0_i32_1 = arith.constant 0 : i32
    return %c0_i32, %c0_i32_0 : i32, i32
  }
  func.func @transform_3(%arg0: i32) -> (i32, i32) {
    %c0_i32 = arith.constant 0 : i32
    %c0_i32_0 = arith.constant 0 : i32
    %c0_i32_1 = arith.constant 0 : i32
    return %c0_i32, %c0_i32_0 : i32, i32
  }
  func.func @transform_4(%arg0: i32) -> (i32, i32) {
    %c0_i32 = arith.constant 0 : i32
    %c0_i32_0 = arith.constant 0 : i32
    return %arg0, %c0_i32 : i32, i32
  }
  func.func @transform_5(%arg0: i32) -> (i32, i32, i32) {
    %c0_i32 = arith.constant 0 : i32
    %c0_i32_0 = arith.constant 0 : i32
    %c0_i32_1 = arith.constant 0 : i32
    return %arg0, %c0_i32, %c0_i32_0 : i32, i32, i32
  }
  func.func @transform_6(%arg0: i32) -> (i32, i32, i32) {
    %c0_i32 = arith.constant 0 : i32
    %c0_i32_0 = arith.constant 0 : i32
    %c0_i32_1 = arith.constant 0 : i32
    return %arg0, %c0_i32, %c0_i32_0 : i32, i32, i32
  }
}

module attributes {stable_mosaic.version = 11 : i64} {
  func.func @kernel(%arg0: i32, %arg1: i32, %arg2: memref<1x256x128xbf16, #tpu.memory_space<vmem>>, %arg3: memref<1x128xf32, #tpu.memory_space<vmem>>, %arg4: memref<1x128xf32, #tpu.memory_space<vmem>>, %arg5: memref<3x384x128xbf16, #tpu.memory_space<vmem>>, %arg6: memref<1x256x128xbf16, #tpu.memory_space<vmem>>, %arg7: memref<1x1x1x128xf32, #tpu.memory_space<vmem>>, %arg8: memref<1x1x1x128xf32, #tpu.memory_space<vmem>>, %arg9: memref<304x128xf32, #tpu.memory_space<vmem>>, %arg10: memref<288x384xbf16, #tpu.memory_space<vmem>>, %arg11: memref<256x128xf32, #tpu.memory_space<vmem>>) attributes {dimension_semantics = [#tpu.dimension_semantics<parallel>, #tpu.dimension_semantics<parallel>], iteration_bounds = array<i64: 2, 1>, scalar_prefetch = 0 : i64, scratch_operands = 3 : i64, tpu.core_type = #tpu.core_type<tc>, window_params = [{transform_indices = @transform_0, window_bounds = array<i64: 1, 256, 128>}, {pipeline_mode = #tpu.pipeline_mode<synchronous>, transform_indices = @transform_1, window_bounds = array<i64: 1, 128>}, {pipeline_mode = #tpu.pipeline_mode<synchronous>, transform_indices = @transform_2, window_bounds = array<i64: 1, 128>}, {pipeline_mode = #tpu.pipeline_mode<synchronous>, transform_indices = @transform_3, window_bounds = array<i64: 3, 384, 128>}, {transform_indices = @transform_4, window_bounds = array<i64: 1, 256, 128>}, {transform_indices = @transform_5, window_bounds = array<i64: 1, 1, 1, 128>}, {transform_indices = @transform_6, window_bounds = array<i64: 1, 1, 1, 128>}]} {
    %c16_i32 = arith.constant 16 : i32
    %0 = arith.muli %arg1, %c16_i32 : i32
    %c0 = arith.constant 0 : index
    %c0_0 = arith.constant 0 : index
    %1 = vector.load %arg3[%c0, %c0_0] : memref<1x128xf32, #tpu.memory_space<vmem>>, vector<1x128xf32>
    %c0_1 = arith.constant 0 : index
    %c0_2 = arith.constant 0 : index
    %2 = vector.load %arg4[%c0_1, %c0_2] : memref<1x128xf32, #tpu.memory_space<vmem>>, vector<1x128xf32>
    %c16_i32_3 = arith.constant 16 : i32
    %3 = arith.muli %0, %c16_i32_3 : i32
    %c1_i32 = arith.constant 1 : i32
    %4 = arith.subi %0, %c1_i32 : i32
    %c0_i32 = arith.constant 0 : i32
    %5 = arith.maxsi %4, %c0_i32 : i32
    %c16_i32_4 = arith.constant 16 : i32
    %6 = arith.muli %5, %c16_i32_4 : i32
    %c16_i32_5 = arith.constant 16 : i32
    %7 = arith.addi %0, %c16_i32_5 : i32
    %c15_i32 = arith.constant 15 : i32
    %8 = arith.minsi %7, %c15_i32 : i32
    %c16_i32_6 = arith.constant 16 : i32
    %9 = arith.muli %8, %c16_i32_6 : i32
    %10 = tpu.assume_multiple %3, 8 : i32
    %11 = tpu.assume_multiple %6, 8 : i32
    %12 = tpu.assume_multiple %9, 8 : i32
    %c0_7 = arith.constant 0 : index
    %13 = arith.index_cast %10 : i32 to index
    %c0_8 = arith.constant 0 : index
    %14 = vector.load %arg2[%c0_7, %13, %c0_8] : memref<1x256x128xbf16, #tpu.memory_space<vmem>>, vector<1x256x128xbf16>
    %15 = vector.shape_cast %14 : vector<1x256x128xbf16> to vector<256x128xbf16>
    %16 = arith.extf %15 : vector<256x128xbf16> to vector<256x128xf32>
    %17 = vector.broadcast %1 : vector<1x128xf32> to vector<256x128xf32>
    %18 = arith.mulf %16, %17 : vector<256x128xf32>
    %19 = vector.broadcast %2 : vector<1x128xf32> to vector<256x128xf32>
    %20 = arith.addf %18, %19 : vector<256x128xf32>
    %cst = arith.constant 0.000000e+00 : f32
    %21 = vector.broadcast %cst : f32 to vector<256x128xf32>
    %22 = arith.maximumf %20, %21 : vector<256x128xf32>
    %c0_9 = arith.constant 0 : index
    %23 = arith.index_cast %11 : i32 to index
    %c0_10 = arith.constant 0 : index
    %24 = vector.load %arg2[%c0_9, %23, %c0_10] : memref<1x256x128xbf16, #tpu.memory_space<vmem>>, vector<1x16x128xbf16>
    %25 = vector.shape_cast %24 : vector<1x16x128xbf16> to vector<16x128xbf16>
    %26 = arith.extf %25 : vector<16x128xbf16> to vector<16x128xf32>
    %27 = vector.broadcast %1 : vector<1x128xf32> to vector<16x128xf32>
    %28 = arith.mulf %26, %27 : vector<16x128xf32>
    %29 = vector.broadcast %2 : vector<1x128xf32> to vector<16x128xf32>
    %30 = arith.addf %28, %29 : vector<16x128xf32>
    %cst_11 = arith.constant 0.000000e+00 : f32
    %31 = vector.broadcast %cst_11 : f32 to vector<16x128xf32>
    %32 = arith.maximumf %30, %31 : vector<16x128xf32>
    %c0_12 = arith.constant 0 : index
    %33 = arith.index_cast %12 : i32 to index
    %c0_13 = arith.constant 0 : index
    %34 = vector.load %arg2[%c0_12, %33, %c0_13] : memref<1x256x128xbf16, #tpu.memory_space<vmem>>, vector<1x16x128xbf16>
    %35 = vector.shape_cast %34 : vector<1x16x128xbf16> to vector<16x128xbf16>
    %36 = arith.extf %35 : vector<16x128xbf16> to vector<16x128xf32>
    %37 = vector.broadcast %1 : vector<1x128xf32> to vector<16x128xf32>
    %38 = arith.mulf %36, %37 : vector<16x128xf32>
    %39 = vector.broadcast %2 : vector<1x128xf32> to vector<16x128xf32>
    %40 = arith.addf %38, %39 : vector<16x128xf32>
    %cst_14 = arith.constant 0.000000e+00 : f32
    %41 = vector.broadcast %cst_14 : f32 to vector<16x128xf32>
    %42 = arith.maximumf %40, %41 : vector<16x128xf32>
    %cst_15 = arith.constant 0.000000e+00 : f32
    %43 = vector.broadcast %cst_15 : f32 to vector<1x128xf32>
    %c7 = arith.constant 7 : index
    %c0_16 = arith.constant 0 : index
    %44 = vector.load %arg9[%c7, %c0_16] : memref<304x128xf32, #tpu.memory_space<vmem>>, vector<1x128xf32>
    tpu.vector_store %arg9[%c7, %c0_16], %43 {strides = array<i32>} : memref<304x128xf32, #tpu.memory_space<vmem>>, vector<1x128xf32>,
    %c296 = arith.constant 296 : index
    %c0_17 = arith.constant 0 : index
    %45 = vector.load %arg9[%c296, %c0_17] : memref<304x128xf32, #tpu.memory_space<vmem>>, vector<1x128xf32>
    tpu.vector_store %arg9[%c296, %c0_17], %43 {strides = array<i32>} : memref<304x128xf32, #tpu.memory_space<vmem>>, vector<1x128xf32>,
    %c0_i32_18 = arith.constant 0 : i32
    %46 = arith.cmpi sgt, %arg1, %c0_i32_18 : i32
    %cst_19 = arith.constant 0.000000e+00 : f32
    %47 = vector.broadcast %cst_19 : f32 to vector<16x128xf32>
    %48 = arith.select %46, %32, %47 : vector<16x128xf32>
    %c8 = arith.constant 8 : index
    %c0_20 = arith.constant 0 : index
    %49 = vector.load %arg9[%c8, %c0_20] : memref<304x128xf32, #tpu.memory_space<vmem>>, vector<16x128xf32>
    tpu.vector_store %arg9[%c8, %c0_20], %48 {strides = array<i32>} : memref<304x128xf32, #tpu.memory_space<vmem>>, vector<16x128xf32>,
    %c24 = arith.constant 24 : index
    %c0_21 = arith.constant 0 : index
    %50 = vector.load %arg9[%c24, %c0_21] : memref<304x128xf32, #tpu.memory_space<vmem>>, vector<256x128xf32>
    tpu.vector_store %arg9[%c24, %c0_21], %22 {strides = array<i32>} : memref<304x128xf32, #tpu.memory_space<vmem>>, vector<256x128xf32>,
    %c0_i32_22 = arith.constant 0 : i32
    %51 = arith.cmpi slt, %arg1, %c0_i32_22 : i32
    %cst_23 = arith.constant 0.000000e+00 : f32
    %52 = vector.broadcast %cst_23 : f32 to vector<16x128xf32>
    %53 = arith.select %51, %42, %52 : vector<16x128xf32>
    %c280 = arith.constant 280 : index
    %c0_24 = arith.constant 0 : index
    %54 = vector.load %arg9[%c280, %c0_24] : memref<304x128xf32, #tpu.memory_space<vmem>>, vector<16x128xf32>
    tpu.vector_store %arg9[%c280, %c0_24], %53 {strides = array<i32>} : memref<304x128xf32, #tpu.memory_space<vmem>>, vector<16x128xf32>,
    %55 = tpu.iota {dimensions = array<i32: 0>} : vector<288x1xi32>
    %c16_i32_25 = arith.constant 16 : i32
    %c0_i32_26 = arith.constant 0 : i32
    %56 = arith.cmpi eq, %c16_i32_25, %c0_i32_26 : i32
    %c1_i32_27 = arith.constant 1 : i32
    %57 = arith.select %56, %c1_i32_27, %c16_i32_25 : i32
    %58 = vector.broadcast %57 : i32 to vector<288x1xi32>
    %59 = arith.remsi %55, %58 : vector<288x1xi32>
    %c0_i32_28 = arith.constant 0 : i32
    %60 = vector.broadcast %c0_i32_28 : i32 to vector<288x1xi32>
    %61 = arith.cmpi ne, %59, %60 : vector<288x1xi32>
    %c0_i32_29 = arith.constant 0 : i32
    %62 = vector.broadcast %c0_i32_29 : i32 to vector<288x1xi32>
    %63 = arith.cmpi slt, %59, %62 : vector<288x1xi32>
    %c0_i32_30 = arith.constant 0 : i32
    %64 = arith.cmpi slt, %57, %c0_i32_30 : i32
    %65 = vector.broadcast %64 : i1 to vector<288x1xi1>
    %66 = vector.broadcast %65 : vector<288x1xi1> to vector<288x1xi1>
    %67 = arith.xori %63, %66 : vector<288x1xi1>
    %68 = arith.andi %67, %61 : vector<288x1xi1>
    %69 = vector.broadcast %57 : i32 to vector<288x1xi32>
    %70 = arith.addi %59, %69 : vector<288x1xi32>
    %71 = arith.select %68, %70, %59 : vector<288x1xi1>, vector<288x1xi32>
    %c8_31 = arith.constant 8 : index
    %c0_32 = arith.constant 0 : index
    %72 = vector.load %arg9[%c8_31, %c0_32] : memref<304x128xf32, #tpu.memory_space<vmem>>, vector<288x128xf32>
    %c0_i32_33 = arith.constant 0 : i32
    %73 = vector.broadcast %c0_i32_33 : i32 to vector<288x1xi32>
    %74 = arith.cmpi ne, %71, %73 : vector<288x1xi32>
    %c7_34 = arith.constant 7 : index
    %c0_35 = arith.constant 0 : index
    %75 = vector.load %arg9[%c7_34, %c0_35] : memref<304x128xf32, #tpu.memory_space<vmem>>, vector<288x128xf32>
    %cst_36 = arith.constant 0.000000e+00 : f32
    %76 = vector.shape_cast %74 : vector<288x1xi1> to vector<288x1xi1>
    %77 = vector.broadcast %76 : vector<288x1xi1> to vector<288x128xi1>
    %78 = vector.broadcast %cst_36 : f32 to vector<288x128xf32>
    %79 = arith.select %77, %75, %78 : vector<288x128xi1>, vector<288x128xf32>
    %c15_i32_37 = arith.constant 15 : i32
    %80 = vector.broadcast %c15_i32_37 : i32 to vector<288x1xi32>
    %81 = arith.cmpi ne, %71, %80 : vector<288x1xi32>
    %c9 = arith.constant 9 : index
    %c0_38 = arith.constant 0 : index
    %82 = vector.load %arg9[%c9, %c0_38] : memref<304x128xf32, #tpu.memory_space<vmem>>, vector<288x128xf32>
    %cst_39 = arith.constant 0.000000e+00 : f32
    %83 = vector.shape_cast %81 : vector<288x1xi1> to vector<288x1xi1>
    %84 = vector.broadcast %83 : vector<288x1xi1> to vector<288x128xi1>
    %85 = vector.broadcast %cst_39 : f32 to vector<288x128xf32>
    %86 = arith.select %84, %82, %85 : vector<288x128xi1>, vector<288x128xf32>
    %87 = arith.truncf %79 : vector<288x128xf32> to vector<288x128xbf16>
    %c0_40 = arith.constant 0 : index
    %c0_41 = arith.constant 0 : index
    %88 = vector.load %arg10[%c0_40, %c0_41] : memref<288x384xbf16, #tpu.memory_space<vmem>>, vector<288x128xbf16>
    tpu.vector_store %arg10[%c0_40, %c0_41], %87 {strides = array<i32>} : memref<288x384xbf16, #tpu.memory_space<vmem>>, vector<288x128xbf16>,
    %89 = arith.truncf %72 : vector<288x128xf32> to vector<288x128xbf16>
    %c0_42 = arith.constant 0 : index
    %c128 = arith.constant 128 : index
    %90 = vector.load %arg10[%c0_42, %c128] : memref<288x384xbf16, #tpu.memory_space<vmem>>, vector<288x128xbf16>
    tpu.vector_store %arg10[%c0_42, %c128], %89 {strides = array<i32>} : memref<288x384xbf16, #tpu.memory_space<vmem>>, vector<288x128xbf16>,
    %91 = arith.truncf %86 : vector<288x128xf32> to vector<288x128xbf16>
    %c0_43 = arith.constant 0 : index
    %c256 = arith.constant 256 : index
    %92 = vector.load %arg10[%c0_43, %c256] : memref<288x384xbf16, #tpu.memory_space<vmem>>, vector<288x128xbf16>
    tpu.vector_store %arg10[%c0_43, %c256], %91 {strides = array<i32>} : memref<288x384xbf16, #tpu.memory_space<vmem>>, vector<288x128xbf16>,
    %c0_44 = arith.constant 0 : index
    %c0_45 = arith.constant 0 : index
    %93 = vector.load %arg10[%c0_44, %c0_45] : memref<288x384xbf16, #tpu.memory_space<vmem>>, vector<256x384xbf16>
    %c0_46 = arith.constant 0 : index
    %c0_47 = arith.constant 0 : index
    %c0_48 = arith.constant 0 : index
    %94 = vector.load %arg5[%c0_46, %c0_47, %c0_48] : memref<3x384x128xbf16, #tpu.memory_space<vmem>>, vector<1x384x128xbf16>
    %95 = vector.shape_cast %94 : vector<1x384x128xbf16> to vector<384x128xbf16>
    %cst_49 = arith.constant dense<0.000000e+00> : vector<256x128xf32>
    %96 = tpu.matmul %93, %95, %cst_49 {dimension_numbers = #tpu.dot_dimension_numbers<[1], [0], [0], [1], [0, 0, 1, 1], [], []>} : vector<256x384xbf16>, vector<384x128xbf16>, vector<256x128xf32> -> vector<256x128xf32>
    %c0_50 = arith.constant 0 : index
    %c0_51 = arith.constant 0 : index
    %97 = vector.load %arg11[%c0_50, %c0_51] : memref<256x128xf32, #tpu.memory_space<vmem>>, vector<256x128xf32>
    tpu.vector_store %arg11[%c0_50, %c0_51], %96 {strides = array<i32>} : memref<256x128xf32, #tpu.memory_space<vmem>>, vector<256x128xf32>,
    %c16 = arith.constant 16 : index
    %c0_52 = arith.constant 0 : index
    %98 = vector.load %arg10[%c16, %c0_52] : memref<288x384xbf16, #tpu.memory_space<vmem>>, vector<256x384xbf16>
    %c1 = arith.constant 1 : index
    %c0_53 = arith.constant 0 : index
    %c0_54 = arith.constant 0 : index
    %99 = vector.load %arg5[%c1, %c0_53, %c0_54] : memref<3x384x128xbf16, #tpu.memory_space<vmem>>, vector<1x384x128xbf16>
    %100 = vector.shape_cast %99 : vector<1x384x128xbf16> to vector<384x128xbf16>
    %cst_55 = arith.constant dense<0.000000e+00> : vector<256x128xf32>
    %101 = tpu.matmul %98, %100, %cst_55 {dimension_numbers = #tpu.dot_dimension_numbers<[1], [0], [0], [1], [0, 0, 1, 1], [], []>} : vector<256x384xbf16>, vector<384x128xbf16>, vector<256x128xf32> -> vector<256x128xf32>
    %c0_56 = arith.constant 0 : index
    %c0_57 = arith.constant 0 : index
    %102 = vector.load %arg11[%c0_56, %c0_57] : memref<256x128xf32, #tpu.memory_space<vmem>>, vector<256x128xf32>
    %103 = arith.addf %102, %101 : vector<256x128xf32>
    %c0_58 = arith.constant 0 : index
    %c0_59 = arith.constant 0 : index
    %104 = vector.load %arg11[%c0_58, %c0_59] : memref<256x128xf32, #tpu.memory_space<vmem>>, vector<256x128xf32>
    tpu.vector_store %arg11[%c0_58, %c0_59], %103 {strides = array<i32>} : memref<256x128xf32, #tpu.memory_space<vmem>>, vector<256x128xf32>,
    %c32 = arith.constant 32 : index
    %c0_60 = arith.constant 0 : index
    %105 = vector.load %arg10[%c32, %c0_60] : memref<288x384xbf16, #tpu.memory_space<vmem>>, vector<256x384xbf16>
    %c2 = arith.constant 2 : index
    %c0_61 = arith.constant 0 : index
    %c0_62 = arith.constant 0 : index
    %106 = vector.load %arg5[%c2, %c0_61, %c0_62] : memref<3x384x128xbf16, #tpu.memory_space<vmem>>, vector<1x384x128xbf16>
    %107 = vector.shape_cast %106 : vector<1x384x128xbf16> to vector<384x128xbf16>
    %cst_63 = arith.constant dense<0.000000e+00> : vector<256x128xf32>
    %108 = tpu.matmul %105, %107, %cst_63 {dimension_numbers = #tpu.dot_dimension_numbers<[1], [0], [0], [1], [0, 0, 1, 1], [], []>} : vector<256x384xbf16>, vector<384x128xbf16>, vector<256x128xf32> -> vector<256x128xf32>
    %c0_64 = arith.constant 0 : index
    %c0_65 = arith.constant 0 : index
    %109 = vector.load %arg11[%c0_64, %c0_65] : memref<256x128xf32, #tpu.memory_space<vmem>>, vector<256x128xf32>
    %110 = arith.addf %109, %108 : vector<256x128xf32>
    %c0_66 = arith.constant 0 : index
    %c0_67 = arith.constant 0 : index
    %111 = vector.load %arg11[%c0_66, %c0_67] : memref<256x128xf32, #tpu.memory_space<vmem>>, vector<256x128xf32>
    tpu.vector_store %arg11[%c0_66, %c0_67], %110 {strides = array<i32>} : memref<256x128xf32, #tpu.memory_space<vmem>>, vector<256x128xf32>,
    %c0_68 = arith.constant 0 : index
    %c0_69 = arith.constant 0 : index
    %112 = vector.load %arg11[%c0_68, %c0_69] : memref<256x128xf32, #tpu.memory_space<vmem>>, vector<256x128xf32>
    %cst_70 = arith.constant dense<0.000000e+00> : vector<128xf32>
    %113 = vector.multi_reduction <add>, %112, %cst_70 [0] : vector<256x128xf32> to vector<128xf32>
    %114 = vector.shape_cast %113 : vector<128xf32> to vector<1x128xf32>
    %c0_71 = arith.constant 0 : index
    %c0_72 = arith.constant 0 : index
    %c0_73 = arith.constant 0 : index
    %c0_74 = arith.constant 0 : index
    %115 = vector.load %arg7[%c0_71, %c0_72, %c0_73, %c0_74] : memref<1x1x1x128xf32, #tpu.memory_space<vmem>>, vector<1x1x1x128xf32>
    %116 = vector.shape_cast %115 : vector<1x1x1x128xf32> to vector<1x128xf32>
    %117 = vector.shape_cast %114 : vector<1x128xf32> to vector<1x1x1x128xf32>
    tpu.vector_store %arg7[%c0_71, %c0_72, %c0_73, %c0_74], %117 {strides = array<i32>} : memref<1x1x1x128xf32, #tpu.memory_space<vmem>>, vector<1x1x1x128xf32>,
    %118 = arith.mulf %112, %112 : vector<256x128xf32>
    %cst_75 = arith.constant dense<0.000000e+00> : vector<128xf32>
    %119 = vector.multi_reduction <add>, %118, %cst_75 [0] : vector<256x128xf32> to vector<128xf32>
    %120 = vector.shape_cast %119 : vector<128xf32> to vector<1x128xf32>
    %c0_76 = arith.constant 0 : index
    %c0_77 = arith.constant 0 : index
    %c0_78 = arith.constant 0 : index
    %c0_79 = arith.constant 0 : index
    %121 = vector.load %arg8[%c0_76, %c0_77, %c0_78, %c0_79] : memref<1x1x1x128xf32, #tpu.memory_space<vmem>>, vector<1x1x1x128xf32>
    %122 = vector.shape_cast %121 : vector<1x1x1x128xf32> to vector<1x128xf32>
    %123 = vector.shape_cast %120 : vector<1x128xf32> to vector<1x1x1x128xf32>
    tpu.vector_store %arg8[%c0_76, %c0_77, %c0_78, %c0_79], %123 {strides = array<i32>} : memref<1x1x1x128xf32, #tpu.memory_space<vmem>>, vector<1x1x1x128xf32>,
    %124 = arith.truncf %112 : vector<256x128xf32> to vector<256x128xbf16>
    %c0_80 = arith.constant 0 : index
    %c0_81 = arith.constant 0 : index
    %c0_82 = arith.constant 0 : index
    %125 = vector.load %arg6[%c0_80, %c0_81, %c0_82] : memref<1x256x128xbf16, #tpu.memory_space<vmem>>, vector<1x256x128xbf16>
    %126 = vector.shape_cast %125 : vector<1x256x128xbf16> to vector<256x128xbf16>
    %127 = vector.shape_cast %124 : vector<256x128xbf16> to vector<1x256x128xbf16>
    tpu.vector_store %arg6[%c0_80, %c0_81, %c0_82], %127 {strides = array<i32>} : memref<1x256x128xbf16, #tpu.memory_space<vmem>>, vector<1x256x128xbf16>,
    return
  }
  func.func @transform_0(%arg0: i32, %arg1: i32) -> (i32, i32, i32) {
    %c0_i32 = arith.constant 0 : i32
    %c0_i32_0 = arith.constant 0 : i32
    %c0_i32_1 = arith.constant 0 : i32
    return %arg0, %c0_i32, %c0_i32_0 : i32, i32, i32
  }
  func.func @transform_1(%arg0: i32, %arg1: i32) -> (i32, i32) {
    %c0_i32 = arith.constant 0 : i32
    %c0_i32_0 = arith.constant 0 : i32
    %c0_i32_1 = arith.constant 0 : i32
    return %c0_i32, %c0_i32_0 : i32, i32
  }
  func.func @transform_2(%arg0: i32, %arg1: i32) -> (i32, i32) {
    %c0_i32 = arith.constant 0 : i32
    %c0_i32_0 = arith.constant 0 : i32
    %c0_i32_1 = arith.constant 0 : i32
    return %c0_i32, %c0_i32_0 : i32, i32
  }
  func.func @transform_3(%arg0: i32, %arg1: i32) -> (i32, i32, i32) {
    %c0_i32 = arith.constant 0 : i32
    %c0_i32_0 = arith.constant 0 : i32
    %c0_i32_1 = arith.constant 0 : i32
    %c0_i32_2 = arith.constant 0 : i32
    return %c0_i32, %c0_i32_0, %c0_i32_1 : i32, i32, i32
  }
  func.func @transform_4(%arg0: i32, %arg1: i32) -> (i32, i32, i32) {
    %c0_i32 = arith.constant 0 : i32
    %c0_i32_0 = arith.constant 0 : i32
    return %arg0, %arg1, %c0_i32 : i32, i32, i32
  }
  func.func @transform_5(%arg0: i32, %arg1: i32) -> (i32, i32, i32, i32) {
    %c0_i32 = arith.constant 0 : i32
    %c0_i32_0 = arith.constant 0 : i32
    %c0_i32_1 = arith.constant 0 : i32
    return %arg0, %arg1, %c0_i32, %c0_i32_0 : i32, i32, i32, i32
  }
  func.func @transform_6(%arg0: i32, %arg1: i32) -> (i32, i32, i32, i32) {
    %c0_i32 = arith.constant 0 : i32
    %c0_i32_0 = arith.constant 0 : i32
    %c0_i32_1 = arith.constant 0 : i32
    return %arg0, %arg1, %c0_i32, %c0_i32_0 : i32, i32, i32, i32
  }
}

module attributes {stable_mosaic.version = 11 : i64} {
  func.func @kernel(%arg0: i32, %arg1: memref<512x128xbf16, #tpu.memory_space<vmem>>, %arg2: memref<1x128xf32, #tpu.memory_space<vmem>>, %arg3: memref<1x128xf32, #tpu.memory_space<vmem>>, %arg4: memref<128x128xbf16, #tpu.memory_space<vmem>>, %arg5: memref<512x128xf32, #tpu.memory_space<vmem>>, %arg6: memref<512x128xf32, #tpu.memory_space<vmem>>) attributes {dimension_semantics = [#tpu.dimension_semantics<parallel>], iteration_bounds = array<i64: 1>, scalar_prefetch = 0 : i64, scratch_operands = 0 : i64, tpu.core_type = #tpu.core_type<tc>, window_params = [{transform_indices = @transform_0, window_bounds = array<i64: 512, 128>}, {pipeline_mode = #tpu.pipeline_mode<synchronous>, transform_indices = @transform_1, window_bounds = array<i64: 1, 128>}, {pipeline_mode = #tpu.pipeline_mode<synchronous>, transform_indices = @transform_2, window_bounds = array<i64: 1, 128>}, {pipeline_mode = #tpu.pipeline_mode<synchronous>, transform_indices = @transform_3, window_bounds = array<i64: 128, 128>}, {transform_indices = @transform_4, window_bounds = array<i64: 512, 128>}, {transform_indices = @transform_5, window_bounds = array<i64: 512, 128>}]} {
    %c0 = arith.constant 0 : index
    %c0_0 = arith.constant 0 : index
    %0 = vector.load %arg1[%c0, %c0_0] : memref<512x128xbf16, #tpu.memory_space<vmem>>, vector<512x128xbf16>
    %c0_1 = arith.constant 0 : index
    %c0_2 = arith.constant 0 : index
    %1 = vector.load %arg2[%c0_1, %c0_2] : memref<1x128xf32, #tpu.memory_space<vmem>>, vector<1x128xf32>
    %2 = arith.extf %0 : vector<512x128xbf16> to vector<512x128xf32>
    %3 = vector.broadcast %1 : vector<1x128xf32> to vector<512x128xf32>
    %4 = arith.mulf %2, %3 : vector<512x128xf32>
    %c0_3 = arith.constant 0 : index
    %c0_4 = arith.constant 0 : index
    %5 = vector.load %arg3[%c0_3, %c0_4] : memref<1x128xf32, #tpu.memory_space<vmem>>, vector<1x128xf32>
    %6 = vector.broadcast %5 : vector<1x128xf32> to vector<512x128xf32>
    %7 = arith.addf %4, %6 : vector<512x128xf32>
    %cst = arith.constant 0.000000e+00 : f32
    %8 = vector.broadcast %cst : f32 to vector<512x128xf32>
    %9 = arith.maximumf %7, %8 : vector<512x128xf32>
    %10 = arith.truncf %9 : vector<512x128xf32> to vector<512x128xbf16>
    %c0_5 = arith.constant 0 : index
    %c0_6 = arith.constant 0 : index
    %11 = vector.load %arg4[%c0_5, %c0_6] : memref<128x128xbf16, #tpu.memory_space<vmem>>, vector<128x128xbf16>
    %cst_7 = arith.constant dense<0.000000e+00> : vector<512x128xf32>
    %12 = tpu.matmul %10, %11, %cst_7 {dimension_numbers = #tpu.dot_dimension_numbers<[1], [0], [0], [1], [0, 0, 1, 1], [], []>} : vector<512x128xbf16>, vector<128x128xbf16>, vector<512x128xf32> -> vector<512x128xf32>
    %c0_8 = arith.constant 0 : index
    %c0_9 = arith.constant 0 : index
    %13 = vector.load %arg5[%c0_8, %c0_9] : memref<512x128xf32, #tpu.memory_space<vmem>>, vector<512x128xf32>
    %14 = arith.addf %12, %13 : vector<512x128xf32>
    %c0_10 = arith.constant 0 : index
    %c0_11 = arith.constant 0 : index
    %15 = vector.load %arg6[%c0_10, %c0_11] : memref<512x128xf32, #tpu.memory_space<vmem>>, vector<512x128xf32>
    tpu.vector_store %arg6[%c0_10, %c0_11], %14 {strides = array<i32>} : memref<512x128xf32, #tpu.memory_space<vmem>>, vector<512x128xf32>,
    return
  }
  func.func @transform_0(%arg0: i32) -> (i32, i32) {
    %c0_i32 = arith.constant 0 : i32
    %c0_i32_0 = arith.constant 0 : i32
    return %arg0, %c0_i32 : i32, i32
  }
  func.func @transform_1(%arg0: i32) -> (i32, i32) {
    %c0_i32 = arith.constant 0 : i32
    %c0_i32_0 = arith.constant 0 : i32
    %c0_i32_1 = arith.constant 0 : i32
    return %c0_i32, %c0_i32_0 : i32, i32
  }
  func.func @transform_2(%arg0: i32) -> (i32, i32) {
    %c0_i32 = arith.constant 0 : i32
    %c0_i32_0 = arith.constant 0 : i32
    %c0_i32_1 = arith.constant 0 : i32
    return %c0_i32, %c0_i32_0 : i32, i32
  }
  func.func @transform_3(%arg0: i32) -> (i32, i32) {
    %c0_i32 = arith.constant 0 : i32
    %c0_i32_0 = arith.constant 0 : i32
    %c0_i32_1 = arith.constant 0 : i32
    return %c0_i32, %c0_i32_0 : i32, i32
  }
  func.func @transform_4(%arg0: i32) -> (i32, i32) {
    %c0_i32 = arith.constant 0 : i32
    %c0_i32_0 = arith.constant 0 : i32
    return %arg0, %c0_i32 : i32, i32
  }
  func.func @transform_5(%arg0: i32) -> (i32, i32) {
    %c0_i32 = arith.constant 0 : i32
    %c0_i32_0 = arith.constant 0 : i32
    return %arg0, %c0_i32 : i32, i32
  }
}

</mosaic_0001>

<llo_original>
// kernel: bottleneck_v2_forward.4
$region0: #{bottleneck_v2_forward.4}
  #allocation0 [shape = 'u32[]', space=smem, size = 0x4, offset = 0x4, fixed_abs, tag = 'smem constant byte address 0x4 - core index']
  #allocation1 [shape = 'u32[72,128]{1,0:T(1,128)}', space=vmem, size = 0x9000, scoped, tag = 'internal scratch']
  %s0 = inlined_call_operand.vmem [shape: f32[512,128], index: 0, kind: input, shape index: {}]
  %s1 = inlined_call_operand.vmem [shape: f32[1,1,128], index: 1, kind: output, shape index: {0}]
  %s2 = inlined_call_operand.vmem [shape: f32[1,1,128], index: 2, kind: output, shape index: {1}]
  %3 = xla_tuple %s1, %s2
  %s4 = sld [smem:[#allocation0]]
  $region22: #{bottleneck_v2_forward.4} parent=0
    _
  %s6 = ssub.s32 1, %s4
  %s7 = scalar_select 0, %s6, %s4
  // Predicated region
  $region2: #{bottleneck_v2_forward.4} parent=0 // pred_check
    _
  $region3: #{bottleneck_v2_forward.4} parent=0 // pred_check_branch
    %9 = sbr.rel (0) target = $region5
  $region4: #{bottleneck_v2_forward.4} parent=0 // pred_region
    _
  $region5: #{bottleneck_v2_forward.4} parent=0 // pred_fallthru
    _
  %s10 = smul.u32 0, 512
  %v11 = vlaneseq
  %v12 = vshrl.u32 %v11, 7
  %v13 = vadd.s32 %v12, 8
  %v14 = vadd.s32 %v12, 16
  %v15 = vadd.s32 %v12, 24
  %v16 = vadd.s32 %v12, 32
  %v17 = vadd.s32 %v12, 40
  %v18 = vadd.s32 %v12, 48
  %v19 = vadd.s32 %v12, 56
  %v20 = vadd.s32 %v12, 64
  %v21 = vadd.s32 %v12, 72
  %v22 = vadd.s32 %v12, 80
  %v23 = vadd.s32 %v12, 88
  %v24 = vadd.s32 %v12, 96
  %v25 = vadd.s32 %v12, 104
  %v26 = vadd.s32 %v12, 112
  %v27 = vadd.s32 %v12, 120
  %v28 = vadd.s32 %v12, 128
  %v29 = vadd.s32 %v12, 136
  %v30 = vadd.s32 %v12, 144
  %v31 = vadd.s32 %v12, 152
  %v32 = vadd.s32 %v12, 160
  %v33 = vadd.s32 %v12, 168
  %v34 = vadd.s32 %v12, 176
  %v35 = vadd.s32 %v12, 184
  %v36 = vadd.s32 %v12, 192
  %v37 = vadd.s32 %v12, 200
  %v38 = vadd.s32 %v12, 208
  %v39 = vadd.s32 %v12, 216
  %v40 = vadd.s32 %v12, 224
  %v41 = vadd.s32 %v12, 232
  %v42 = vadd.s32 %v12, 240
  %v43 = vadd.s32 %v12, 248
  %v44 = vadd.s32 %v12, 256
  %v45 = vadd.s32 %v12, 264
  %v46 = vadd.s32 %v12, 272
  %v47 = vadd.s32 %v12, 280
  %v48 = vadd.s32 %v12, 288
  %v49 = vadd.s32 %v12, 296
  %v50 = vadd.s32 %v12, 304
  %v51 = vadd.s32 %v12, 312
  %v52 = vadd.s32 %v12, 320
  %v53 = vadd.s32 %v12, 328
  %v54 = vadd.s32 %v12, 336
  %v55 = vadd.s32 %v12, 344
  %v56 = vadd.s32 %v12, 352
  %v57 = vadd.s32 %v12, 360
  %v58 = vadd.s32 %v12, 368
  %v59 = vadd.s32 %v12, 376
  %v60 = vadd.s32 %v12, 384
  %v61 = vadd.s32 %v12, 392
  %v62 = vadd.s32 %v12, 400
  %v63 = vadd.s32 %v12, 408
  %v64 = vadd.s32 %v12, 416
  %v65 = vadd.s32 %v12, 424
  %v66 = vadd.s32 %v12, 432
  %v67 = vadd.s32 %v12, 440
  %v68 = vadd.s32 %v12, 448
  %v69 = vadd.s32 %v12, 456
  %v70 = vadd.s32 %v12, 464
  %v71 = vadd.s32 %v12, 472
  %v72 = vadd.s32 %v12, 480
  %v73 = vadd.s32 %v12, 488
  %v74 = vadd.s32 %v12, 496
  %v75 = vadd.s32 %v12, 504
  %v76 = vstv %s10
  %v77 = vadd.s32 %v76, %v12
  %v78 = vadd.s32 %v76, %v13
  %v79 = vadd.s32 %v76, %v14
  %v80 = vadd.s32 %v76, %v15
  %v81 = vadd.s32 %v76, %v16
  %v82 = vadd.s32 %v76, %v17
  %v83 = vadd.s32 %v76, %v18
  %v84 = vadd.s32 %v76, %v19
  %v85 = vadd.s32 %v76, %v20
  %v86 = vadd.s32 %v76, %v21
  %v87 = vadd.s32 %v76, %v22
  %v88 = vadd.s32 %v76, %v23
  %v89 = vadd.s32 %v76, %v24
  %v90 = vadd.s32 %v76, %v25
  %v91 = vadd.s32 %v76, %v26
  %v92 = vadd.s32 %v76, %v27
  %v93 = vadd.s32 %v76, %v28
  %v94 = vadd.s32 %v76, %v29
  %v95 = vadd.s32 %v76, %v30
  %v96 = vadd.s32 %v76, %v31
  %v97 = vadd.s32 %v76, %v32
  %v98 = vadd.s32 %v76, %v33
  %v99 = vadd.s32 %v76, %v34
  %v100 = vadd.s32 %v76, %v35
  %v101 = vadd.s32 %v76, %v36
  %v102 = vadd.s32 %v76, %v37
  %v103 = vadd.s32 %v76, %v38
  %v104 = vadd.s32 %v76, %v39
  %v105 = vadd.s32 %v76, %v40
  %v106 = vadd.s32 %v76, %v41
  %v107 = vadd.s32 %v76, %v42
  %v108 = vadd.s32 %v76, %v43
  %v109 = vadd.s32 %v76, %v44
  %v110 = vadd.s32 %v76, %v45
  %v111 = vadd.s32 %v76, %v46
  %v112 = vadd.s32 %v76, %v47
  %v113 = vadd.s32 %v76, %v48
  %v114 = vadd.s32 %v76, %v49
  %v115 = vadd.s32 %v76, %v50
  %v116 = vadd.s32 %v76, %v51
  %v117 = vadd.s32 %v76, %v52
  %v118 = vadd.s32 %v76, %v53
  %v119 = vadd.s32 %v76, %v54
  %v120 = vadd.s32 %v76, %v55
  %v121 = vadd.s32 %v76, %v56
  %v122 = vadd.s32 %v76, %v57
  %v123 = vadd.s32 %v76, %v58
  %v124 = vadd.s32 %v76, %v59
  %v125 = vadd.s32 %v76, %v60
  %v126 = vadd.s32 %v76, %v61
  %v127 = vadd.s32 %v76, %v62
  %v128 = vadd.s32 %v76, %v63
  %v129 = vadd.s32 %v76, %v64
  %v130 = vadd.s32 %v76, %v65
  %v131 = vadd.s32 %v76, %v66
  %v132 = vadd.s32 %v76, %v67
  %v133 = vadd.s32 %v76, %v68
  %v134 = vadd.s32 %v76, %v69
  %v135 = vadd.s32 %v76, %v70
  %v136 = vadd.s32 %v76, %v71
  %v137 = vadd.s32 %v76, %v72
  %v138 = vadd.s32 %v76, %v73
  %v139 = vadd.s32 %v76, %v74
  %v140 = vadd.s32 %v76, %v75
  %vm141 = vcmp.lt.s32.totalorder %v77, 512
  %vm142 = vcmp.lt.s32.totalorder %v78, 512
  %vm143 = vcmp.lt.s32.totalorder %v79, 512
  %vm144 = vcmp.lt.s32.totalorder %v80, 512
  %vm145 = vcmp.lt.s32.totalorder %v81, 512
  %vm146 = vcmp.lt.s32.totalorder %v82, 512
  %vm147 = vcmp.lt.s32.totalorder %v83, 512
  %vm148 = vcmp.lt.s32.totalorder %v84, 512
  %vm149 = vcmp.lt.s32.totalorder %v85, 512
  %vm150 = vcmp.lt.s32.totalorder %v86, 512
  %vm151 = vcmp.lt.s32.totalorder %v87, 512
  %vm152 = vcmp.lt.s32.totalorder %v88, 512
  %vm153 = vcmp.lt.s32.totalorder %v89, 512
  %vm154 = vcmp.lt.s32.totalorder %v90, 512
  %vm155 = vcmp.lt.s32.totalorder %v91, 512
  %vm156 = vcmp.lt.s32.totalorder %v92, 512
  %vm157 = vcmp.lt.s32.totalorder %v93, 512
  %vm158 = vcmp.lt.s32.totalorder %v94, 512
  %vm159 = vcmp.lt.s32.totalorder %v95, 512
  %vm160 = vcmp.lt.s32.totalorder %v96, 512
  %vm161 = vcmp.lt.s32.totalorder %v97, 512
  %vm162 = vcmp.lt.s32.totalorder %v98, 512
  %vm163 = vcmp.lt.s32.totalorder %v99, 512
  %vm164 = vcmp.lt.s32.totalorder %v100, 512
  %vm165 = vcmp.lt.s32.totalorder %v101, 512
  %vm166 = vcmp.lt.s32.totalorder %v102, 512
  %vm167 = vcmp.lt.s32.totalorder %v103, 512
  %vm168 = vcmp.lt.s32.totalorder %v104, 512
  %vm169 = vcmp.lt.s32.totalorder %v105, 512
  %vm170 = vcmp.lt.s32.totalorder %v106, 512
  %vm171 = vcmp.lt.s32.totalorder %v107, 512
  %vm172 = vcmp.lt.s32.totalorder %v108, 512
  %vm173 = vcmp.lt.s32.totalorder %v109, 512
  %vm174 = vcmp.lt.s32.totalorder %v110, 512
  %vm175 = vcmp.lt.s32.totalorder %v111, 512
  %vm176 = vcmp.lt.s32.totalorder %v112, 512
  %vm177 = vcmp.lt.s32.totalorder %v113, 512
  %vm178 = vcmp.lt.s32.totalorder %v114, 512
  %vm179 = vcmp.lt.s32.totalorder %v115, 512
  %vm180 = vcmp.lt.s32.totalorder %v116, 512
  %vm181 = vcmp.lt.s32.totalorder %v117, 512
  %vm182 = vcmp.lt.s32.totalorder %v118, 512
  %vm183 = vcmp.lt.s32.totalorder %v119, 512
  %vm184 = vcmp.lt.s32.totalorder %v120, 512
  %vm185 = vcmp.lt.s32.totalorder %v121, 512
  %vm186 = vcmp.lt.s32.totalorder %v122, 512
  %vm187 = vcmp.lt.s32.totalorder %v123, 512
  %vm188 = vcmp.lt.s32.totalorder %v124, 512
  %vm189 = vcmp.lt.s32.totalorder %v125, 512
  %vm190 = vcmp.lt.s32.totalorder %v126, 512
  %vm191 = vcmp.lt.s32.totalorder %v127, 512
  %vm192 = vcmp.lt.s32.totalorder %v128, 512
  %vm193 = vcmp.lt.s32.totalorder %v129, 512
  %vm194 = vcmp.lt.s32.totalorder %v130, 512
  %vm195 = vcmp.lt.s32.totalorder %v131, 512
  %vm196 = vcmp.lt.s32.totalorder %v132, 512
  %vm197 = vcmp.lt.s32.totalorder %v133, 512
  %vm198 = vcmp.lt.s32.totalorder %v134, 512
  %vm199 = vcmp.lt.s32.totalorder %v135, 512
  %vm200 = vcmp.lt.s32.totalorder %v136, 512
  %vm201 = vcmp.lt.s32.totalorder %v137, 512
  %vm202 = vcmp.lt.s32.totalorder %v138, 512
  %vm203 = vcmp.lt.s32.totalorder %v139, 512
  %vm204 = vcmp.lt.s32.totalorder %v140, 512
  %v205 = vld [vmem:[%s0] sm:$0xff]
  %v206 = vld [vmem:[%s0 + $0x8] sm:$0xff]
  %v207 = vld [vmem:[%s0 + $0x10] sm:$0xff]
  %v208 = vld [vmem:[%s0 + $0x18] sm:$0xff]
  %v209 = vld [vmem:[%s0 + $0x20] sm:$0xff]
  %v210 = vld [vmem:[%s0 + $0x28] sm:$0xff]
  %v211 = vld [vmem:[%s0 + $0x30] sm:$0xff]
  %v212 = vld [vmem:[%s0 + $0x38] sm:$0xff]
  %v213 = vld [vmem:[%s0 + $0x40] sm:$0xff]
  %v214 = vld [vmem:[%s0 + $0x48] sm:$0xff]
  %v215 = vld [vmem:[%s0 + $0x50] sm:$0xff]
  %v216 = vld [vmem:[%s0 + $0x58] sm:$0xff]
  %v217 = vld [vmem:[%s0 + $0x60] sm:$0xff]
  %v218 = vld [vmem:[%s0 + $0x68] sm:$0xff]
  %v219 = vld [vmem:[%s0 + $0x70] sm:$0xff]
  %v220 = vld [vmem:[%s0 + $0x78] sm:$0xff]
  %v221 = vld [vmem:[%s0 + $0x80] sm:$0xff]
  %v222 = vld [vmem:[%s0 + $0x88] sm:$0xff]
  %v223 = vld [vmem:[%s0 + $0x90] sm:$0xff]
  %v224 = vld [vmem:[%s0 + $0x98] sm:$0xff]
  %v225 = vld [vmem:[%s0 + $0xa0] sm:$0xff]
  %v226 = vld [vmem:[%s0 + $0xa8] sm:$0xff]
  %v227 = vld [vmem:[%s0 + $0xb0] sm:$0xff]
  %v228 = vld [vmem:[%s0 + $0xb8] sm:$0xff]
  %v229 = vld [vmem:[%s0 + $0xc0] sm:$0xff]
  %v230 = vld [vmem:[%s0 + $0xc8] sm:$0xff]
  %v231 = vld [vmem:[%s0 + $0xd0] sm:$0xff]
  %v232 = vld [vmem:[%s0 + $0xd8] sm:$0xff]
  %v233 = vld [vmem:[%s0 + $0xe0] sm:$0xff]
  %v234 = vld [vmem:[%s0 + $0xe8] sm:$0xff]
  %v235 = vld [vmem:[%s0 + $0xf0] sm:$0xff]
  %v236 = vld [vmem:[%s0 + $0xf8] sm:$0xff]
  %v237 = vld [vmem:[%s0 + $0x100] sm:$0xff]
  %v238 = vld [vmem:[%s0 + $0x108] sm:$0xff]
  %v239 = vld [vmem:[%s0 + $0x110] sm:$0xff]
  %v240 = vld [vmem:[%s0 + $0x118] sm:$0xff]
  %v241 = vld [vmem:[%s0 + $0x120] sm:$0xff]
  %v242 = vld [vmem:[%s0 + $0x128] sm:$0xff]
  %v243 = vld [vmem:[%s0 + $0x130] sm:$0xff]
  %v244 = vld [vmem:[%s0 + $0x138] sm:$0xff]
  %v245 = vld [vmem:[%s0 + $0x140] sm:$0xff]
  %v246 = vld [vmem:[%s0 + $0x148] sm:$0xff]
  %v247 = vld [vmem:[%s0 + $0x150] sm:$0xff]
  %v248 = vld [vmem:[%s0 + $0x158] sm:$0xff]
  %v249 = vld [vmem:[%s0 + $0x160] sm:$0xff]
  %v250 = vld [vmem:[%s0 + $0x168] sm:$0xff]
  %v251 = vld [vmem:[%s0 + $0x170] sm:$0xff]
  %v252 = vld [vmem:[%s0 + $0x178] sm:$0xff]
  %v253 = vld [vmem:[%s0 + $0x180] sm:$0xff]
  %v254 = vld [vmem:[%s0 + $0x188] sm:$0xff]
  %v255 = vld [vmem:[%s0 + $0x190] sm:$0xff]
  %v256 = vld [vmem:[%s0 + $0x198] sm:$0xff]
  %v257 = vld [vmem:[%s0 + $0x1a0] sm:$0xff]
  %v258 = vld [vmem:[%s0 + $0x1a8] sm:$0xff]
  %v259 = vld [vmem:[%s0 + $0x1b0] sm:$0xff]
  %v260 = vld [vmem:[%s0 + $0x1b8] sm:$0xff]
  %v261 = vld [vmem:[%s0 + $0x1c0] sm:$0xff]
  %v262 = vld [vmem:[%s0 + $0x1c8] sm:$0xff]
  %v263 = vld [vmem:[%s0 + $0x1d0] sm:$0xff]
  %v264 = vld [vmem:[%s0 + $0x1d8] sm:$0xff]
  %v265 = vld [vmem:[%s0 + $0x1e0] sm:$0xff]
  %v266 = vld [vmem:[%s0 + $0x1e8] sm:$0xff]
  %v267 = vld [vmem:[%s0 + $0x1f0] sm:$0xff]
  %v268 = vld [vmem:[%s0 + $0x1f8] sm:$0xff]
  %v269 = vsel %vm141, 1, 0
  %v270 = vsel %vm142, 1, 0
  %v271 = vsel %vm143, 1, 0
  %v272 = vsel %vm144, 1, 0
  %v273 = vsel %vm145, 1, 0
  %v274 = vsel %vm146, 1, 0
  %v275 = vsel %vm147, 1, 0
  %v276 = vsel %vm148, 1, 0
  %v277 = vsel %vm149, 1, 0
  %v278 = vsel %vm150, 1, 0
  %v279 = vsel %vm151, 1, 0
  %v280 = vsel %vm152, 1, 0
  %v281 = vsel %vm153, 1, 0
  %v282 = vsel %vm154, 1, 0
  %v283 = vsel %vm155, 1, 0
  %v284 = vsel %vm156, 1, 0
  %v285 = vsel %vm157, 1, 0
  %v286 = vsel %vm158, 1, 0
  %v287 = vsel %vm159, 1, 0
  %v288 = vsel %vm160, 1, 0
  %v289 = vsel %vm161, 1, 0
  %v290 = vsel %vm162, 1, 0
  %v291 = vsel %vm163, 1, 0
  %v292 = vsel %vm164, 1, 0
  %v293 = vsel %vm165, 1, 0
  %v294 = vsel %vm166, 1, 0
  %v295 = vsel %vm167, 1, 0
  %v296 = vsel %vm168, 1, 0
  %v297 = vsel %vm169, 1, 0
  %v298 = vsel %vm170, 1, 0
  %v299 = vsel %vm171, 1, 0
  %v300 = vsel %vm172, 1, 0
  %v301 = vsel %vm173, 1, 0
  %v302 = vsel %vm174, 1, 0
  %v303 = vsel %vm175, 1, 0
  %v304 = vsel %vm176, 1, 0
  %v305 = vsel %vm177, 1, 0
  %v306 = vsel %vm178, 1, 0
  %v307 = vsel %vm179, 1, 0
  %v308 = vsel %vm180, 1, 0
  %v309 = vsel %vm181, 1, 0
  %v310 = vsel %vm182, 1, 0
  %v311 = vsel %vm183, 1, 0
  %v312 = vsel %vm184, 1, 0
  %v313 = vsel %vm185, 1, 0
  %v314 = vsel %vm186, 1, 0
  %v315 = vsel %vm187, 1, 0
  %v316 = vsel %vm188, 1, 0
  %v317 = vsel %vm189, 1, 0
  %v318 = vsel %vm190, 1, 0
  %v319 = vsel %vm191, 1, 0
  %v320 = vsel %vm192, 1, 0
  %v321 = vsel %vm193, 1, 0
  %v322 = vsel %vm194, 1, 0
  %v323 = vsel %vm195, 1, 0
  %v324 = vsel %vm196, 1, 0
  %v325 = vsel %vm197, 1, 0
  %v326 = vsel %vm198, 1, 0
  %v327 = vsel %vm199, 1, 0
  %v328 = vsel %vm200, 1, 0
  %v329 = vsel %vm201, 1, 0
  %v330 = vsel %vm202, 1, 0
  %v331 = vsel %vm203, 1, 0
  %v332 = vsel %vm204, 1, 0
  %vm333 = vcmp.eq.s32.totalorder %v269, 1
  %vm334 = vcmp.eq.s32.totalorder %v270, 1
  %vm335 = vcmp.eq.s32.totalorder %v271, 1
  %vm336 = vcmp.eq.s32.totalorder %v272, 1
  %vm337 = vcmp.eq.s32.totalorder %v273, 1
  %vm338 = vcmp.eq.s32.totalorder %v274, 1
  %vm339 = vcmp.eq.s32.totalorder %v275, 1
  %vm340 = vcmp.eq.s32.totalorder %v276, 1
  %vm341 = vcmp.eq.s32.totalorder %v277, 1
  %vm342 = vcmp.eq.s32.totalorder %v278, 1
  %vm343 = vcmp.eq.s32.totalorder %v279, 1
  %vm344 = vcmp.eq.s32.totalorder %v280, 1
  %vm345 = vcmp.eq.s32.totalorder %v281, 1
  %vm346 = vcmp.eq.s32.totalorder %v282, 1
  %vm347 = vcmp.eq.s32.totalorder %v283, 1
  %vm348 = vcmp.eq.s32.totalorder %v284, 1
  %vm349 = vcmp.eq.s32.totalorder %v285, 1
  %vm350 = vcmp.eq.s32.totalorder %v286, 1
  %vm351 = vcmp.eq.s32.totalorder %v287, 1
  %vm352 = vcmp.eq.s32.totalorder %v288, 1
  %vm353 = vcmp.eq.s32.totalorder %v289, 1
  %vm354 = vcmp.eq.s32.totalorder %v290, 1
  %vm355 = vcmp.eq.s32.totalorder %v291, 1
  %vm356 = vcmp.eq.s32.totalorder %v292, 1
  %vm357 = vcmp.eq.s32.totalorder %v293, 1
  %vm358 = vcmp.eq.s32.totalorder %v294, 1
  %vm359 = vcmp.eq.s32.totalorder %v295, 1
  %vm360 = vcmp.eq.s32.totalorder %v296, 1
  %vm361 = vcmp.eq.s32.totalorder %v297, 1
  %vm362 = vcmp.eq.s32.totalorder %v298, 1
  %vm363 = vcmp.eq.s32.totalorder %v299, 1
  %vm364 = vcmp.eq.s32.totalorder %v300, 1
  %vm365 = vcmp.eq.s32.totalorder %v301, 1
  %vm366 = vcmp.eq.s32.totalorder %v302, 1
  %vm367 = vcmp.eq.s32.totalorder %v303, 1
  %vm368 = vcmp.eq.s32.totalorder %v304, 1
  %vm369 = vcmp.eq.s32.totalorder %v305, 1
  %vm370 = vcmp.eq.s32.totalorder %v306, 1
  %vm371 = vcmp.eq.s32.totalorder %v307, 1
  %vm372 = vcmp.eq.s32.totalorder %v308, 1
  %vm373 = vcmp.eq.s32.totalorder %v309, 1
  %vm374 = vcmp.eq.s32.totalorder %v310, 1
  %vm375 = vcmp.eq.s32.totalorder %v311, 1
  %vm376 = vcmp.eq.s32.totalorder %v312, 1
  %vm377 = vcmp.eq.s32.totalorder %v313, 1
  %vm378 = vcmp.eq.s32.totalorder %v314, 1
  %vm379 = vcmp.eq.s32.totalorder %v315, 1
  %vm380 = vcmp.eq.s32.totalorder %v316, 1
  %vm381 = vcmp.eq.s32.totalorder %v317, 1
  %vm382 = vcmp.eq.s32.totalorder %v318, 1
  %vm383 = vcmp.eq.s32.totalorder %v319, 1
  %vm384 = vcmp.eq.s32.totalorder %v320, 1
  %vm385 = vcmp.eq.s32.totalorder %v321, 1
  %vm386 = vcmp.eq.s32.totalorder %v322, 1
  %vm387 = vcmp.eq.s32.totalorder %v323, 1
  %vm388 = vcmp.eq.s32.totalorder %v324, 1
  %vm389 = vcmp.eq.s32.totalorder %v325, 1
  %vm390 = vcmp.eq.s32.totalorder %v326, 1
  %vm391 = vcmp.eq.s32.totalorder %v327, 1
  %vm392 = vcmp.eq.s32.totalorder %v328, 1
  %vm393 = vcmp.eq.s32.totalorder %v329, 1
  %vm394 = vcmp.eq.s32.totalorder %v330, 1
  %vm395 = vcmp.eq.s32.totalorder %v331, 1
  %vm396 = vcmp.eq.s32.totalorder %v332, 1
  %v397 = vsel %vm333, %v205, 0.0
  %v398 = vsel %vm334, %v206, 0.0
  %v399 = vsel %vm335, %v207, 0.0
  %v400 = vsel %vm336, %v208, 0.0
  %v401 = vsel %vm337, %v209, 0.0
  %v402 = vsel %vm338, %v210, 0.0
  %v403 = vsel %vm339, %v211, 0.0
  %v404 = vsel %vm340, %v212, 0.0
  %v405 = vsel %vm341, %v213, 0.0
  %v406 = vsel %vm342, %v214, 0.0
  %v407 = vsel %vm343, %v215, 0.0
  %v408 = vsel %vm344, %v216, 0.0
  %v409 = vsel %vm345, %v217, 0.0
  %v410 = vsel %vm346, %v218, 0.0
  %v411 = vsel %vm347, %v219, 0.0
  %v412 = vsel %vm348, %v220, 0.0
  %v413 = vsel %vm349, %v221, 0.0
  %v414 = vsel %vm350, %v222, 0.0
  %v415 = vsel %vm351, %v223, 0.0
  %v416 = vsel %vm352, %v224, 0.0
  %v417 = vsel %vm353, %v225, 0.0
  %v418 = vsel %vm354, %v226, 0.0
  %v419 = vsel %vm355, %v227, 0.0
  %v420 = vsel %vm356, %v228, 0.0
  %v421 = vsel %vm357, %v229, 0.0
  %v422 = vsel %vm358, %v230, 0.0
  %v423 = vsel %vm359, %v231, 0.0
  %v424 = vsel %vm360, %v232, 0.0
  %v425 = vsel %vm361, %v233, 0.0
  %v426 = vsel %vm362, %v234, 0.0
  %v427 = vsel %vm363, %v235, 0.0
  %v428 = vsel %vm364, %v236, 0.0
  %v429 = vsel %vm365, %v237, 0.0
  %v430 = vsel %vm366, %v238, 0.0
  %v431 = vsel %vm367, %v239, 0.0
  %v432 = vsel %vm368, %v240, 0.0
  %v433 = vsel %vm369, %v241, 0.0
  %v434 = vsel %vm370, %v242, 0.0
  %v435 = vsel %vm371, %v243, 0.0
  %v436 = vsel %vm372, %v244, 0.0
  %v437 = vsel %vm373, %v245, 0.0
  %v438 = vsel %vm374, %v246, 0.0
  %v439 = vsel %vm375, %v247, 0.0
  %v440 = vsel %vm376, %v248, 0.0
  %v441 = vsel %vm377, %v249, 0.0
  %v442 = vsel %vm378, %v250, 0.0
  %v443 = vsel %vm379, %v251, 0.0
  %v444 = vsel %vm380, %v252, 0.0
  %v445 = vsel %vm381, %v253, 0.0
  %v446 = vsel %vm382, %v254, 0.0
  %v447 = vsel %vm383, %v255, 0.0
  %v448 = vsel %vm384, %v256, 0.0
  %v449 = vsel %vm385, %v257, 0.0
  %v450 = vsel %vm386, %v258, 0.0
  %v451 = vsel %vm387, %v259, 0.0
  %v452 = vsel %vm388, %v260, 0.0
  %v453 = vsel %vm389, %v261, 0.0
  %v454 = vsel %vm390, %v262, 0.0
  %v455 = vsel %vm391, %v263, 0.0
  %v456 = vsel %vm392, %v264, 0.0
  %v457 = vsel %vm393, %v265, 0.0
  %v458 = vsel %vm394, %v266, 0.0
  %v459 = vsel %vm395, %v267, 0.0
  %v460 = vsel %vm396, %v268, 0.0
  %v461 = vadd.f32 %v397, %v398
  %v462 = vadd.f32 %v461, %v399
  %v463 = vadd.f32 %v462, %v400
  %v464 = vadd.f32 %v463, %v401
  %v465 = vadd.f32 %v464, %v402
  %v466 = vadd.f32 %v465, %v403
  %v467 = vadd.f32 %v466, %v404
  %v468 = vadd.f32 %v467, %v405
  %v469 = vadd.f32 %v468, %v406
  %v470 = vadd.f32 %v469, %v407
  %v471 = vadd.f32 %v470, %v408
  %v472 = vadd.f32 %v471, %v409
  %v473 = vadd.f32 %v472, %v410
  %v474 = vadd.f32 %v473, %v411
  %v475 = vadd.f32 %v474, %v412
  %v476 = vadd.f32 %v475, %v413
  %v477 = vadd.f32 %v476, %v414
  %v478 = vadd.f32 %v477, %v415
  %v479 = vadd.f32 %v478, %v416
  %v480 = vadd.f32 %v479, %v417
  %v481 = vadd.f32 %v480, %v418
  %v482 = vadd.f32 %v481, %v419
  %v483 = vadd.f32 %v482, %v420
  %v484 = vadd.f32 %v483, %v421
  %v485 = vadd.f32 %v484, %v422
  %v486 = vadd.f32 %v485, %v423
  %v487 = vadd.f32 %v486, %v424
  %v488 = vadd.f32 %v487, %v425
  %v489 = vadd.f32 %v488, %v426
  %v490 = vadd.f32 %v489, %v427
  %v491 = vadd.f32 %v490, %v428
  %v492 = vadd.f32 %v491, %v429
  %v493 = vadd.f32 %v492, %v430
  %v494 = vadd.f32 %v493, %v431
  %v495 = vadd.f32 %v494, %v432
  %v496 = vadd.f32 %v495, %v433
  %v497 = vadd.f32 %v496, %v434
  %v498 = vadd.f32 %v497, %v435
  %v499 = vadd.f32 %v498, %v436
  %v500 = vadd.f32 %v499, %v437
  %v501 = vadd.f32 %v500, %v438
  %v502 = vadd.f32 %v501, %v439
  %v503 = vadd.f32 %v502, %v440
  %v504 = vadd.f32 %v503, %v441
  %v505 = vadd.f32 %v504, %v442
  %v506 = vadd.f32 %v505, %v443
  %v507 = vadd.f32 %v506, %v444
  %v508 = vadd.f32 %v507, %v445
  %v509 = vadd.f32 %v508, %v446
  %v510 = vadd.f32 %v509, %v447
  %v511 = vadd.f32 %v510, %v448
  %v512 = vadd.f32 %v511, %v449
  %v513 = vadd.f32 %v512, %v450
  %v514 = vadd.f32 %v513, %v451
  %v515 = vadd.f32 %v514, %v452
  %v516 = vadd.f32 %v515, %v453
  %v517 = vadd.f32 %v516, %v454
  %v518 = vadd.f32 %v517, %v455
  %v519 = vadd.f32 %v518, %v456
  %v520 = vadd.f32 %v519, %v457
  %v521 = vadd.f32 %v520, %v458
  %v522 = vadd.f32 %v521, %v459
  %v523 = vadd.f32 %v522, %v460
  %v524 = vrot.slane %v523, 4
  %v525 = vadd.f32 %v523, %v524
  %v526 = vrot.slane %v525, 2
  %v527 = vadd.f32 %v525, %v526
  %v528 = vrot.slane %v527, 1
  %v529 = vadd.f32 %v527, %v528
  %530 = vst [vmem:[%s1] sm:$0x1] %v529
  %v531 = vmul.f32 %v397, %v397
  %v532 = vmul.f32 %v398, %v398
  %v533 = vmul.f32 %v399, %v399
  %v534 = vmul.f32 %v400, %v400
  %v535 = vmul.f32 %v401, %v401
  %v536 = vmul.f32 %v402, %v402
  %v537 = vmul.f32 %v403, %v403
  %v538 = vmul.f32 %v404, %v404
  %v539 = vmul.f32 %v405, %v405
  %v540 = vmul.f32 %v406, %v406
  %v541 = vmul.f32 %v407, %v407
  %v542 = vmul.f32 %v408, %v408
  %v543 = vmul.f32 %v409, %v409
  %v544 = vmul.f32 %v410, %v410
  %v545 = vmul.f32 %v411, %v411
  %v546 = vmul.f32 %v412, %v412
  %v547 = vmul.f32 %v413, %v413
  %v548 = vmul.f32 %v414, %v414
  %v549 = vmul.f32 %v415, %v415
  %v550 = vmul.f32 %v416, %v416
  %v551 = vmul.f32 %v417, %v417
  %v552 = vmul.f32 %v418, %v418
  %v553 = vmul.f32 %v419, %v419
  %v554 = vmul.f32 %v420, %v420
  %v555 = vmul.f32 %v421, %v421
  %v556 = vmul.f32 %v422, %v422
  %v557 = vmul.f32 %v423, %v423
  %v558 = vmul.f32 %v424, %v424
  %v559 = vmul.f32 %v425, %v425
  %v560 = vmul.f32 %v426, %v426
  %v561 = vmul.f32 %v427, %v427
  %v562 = vmul.f32 %v428, %v428
  %v563 = vmul.f32 %v429, %v429
  %v564 = vmul.f32 %v430, %v430
  %v565 = vmul.f32 %v431, %v431
  %v566 = vmul.f32 %v432, %v432
  %v567 = vmul.f32 %v433, %v433
  %v568 = vmul.f32 %v434, %v434
  %v569 = vmul.f32 %v435, %v435
  %v570 = vmul.f32 %v436, %v436
  %v571 = vmul.f32 %v437, %v437
  %v572 = vmul.f32 %v438, %v438
  %v573 = vmul.f32 %v439, %v439
  %v574 = vmul.f32 %v440, %v440
  %v575 = vmul.f32 %v441, %v441
  %v576 = vmul.f32 %v442, %v442
  %v577 = vmul.f32 %v443, %v443
  %v578 = vmul.f32 %v444, %v444
  %v579 = vmul.f32 %v445, %v445
  %v580 = vmul.f32 %v446, %v446
  %v581 = vmul.f32 %v447, %v447
  %v582 = vmul.f32 %v448, %v448
  %v583 = vmul.f32 %v449, %v449
  %v584 = vmul.f32 %v450, %v450
  %v585 = vmul.f32 %v451, %v451
  %v586 = vmul.f32 %v452, %v452
  %v587 = vmul.f32 %v453, %v453
  %v588 = vmul.f32 %v454, %v454
  %v589 = vmul.f32 %v455, %v455
  %v590 = vmul.f32 %v456, %v456
  %v591 = vmul.f32 %v457, %v457
  %v592 = vmul.f32 %v458, %v458
  %v593 = vmul.f32 %v459, %v459
  %v594 = vmul.f32 %v460, %v460
  %v595 = vadd.f32 %v531, %v532
  %v596 = vadd.f32 %v595, %v533
  %v597 = vadd.f32 %v596, %v534
  %v598 = vadd.f32 %v597, %v535
  %v599 = vadd.f32 %v598, %v536
  %v600 = vadd.f32 %v599, %v537
  %v601 = vadd.f32 %v600, %v538
  %v602 = vadd.f32 %v601, %v539
  %v603 = vadd.f32 %v602, %v540
  %v604 = vadd.f32 %v603, %v541
  %v605 = vadd.f32 %v604, %v542
  %v606 = vadd.f32 %v605, %v543
  %v607 = vadd.f32 %v606, %v544
  %v608 = vadd.f32 %v607, %v545
  %v609 = vadd.f32 %v608, %v546
  %v610 = vadd.f32 %v609, %v547
  %v611 = vadd.f32 %v610, %v548
  %v612 = vadd.f32 %v611, %v549
  %v613 = vadd.f32 %v612, %v550
  %v614 = vadd.f32 %v613, %v551
  %v615 = vadd.f32 %v614, %v552
  %v616 = vadd.f32 %v615, %v553
  %v617 = vadd.f32 %v616, %v554
  %v618 = vadd.f32 %v617, %v555
  %v619 = vadd.f32 %v618, %v556
  %v620 = vadd.f32 %v619, %v557
  %v621 = vadd.f32 %v620, %v558
  %v622 = vadd.f32 %v621, %v559
  %v623 = vadd.f32 %v622, %v560
  %v624 = vadd.f32 %v623, %v561
  %v625 = vadd.f32 %v624, %v562
  %v626 = vadd.f32 %v625, %v563
  %v627 = vadd.f32 %v626, %v564
  %v628 = vadd.f32 %v627, %v565
  %v629 = vadd.f32 %v628, %v566
  %v630 = vadd.f32 %v629, %v567
  %v631 = vadd.f32 %v630, %v568
  %v632 = vadd.f32 %v631, %v569
  %v633 = vadd.f32 %v632, %v570
  %v634 = vadd.f32 %v633, %v571
  %v635 = vadd.f32 %v634, %v572
  %v636 = vadd.f32 %v635, %v573
  %v637 = vadd.f32 %v636, %v574
  %v638 = vadd.f32 %v637, %v575
  %v639 = vadd.f32 %v638, %v576
  %v640 = vadd.f32 %v639, %v577
  %v641 = vadd.f32 %v640, %v578
  %v642 = vadd.f32 %v641, %v579
  %v643 = vadd.f32 %v642, %v580
  %v644 = vadd.f32 %v643, %v581
  %v645 = vadd.f32 %v644, %v582
  %v646 = vadd.f32 %v645, %v583
  %v647 = vadd.f32 %v646, %v584
  %v648 = vadd.f32 %v647, %v585
  %v649 = vadd.f32 %v648, %v586
  %v650 = vadd.f32 %v649, %v587
  %v651 = vadd.f32 %v650, %v588
  %v652 = vadd.f32 %v651, %v589
  %v653 = vadd.f32 %v652, %v590
  %v654 = vadd.f32 %v653, %v591
  %v655 = vadd.f32 %v654, %v592
  %v656 = vadd.f32 %v655, %v593
  %v657 = vadd.f32 %v656, %v594
  %v658 = vrot.slane %v657, 4
  %v659 = vadd.f32 %v657, %v658
  %v660 = vrot.slane %v659, 2
  %v661 = vadd.f32 %v659, %v660
  %v662 = vrot.slane %v661, 1
  %v663 = vadd.f32 %v661, %v662
  %664 = vst [vmem:[%s2] sm:$0x1] %v663
  // Predicated region
  $region6: #{bottleneck_v2_forward.4} parent=0 // pred_check
    _
  $region7: #{bottleneck_v2_forward.4} parent=0 // pred_check_branch
    %666 = sbr.rel (0) target = $region9
  $region8: #{bottleneck_v2_forward.4} parent=0 // pred_region
    _
  $region9: #{bottleneck_v2_forward.4} parent=0 // pred_fallthru
    _
  // Predicated region
  $region10: #{bottleneck_v2_forward.4} parent=0 // pred_check
    _
  $region11: #{bottleneck_v2_forward.4} parent=0 // pred_check_branch
    %668 = sbr.rel (0) target = $region13
  $region12: #{bottleneck_v2_forward.4} parent=0 // pred_region
    _
  $region13: #{bottleneck_v2_forward.4} parent=0 // pred_fallthru
    _
  // Predicated region
  $region14: #{bottleneck_v2_forward.4} parent=0 // pred_check
    _
  $region15: #{bottleneck_v2_forward.4} parent=0 // pred_check_branch
    %670 = sbr.rel (0) target = $region17
  $region16: #{bottleneck_v2_forward.4} parent=0 // pred_region
    _
  $region17: #{bottleneck_v2_forward.4} parent=0 // pred_fallthru
    _
  // Predicated region
  $region18: #{bottleneck_v2_forward.4} parent=0 // pred_check
    _
  $region19: #{bottleneck_v2_forward.4} parent=0 // pred_check_branch
    %672 = sbr.rel (0) target = $region21
  $region20: #{bottleneck_v2_forward.4} parent=0 // pred_region
    _
  $region21: #{bottleneck_v2_forward.4} parent=0 // pred_fallthru
    _

// kernel: bottleneck_v2_forward.5
$region0: #{bottleneck_v2_forward.5}
  #allocation0 [shape = 'u32[]', space=smem, size = 0x4, offset = 0x4, fixed_abs, tag = 'smem constant byte address 0x4 - core index']
  #allocation1 [shape = 'u32[72,128]{1,0:T(1,128)}', space=vmem, size = 0x9000, scoped, tag = 'internal scratch']
  %s0 = inlined_call_operand.vmem [shape: f32[512,128], index: 0, kind: input, shape index: {}]
  %s1 = inlined_call_operand.vmem [shape: f32[1,128], index: 1, kind: input, shape index: {}]
  %s2 = inlined_call_operand.vmem [shape: f32[1,128], index: 2, kind: input, shape index: {}]
  %s3 = inlined_call_operand.vmem [shape: bf16[128,128], index: 3, kind: input, shape index: {}]
  %s4 = inlined_call_operand.vmem [shape: bf16[512,128], index: 4, kind: output, shape index: {0}]
  %s5 = inlined_call_operand.vmem [shape: f32[1,1,128], index: 5, kind: output, shape index: {1}]
  %s6 = inlined_call_operand.vmem [shape: f32[1,1,128], index: 6, kind: output, shape index: {2}]
  %7 = xla_tuple %s4, %s5, %s6
  %s8 = sld [smem:[#allocation0]]
  $region42: #{bottleneck_v2_forward.5} parent=0
    _
  %s10 = ssub.s32 1, %s8
  %s11 = scalar_select 0, %s10, %s8
  // Predicated region
  $region2: #{bottleneck_v2_forward.5} parent=0 // pred_check
    _
  $region3: #{bottleneck_v2_forward.5} parent=0 // pred_check_branch
    %13 = sbr.rel (0) target = $region5
  $region4: #{bottleneck_v2_forward.5} parent=0 // pred_region
    _
  $region5: #{bottleneck_v2_forward.5} parent=0 // pred_fallthru
    _
  // Predicated region
  $region6: #{bottleneck_v2_forward.5} parent=0 // pred_check
    _
  $region7: #{bottleneck_v2_forward.5} parent=0 // pred_check_branch
    %15 = sbr.rel (0) target = $region9
  $region8: #{bottleneck_v2_forward.5} parent=0 // pred_region
    _
  $region9: #{bottleneck_v2_forward.5} parent=0 // pred_fallthru
    _
  // Predicated region
  $region10: #{bottleneck_v2_forward.5} parent=0 // pred_check
    _
  $region11: #{bottleneck_v2_forward.5} parent=0 // pred_check_branch
    %17 = sbr.rel (0) target = $region13
  $region12: #{bottleneck_v2_forward.5} parent=0 // pred_region
    _
  $region13: #{bottleneck_v2_forward.5} parent=0 // pred_fallthru
    _
  // Predicated region
  $region14: #{bottleneck_v2_forward.5} parent=0 // pred_check
    _
  $region15: #{bottleneck_v2_forward.5} parent=0 // pred_check_branch
    %19 = sbr.rel (0) target = $region17
  $region16: #{bottleneck_v2_forward.5} parent=0 // pred_region
    _
  $region17: #{bottleneck_v2_forward.5} parent=0 // pred_fallthru
    _
  %v20 = vld [vmem:[%s0] sm:$0xff]
  %v21 = vld [vmem:[%s0 + $0x8] sm:$0xff]
  %v22 = vld [vmem:[%s0 + $0x10] sm:$0xff]
  %v23 = vld [vmem:[%s0 + $0x18] sm:$0xff]
  %v24 = vld [vmem:[%s0 + $0x20] sm:$0xff]
  %v25 = vld [vmem:[%s0 + $0x28] sm:$0xff]
  %v26 = vld [vmem:[%s0 + $0x30] sm:$0xff]
  %v27 = vld [vmem:[%s0 + $0x38] sm:$0xff]
  %v28 = vld [vmem:[%s0 + $0x40] sm:$0xff]
  %v29 = vld [vmem:[%s0 + $0x48] sm:$0xff]
  %v30 = vld [vmem:[%s0 + $0x50] sm:$0xff]
  %v31 = vld [vmem:[%s0 + $0x58] sm:$0xff]
  %v32 = vld [vmem:[%s0 + $0x60] sm:$0xff]
  %v33 = vld [vmem:[%s0 + $0x68] sm:$0xff]
  %v34 = vld [vmem:[%s0 + $0x70] sm:$0xff]
  %v35 = vld [vmem:[%s0 + $0x78] sm:$0xff]
  %v36 = vld [vmem:[%s0 + $0x80] sm:$0xff]
  %v37 = vld [vmem:[%s0 + $0x88] sm:$0xff]
  %v38 = vld [vmem:[%s0 + $0x90] sm:$0xff]
  %v39 = vld [vmem:[%s0 + $0x98] sm:$0xff]
  %v40 = vld [vmem:[%s0 + $0xa0] sm:$0xff]
  %v41 = vld [vmem:[%s0 + $0xa8] sm:$0xff]
  %v42 = vld [vmem:[%s0 + $0xb0] sm:$0xff]
  %v43 = vld [vmem:[%s0 + $0xb8] sm:$0xff]
  %v44 = vld [vmem:[%s0 + $0xc0] sm:$0xff]
  %v45 = vld [vmem:[%s0 + $0xc8] sm:$0xff]
  %v46 = vld [vmem:[%s0 + $0xd0] sm:$0xff]
  %v47 = vld [vmem:[%s0 + $0xd8] sm:$0xff]
  %v48 = vld [vmem:[%s0 + $0xe0] sm:$0xff]
  %v49 = vld [vmem:[%s0 + $0xe8] sm:$0xff]
  %v50 = vld [vmem:[%s0 + $0xf0] sm:$0xff]
  %v51 = vld [vmem:[%s0 + $0xf8] sm:$0xff]
  %v52 = vld [vmem:[%s0 + $0x100] sm:$0xff]
  %v53 = vld [vmem:[%s0 + $0x108] sm:$0xff]
  %v54 = vld [vmem:[%s0 + $0x110] sm:$0xff]
  %v55 = vld [vmem:[%s0 + $0x118] sm:$0xff]
  %v56 = vld [vmem:[%s0 + $0x120] sm:$0xff]
  %v57 = vld [vmem:[%s0 + $0x128] sm:$0xff]
  %v58 = vld [vmem:[%s0 + $0x130] sm:$0xff]
  %v59 = vld [vmem:[%s0 + $0x138] sm:$0xff]
  %v60 = vld [vmem:[%s0 + $0x140] sm:$0xff]
  %v61 = vld [vmem:[%s0 + $0x148] sm:$0xff]
  %v62 = vld [vmem:[%s0 + $0x150] sm:$0xff]
  %v63 = vld [vmem:[%s0 + $0x158] sm:$0xff]
  %v64 = vld [vmem:[%s0 + $0x160] sm:$0xff]
  %v65 = vld [vmem:[%s0 + $0x168] sm:$0xff]
  %v66 = vld [vmem:[%s0 + $0x170] sm:$0xff]
  %v67 = vld [vmem:[%s0 + $0x178] sm:$0xff]
  %v68 = vld [vmem:[%s0 + $0x180] sm:$0xff]
  %v69 = vld [vmem:[%s0 + $0x188] sm:$0xff]
  %v70 = vld [vmem:[%s0 + $0x190] sm:$0xff]
  %v71 = vld [vmem:[%s0 + $0x198] sm:$0xff]
  %v72 = vld [vmem:[%s0 + $0x1a0] sm:$0xff]
  %v73 = vld [vmem:[%s0 + $0x1a8] sm:$0xff]
  %v74 = vld [vmem:[%s0 + $0x1b0] sm:$0xff]
  %v75 = vld [vmem:[%s0 + $0x1b8] sm:$0xff]
  %v76 = vld [vmem:[%s0 + $0x1c0] sm:$0xff]
  %v77 = vld [vmem:[%s0 + $0x1c8] sm:$0xff]
  %v78 = vld [vmem:[%s0 + $0x1d0] sm:$0xff]
  %v79 = vld [vmem:[%s0 + $0x1d8] sm:$0xff]
  %v80 = vld [vmem:[%s0 + $0x1e0] sm:$0xff]
  %v81 = vld [vmem:[%s0 + $0x1e8] sm:$0xff]
  %v82 = vld [vmem:[%s0 + $0x1f0] sm:$0xff]
  %v83 = vld [vmem:[%s0 + $0x1f8] sm:$0xff]
  %v84 = vld [vmem:[%s1] sm:$0x1]
  %v86 = vperm.slane %v84, 0
  %v88 = vmul.f32 %v20, %v86
  %v89 = vmul.f32 %v21, %v86
  %v90 = vmul.f32 %v22, %v86
  %v91 = vmul.f32 %v23, %v86
  %v92 = vmul.f32 %v24, %v86
  %v93 = vmul.f32 %v25, %v86
  %v94 = vmul.f32 %v26, %v86
  %v95 = vmul.f32 %v27, %v86
  %v96 = vmul.f32 %v28, %v86
  %v97 = vmul.f32 %v29, %v86
  %v98 = vmul.f32 %v30, %v86
  %v99 = vmul.f32 %v31, %v86
  %v100 = vmul.f32 %v32, %v86
  %v101 = vmul.f32 %v33, %v86
  %v102 = vmul.f32 %v34, %v86
  %v103 = vmul.f32 %v35, %v86
  %v104 = vmul.f32 %v36, %v86
  %v105 = vmul.f32 %v37, %v86
  %v106 = vmul.f32 %v38, %v86
  %v107 = vmul.f32 %v39, %v86
  %v108 = vmul.f32 %v40, %v86
  %v109 = vmul.f32 %v41, %v86
  %v110 = vmul.f32 %v42, %v86
  %v111 = vmul.f32 %v43, %v86
  %v112 = vmul.f32 %v44, %v86
  %v113 = vmul.f32 %v45, %v86
  %v114 = vmul.f32 %v46, %v86
  %v115 = vmul.f32 %v47, %v86
  %v116 = vmul.f32 %v48, %v86
  %v117 = vmul.f32 %v49, %v86
  %v118 = vmul.f32 %v50, %v86
  %v119 = vmul.f32 %v51, %v86
  %v120 = vmul.f32 %v52, %v86
  %v121 = vmul.f32 %v53, %v86
  %v122 = vmul.f32 %v54, %v86
  %v123 = vmul.f32 %v55, %v86
  %v124 = vmul.f32 %v56, %v86
  %v125 = vmul.f32 %v57, %v86
  %v126 = vmul.f32 %v58, %v86
  %v127 = vmul.f32 %v59, %v86
  %v128 = vmul.f32 %v60, %v86
  %v129 = vmul.f32 %v61, %v86
  %v130 = vmul.f32 %v62, %v86
  %v131 = vmul.f32 %v63, %v86
  %v132 = vmul.f32 %v64, %v86
  %v133 = vmul.f32 %v65, %v86
  %v134 = vmul.f32 %v66, %v86
  %v135 = vmul.f32 %v67, %v86
  %v136 = vmul.f32 %v68, %v86
  %v137 = vmul.f32 %v69, %v86
  %v138 = vmul.f32 %v70, %v86
  %v139 = vmul.f32 %v71, %v86
  %v140 = vmul.f32 %v72, %v86
  %v141 = vmul.f32 %v73, %v86
  %v142 = vmul.f32 %v74, %v86
  %v143 = vmul.f32 %v75, %v86
  %v144 = vmul.f32 %v76, %v86
  %v145 = vmul.f32 %v77, %v86
  %v146 = vmul.f32 %v78, %v86
  %v147 = vmul.f32 %v79, %v86
  %v148 = vmul.f32 %v80, %v86
  %v149 = vmul.f32 %v81, %v86
  %v150 = vmul.f32 %v82, %v86
  %v151 = vmul.f32 %v83, %v86
  %v152 = vld [vmem:[%s2] sm:$0x1]
  %v154 = vperm.slane %v152, 0
  %v156 = vadd.f32 %v88, %v154
  %v157 = vadd.f32 %v89, %v154
  %v158 = vadd.f32 %v90, %v154
  %v159 = vadd.f32 %v91, %v154
  %v160 = vadd.f32 %v92, %v154
  %v161 = vadd.f32 %v93, %v154
  %v162 = vadd.f32 %v94, %v154
  %v163 = vadd.f32 %v95, %v154
  %v164 = vadd.f32 %v96, %v154
  %v165 = vadd.f32 %v97, %v154
  %v166 = vadd.f32 %v98, %v154
  %v167 = vadd.f32 %v99, %v154
  %v168 = vadd.f32 %v100, %v154
  %v169 = vadd.f32 %v101, %v154
  %v170 = vadd.f32 %v102, %v154
  %v171 = vadd.f32 %v103, %v154
  %v172 = vadd.f32 %v104, %v154
  %v173 = vadd.f32 %v105, %v154
  %v174 = vadd.f32 %v106, %v154
  %v175 = vadd.f32 %v107, %v154
  %v176 = vadd.f32 %v108, %v154
  %v177 = vadd.f32 %v109, %v154
  %v178 = vadd.f32 %v110, %v154
  %v179 = vadd.f32 %v111, %v154
  %v180 = vadd.f32 %v112, %v154
  %v181 = vadd.f32 %v113, %v154
  %v182 = vadd.f32 %v114, %v154
  %v183 = vadd.f32 %v115, %v154
  %v184 = vadd.f32 %v116, %v154
  %v185 = vadd.f32 %v117, %v154
  %v186 = vadd.f32 %v118, %v154
  %v187 = vadd.f32 %v119, %v154
  %v188 = vadd.f32 %v120, %v154
  %v189 = vadd.f32 %v121, %v154
  %v190 = vadd.f32 %v122, %v154
  %v191 = vadd.f32 %v123, %v154
  %v192 = vadd.f32 %v124, %v154
  %v193 = vadd.f32 %v125, %v154
  %v194 = vadd.f32 %v126, %v154
  %v195 = vadd.f32 %v127, %v154
  %v196 = vadd.f32 %v128, %v154
  %v197 = vadd.f32 %v129, %v154
  %v198 = vadd.f32 %v130, %v154
  %v199 = vadd.f32 %v131, %v154
  %v200 = vadd.f32 %v132, %v154
  %v201 = vadd.f32 %v133, %v154
  %v202 = vadd.f32 %v134, %v154
  %v203 = vadd.f32 %v135, %v154
  %v204 = vadd.f32 %v136, %v154
  %v205 = vadd.f32 %v137, %v154
  %v206 = vadd.f32 %v138, %v154
  %v207 = vadd.f32 %v139, %v154
  %v208 = vadd.f32 %v140, %v154
  %v209 = vadd.f32 %v141, %v154
  %v210 = vadd.f32 %v142, %v154
  %v211 = vadd.f32 %v143, %v154
  %v212 = vadd.f32 %v144, %v154
  %v213 = vadd.f32 %v145, %v154
  %v214 = vadd.f32 %v146, %v154
  %v215 = vadd.f32 %v147, %v154
  %v216 = vadd.f32 %v148, %v154
  %v217 = vadd.f32 %v149, %v154
  %v218 = vadd.f32 %v150, %v154
  %v219 = vadd.f32 %v151, %v154
  %v220 = vmax.f32 %v156, 0.0
  %v221 = vmax.f32 %v157, 0.0
  %v222 = vmax.f32 %v158, 0.0
  %v223 = vmax.f32 %v159, 0.0
  %v224 = vmax.f32 %v160, 0.0
  %v225 = vmax.f32 %v161, 0.0
  %v226 = vmax.f32 %v162, 0.0
  %v227 = vmax.f32 %v163, 0.0
  %v228 = vmax.f32 %v164, 0.0
  %v229 = vmax.f32 %v165, 0.0
  %v230 = vmax.f32 %v166, 0.0
  %v231 = vmax.f32 %v167, 0.0
  %v232 = vmax.f32 %v168, 0.0
  %v233 = vmax.f32 %v169, 0.0
  %v234 = vmax.f32 %v170, 0.0
  %v235 = vmax.f32 %v171, 0.0
  %v236 = vmax.f32 %v172, 0.0
  %v237 = vmax.f32 %v173, 0.0
  %v238 = vmax.f32 %v174, 0.0
  %v239 = vmax.f32 %v175, 0.0
  %v240 = vmax.f32 %v176, 0.0
  %v241 = vmax.f32 %v177, 0.0
  %v242 = vmax.f32 %v178, 0.0
  %v243 = vmax.f32 %v179, 0.0
  %v244 = vmax.f32 %v180, 0.0
  %v245 = vmax.f32 %v181, 0.0
  %v246 = vmax.f32 %v182, 0.0
  %v247 = vmax.f32 %v183, 0.0
  %v248 = vmax.f32 %v184, 0.0
  %v249 = vmax.f32 %v185, 0.0
  %v250 = vmax.f32 %v186, 0.0
  %v251 = vmax.f32 %v187, 0.0
  %v252 = vmax.f32 %v188, 0.0
  %v253 = vmax.f32 %v189, 0.0
  %v254 = vmax.f32 %v190, 0.0
  %v255 = vmax.f32 %v191, 0.0
  %v256 = vmax.f32 %v192, 0.0
  %v257 = vmax.f32 %v193, 0.0
  %v258 = vmax.f32 %v194, 0.0
  %v259 = vmax.f32 %v195, 0.0
  %v260 = vmax.f32 %v196, 0.0
  %v261 = vmax.f32 %v197, 0.0
  %v262 = vmax.f32 %v198, 0.0
  %v263 = vmax.f32 %v199, 0.0
  %v264 = vmax.f32 %v200, 0.0
  %v265 = vmax.f32 %v201, 0.0
  %v266 = vmax.f32 %v202, 0.0
  %v267 = vmax.f32 %v203, 0.0
  %v268 = vmax.f32 %v204, 0.0
  %v269 = vmax.f32 %v205, 0.0
  %v270 = vmax.f32 %v206, 0.0
  %v271 = vmax.f32 %v207, 0.0
  %v272 = vmax.f32 %v208, 0.0
  %v273 = vmax.f32 %v209, 0.0
  %v274 = vmax.f32 %v210, 0.0
  %v275 = vmax.f32 %v211, 0.0
  %v276 = vmax.f32 %v212, 0.0
  %v277 = vmax.f32 %v213, 0.0
  %v278 = vmax.f32 %v214, 0.0
  %v279 = vmax.f32 %v215, 0.0
  %v280 = vmax.f32 %v216, 0.0
  %v281 = vmax.f32 %v217, 0.0
  %v282 = vmax.f32 %v218, 0.0
  %v283 = vmax.f32 %v219, 0.0
  %v284 = vpack.c.bf16 %v221, %v220
  %v285 = vpack.c.bf16 %v223, %v222
  %v286 = vpack.c.bf16 %v225, %v224
  %v287 = vpack.c.bf16 %v227, %v226
  %v288 = vpack.c.bf16 %v229, %v228
  %v289 = vpack.c.bf16 %v231, %v230
  %v290 = vpack.c.bf16 %v233, %v232
  %v291 = vpack.c.bf16 %v235, %v234
  %v292 = vpack.c.bf16 %v237, %v236
  %v293 = vpack.c.bf16 %v239, %v238
  %v294 = vpack.c.bf16 %v241, %v240
  %v295 = vpack.c.bf16 %v243, %v242
  %v296 = vpack.c.bf16 %v245, %v244
  %v297 = vpack.c.bf16 %v247, %v246
  %v298 = vpack.c.bf16 %v249, %v248
  %v299 = vpack.c.bf16 %v251, %v250
  %v300 = vpack.c.bf16 %v253, %v252
  %v301 = vpack.c.bf16 %v255, %v254
  %v302 = vpack.c.bf16 %v257, %v256
  %v303 = vpack.c.bf16 %v259, %v258
  %v304 = vpack.c.bf16 %v261, %v260
  %v305 = vpack.c.bf16 %v263, %v262
  %v306 = vpack.c.bf16 %v265, %v264
  %v307 = vpack.c.bf16 %v267, %v266
  %v308 = vpack.c.bf16 %v269, %v268
  %v309 = vpack.c.bf16 %v271, %v270
  %v310 = vpack.c.bf16 %v273, %v272
  %v311 = vpack.c.bf16 %v275, %v274
  %v312 = vpack.c.bf16 %v277, %v276
  %v313 = vpack.c.bf16 %v279, %v278
  %v314 = vpack.c.bf16 %v281, %v280
  %v315 = vpack.c.bf16 %v283, %v282
  %v316 = vld [vmem:[%s3] sm:$0xf]
  %v317 = vld [vmem:[%s3 + $0x4] sm:$0xf]
  %v318 = vld [vmem:[%s3 + $0x8] sm:$0xf]
  %v319 = vld [vmem:[%s3 + $0xc] sm:$0xf]
  %v320 = vld [vmem:[%s3 + $0x10] sm:$0xf]
  %v321 = vld [vmem:[%s3 + $0x14] sm:$0xf]
  %v322 = vld [vmem:[%s3 + $0x18] sm:$0xf]
  %v323 = vld [vmem:[%s3 + $0x1c] sm:$0xf]
  %v324 = vld [vmem:[%s3 + $0x20] sm:$0xf]
  %v325 = vld [vmem:[%s3 + $0x24] sm:$0xf]
  %v326 = vld [vmem:[%s3 + $0x28] sm:$0xf]
  %v327 = vld [vmem:[%s3 + $0x2c] sm:$0xf]
  %v328 = vld [vmem:[%s3 + $0x30] sm:$0xf]
  %v329 = vld [vmem:[%s3 + $0x34] sm:$0xf]
  %v330 = vld [vmem:[%s3 + $0x38] sm:$0xf]
  %v331 = vld [vmem:[%s3 + $0x3c] sm:$0xf]
  %v348 = vunpack.c.l.b16 %v316
  %v349 = vunpack.c.l.b16 %v317
  %v350 = vunpack.c.l.b16 %v318
  %v351 = vunpack.c.l.b16 %v319
  %v352 = vunpack.c.l.b16 %v320
  %v353 = vunpack.c.l.b16 %v321
  %v354 = vunpack.c.l.b16 %v322
  %v355 = vunpack.c.l.b16 %v323
  %v356 = vunpack.c.l.b16 %v324
  %v357 = vunpack.c.l.b16 %v325
  %v358 = vunpack.c.l.b16 %v326
  %v359 = vunpack.c.l.b16 %v327
  %v360 = vunpack.c.l.b16 %v328
  %v361 = vunpack.c.l.b16 %v329
  %v362 = vunpack.c.l.b16 %v330
  %v363 = vunpack.c.l.b16 %v331
  %v364 = vpack.c.b16 %v349, %v348
  %v365 = vpack.c.b16 %v351, %v350
  %v366 = vpack.c.b16 %v353, %v352
  %v367 = vpack.c.b16 %v355, %v354
  %v368 = vpack.c.b16 %v357, %v356
  %v369 = vpack.c.b16 %v359, %v358
  %v370 = vpack.c.b16 %v361, %v360
  %v371 = vpack.c.b16 %v363, %v362
  %380 = vmatpush.bf16.msra.mxu0 %v371
  %381 = vmatpush.bf16.msra.mxu0 %v370
  %382 = vmatpush.bf16.msra.mxu0 %v369
  %383 = vmatpush.bf16.msra.mxu0 %v368
  %384 = vmatpush.bf16.msra.mxu0 %v367
  %385 = vmatpush.bf16.msra.mxu0 %v366
  %386 = vmatpush.bf16.msra.mxu0 %v365
  %387 = vmatpush.bf16.msra.mxu0 %v364
  %388 = vmatmul.bf16.gmra.mxu0 %v284
  %v389 = vpop.f32.mrf.mxu0
  %v390 = vadd.f32 0.0, %v389
  %v391 = vpop.f32.mrf.mxu0
  %v392 = vadd.f32 0.0, %v391
  %393 = vmatmul.bf16.gmra.mxu0 %v285
  %v394 = vpop.f32.mrf.mxu0
  %v395 = vadd.f32 0.0, %v394
  %v396 = vpop.f32.mrf.mxu0
  %v397 = vadd.f32 0.0, %v396
  %398 = vmatmul.bf16.gmra.mxu0 %v286
  %v399 = vpop.f32.mrf.mxu0
  %v400 = vadd.f32 0.0, %v399
  %v401 = vpop.f32.mrf.mxu0
  %v402 = vadd.f32 0.0, %v401
  %403 = vmatmul.bf16.gmra.mxu0 %v287
  %v404 = vpop.f32.mrf.mxu0
  %v405 = vadd.f32 0.0, %v404
  %v406 = vpop.f32.mrf.mxu0
  %v407 = vadd.f32 0.0, %v406
  %408 = vmatmul.bf16.gmra.mxu0 %v288
  %v409 = vpop.f32.mrf.mxu0
  %v410 = vadd.f32 0.0, %v409
  %v411 = vpop.f32.mrf.mxu0
  %v412 = vadd.f32 0.0, %v411
  %413 = vmatmul.bf16.gmra.mxu0 %v289
  %v414 = vpop.f32.mrf.mxu0
  %v415 = vadd.f32 0.0, %v414
  %v416 = vpop.f32.mrf.mxu0
  %v417 = vadd.f32 0.0, %v416
  %418 = vmatmul.bf16.gmra.mxu0 %v290
  %v419 = vpop.f32.mrf.mxu0
  %v420 = vadd.f32 0.0, %v419
  %v421 = vpop.f32.mrf.mxu0
  %v422 = vadd.f32 0.0, %v421
  %423 = vmatmul.bf16.gmra.mxu0 %v291
  %v424 = vpop.f32.mrf.mxu0
  %v425 = vadd.f32 0.0, %v424
  %v426 = vpop.f32.mrf.mxu0
  %v427 = vadd.f32 0.0, %v426
  %428 = vmatmul.bf16.gmra.mxu0 %v292
  %v429 = vpop.f32.mrf.mxu0
  %v430 = vadd.f32 0.0, %v429
  %v431 = vpop.f32.mrf.mxu0
  %v432 = vadd.f32 0.0, %v431
  %433 = vmatmul.bf16.gmra.mxu0 %v293
  %v434 = vpop.f32.mrf.mxu0
  %v435 = vadd.f32 0.0, %v434
  %v436 = vpop.f32.mrf.mxu0
  %v437 = vadd.f32 0.0, %v436
  %438 = vmatmul.bf16.gmra.mxu0 %v294
  %v439 = vpop.f32.mrf.mxu0
  %v440 = vadd.f32 0.0, %v439
  %v441 = vpop.f32.mrf.mxu0
  %v442 = vadd.f32 0.0, %v441
  %443 = vmatmul.bf16.gmra.mxu0 %v295
  %v444 = vpop.f32.mrf.mxu0
  %v445 = vadd.f32 0.0, %v444
  %v446 = vpop.f32.mrf.mxu0
  %v447 = vadd.f32 0.0, %v446
  %448 = vmatmul.bf16.gmra.mxu0 %v296
  %v449 = vpop.f32.mrf.mxu0
  %v450 = vadd.f32 0.0, %v449
  %v451 = vpop.f32.mrf.mxu0
  %v452 = vadd.f32 0.0, %v451
  %453 = vmatmul.bf16.gmra.mxu0 %v297
  %v454 = vpop.f32.mrf.mxu0
  %v455 = vadd.f32 0.0, %v454
  %v456 = vpop.f32.mrf.mxu0
  %v457 = vadd.f32 0.0, %v456
  %458 = vmatmul.bf16.gmra.mxu0 %v298
  %v459 = vpop.f32.mrf.mxu0
  %v460 = vadd.f32 0.0, %v459
  %v461 = vpop.f32.mrf.mxu0
  %v462 = vadd.f32 0.0, %v461
  %463 = vmatmul.bf16.gmra.mxu0 %v299
  %v464 = vpop.f32.mrf.mxu0
  %v465 = vadd.f32 0.0, %v464
  %v466 = vpop.f32.mrf.mxu0
  %v467 = vadd.f32 0.0, %v466
  %468 = vmatmul.bf16.gmra.mxu0 %v300
  %v469 = vpop.f32.mrf.mxu0
  %v470 = vadd.f32 0.0, %v469
  %v471 = vpop.f32.mrf.mxu0
  %v472 = vadd.f32 0.0, %v471
  %473 = vmatmul.bf16.gmra.mxu0 %v301
  %v474 = vpop.f32.mrf.mxu0
  %v475 = vadd.f32 0.0, %v474
  %v476 = vpop.f32.mrf.mxu0
  %v477 = vadd.f32 0.0, %v476
  %478 = vmatmul.bf16.gmra.mxu0 %v302
  %v479 = vpop.f32.mrf.mxu0
  %v480 = vadd.f32 0.0, %v479
  %v481 = vpop.f32.mrf.mxu0
  %v482 = vadd.f32 0.0, %v481
  %483 = vmatmul.bf16.gmra.mxu0 %v303
  %v484 = vpop.f32.mrf.mxu0
  %v485 = vadd.f32 0.0, %v484
  %v486 = vpop.f32.mrf.mxu0
  %v487 = vadd.f32 0.0, %v486
  %488 = vmatmul.bf16.gmra.mxu0 %v304
  %v489 = vpop.f32.mrf.mxu0
  %v490 = vadd.f32 0.0, %v489
  %v491 = vpop.f32.mrf.mxu0
  %v492 = vadd.f32 0.0, %v491
  %493 = vmatmul.bf16.gmra.mxu0 %v305
  %v494 = vpop.f32.mrf.mxu0
  %v495 = vadd.f32 0.0, %v494
  %v496 = vpop.f32.mrf.mxu0
  %v497 = vadd.f32 0.0, %v496
  %498 = vmatmul.bf16.gmra.mxu0 %v306
  %v499 = vpop.f32.mrf.mxu0
  %v500 = vadd.f32 0.0, %v499
  %v501 = vpop.f32.mrf.mxu0
  %v502 = vadd.f32 0.0, %v501
  %503 = vmatmul.bf16.gmra.mxu0 %v307
  %v504 = vpop.f32.mrf.mxu0
  %v505 = vadd.f32 0.0, %v504
  %v506 = vpop.f32.mrf.mxu0
  %v507 = vadd.f32 0.0, %v506
  %508 = vmatmul.bf16.gmra.mxu0 %v308
  %v509 = vpop.f32.mrf.mxu0
  %v510 = vadd.f32 0.0, %v509
  %v511 = vpop.f32.mrf.mxu0
  %v512 = vadd.f32 0.0, %v511
  %513 = vmatmul.bf16.gmra.mxu0 %v309
  %v514 = vpop.f32.mrf.mxu0
  %v515 = vadd.f32 0.0, %v514
  %v516 = vpop.f32.mrf.mxu0
  %v517 = vadd.f32 0.0, %v516
  %518 = vmatmul.bf16.gmra.mxu0 %v310
  %v519 = vpop.f32.mrf.mxu0
  %v520 = vadd.f32 0.0, %v519
  %v521 = vpop.f32.mrf.mxu0
  %v522 = vadd.f32 0.0, %v521
  %523 = vmatmul.bf16.gmra.mxu0 %v311
  %v524 = vpop.f32.mrf.mxu0
  %v525 = vadd.f32 0.0, %v524
  %v526 = vpop.f32.mrf.mxu0
  %v527 = vadd.f32 0.0, %v526
  %528 = vmatmul.bf16.gmra.mxu0 %v312
  %v529 = vpop.f32.mrf.mxu0
  %v530 = vadd.f32 0.0, %v529
  %v531 = vpop.f32.mrf.mxu0
  %v532 = vadd.f32 0.0, %v531
  %533 = vmatmul.bf16.gmra.mxu0 %v313
  %v534 = vpop.f32.mrf.mxu0
  %v535 = vadd.f32 0.0, %v534
  %v536 = vpop.f32.mrf.mxu0
  %v537 = vadd.f32 0.0, %v536
  %538 = vmatmul.bf16.gmra.mxu0 %v314
  %v539 = vpop.f32.mrf.mxu0
  %v540 = vadd.f32 0.0, %v539
  %v541 = vpop.f32.mrf.mxu0
  %v542 = vadd.f32 0.0, %v541
  %543 = vmatmul.bf16.gmra.mxu0 %v315
  %v544 = vpop.f32.mrf.mxu0
  %v545 = vadd.f32 0.0, %v544
  %v546 = vpop.f32.mrf.mxu0
  %v547 = vadd.f32 0.0, %v546
  %548 = vdwg.mxu0
  %v549 = vpack.c.bf16 %v390, %v390
  %v550 = vpack.c.bf16 %v392, %v392
  %v551 = vpack.c.bf16 %v395, %v395
  %v552 = vpack.c.bf16 %v397, %v397
  %v553 = vpack.c.bf16 %v400, %v400
  %v554 = vpack.c.bf16 %v402, %v402
  %v555 = vpack.c.bf16 %v405, %v405
  %v556 = vpack.c.bf16 %v407, %v407
  %v557 = vpack.c.bf16 %v410, %v410
  %v558 = vpack.c.bf16 %v412, %v412
  %v559 = vpack.c.bf16 %v415, %v415
  %v560 = vpack.c.bf16 %v417, %v417
  %v561 = vpack.c.bf16 %v420, %v420
  %v562 = vpack.c.bf16 %v422, %v422
  %v563 = vpack.c.bf16 %v425, %v425
  %v564 = vpack.c.bf16 %v427, %v427
  %v565 = vpack.c.bf16 %v430, %v430
  %v566 = vpack.c.bf16 %v432, %v432
  %v567 = vpack.c.bf16 %v435, %v435
  %v568 = vpack.c.bf16 %v437, %v437
  %v569 = vpack.c.bf16 %v440, %v440
  %v570 = vpack.c.bf16 %v442, %v442
  %v571 = vpack.c.bf16 %v445, %v445
  %v572 = vpack.c.bf16 %v447, %v447
  %v573 = vpack.c.bf16 %v450, %v450
  %v574 = vpack.c.bf16 %v452, %v452
  %v575 = vpack.c.bf16 %v455, %v455
  %v576 = vpack.c.bf16 %v457, %v457
  %v577 = vpack.c.bf16 %v460, %v460
  %v578 = vpack.c.bf16 %v462, %v462
  %v579 = vpack.c.bf16 %v465, %v465
  %v580 = vpack.c.bf16 %v467, %v467
  %v581 = vpack.c.bf16 %v470, %v470
  %v582 = vpack.c.bf16 %v472, %v472
  %v583 = vpack.c.bf16 %v475, %v475
  %v584 = vpack.c.bf16 %v477, %v477
  %v585 = vpack.c.bf16 %v480, %v480
  %v586 = vpack.c.bf16 %v482, %v482
  %v587 = vpack.c.bf16 %v485, %v485
  %v588 = vpack.c.bf16 %v487, %v487
  %v589 = vpack.c.bf16 %v490, %v490
  %v590 = vpack.c.bf16 %v492, %v492
  %v591 = vpack.c.bf16 %v495, %v495
  %v592 = vpack.c.bf16 %v497, %v497
  %v593 = vpack.c.bf16 %v500, %v500
  %v594 = vpack.c.bf16 %v502, %v502
  %v595 = vpack.c.bf16 %v505, %v505
  %v596 = vpack.c.bf16 %v507, %v507
  %v597 = vpack.c.bf16 %v510, %v510
  %v598 = vpack.c.bf16 %v512, %v512
  %v599 = vpack.c.bf16 %v515, %v515
  %v600 = vpack.c.bf16 %v517, %v517
  %v601 = vpack.c.bf16 %v520, %v520
  %v602 = vpack.c.bf16 %v522, %v522
  %v603 = vpack.c.bf16 %v525, %v525
  %v604 = vpack.c.bf16 %v527, %v527
  %v605 = vpack.c.bf16 %v530, %v530
  %v606 = vpack.c.bf16 %v532, %v532
  %v607 = vpack.c.bf16 %v535, %v535
  %v608 = vpack.c.bf16 %v537, %v537
  %v609 = vpack.c.bf16 %v540, %v540
  %v610 = vpack.c.bf16 %v542, %v542
  %v611 = vpack.c.bf16 %v545, %v545
  %v612 = vpack.c.bf16 %v547, %v547
  %613 = vst [vmem:[%s4] sm:$0xf] %v549
  %614 = vst [vmem:[%s4 + $0x4] sm:$0xf] %v550
  %615 = vst [vmem:[%s4 + $0x8] sm:$0xf] %v551
  %616 = vst [vmem:[%s4 + $0xc] sm:$0xf] %v552
  %617 = vst [vmem:[%s4 + $0x10] sm:$0xf] %v553
  %618 = vst [vmem:[%s4 + $0x14] sm:$0xf] %v554
  %619 = vst [vmem:[%s4 + $0x18] sm:$0xf] %v555
  %620 = vst [vmem:[%s4 + $0x1c] sm:$0xf] %v556
  %621 = vst [vmem:[%s4 + $0x20] sm:$0xf] %v557
  %622 = vst [vmem:[%s4 + $0x24] sm:$0xf] %v558
  %623 = vst [vmem:[%s4 + $0x28] sm:$0xf] %v559
  %624 = vst [vmem:[%s4 + $0x2c] sm:$0xf] %v560
  %625 = vst [vmem:[%s4 + $0x30] sm:$0xf] %v561
  %626 = vst [vmem:[%s4 + $0x34] sm:$0xf] %v562
  %627 = vst [vmem:[%s4 + $0x38] sm:$0xf] %v563
  %628 = vst [vmem:[%s4 + $0x3c] sm:$0xf] %v564
  %629 = vst [vmem:[%s4 + $0x40] sm:$0xf] %v565
  %630 = vst [vmem:[%s4 + $0x44] sm:$0xf] %v566
  %631 = vst [vmem:[%s4 + $0x48] sm:$0xf] %v567
  %632 = vst [vmem:[%s4 + $0x4c] sm:$0xf] %v568
  %633 = vst [vmem:[%s4 + $0x50] sm:$0xf] %v569
  %634 = vst [vmem:[%s4 + $0x54] sm:$0xf] %v570
  %635 = vst [vmem:[%s4 + $0x58] sm:$0xf] %v571
  %636 = vst [vmem:[%s4 + $0x5c] sm:$0xf] %v572
  %637 = vst [vmem:[%s4 + $0x60] sm:$0xf] %v573
  %638 = vst [vmem:[%s4 + $0x64] sm:$0xf] %v574
  %639 = vst [vmem:[%s4 + $0x68] sm:$0xf] %v575
  %640 = vst [vmem:[%s4 + $0x6c] sm:$0xf] %v576
  %641 = vst [vmem:[%s4 + $0x70] sm:$0xf] %v577
  %642 = vst [vmem:[%s4 + $0x74] sm:$0xf] %v578
  %643 = vst [vmem:[%s4 + $0x78] sm:$0xf] %v579
  %644 = vst [vmem:[%s4 + $0x7c] sm:$0xf] %v580
  %645 = vst [vmem:[%s4 + $0x80] sm:$0xf] %v581
  %646 = vst [vmem:[%s4 + $0x84] sm:$0xf] %v582
  %647 = vst [vmem:[%s4 + $0x88] sm:$0xf] %v583
  %648 = vst [vmem:[%s4 + $0x8c] sm:$0xf] %v584
  %649 = vst [vmem:[%s4 + $0x90] sm:$0xf] %v585
  %650 = vst [vmem:[%s4 + $0x94] sm:$0xf] %v586
  %651 = vst [vmem:[%s4 + $0x98] sm:$0xf] %v587
  %652 = vst [vmem:[%s4 + $0x9c] sm:$0xf] %v588
  %653 = vst [vmem:[%s4 + $0xa0] sm:$0xf] %v589
  %654 = vst [vmem:[%s4 + $0xa4] sm:$0xf] %v590
  %655 = vst [vmem:[%s4 + $0xa8] sm:$0xf] %v591
  %656 = vst [vmem:[%s4 + $0xac] sm:$0xf] %v592
  %657 = vst [vmem:[%s4 + $0xb0] sm:$0xf] %v593
  %658 = vst [vmem:[%s4 + $0xb4] sm:$0xf] %v594
  %659 = vst [vmem:[%s4 + $0xb8] sm:$0xf] %v595
  %660 = vst [vmem:[%s4 + $0xbc] sm:$0xf] %v596
  %661 = vst [vmem:[%s4 + $0xc0] sm:$0xf] %v597
  %662 = vst [vmem:[%s4 + $0xc4] sm:$0xf] %v598
  %663 = vst [vmem:[%s4 + $0xc8] sm:$0xf] %v599
  %664 = vst [vmem:[%s4 + $0xcc] sm:$0xf] %v600
  %665 = vst [vmem:[%s4 + $0xd0] sm:$0xf] %v601
  %666 = vst [vmem:[%s4 + $0xd4] sm:$0xf] %v602
  %667 = vst [vmem:[%s4 + $0xd8] sm:$0xf] %v603
  %668 = vst [vmem:[%s4 + $0xdc] sm:$0xf] %v604
  %669 = vst [vmem:[%s4 + $0xe0] sm:$0xf] %v605
  %670 = vst [vmem:[%s4 + $0xe4] sm:$0xf] %v606
  %671 = vst [vmem:[%s4 + $0xe8] sm:$0xf] %v607
  %672 = vst [vmem:[%s4 + $0xec] sm:$0xf] %v608
  %673 = vst [vmem:[%s4 + $0xf0] sm:$0xf] %v609
  %674 = vst [vmem:[%s4 + $0xf4] sm:$0xf] %v610
  %675 = vst [vmem:[%s4 + $0xf8] sm:$0xf] %v611
  %676 = vst [vmem:[%s4 + $0xfc] sm:$0xf] %v612
  %s677 = smul.u32 0, 512
  %v678 = vlaneseq
  %v679 = vshrl.u32 %v678, 7
  %v680 = vadd.s32 %v679, 8
  %v681 = vadd.s32 %v679, 16
  %v682 = vadd.s32 %v679, 24
  %v683 = vadd.s32 %v679, 32
  %v684 = vadd.s32 %v679, 40
  %v685 = vadd.s32 %v679, 48
  %v686 = vadd.s32 %v679, 56
  %v687 = vadd.s32 %v679, 64
  %v688 = vadd.s32 %v679, 72
  %v689 = vadd.s32 %v679, 80
  %v690 = vadd.s32 %v679, 88
  %v691 = vadd.s32 %v679, 96
  %v692 = vadd.s32 %v679, 104
  %v693 = vadd.s32 %v679, 112
  %v694 = vadd.s32 %v679, 120
  %v695 = vadd.s32 %v679, 128
  %v696 = vadd.s32 %v679, 136
  %v697 = vadd.s32 %v679, 144
  %v698 = vadd.s32 %v679, 152
  %v699 = vadd.s32 %v679, 160
  %v700 = vadd.s32 %v679, 168
  %v701 = vadd.s32 %v679, 176
  %v702 = vadd.s32 %v679, 184
  %v703 = vadd.s32 %v679, 192
  %v704 = vadd.s32 %v679, 200
  %v705 = vadd.s32 %v679, 208
  %v706 = vadd.s32 %v679, 216
  %v707 = vadd.s32 %v679, 224
  %v708 = vadd.s32 %v679, 232
  %v709 = vadd.s32 %v679, 240
  %v710 = vadd.s32 %v679, 248
  %v711 = vadd.s32 %v679, 256
  %v712 = vadd.s32 %v679, 264
  %v713 = vadd.s32 %v679, 272
  %v714 = vadd.s32 %v679, 280
  %v715 = vadd.s32 %v679, 288
  %v716 = vadd.s32 %v679, 296
  %v717 = vadd.s32 %v679, 304
  %v718 = vadd.s32 %v679, 312
  %v719 = vadd.s32 %v679, 320
  %v720 = vadd.s32 %v679, 328
  %v721 = vadd.s32 %v679, 336
  %v722 = vadd.s32 %v679, 344
  %v723 = vadd.s32 %v679, 352
  %v724 = vadd.s32 %v679, 360
  %v725 = vadd.s32 %v679, 368
  %v726 = vadd.s32 %v679, 376
  %v727 = vadd.s32 %v679, 384
  %v728 = vadd.s32 %v679, 392
  %v729 = vadd.s32 %v679, 400
  %v730 = vadd.s32 %v679, 408
  %v731 = vadd.s32 %v679, 416
  %v732 = vadd.s32 %v679, 424
  %v733 = vadd.s32 %v679, 432
  %v734 = vadd.s32 %v679, 440
  %v735 = vadd.s32 %v679, 448
  %v736 = vadd.s32 %v679, 456
  %v737 = vadd.s32 %v679, 464
  %v738 = vadd.s32 %v679, 472
  %v739 = vadd.s32 %v679, 480
  %v740 = vadd.s32 %v679, 488
  %v741 = vadd.s32 %v679, 496
  %v742 = vadd.s32 %v679, 504
  %v743 = vstv %s677
  %v744 = vadd.s32 %v743, %v679
  %v745 = vadd.s32 %v743, %v680
  %v746 = vadd.s32 %v743, %v681
  %v747 = vadd.s32 %v743, %v682
  %v748 = vadd.s32 %v743, %v683
  %v749 = vadd.s32 %v743, %v684
  %v750 = vadd.s32 %v743, %v685
  %v751 = vadd.s32 %v743, %v686
  %v752 = vadd.s32 %v743, %v687
  %v753 = vadd.s32 %v743, %v688
  %v754 = vadd.s32 %v743, %v689
  %v755 = vadd.s32 %v743, %v690
  %v756 = vadd.s32 %v743, %v691
  %v757 = vadd.s32 %v743, %v692
  %v758 = vadd.s32 %v743, %v693
  %v759 = vadd.s32 %v743, %v694
  %v760 = vadd.s32 %v743, %v695
  %v761 = vadd.s32 %v743, %v696
  %v762 = vadd.s32 %v743, %v697
  %v763 = vadd.s32 %v743, %v698
  %v764 = vadd.s32 %v743, %v699
  %v765 = vadd.s32 %v743, %v700
  %v766 = vadd.s32 %v743, %v701
  %v767 = vadd.s32 %v743, %v702
  %v768 = vadd.s32 %v743, %v703
  %v769 = vadd.s32 %v743, %v704
  %v770 = vadd.s32 %v743, %v705
  %v771 = vadd.s32 %v743, %v706
  %v772 = vadd.s32 %v743, %v707
  %v773 = vadd.s32 %v743, %v708
  %v774 = vadd.s32 %v743, %v709
  %v775 = vadd.s32 %v743, %v710
  %v776 = vadd.s32 %v743, %v711
  %v777 = vadd.s32 %v743, %v712
  %v778 = vadd.s32 %v743, %v713
  %v779 = vadd.s32 %v743, %v714
  %v780 = vadd.s32 %v743, %v715
  %v781 = vadd.s32 %v743, %v716
  %v782 = vadd.s32 %v743, %v717
  %v783 = vadd.s32 %v743, %v718
  %v784 = vadd.s32 %v743, %v719
  %v785 = vadd.s32 %v743, %v720
  %v786 = vadd.s32 %v743, %v721
  %v787 = vadd.s32 %v743, %v722
  %v788 = vadd.s32 %v743, %v723
  %v789 = vadd.s32 %v743, %v724
  %v790 = vadd.s32 %v743, %v725
  %v791 = vadd.s32 %v743, %v726
  %v792 = vadd.s32 %v743, %v727
  %v793 = vadd.s32 %v743, %v728
  %v794 = vadd.s32 %v743, %v729
  %v795 = vadd.s32 %v743, %v730
  %v796 = vadd.s32 %v743, %v731
  %v797 = vadd.s32 %v743, %v732
  %v798 = vadd.s32 %v743, %v733
  %v799 = vadd.s32 %v743, %v734
  %v800 = vadd.s32 %v743, %v735
  %v801 = vadd.s32 %v743, %v736
  %v802 = vadd.s32 %v743, %v737
  %v803 = vadd.s32 %v743, %v738
  %v804 = vadd.s32 %v743, %v739
  %v805 = vadd.s32 %v743, %v740
  %v806 = vadd.s32 %v743, %v741
  %v807 = vadd.s32 %v743, %v742
  %vm808 = vcmp.lt.s32.totalorder %v744, 512
  %vm809 = vcmp.lt.s32.totalorder %v745, 512
  %vm810 = vcmp.lt.s32.totalorder %v746, 512
  %vm811 = vcmp.lt.s32.totalorder %v747, 512
  %vm812 = vcmp.lt.s32.totalorder %v748, 512
  %vm813 = vcmp.lt.s32.totalorder %v749, 512
  %vm814 = vcmp.lt.s32.totalorder %v750, 512
  %vm815 = vcmp.lt.s32.totalorder %v751, 512
  %vm816 = vcmp.lt.s32.totalorder %v752, 512
  %vm817 = vcmp.lt.s32.totalorder %v753, 512
  %vm818 = vcmp.lt.s32.totalorder %v754, 512
  %vm819 = vcmp.lt.s32.totalorder %v755, 512
  %vm820 = vcmp.lt.s32.totalorder %v756, 512
  %vm821 = vcmp.lt.s32.totalorder %v757, 512
  %vm822 = vcmp.lt.s32.totalorder %v758, 512
  %vm823 = vcmp.lt.s32.totalorder %v759, 512
  %vm824 = vcmp.lt.s32.totalorder %v760, 512
  %vm825 = vcmp.lt.s32.totalorder %v761, 512
  %vm826 = vcmp.lt.s32.totalorder %v762, 512
  %vm827 = vcmp.lt.s32.totalorder %v763, 512
  %vm828 = vcmp.lt.s32.totalorder %v764, 512
  %vm829 = vcmp.lt.s32.totalorder %v765, 512
  %vm830 = vcmp.lt.s32.totalorder %v766, 512
  %vm831 = vcmp.lt.s32.totalorder %v767, 512
  %vm832 = vcmp.lt.s32.totalorder %v768, 512
  %vm833 = vcmp.lt.s32.totalorder %v769, 512
  %vm834 = vcmp.lt.s32.totalorder %v770, 512
  %vm835 = vcmp.lt.s32.totalorder %v771, 512
  %vm836 = vcmp.lt.s32.totalorder %v772, 512
  %vm837 = vcmp.lt.s32.totalorder %v773, 512
  %vm838 = vcmp.lt.s32.totalorder %v774, 512
  %vm839 = vcmp.lt.s32.totalorder %v775, 512
  %vm840 = vcmp.lt.s32.totalorder %v776, 512
  %vm841 = vcmp.lt.s32.totalorder %v777, 512
  %vm842 = vcmp.lt.s32.totalorder %v778, 512
  %vm843 = vcmp.lt.s32.totalorder %v779, 512
  %vm844 = vcmp.lt.s32.totalorder %v780, 512
  %vm845 = vcmp.lt.s32.totalorder %v781, 512
  %vm846 = vcmp.lt.s32.totalorder %v782, 512
  %vm847 = vcmp.lt.s32.totalorder %v783, 512
  %vm848 = vcmp.lt.s32.totalorder %v784, 512
  %vm849 = vcmp.lt.s32.totalorder %v785, 512
  %vm850 = vcmp.lt.s32.totalorder %v786, 512
  %vm851 = vcmp.lt.s32.totalorder %v787, 512
  %vm852 = vcmp.lt.s32.totalorder %v788, 512
  %vm853 = vcmp.lt.s32.totalorder %v789, 512
  %vm854 = vcmp.lt.s32.totalorder %v790, 512
  %vm855 = vcmp.lt.s32.totalorder %v791, 512
  %vm856 = vcmp.lt.s32.totalorder %v792, 512
  %vm857 = vcmp.lt.s32.totalorder %v793, 512
  %vm858 = vcmp.lt.s32.totalorder %v794, 512
  %vm859 = vcmp.lt.s32.totalorder %v795, 512
  %vm860 = vcmp.lt.s32.totalorder %v796, 512
  %vm861 = vcmp.lt.s32.totalorder %v797, 512
  %vm862 = vcmp.lt.s32.totalorder %v798, 512
  %vm863 = vcmp.lt.s32.totalorder %v799, 512
  %vm864 = vcmp.lt.s32.totalorder %v800, 512
  %vm865 = vcmp.lt.s32.totalorder %v801, 512
  %vm866 = vcmp.lt.s32.totalorder %v802, 512
  %vm867 = vcmp.lt.s32.totalorder %v803, 512
  %vm868 = vcmp.lt.s32.totalorder %v804, 512
  %vm869 = vcmp.lt.s32.totalorder %v805, 512
  %vm870 = vcmp.lt.s32.totalorder %v806, 512
  %vm871 = vcmp.lt.s32.totalorder %v807, 512
  %v872 = vsel %vm808, 1, 0
  %v873 = vsel %vm809, 1, 0
  %v874 = vsel %vm810, 1, 0
  %v875 = vsel %vm811, 1, 0
  %v876 = vsel %vm812, 1, 0
  %v877 = vsel %vm813, 1, 0
  %v878 = vsel %vm814, 1, 0
  %v879 = vsel %vm815, 1, 0
  %v880 = vsel %vm816, 1, 0
  %v881 = vsel %vm817, 1, 0
  %v882 = vsel %vm818, 1, 0
  %v883 = vsel %vm819, 1, 0
  %v884 = vsel %vm820, 1, 0
  %v885 = vsel %vm821, 1, 0
  %v886 = vsel %vm822, 1, 0
  %v887 = vsel %vm823, 1, 0
  %v888 = vsel %vm824, 1, 0
  %v889 = vsel %vm825, 1, 0
  %v890 = vsel %vm826, 1, 0
  %v891 = vsel %vm827, 1, 0
  %v892 = vsel %vm828, 1, 0
  %v893 = vsel %vm829, 1, 0
  %v894 = vsel %vm830, 1, 0
  %v895 = vsel %vm831, 1, 0
  %v896 = vsel %vm832, 1, 0
  %v897 = vsel %vm833, 1, 0
  %v898 = vsel %vm834, 1, 0
  %v899 = vsel %vm835, 1, 0
  %v900 = vsel %vm836, 1, 0
  %v901 = vsel %vm837, 1, 0
  %v902 = vsel %vm838, 1, 0
  %v903 = vsel %vm839, 1, 0
  %v904 = vsel %vm840, 1, 0
  %v905 = vsel %vm841, 1, 0
  %v906 = vsel %vm842, 1, 0
  %v907 = vsel %vm843, 1, 0
  %v908 = vsel %vm844, 1, 0
  %v909 = vsel %vm845, 1, 0
  %v910 = vsel %vm846, 1, 0
  %v911 = vsel %vm847, 1, 0
  %v912 = vsel %vm848, 1, 0
  %v913 = vsel %vm849, 1, 0
  %v914 = vsel %vm850, 1, 0
  %v915 = vsel %vm851, 1, 0
  %v916 = vsel %vm852, 1, 0
  %v917 = vsel %vm853, 1, 0
  %v918 = vsel %vm854, 1, 0
  %v919 = vsel %vm855, 1, 0
  %v920 = vsel %vm856, 1, 0
  %v921 = vsel %vm857, 1, 0
  %v922 = vsel %vm858, 1, 0
  %v923 = vsel %vm859, 1, 0
  %v924 = vsel %vm860, 1, 0
  %v925 = vsel %vm861, 1, 0
  %v926 = vsel %vm862, 1, 0
  %v927 = vsel %vm863, 1, 0
  %v928 = vsel %vm864, 1, 0
  %v929 = vsel %vm865, 1, 0
  %v930 = vsel %vm866, 1, 0
  %v931 = vsel %vm867, 1, 0
  %v932 = vsel %vm868, 1, 0
  %v933 = vsel %vm869, 1, 0
  %v934 = vsel %vm870, 1, 0
  %v935 = vsel %vm871, 1, 0
  %vm936 = vcmp.eq.s32.totalorder %v872, 1
  %vm937 = vcmp.eq.s32.totalorder %v873, 1
  %vm938 = vcmp.eq.s32.totalorder %v874, 1
  %vm939 = vcmp.eq.s32.totalorder %v875, 1
  %vm940 = vcmp.eq.s32.totalorder %v876, 1
  %vm941 = vcmp.eq.s32.totalorder %v877, 1
  %vm942 = vcmp.eq.s32.totalorder %v878, 1
  %vm943 = vcmp.eq.s32.totalorder %v879, 1
  %vm944 = vcmp.eq.s32.totalorder %v880, 1
  %vm945 = vcmp.eq.s32.totalorder %v881, 1
  %vm946 = vcmp.eq.s32.totalorder %v882, 1
  %vm947 = vcmp.eq.s32.totalorder %v883, 1
  %vm948 = vcmp.eq.s32.totalorder %v884, 1
  %vm949 = vcmp.eq.s32.totalorder %v885, 1
  %vm950 = vcmp.eq.s32.totalorder %v886, 1
  %vm951 = vcmp.eq.s32.totalorder %v887, 1
  %vm952 = vcmp.eq.s32.totalorder %v888, 1
  %vm953 = vcmp.eq.s32.totalorder %v889, 1
  %vm954 = vcmp.eq.s32.totalorder %v890, 1
  %vm955 = vcmp.eq.s32.totalorder %v891, 1
  %vm956 = vcmp.eq.s32.totalorder %v892, 1
  %vm957 = vcmp.eq.s32.totalorder %v893, 1
  %vm958 = vcmp.eq.s32.totalorder %v894, 1
  %vm959 = vcmp.eq.s32.totalorder %v895, 1
  %vm960 = vcmp.eq.s32.totalorder %v896, 1
  %vm961 = vcmp.eq.s32.totalorder %v897, 1
  %vm962 = vcmp.eq.s32.totalorder %v898, 1
  %vm963 = vcmp.eq.s32.totalorder %v899, 1
  %vm964 = vcmp.eq.s32.totalorder %v900, 1
  %vm965 = vcmp.eq.s32.totalorder %v901, 1
  %vm966 = vcmp.eq.s32.totalorder %v902, 1
  %vm967 = vcmp.eq.s32.totalorder %v903, 1
  %vm968 = vcmp.eq.s32.totalorder %v904, 1
  %vm969 = vcmp.eq.s32.totalorder %v905, 1
  %vm970 = vcmp.eq.s32.totalorder %v906, 1
  %vm971 = vcmp.eq.s32.totalorder %v907, 1
  %vm972 = vcmp.eq.s32.totalorder %v908, 1
  %vm973 = vcmp.eq.s32.totalorder %v909, 1
  %vm974 = vcmp.eq.s32.totalorder %v910, 1
  %vm975 = vcmp.eq.s32.totalorder %v911, 1
  %vm976 = vcmp.eq.s32.totalorder %v912, 1
  %vm977 = vcmp.eq.s32.totalorder %v913, 1
  %vm978 = vcmp.eq.s32.totalorder %v914, 1
  %vm979 = vcmp.eq.s32.totalorder %v915, 1
  %vm980 = vcmp.eq.s32.totalorder %v916, 1
  %vm981 = vcmp.eq.s32.totalorder %v917, 1
  %vm982 = vcmp.eq.s32.totalorder %v918, 1
  %vm983 = vcmp.eq.s32.totalorder %v919, 1
  %vm984 = vcmp.eq.s32.totalorder %v920, 1
  %vm985 = vcmp.eq.s32.totalorder %v921, 1
  %vm986 = vcmp.eq.s32.totalorder %v922, 1
  %vm987 = vcmp.eq.s32.totalorder %v923, 1
  %vm988 = vcmp.eq.s32.totalorder %v924, 1
  %vm989 = vcmp.eq.s32.totalorder %v925, 1
  %vm990 = vcmp.eq.s32.totalorder %v926, 1
  %vm991 = vcmp.eq.s32.totalorder %v927, 1
  %vm992 = vcmp.eq.s32.totalorder %v928, 1
  %vm993 = vcmp.eq.s32.totalorder %v929, 1
  %vm994 = vcmp.eq.s32.totalorder %v930, 1
  %vm995 = vcmp.eq.s32.totalorder %v931, 1
  %vm996 = vcmp.eq.s32.totalorder %v932, 1
  %vm997 = vcmp.eq.s32.totalorder %v933, 1
  %vm998 = vcmp.eq.s32.totalorder %v934, 1
  %vm999 = vcmp.eq.s32.totalorder %v935, 1
  %v1000 = vsel %vm936, %v390, 0.0
  %v1001 = vsel %vm937, %v392, 0.0
  %v1002 = vsel %vm938, %v395, 0.0
  %v1003 = vsel %vm939, %v397, 0.0
  %v1004 = vsel %vm940, %v400, 0.0
  %v1005 = vsel %vm941, %v402, 0.0
  %v1006 = vsel %vm942, %v405, 0.0
  %v1007 = vsel %vm943, %v407, 0.0
  %v1008 = vsel %vm944, %v410, 0.0
  %v1009 = vsel %vm945, %v412, 0.0
  %v1010 = vsel %vm946, %v415, 0.0
  %v1011 = vsel %vm947, %v417, 0.0
  %v1012 = vsel %vm948, %v420, 0.0
  %v1013 = vsel %vm949, %v422, 0.0
  %v1014 = vsel %vm950, %v425, 0.0
  %v1015 = vsel %vm951, %v427, 0.0
  %v1016 = vsel %vm952, %v430, 0.0
  %v1017 = vsel %vm953, %v432, 0.0
  %v1018 = vsel %vm954, %v435, 0.0
  %v1019 = vsel %vm955, %v437, 0.0
  %v1020 = vsel %vm956, %v440, 0.0
  %v1021 = vsel %vm957, %v442, 0.0
  %v1022 = vsel %vm958, %v445, 0.0
  %v1023 = vsel %vm959, %v447, 0.0
  %v1024 = vsel %vm960, %v450, 0.0
  %v1025 = vsel %vm961, %v452, 0.0
  %v1026 = vsel %vm962, %v455, 0.0
  %v1027 = vsel %vm963, %v457, 0.0
  %v1028 = vsel %vm964, %v460, 0.0
  %v1029 = vsel %vm965, %v462, 0.0
  %v1030 = vsel %vm966, %v465, 0.0
  %v1031 = vsel %vm967, %v467, 0.0
  %v1032 = vsel %vm968, %v470, 0.0
  %v1033 = vsel %vm969, %v472, 0.0
  %v1034 = vsel %vm970, %v475, 0.0
  %v1035 = vsel %vm971, %v477, 0.0
  %v1036 = vsel %vm972, %v480, 0.0
  %v1037 = vsel %vm973, %v482, 0.0
  %v1038 = vsel %vm974, %v485, 0.0
  %v1039 = vsel %vm975, %v487, 0.0
  %v1040 = vsel %vm976, %v490, 0.0
  %v1041 = vsel %vm977, %v492, 0.0
  %v1042 = vsel %vm978, %v495, 0.0
  %v1043 = vsel %vm979, %v497, 0.0
  %v1044 = vsel %vm980, %v500, 0.0
  %v1045 = vsel %vm981, %v502, 0.0
  %v1046 = vsel %vm982, %v505, 0.0
  %v1047 = vsel %vm983, %v507, 0.0
  %v1048 = vsel %vm984, %v510, 0.0
  %v1049 = vsel %vm985, %v512, 0.0
  %v1050 = vsel %vm986, %v515, 0.0
  %v1051 = vsel %vm987, %v517, 0.0
  %v1052 = vsel %vm988, %v520, 0.0
  %v1053 = vsel %vm989, %v522, 0.0
  %v1054 = vsel %vm990, %v525, 0.0
  %v1055 = vsel %vm991, %v527, 0.0
  %v1056 = vsel %vm992, %v530, 0.0
  %v1057 = vsel %vm993, %v532, 0.0
  %v1058 = vsel %vm994, %v535, 0.0
  %v1059 = vsel %vm995, %v537, 0.0
  %v1060 = vsel %vm996, %v540, 0.0
  %v1061 = vsel %vm997, %v542, 0.0
  %v1062 = vsel %vm998, %v545, 0.0
  %v1063 = vsel %vm999, %v547, 0.0
  %v1064 = vadd.f32 %v1000, %v1001
  %v1065 = vadd.f32 %v1064, %v1002
  %v1066 = vadd.f32 %v1065, %v1003
  %v1067 = vadd.f32 %v1066, %v1004
  %v1068 = vadd.f32 %v1067, %v1005
  %v1069 = vadd.f32 %v1068, %v1006
  %v1070 = vadd.f32 %v1069, %v1007
  %v1071 = vadd.f32 %v1070, %v1008
  %v1072 = vadd.f32 %v1071, %v1009
  %v1073 = vadd.f32 %v1072, %v1010
  %v1074 = vadd.f32 %v1073, %v1011
  %v1075 = vadd.f32 %v1074, %v1012
  %v1076 = vadd.f32 %v1075, %v1013
  %v1077 = vadd.f32 %v1076, %v1014
  %v1078 = vadd.f32 %v1077, %v1015
  %v1079 = vadd.f32 %v1078, %v1016
  %v1080 = vadd.f32 %v1079, %v1017
  %v1081 = vadd.f32 %v1080, %v1018
  %v1082 = vadd.f32 %v1081, %v1019
  %v1083 = vadd.f32 %v1082, %v1020
  %v1084 = vadd.f32 %v1083, %v1021
  %v1085 = vadd.f32 %v1084, %v1022
  %v1086 = vadd.f32 %v1085, %v1023
  %v1087 = vadd.f32 %v1086, %v1024
  %v1088 = vadd.f32 %v1087, %v1025
  %v1089 = vadd.f32 %v1088, %v1026
  %v1090 = vadd.f32 %v1089, %v1027
  %v1091 = vadd.f32 %v1090, %v1028
  %v1092 = vadd.f32 %v1091, %v1029
  %v1093 = vadd.f32 %v1092, %v1030
  %v1094 = vadd.f32 %v1093, %v1031
  %v1095 = vadd.f32 %v1094, %v1032
  %v1096 = vadd.f32 %v1095, %v1033
  %v1097 = vadd.f32 %v1096, %v1034
  %v1098 = vadd.f32 %v1097, %v1035
  %v1099 = vadd.f32 %v1098, %v1036
  %v1100 = vadd.f32 %v1099, %v1037
  %v1101 = vadd.f32 %v1100, %v1038
  %v1102 = vadd.f32 %v1101, %v1039
  %v1103 = vadd.f32 %v1102, %v1040
  %v1104 = vadd.f32 %v1103, %v1041
  %v1105 = vadd.f32 %v1104, %v1042
  %v1106 = vadd.f32 %v1105, %v1043
  %v1107 = vadd.f32 %v1106, %v1044
  %v1108 = vadd.f32 %v1107, %v1045
  %v1109 = vadd.f32 %v1108, %v1046
  %v1110 = vadd.f32 %v1109, %v1047
  %v1111 = vadd.f32 %v1110, %v1048
  %v1112 = vadd.f32 %v1111, %v1049
  %v1113 = vadd.f32 %v1112, %v1050
  %v1114 = vadd.f32 %v1113, %v1051
  %v1115 = vadd.f32 %v1114, %v1052
  %v1116 = vadd.f32 %v1115, %v1053
  %v1117 = vadd.f32 %v1116, %v1054
  %v1118 = vadd.f32 %v1117, %v1055
  %v1119 = vadd.f32 %v1118, %v1056
  %v1120 = vadd.f32 %v1119, %v1057
  %v1121 = vadd.f32 %v1120, %v1058
  %v1122 = vadd.f32 %v1121, %v1059
  %v1123 = vadd.f32 %v1122, %v1060
  %v1124 = vadd.f32 %v1123, %v1061
  %v1125 = vadd.f32 %v1124, %v1062
  %v1126 = vadd.f32 %v1125, %v1063
  %v1127 = vrot.slane %v1126, 4
  %v1128 = vadd.f32 %v1126, %v1127
  %v1129 = vrot.slane %v1128, 2
  %v1130 = vadd.f32 %v1128, %v1129
  %v1131 = vrot.slane %v1130, 1
  %v1132 = vadd.f32 %v1130, %v1131
  %1133 = vst [vmem:[%s5] sm:$0x1] %v1132
  %v1134 = vmul.f32 %v1000, %v1000
  %v1135 = vmul.f32 %v1001, %v1001
  %v1136 = vmul.f32 %v1002, %v1002
  %v1137 = vmul.f32 %v1003, %v1003
  %v1138 = vmul.f32 %v1004, %v1004
  %v1139 = vmul.f32 %v1005, %v1005
  %v1140 = vmul.f32 %v1006, %v1006
  %v1141 = vmul.f32 %v1007, %v1007
  %v1142 = vmul.f32 %v1008, %v1008
  %v1143 = vmul.f32 %v1009, %v1009
  %v1144 = vmul.f32 %v1010, %v1010
  %v1145 = vmul.f32 %v1011, %v1011
  %v1146 = vmul.f32 %v1012, %v1012
  %v1147 = vmul.f32 %v1013, %v1013
  %v1148 = vmul.f32 %v1014, %v1014
  %v1149 = vmul.f32 %v1015, %v1015
  %v1150 = vmul.f32 %v1016, %v1016
  %v1151 = vmul.f32 %v1017, %v1017
  %v1152 = vmul.f32 %v1018, %v1018
  %v1153 = vmul.f32 %v1019, %v1019
  %v1154 = vmul.f32 %v1020, %v1020
  %v1155 = vmul.f32 %v1021, %v1021
  %v1156 = vmul.f32 %v1022, %v1022
  %v1157 = vmul.f32 %v1023, %v1023
  %v1158 = vmul.f32 %v1024, %v1024
  %v1159 = vmul.f32 %v1025, %v1025
  %v1160 = vmul.f32 %v1026, %v1026
  %v1161 = vmul.f32 %v1027, %v1027
  %v1162 = vmul.f32 %v1028, %v1028
  %v1163 = vmul.f32 %v1029, %v1029
  %v1164 = vmul.f32 %v1030, %v1030
  %v1165 = vmul.f32 %v1031, %v1031
  %v1166 = vmul.f32 %v1032, %v1032
  %v1167 = vmul.f32 %v1033, %v1033
  %v1168 = vmul.f32 %v1034, %v1034
  %v1169 = vmul.f32 %v1035, %v1035
  %v1170 = vmul.f32 %v1036, %v1036
  %v1171 = vmul.f32 %v1037, %v1037
  %v1172 = vmul.f32 %v1038, %v1038
  %v1173 = vmul.f32 %v1039, %v1039
  %v1174 = vmul.f32 %v1040, %v1040
  %v1175 = vmul.f32 %v1041, %v1041
  %v1176 = vmul.f32 %v1042, %v1042
  %v1177 = vmul.f32 %v1043, %v1043
  %v1178 = vmul.f32 %v1044, %v1044
  %v1179 = vmul.f32 %v1045, %v1045
  %v1180 = vmul.f32 %v1046, %v1046
  %v1181 = vmul.f32 %v1047, %v1047
  %v1182 = vmul.f32 %v1048, %v1048
  %v1183 = vmul.f32 %v1049, %v1049
  %v1184 = vmul.f32 %v1050, %v1050
  %v1185 = vmul.f32 %v1051, %v1051
  %v1186 = vmul.f32 %v1052, %v1052
  %v1187 = vmul.f32 %v1053, %v1053
  %v1188 = vmul.f32 %v1054, %v1054
  %v1189 = vmul.f32 %v1055, %v1055
  %v1190 = vmul.f32 %v1056, %v1056
  %v1191 = vmul.f32 %v1057, %v1057
  %v1192 = vmul.f32 %v1058, %v1058
  %v1193 = vmul.f32 %v1059, %v1059
  %v1194 = vmul.f32 %v1060, %v1060
  %v1195 = vmul.f32 %v1061, %v1061
  %v1196 = vmul.f32 %v1062, %v1062
  %v1197 = vmul.f32 %v1063, %v1063
  %v1198 = vadd.f32 %v1134, %v1135
  %v1199 = vadd.f32 %v1198, %v1136
  %v1200 = vadd.f32 %v1199, %v1137
  %v1201 = vadd.f32 %v1200, %v1138
  %v1202 = vadd.f32 %v1201, %v1139
  %v1203 = vadd.f32 %v1202, %v1140
  %v1204 = vadd.f32 %v1203, %v1141
  %v1205 = vadd.f32 %v1204, %v1142
  %v1206 = vadd.f32 %v1205, %v1143
  %v1207 = vadd.f32 %v1206, %v1144
  %v1208 = vadd.f32 %v1207, %v1145
  %v1209 = vadd.f32 %v1208, %v1146
  %v1210 = vadd.f32 %v1209, %v1147
  %v1211 = vadd.f32 %v1210, %v1148
  %v1212 = vadd.f32 %v1211, %v1149
  %v1213 = vadd.f32 %v1212, %v1150
  %v1214 = vadd.f32 %v1213, %v1151
  %v1215 = vadd.f32 %v1214, %v1152
  %v1216 = vadd.f32 %v1215, %v1153
  %v1217 = vadd.f32 %v1216, %v1154
  %v1218 = vadd.f32 %v1217, %v1155
  %v1219 = vadd.f32 %v1218, %v1156
  %v1220 = vadd.f32 %v1219, %v1157
  %v1221 = vadd.f32 %v1220, %v1158
  %v1222 = vadd.f32 %v1221, %v1159
  %v1223 = vadd.f32 %v1222, %v1160
  %v1224 = vadd.f32 %v1223, %v1161
  %v1225 = vadd.f32 %v1224, %v1162
  %v1226 = vadd.f32 %v1225, %v1163
  %v1227 = vadd.f32 %v1226, %v1164
  %v1228 = vadd.f32 %v1227, %v1165
  %v1229 = vadd.f32 %v1228, %v1166
  %v1230 = vadd.f32 %v1229, %v1167
  %v1231 = vadd.f32 %v1230, %v1168
  %v1232 = vadd.f32 %v1231, %v1169
  %v1233 = vadd.f32 %v1232, %v1170
  %v1234 = vadd.f32 %v1233, %v1171
  %v1235 = vadd.f32 %v1234, %v1172
  %v1236 = vadd.f32 %v1235, %v1173
  %v1237 = vadd.f32 %v1236, %v1174
  %v1238 = vadd.f32 %v1237, %v1175
  %v1239 = vadd.f32 %v1238, %v1176
  %v1240 = vadd.f32 %v1239, %v1177
  %v1241 = vadd.f32 %v1240, %v1178
  %v1242 = vadd.f32 %v1241, %v1179
  %v1243 = vadd.f32 %v1242, %v1180
  %v1244 = vadd.f32 %v1243, %v1181
  %v1245 = vadd.f32 %v1244, %v1182
  %v1246 = vadd.f32 %v1245, %v1183
  %v1247 = vadd.f32 %v1246, %v1184
  %v1248 = vadd.f32 %v1247, %v1185
  %v1249 = vadd.f32 %v1248, %v1186
  %v1250 = vadd.f32 %v1249, %v1187
  %v1251 = vadd.f32 %v1250, %v1188
  %v1252 = vadd.f32 %v1251, %v1189
  %v1253 = vadd.f32 %v1252, %v1190
  %v1254 = vadd.f32 %v1253, %v1191
  %v1255 = vadd.f32 %v1254, %v1192
  %v1256 = vadd.f32 %v1255, %v1193
  %v1257 = vadd.f32 %v1256, %v1194
  %v1258 = vadd.f32 %v1257, %v1195
  %v1259 = vadd.f32 %v1258, %v1196
  %v1260 = vadd.f32 %v1259, %v1197
  %v1261 = vrot.slane %v1260, 4
  %v1262 = vadd.f32 %v1260, %v1261
  %v1263 = vrot.slane %v1262, 2
  %v1264 = vadd.f32 %v1262, %v1263
  %v1265 = vrot.slane %v1264, 1
  %v1266 = vadd.f32 %v1264, %v1265
  %1267 = vst [vmem:[%s6] sm:$0x1] %v1266
  // Predicated region
  $region18: #{bottleneck_v2_forward.5} parent=0 // pred_check
    _
  $region19: #{bottleneck_v2_forward.5} parent=0 // pred_check_branch
    %1269 = sbr.rel (0) target = $region21
  $region20: #{bottleneck_v2_forward.5} parent=0 // pred_region
    _
  $region21: #{bottleneck_v2_forward.5} parent=0 // pred_fallthru
    _
  // Predicated region
  $region22: #{bottleneck_v2_forward.5} parent=0 // pred_check
    _
  $region23: #{bottleneck_v2_forward.5} parent=0 // pred_check_branch
    %1271 = sbr.rel (0) target = $region25
  $region24: #{bottleneck_v2_forward.5} parent=0 // pred_region
    _
  $region25: #{bottleneck_v2_forward.5} parent=0 // pred_fallthru
    _
  // Predicated region
  $region26: #{bottleneck_v2_forward.5} parent=0 // pred_check
    _
  $region27: #{bottleneck_v2_forward.5} parent=0 // pred_check_branch
    %1273 = sbr.rel (0) target = $region29
  $region28: #{bottleneck_v2_forward.5} parent=0 // pred_region
    _
  $region29: #{bottleneck_v2_forward.5} parent=0 // pred_fallthru
    _
  // Predicated region
  $region30: #{bottleneck_v2_forward.5} parent=0 // pred_check
    _
  $region31: #{bottleneck_v2_forward.5} parent=0 // pred_check_branch
    %1275 = sbr.rel (0) target = $region33
  $region32: #{bottleneck_v2_forward.5} parent=0 // pred_region
    _
  $region33: #{bottleneck_v2_forward.5} parent=0 // pred_fallthru
    _
  // Predicated region
  $region34: #{bottleneck_v2_forward.5} parent=0 // pred_check
    _
  $region35: #{bottleneck_v2_forward.5} parent=0 // pred_check_branch
    %1277 = sbr.rel (0) target = $region37
  $region36: #{bottleneck_v2_forward.5} parent=0 // pred_region
    _
  $region37: #{bottleneck_v2_forward.5} parent=0 // pred_fallthru
    _
  // Predicated region
  $region38: #{bottleneck_v2_forward.5} parent=0 // pred_check
    _
  $region39: #{bottleneck_v2_forward.5} parent=0 // pred_check_branch
    %1279 = sbr.rel (0) target = $region41
  $region40: #{bottleneck_v2_forward.5} parent=0 // pred_region
    _
  $region41: #{bottleneck_v2_forward.5} parent=0 // pred_fallthru
    _

// kernel: bottleneck_v2_forward.7
$region0: #{bottleneck_v2_forward.7}
  #allocation0 [shape = 'u32[]', space=smem, size = 0x4, offset = 0x4, fixed_abs, tag = 'smem constant byte address 0x4 - core index']
  #allocation1 [shape = 'u32[72,128]{1,0:T(1,128)}', space=vmem, size = 0x9000, scoped, tag = 'internal scratch']
  %s0 = inlined_call_operand.vmem [shape: bf16[512,128], index: 0, kind: input, shape index: {}]
  %s1 = inlined_call_operand.vmem [shape: f32[1,128], index: 1, kind: input, shape index: {}]
  %s2 = inlined_call_operand.vmem [shape: f32[1,128], index: 2, kind: input, shape index: {}]
  %s3 = inlined_call_operand.vmem [shape: bf16[128,128], index: 3, kind: input, shape index: {}]
  %s4 = inlined_call_operand.vmem [shape: f32[512,128], index: 4, kind: input, shape index: {}]
  %s5 = inlined_call_operand.vmem [shape: f32[512,128], index: 5, kind: output, shape index: {}]
  %s6 = sld [smem:[#allocation0]]
  $region30: #{bottleneck_v2_forward.7} parent=0
    _
  %s8 = ssub.s32 1, %s6
  %s9 = scalar_select 0, %s8, %s6
  // Predicated region
  $region2: #{bottleneck_v2_forward.7} parent=0 // pred_check
    _
  $region3: #{bottleneck_v2_forward.7} parent=0 // pred_check_branch
    %11 = sbr.rel (0) target = $region5
  $region4: #{bottleneck_v2_forward.7} parent=0 // pred_region
    _
  $region5: #{bottleneck_v2_forward.7} parent=0 // pred_fallthru
    _
  // Predicated region
  $region6: #{bottleneck_v2_forward.7} parent=0 // pred_check
    _
  $region7: #{bottleneck_v2_forward.7} parent=0 // pred_check_branch
    %13 = sbr.rel (0) target = $region9
  $region8: #{bottleneck_v2_forward.7} parent=0 // pred_region
    _
  $region9: #{bottleneck_v2_forward.7} parent=0 // pred_fallthru
    _
  // Predicated region
  $region10: #{bottleneck_v2_forward.7} parent=0 // pred_check
    _
  $region11: #{bottleneck_v2_forward.7} parent=0 // pred_check_branch
    %15 = sbr.rel (0) target = $region13
  $region12: #{bottleneck_v2_forward.7} parent=0 // pred_region
    _
  $region13: #{bottleneck_v2_forward.7} parent=0 // pred_fallthru
    _
  // Predicated region
  $region14: #{bottleneck_v2_forward.7} parent=0 // pred_check
    _
  $region15: #{bottleneck_v2_forward.7} parent=0 // pred_check_branch
    %17 = sbr.rel (0) target = $region17
  $region16: #{bottleneck_v2_forward.7} parent=0 // pred_region
    _
  $region17: #{bottleneck_v2_forward.7} parent=0 // pred_fallthru
    _
  // Predicated region
  $region18: #{bottleneck_v2_forward.7} parent=0 // pred_check
    _
  $region19: #{bottleneck_v2_forward.7} parent=0 // pred_check_branch
    %19 = sbr.rel (0) target = $region21
  $region20: #{bottleneck_v2_forward.7} parent=0 // pred_region
    _
  $region21: #{bottleneck_v2_forward.7} parent=0 // pred_fallthru
    _
  %v20 = vld [vmem:[%s0] sm:$0xf]
  %v21 = vld [vmem:[%s0 + $0x4] sm:$0xf]
  %v22 = vld [vmem:[%s0 + $0x8] sm:$0xf]
  %v23 = vld [vmem:[%s0 + $0xc] sm:$0xf]
  %v24 = vld [vmem:[%s0 + $0x10] sm:$0xf]
  %v25 = vld [vmem:[%s0 + $0x14] sm:$0xf]
  %v26 = vld [vmem:[%s0 + $0x18] sm:$0xf]
  %v27 = vld [vmem:[%s0 + $0x1c] sm:$0xf]
  %v28 = vld [vmem:[%s0 + $0x20] sm:$0xf]
  %v29 = vld [vmem:[%s0 + $0x24] sm:$0xf]
  %v30 = vld [vmem:[%s0 + $0x28] sm:$0xf]
  %v31 = vld [vmem:[%s0 + $0x2c] sm:$0xf]
  %v32 = vld [vmem:[%s0 + $0x30] sm:$0xf]
  %v33 = vld [vmem:[%s0 + $0x34] sm:$0xf]
  %v34 = vld [vmem:[%s0 + $0x38] sm:$0xf]
  %v35 = vld [vmem:[%s0 + $0x3c] sm:$0xf]
  %v36 = vld [vmem:[%s0 + $0x40] sm:$0xf]
  %v37 = vld [vmem:[%s0 + $0x44] sm:$0xf]
  %v38 = vld [vmem:[%s0 + $0x48] sm:$0xf]
  %v39 = vld [vmem:[%s0 + $0x4c] sm:$0xf]
  %v40 = vld [vmem:[%s0 + $0x50] sm:$0xf]
  %v41 = vld [vmem:[%s0 + $0x54] sm:$0xf]
  %v42 = vld [vmem:[%s0 + $0x58] sm:$0xf]
  %v43 = vld [vmem:[%s0 + $0x5c] sm:$0xf]
  %v44 = vld [vmem:[%s0 + $0x60] sm:$0xf]
  %v45 = vld [vmem:[%s0 + $0x64] sm:$0xf]
  %v46 = vld [vmem:[%s0 + $0x68] sm:$0xf]
  %v47 = vld [vmem:[%s0 + $0x6c] sm:$0xf]
  %v48 = vld [vmem:[%s0 + $0x70] sm:$0xf]
  %v49 = vld [vmem:[%s0 + $0x74] sm:$0xf]
  %v50 = vld [vmem:[%s0 + $0x78] sm:$0xf]
  %v51 = vld [vmem:[%s0 + $0x7c] sm:$0xf]
  %v52 = vld [vmem:[%s0 + $0x80] sm:$0xf]
  %v53 = vld [vmem:[%s0 + $0x84] sm:$0xf]
  %v54 = vld [vmem:[%s0 + $0x88] sm:$0xf]
  %v55 = vld [vmem:[%s0 + $0x8c] sm:$0xf]
  %v56 = vld [vmem:[%s0 + $0x90] sm:$0xf]
  %v57 = vld [vmem:[%s0 + $0x94] sm:$0xf]
  %v58 = vld [vmem:[%s0 + $0x98] sm:$0xf]
  %v59 = vld [vmem:[%s0 + $0x9c] sm:$0xf]
  %v60 = vld [vmem:[%s0 + $0xa0] sm:$0xf]
  %v61 = vld [vmem:[%s0 + $0xa4] sm:$0xf]
  %v62 = vld [vmem:[%s0 + $0xa8] sm:$0xf]
  %v63 = vld [vmem:[%s0 + $0xac] sm:$0xf]
  %v64 = vld [vmem:[%s0 + $0xb0] sm:$0xf]
  %v65 = vld [vmem:[%s0 + $0xb4] sm:$0xf]
  %v66 = vld [vmem:[%s0 + $0xb8] sm:$0xf]
  %v67 = vld [vmem:[%s0 + $0xbc] sm:$0xf]
  %v68 = vld [vmem:[%s0 + $0xc0] sm:$0xf]
  %v69 = vld [vmem:[%s0 + $0xc4] sm:$0xf]
  %v70 = vld [vmem:[%s0 + $0xc8] sm:$0xf]
  %v71 = vld [vmem:[%s0 + $0xcc] sm:$0xf]
  %v72 = vld [vmem:[%s0 + $0xd0] sm:$0xf]
  %v73 = vld [vmem:[%s0 + $0xd4] sm:$0xf]
  %v74 = vld [vmem:[%s0 + $0xd8] sm:$0xf]
  %v75 = vld [vmem:[%s0 + $0xdc] sm:$0xf]
  %v76 = vld [vmem:[%s0 + $0xe0] sm:$0xf]
  %v77 = vld [vmem:[%s0 + $0xe4] sm:$0xf]
  %v78 = vld [vmem:[%s0 + $0xe8] sm:$0xf]
  %v79 = vld [vmem:[%s0 + $0xec] sm:$0xf]
  %v80 = vld [vmem:[%s0 + $0xf0] sm:$0xf]
  %v81 = vld [vmem:[%s0 + $0xf4] sm:$0xf]
  %v82 = vld [vmem:[%s0 + $0xf8] sm:$0xf]
  %v83 = vld [vmem:[%s0 + $0xfc] sm:$0xf]
  %v84 = vld [vmem:[%s1] sm:$0x1]
  %v85 = vunpack.c.l.bf16 %v20
  %v86 = vunpack.c.l.bf16 %v21
  %v87 = vunpack.c.l.bf16 %v22
  %v88 = vunpack.c.l.bf16 %v23
  %v89 = vunpack.c.l.bf16 %v24
  %v90 = vunpack.c.l.bf16 %v25
  %v91 = vunpack.c.l.bf16 %v26
  %v92 = vunpack.c.l.bf16 %v27
  %v93 = vunpack.c.l.bf16 %v28
  %v94 = vunpack.c.l.bf16 %v29
  %v95 = vunpack.c.l.bf16 %v30
  %v96 = vunpack.c.l.bf16 %v31
  %v97 = vunpack.c.l.bf16 %v32
  %v98 = vunpack.c.l.bf16 %v33
  %v99 = vunpack.c.l.bf16 %v34
  %v100 = vunpack.c.l.bf16 %v35
  %v101 = vunpack.c.l.bf16 %v36
  %v102 = vunpack.c.l.bf16 %v37
  %v103 = vunpack.c.l.bf16 %v38
  %v104 = vunpack.c.l.bf16 %v39
  %v105 = vunpack.c.l.bf16 %v40
  %v106 = vunpack.c.l.bf16 %v41
  %v107 = vunpack.c.l.bf16 %v42
  %v108 = vunpack.c.l.bf16 %v43
  %v109 = vunpack.c.l.bf16 %v44
  %v110 = vunpack.c.l.bf16 %v45
  %v111 = vunpack.c.l.bf16 %v46
  %v112 = vunpack.c.l.bf16 %v47
  %v113 = vunpack.c.l.bf16 %v48
  %v114 = vunpack.c.l.bf16 %v49
  %v115 = vunpack.c.l.bf16 %v50
  %v116 = vunpack.c.l.bf16 %v51
  %v117 = vunpack.c.l.bf16 %v52
  %v118 = vunpack.c.l.bf16 %v53
  %v119 = vunpack.c.l.bf16 %v54
  %v120 = vunpack.c.l.bf16 %v55
  %v121 = vunpack.c.l.bf16 %v56
  %v122 = vunpack.c.l.bf16 %v57
  %v123 = vunpack.c.l.bf16 %v58
  %v124 = vunpack.c.l.bf16 %v59
  %v125 = vunpack.c.l.bf16 %v60
  %v126 = vunpack.c.l.bf16 %v61
  %v127 = vunpack.c.l.bf16 %v62
  %v128 = vunpack.c.l.bf16 %v63
  %v129 = vunpack.c.l.bf16 %v64
  %v130 = vunpack.c.l.bf16 %v65
  %v131 = vunpack.c.l.bf16 %v66
  %v132 = vunpack.c.l.bf16 %v67
  %v133 = vunpack.c.l.bf16 %v68
  %v134 = vunpack.c.l.bf16 %v69
  %v135 = vunpack.c.l.bf16 %v70
  %v136 = vunpack.c.l.bf16 %v71
  %v137 = vunpack.c.l.bf16 %v72
  %v138 = vunpack.c.l.bf16 %v73
  %v139 = vunpack.c.l.bf16 %v74
  %v140 = vunpack.c.l.bf16 %v75
  %v141 = vunpack.c.l.bf16 %v76
  %v142 = vunpack.c.l.bf16 %v77
  %v143 = vunpack.c.l.bf16 %v78
  %v144 = vunpack.c.l.bf16 %v79
  %v145 = vunpack.c.l.bf16 %v80
  %v146 = vunpack.c.l.bf16 %v81
  %v147 = vunpack.c.l.bf16 %v82
  %v148 = vunpack.c.l.bf16 %v83
  %v150 = vperm.slane %v84, 0
  %v152 = vmul.f32 %v85, %v150
  %v153 = vmul.f32 %v86, %v150
  %v154 = vmul.f32 %v87, %v150
  %v155 = vmul.f32 %v88, %v150
  %v156 = vmul.f32 %v89, %v150
  %v157 = vmul.f32 %v90, %v150
  %v158 = vmul.f32 %v91, %v150
  %v159 = vmul.f32 %v92, %v150
  %v160 = vmul.f32 %v93, %v150
  %v161 = vmul.f32 %v94, %v150
  %v162 = vmul.f32 %v95, %v150
  %v163 = vmul.f32 %v96, %v150
  %v164 = vmul.f32 %v97, %v150
  %v165 = vmul.f32 %v98, %v150
  %v166 = vmul.f32 %v99, %v150
  %v167 = vmul.f32 %v100, %v150
  %v168 = vmul.f32 %v101, %v150
  %v169 = vmul.f32 %v102, %v150
  %v170 = vmul.f32 %v103, %v150
  %v171 = vmul.f32 %v104, %v150
  %v172 = vmul.f32 %v105, %v150
  %v173 = vmul.f32 %v106, %v150
  %v174 = vmul.f32 %v107, %v150
  %v175 = vmul.f32 %v108, %v150
  %v176 = vmul.f32 %v109, %v150
  %v177 = vmul.f32 %v110, %v150
  %v178 = vmul.f32 %v111, %v150
  %v179 = vmul.f32 %v112, %v150
  %v180 = vmul.f32 %v113, %v150
  %v181 = vmul.f32 %v114, %v150
  %v182 = vmul.f32 %v115, %v150
  %v183 = vmul.f32 %v116, %v150
  %v184 = vmul.f32 %v117, %v150
  %v185 = vmul.f32 %v118, %v150
  %v186 = vmul.f32 %v119, %v150
  %v187 = vmul.f32 %v120, %v150
  %v188 = vmul.f32 %v121, %v150
  %v189 = vmul.f32 %v122, %v150
  %v190 = vmul.f32 %v123, %v150
  %v191 = vmul.f32 %v124, %v150
  %v192 = vmul.f32 %v125, %v150
  %v193 = vmul.f32 %v126, %v150
  %v194 = vmul.f32 %v127, %v150
  %v195 = vmul.f32 %v128, %v150
  %v196 = vmul.f32 %v129, %v150
  %v197 = vmul.f32 %v130, %v150
  %v198 = vmul.f32 %v131, %v150
  %v199 = vmul.f32 %v132, %v150
  %v200 = vmul.f32 %v133, %v150
  %v201 = vmul.f32 %v134, %v150
  %v202 = vmul.f32 %v135, %v150
  %v203 = vmul.f32 %v136, %v150
  %v204 = vmul.f32 %v137, %v150
  %v205 = vmul.f32 %v138, %v150
  %v206 = vmul.f32 %v139, %v150
  %v207 = vmul.f32 %v140, %v150
  %v208 = vmul.f32 %v141, %v150
  %v209 = vmul.f32 %v142, %v150
  %v210 = vmul.f32 %v143, %v150
  %v211 = vmul.f32 %v144, %v150
  %v212 = vmul.f32 %v145, %v150
  %v213 = vmul.f32 %v146, %v150
  %v214 = vmul.f32 %v147, %v150
  %v215 = vmul.f32 %v148, %v150
  %v216 = vld [vmem:[%s2] sm:$0x1]
  %v218 = vperm.slane %v216, 0
  %v220 = vadd.f32 %v152, %v218
  %v221 = vadd.f32 %v153, %v218
  %v222 = vadd.f32 %v154, %v218
  %v223 = vadd.f32 %v155, %v218
  %v224 = vadd.f32 %v156, %v218
  %v225 = vadd.f32 %v157, %v218
  %v226 = vadd.f32 %v158, %v218
  %v227 = vadd.f32 %v159, %v218
  %v228 = vadd.f32 %v160, %v218
  %v229 = vadd.f32 %v161, %v218
  %v230 = vadd.f32 %v162, %v218
  %v231 = vadd.f32 %v163, %v218
  %v232 = vadd.f32 %v164, %v218
  %v233 = vadd.f32 %v165, %v218
  %v234 = vadd.f32 %v166, %v218
  %v235 = vadd.f32 %v167, %v218
  %v236 = vadd.f32 %v168, %v218
  %v237 = vadd.f32 %v169, %v218
  %v238 = vadd.f32 %v170, %v218
  %v239 = vadd.f32 %v171, %v218
  %v240 = vadd.f32 %v172, %v218
  %v241 = vadd.f32 %v173, %v218
  %v242 = vadd.f32 %v174, %v218
  %v243 = vadd.f32 %v175, %v218
  %v244 = vadd.f32 %v176, %v218
  %v245 = vadd.f32 %v177, %v218
  %v246 = vadd.f32 %v178, %v218
  %v247 = vadd.f32 %v179, %v218
  %v248 = vadd.f32 %v180, %v218
  %v249 = vadd.f32 %v181, %v218
  %v250 = vadd.f32 %v182, %v218
  %v251 = vadd.f32 %v183, %v218
  %v252 = vadd.f32 %v184, %v218
  %v253 = vadd.f32 %v185, %v218
  %v254 = vadd.f32 %v186, %v218
  %v255 = vadd.f32 %v187, %v218
  %v256 = vadd.f32 %v188, %v218
  %v257 = vadd.f32 %v189, %v218
  %v258 = vadd.f32 %v190, %v218
  %v259 = vadd.f32 %v191, %v218
  %v260 = vadd.f32 %v192, %v218
  %v261 = vadd.f32 %v193, %v218
  %v262 = vadd.f32 %v194, %v218
  %v263 = vadd.f32 %v195, %v218
  %v264 = vadd.f32 %v196, %v218
  %v265 = vadd.f32 %v197, %v218
  %v266 = vadd.f32 %v198, %v218
  %v267 = vadd.f32 %v199, %v218
  %v268 = vadd.f32 %v200, %v218
  %v269 = vadd.f32 %v201, %v218
  %v270 = vadd.f32 %v202, %v218
  %v271 = vadd.f32 %v203, %v218
  %v272 = vadd.f32 %v204, %v218
  %v273 = vadd.f32 %v205, %v218
  %v274 = vadd.f32 %v206, %v218
  %v275 = vadd.f32 %v207, %v218
  %v276 = vadd.f32 %v208, %v218
  %v277 = vadd.f32 %v209, %v218
  %v278 = vadd.f32 %v210, %v218
  %v279 = vadd.f32 %v211, %v218
  %v280 = vadd.f32 %v212, %v218
  %v281 = vadd.f32 %v213, %v218
  %v282 = vadd.f32 %v214, %v218
  %v283 = vadd.f32 %v215, %v218
  %v284 = vmax.f32 %v220, 0.0
  %v285 = vmax.f32 %v221, 0.0
  %v286 = vmax.f32 %v222, 0.0
  %v287 = vmax.f32 %v223, 0.0
  %v288 = vmax.f32 %v224, 0.0
  %v289 = vmax.f32 %v225, 0.0
  %v290 = vmax.f32 %v226, 0.0
  %v291 = vmax.f32 %v227, 0.0
  %v292 = vmax.f32 %v228, 0.0
  %v293 = vmax.f32 %v229, 0.0
  %v294 = vmax.f32 %v230, 0.0
  %v295 = vmax.f32 %v231, 0.0
  %v296 = vmax.f32 %v232, 0.0
  %v297 = vmax.f32 %v233, 0.0
  %v298 = vmax.f32 %v234, 0.0
  %v299 = vmax.f32 %v235, 0.0
  %v300 = vmax.f32 %v236, 0.0
  %v301 = vmax.f32 %v237, 0.0
  %v302 = vmax.f32 %v238, 0.0
  %v303 = vmax.f32 %v239, 0.0
  %v304 = vmax.f32 %v240, 0.0
  %v305 = vmax.f32 %v241, 0.0
  %v306 = vmax.f32 %v242, 0.0
  %v307 = vmax.f32 %v243, 0.0
  %v308 = vmax.f32 %v244, 0.0
  %v309 = vmax.f32 %v245, 0.0
  %v310 = vmax.f32 %v246, 0.0
  %v311 = vmax.f32 %v247, 0.0
  %v312 = vmax.f32 %v248, 0.0
  %v313 = vmax.f32 %v249, 0.0
  %v314 = vmax.f32 %v250, 0.0
  %v315 = vmax.f32 %v251, 0.0
  %v316 = vmax.f32 %v252, 0.0
  %v317 = vmax.f32 %v253, 0.0
  %v318 = vmax.f32 %v254, 0.0
  %v319 = vmax.f32 %v255, 0.0
  %v320 = vmax.f32 %v256, 0.0
  %v321 = vmax.f32 %v257, 0.0
  %v322 = vmax.f32 %v258, 0.0
  %v323 = vmax.f32 %v259, 0.0
  %v324 = vmax.f32 %v260, 0.0
  %v325 = vmax.f32 %v261, 0.0
  %v326 = vmax.f32 %v262, 0.0
  %v327 = vmax.f32 %v263, 0.0
  %v328 = vmax.f32 %v264, 0.0
  %v329 = vmax.f32 %v265, 0.0
  %v330 = vmax.f32 %v266, 0.0
  %v331 = vmax.f32 %v267, 0.0
  %v332 = vmax.f32 %v268, 0.0
  %v333 = vmax.f32 %v269, 0.0
  %v334 = vmax.f32 %v270, 0.0
  %v335 = vmax.f32 %v271, 0.0
  %v336 = vmax.f32 %v272, 0.0
  %v337 = vmax.f32 %v273, 0.0
  %v338 = vmax.f32 %v274, 0.0
  %v339 = vmax.f32 %v275, 0.0
  %v340 = vmax.f32 %v276, 0.0
  %v341 = vmax.f32 %v277, 0.0
  %v342 = vmax.f32 %v278, 0.0
  %v343 = vmax.f32 %v279, 0.0
  %v344 = vmax.f32 %v280, 0.0
  %v345 = vmax.f32 %v281, 0.0
  %v346 = vmax.f32 %v282, 0.0
  %v347 = vmax.f32 %v283, 0.0
  %v348 = vpack.c.bf16 %v285, %v284
  %v349 = vpack.c.bf16 %v287, %v286
  %v350 = vpack.c.bf16 %v289, %v288
  %v351 = vpack.c.bf16 %v291, %v290
  %v352 = vpack.c.bf16 %v293, %v292
  %v353 = vpack.c.bf16 %v295, %v294
  %v354 = vpack.c.bf16 %v297, %v296
  %v355 = vpack.c.bf16 %v299, %v298
  %v356 = vpack.c.bf16 %v301, %v300
  %v357 = vpack.c.bf16 %v303, %v302
  %v358 = vpack.c.bf16 %v305, %v304
  %v359 = vpack.c.bf16 %v307, %v306
  %v360 = vpack.c.bf16 %v309, %v308
  %v361 = vpack.c.bf16 %v311, %v310
  %v362 = vpack.c.bf16 %v313, %v312
  %v363 = vpack.c.bf16 %v315, %v314
  %v364 = vpack.c.bf16 %v317, %v316
  %v365 = vpack.c.bf16 %v319, %v318
  %v366 = vpack.c.bf16 %v321, %v320
  %v367 = vpack.c.bf16 %v323, %v322
  %v368 = vpack.c.bf16 %v325, %v324
  %v369 = vpack.c.bf16 %v327, %v326
  %v370 = vpack.c.bf16 %v329, %v328
  %v371 = vpack.c.bf16 %v331, %v330
  %v372 = vpack.c.bf16 %v333, %v332
  %v373 = vpack.c.bf16 %v335, %v334
  %v374 = vpack.c.bf16 %v337, %v336
  %v375 = vpack.c.bf16 %v339, %v338
  %v376 = vpack.c.bf16 %v341, %v340
  %v377 = vpack.c.bf16 %v343, %v342
  %v378 = vpack.c.bf16 %v345, %v344
  %v379 = vpack.c.bf16 %v347, %v346
  %v380 = vld [vmem:[%s3] sm:$0xf]
  %v381 = vld [vmem:[%s3 + $0x4] sm:$0xf]
  %v382 = vld [vmem:[%s3 + $0x8] sm:$0xf]
  %v383 = vld [vmem:[%s3 + $0xc] sm:$0xf]
  %v384 = vld [vmem:[%s3 + $0x10] sm:$0xf]
  %v385 = vld [vmem:[%s3 + $0x14] sm:$0xf]
  %v386 = vld [vmem:[%s3 + $0x18] sm:$0xf]
  %v387 = vld [vmem:[%s3 + $0x1c] sm:$0xf]
  %v388 = vld [vmem:[%s3 + $0x20] sm:$0xf]
  %v389 = vld [vmem:[%s3 + $0x24] sm:$0xf]
  %v390 = vld [vmem:[%s3 + $0x28] sm:$0xf]
  %v391 = vld [vmem:[%s3 + $0x2c] sm:$0xf]
  %v392 = vld [vmem:[%s3 + $0x30] sm:$0xf]
  %v393 = vld [vmem:[%s3 + $0x34] sm:$0xf]
  %v394 = vld [vmem:[%s3 + $0x38] sm:$0xf]
  %v395 = vld [vmem:[%s3 + $0x3c] sm:$0xf]
  %v396 = vld [vmem:[%s4] sm:$0xff]
  %v397 = vld [vmem:[%s4 + $0x8] sm:$0xff]
  %v398 = vld [vmem:[%s4 + $0x10] sm:$0xff]
  %v399 = vld [vmem:[%s4 + $0x18] sm:$0xff]
  %v400 = vld [vmem:[%s4 + $0x20] sm:$0xff]
  %v401 = vld [vmem:[%s4 + $0x28] sm:$0xff]
  %v402 = vld [vmem:[%s4 + $0x30] sm:$0xff]
  %v403 = vld [vmem:[%s4 + $0x38] sm:$0xff]
  %v404 = vld [vmem:[%s4 + $0x40] sm:$0xff]
  %v405 = vld [vmem:[%s4 + $0x48] sm:$0xff]
  %v406 = vld [vmem:[%s4 + $0x50] sm:$0xff]
  %v407 = vld [vmem:[%s4 + $0x58] sm:$0xff]
  %v408 = vld [vmem:[%s4 + $0x60] sm:$0xff]
  %v409 = vld [vmem:[%s4 + $0x68] sm:$0xff]
  %v410 = vld [vmem:[%s4 + $0x70] sm:$0xff]
  %v411 = vld [vmem:[%s4 + $0x78] sm:$0xff]
  %v412 = vld [vmem:[%s4 + $0x80] sm:$0xff]
  %v413 = vld [vmem:[%s4 + $0x88] sm:$0xff]
  %v414 = vld [vmem:[%s4 + $0x90] sm:$0xff]
  %v415 = vld [vmem:[%s4 + $0x98] sm:$0xff]
  %v416 = vld [vmem:[%s4 + $0xa0] sm:$0xff]
  %v417 = vld [vmem:[%s4 + $0xa8] sm:$0xff]
  %v418 = vld [vmem:[%s4 + $0xb0] sm:$0xff]
  %v419 = vld [vmem:[%s4 + $0xb8] sm:$0xff]
  %v420 = vld [vmem:[%s4 + $0xc0] sm:$0xff]
  %v421 = vld [vmem:[%s4 + $0xc8] sm:$0xff]
  %v422 = vld [vmem:[%s4 + $0xd0] sm:$0xff]
  %v423 = vld [vmem:[%s4 + $0xd8] sm:$0xff]
  %v424 = vld [vmem:[%s4 + $0xe0] sm:$0xff]
  %v425 = vld [vmem:[%s4 + $0xe8] sm:$0xff]
  %v426 = vld [vmem:[%s4 + $0xf0] sm:$0xff]
  %v427 = vld [vmem:[%s4 + $0xf8] sm:$0xff]
  %v428 = vld [vmem:[%s4 + $0x100] sm:$0xff]
  %v429 = vld [vmem:[%s4 + $0x108] sm:$0xff]
  %v430 = vld [vmem:[%s4 + $0x110] sm:$0xff]
  %v431 = vld [vmem:[%s4 + $0x118] sm:$0xff]
  %v432 = vld [vmem:[%s4 + $0x120] sm:$0xff]
  %v433 = vld [vmem:[%s4 + $0x128] sm:$0xff]
  %v434 = vld [vmem:[%s4 + $0x130] sm:$0xff]
  %v435 = vld [vmem:[%s4 + $0x138] sm:$0xff]
  %v436 = vld [vmem:[%s4 + $0x140] sm:$0xff]
  %v437 = vld [vmem:[%s4 + $0x148] sm:$0xff]
  %v438 = vld [vmem:[%s4 + $0x150] sm:$0xff]
  %v439 = vld [vmem:[%s4 + $0x158] sm:$0xff]
  %v440 = vld [vmem:[%s4 + $0x160] sm:$0xff]
  %v441 = vld [vmem:[%s4 + $0x168] sm:$0xff]
  %v442 = vld [vmem:[%s4 + $0x170] sm:$0xff]
  %v443 = vld [vmem:[%s4 + $0x178] sm:$0xff]
  %v444 = vld [vmem:[%s4 + $0x180] sm:$0xff]
  %v445 = vld [vmem:[%s4 + $0x188] sm:$0xff]
  %v446 = vld [vmem:[%s4 + $0x190] sm:$0xff]
  %v447 = vld [vmem:[%s4 + $0x198] sm:$0xff]
  %v448 = vld [vmem:[%s4 + $0x1a0] sm:$0xff]
  %v449 = vld [vmem:[%s4 + $0x1a8] sm:$0xff]
  %v450 = vld [vmem:[%s4 + $0x1b0] sm:$0xff]
  %v451 = vld [vmem:[%s4 + $0x1b8] sm:$0xff]
  %v452 = vld [vmem:[%s4 + $0x1c0] sm:$0xff]
  %v453 = vld [vmem:[%s4 + $0x1c8] sm:$0xff]
  %v454 = vld [vmem:[%s4 + $0x1d0] sm:$0xff]
  %v455 = vld [vmem:[%s4 + $0x1d8] sm:$0xff]
  %v456 = vld [vmem:[%s4 + $0x1e0] sm:$0xff]
  %v457 = vld [vmem:[%s4 + $0x1e8] sm:$0xff]
  %v458 = vld [vmem:[%s4 + $0x1f0] sm:$0xff]
  %v459 = vld [vmem:[%s4 + $0x1f8] sm:$0xff]
  %v476 = vunpack.c.l.b16 %v380
  %v477 = vunpack.c.l.b16 %v381
  %v478 = vunpack.c.l.b16 %v382
  %v479 = vunpack.c.l.b16 %v383
  %v480 = vunpack.c.l.b16 %v384
  %v481 = vunpack.c.l.b16 %v385
  %v482 = vunpack.c.l.b16 %v386
  %v483 = vunpack.c.l.b16 %v387
  %v484 = vunpack.c.l.b16 %v388
  %v485 = vunpack.c.l.b16 %v389
  %v486 = vunpack.c.l.b16 %v390
  %v487 = vunpack.c.l.b16 %v391
  %v488 = vunpack.c.l.b16 %v392
  %v489 = vunpack.c.l.b16 %v393
  %v490 = vunpack.c.l.b16 %v394
  %v491 = vunpack.c.l.b16 %v395
  %v492 = vpack.c.b16 %v477, %v476
  %v493 = vpack.c.b16 %v479, %v478
  %v494 = vpack.c.b16 %v481, %v480
  %v495 = vpack.c.b16 %v483, %v482
  %v496 = vpack.c.b16 %v485, %v484
  %v497 = vpack.c.b16 %v487, %v486
  %v498 = vpack.c.b16 %v489, %v488
  %v499 = vpack.c.b16 %v491, %v490
  %508 = vmatpush.bf16.msra.mxu0 %v499
  %509 = vmatpush.bf16.msra.mxu0 %v498
  %510 = vmatpush.bf16.msra.mxu0 %v497
  %511 = vmatpush.bf16.msra.mxu0 %v496
  %512 = vmatpush.bf16.msra.mxu0 %v495
  %513 = vmatpush.bf16.msra.mxu0 %v494
  %514 = vmatpush.bf16.msra.mxu0 %v493
  %515 = vmatpush.bf16.msra.mxu0 %v492
  %516 = vmatmul.bf16.gmra.mxu0 %v348
  %v517 = vpop.f32.mrf.mxu0
  %v518 = vadd.f32 %v396, %v517
  %v519 = vpop.f32.mrf.mxu0
  %v520 = vadd.f32 %v397, %v519
  %521 = vmatmul.bf16.gmra.mxu0 %v349
  %v522 = vpop.f32.mrf.mxu0
  %v523 = vadd.f32 %v398, %v522
  %v524 = vpop.f32.mrf.mxu0
  %v525 = vadd.f32 %v399, %v524
  %526 = vmatmul.bf16.gmra.mxu0 %v350
  %v527 = vpop.f32.mrf.mxu0
  %v528 = vadd.f32 %v400, %v527
  %v529 = vpop.f32.mrf.mxu0
  %v530 = vadd.f32 %v401, %v529
  %531 = vmatmul.bf16.gmra.mxu0 %v351
  %v532 = vpop.f32.mrf.mxu0
  %v533 = vadd.f32 %v402, %v532
  %v534 = vpop.f32.mrf.mxu0
  %v535 = vadd.f32 %v403, %v534
  %536 = vmatmul.bf16.gmra.mxu0 %v352
  %v537 = vpop.f32.mrf.mxu0
  %v538 = vadd.f32 %v404, %v537
  %v539 = vpop.f32.mrf.mxu0
  %v540 = vadd.f32 %v405, %v539
  %541 = vmatmul.bf16.gmra.mxu0 %v353
  %v542 = vpop.f32.mrf.mxu0
  %v543 = vadd.f32 %v406, %v542
  %v544 = vpop.f32.mrf.mxu0
  %v545 = vadd.f32 %v407, %v544
  %546 = vmatmul.bf16.gmra.mxu0 %v354
  %v547 = vpop.f32.mrf.mxu0
  %v548 = vadd.f32 %v408, %v547
  %v549 = vpop.f32.mrf.mxu0
  %v550 = vadd.f32 %v409, %v549
  %551 = vmatmul.bf16.gmra.mxu0 %v355
  %v552 = vpop.f32.mrf.mxu0
  %v553 = vadd.f32 %v410, %v552
  %v554 = vpop.f32.mrf.mxu0
  %v555 = vadd.f32 %v411, %v554
  %556 = vmatmul.bf16.gmra.mxu0 %v356
  %v557 = vpop.f32.mrf.mxu0
  %v558 = vadd.f32 %v412, %v557
  %v559 = vpop.f32.mrf.mxu0
  %v560 = vadd.f32 %v413, %v559
  %561 = vmatmul.bf16.gmra.mxu0 %v357
  %v562 = vpop.f32.mrf.mxu0
  %v563 = vadd.f32 %v414, %v562
  %v564 = vpop.f32.mrf.mxu0
  %v565 = vadd.f32 %v415, %v564
  %566 = vmatmul.bf16.gmra.mxu0 %v358
  %v567 = vpop.f32.mrf.mxu0
  %v568 = vadd.f32 %v416, %v567
  %v569 = vpop.f32.mrf.mxu0
  %v570 = vadd.f32 %v417, %v569
  %571 = vmatmul.bf16.gmra.mxu0 %v359
  %v572 = vpop.f32.mrf.mxu0
  %v573 = vadd.f32 %v418, %v572
  %v574 = vpop.f32.mrf.mxu0
  %v575 = vadd.f32 %v419, %v574
  %576 = vmatmul.bf16.gmra.mxu0 %v360
  %v577 = vpop.f32.mrf.mxu0
  %v578 = vadd.f32 %v420, %v577
  %v579 = vpop.f32.mrf.mxu0
  %v580 = vadd.f32 %v421, %v579
  %581 = vmatmul.bf16.gmra.mxu0 %v361
  %v582 = vpop.f32.mrf.mxu0
  %v583 = vadd.f32 %v422, %v582
  %v584 = vpop.f32.mrf.mxu0
  %v585 = vadd.f32 %v423, %v584
  %586 = vmatmul.bf16.gmra.mxu0 %v362
  %v587 = vpop.f32.mrf.mxu0
  %v588 = vadd.f32 %v424, %v587
  %v589 = vpop.f32.mrf.mxu0
  %v590 = vadd.f32 %v425, %v589
  %591 = vmatmul.bf16.gmra.mxu0 %v363
  %v592 = vpop.f32.mrf.mxu0
  %v593 = vadd.f32 %v426, %v592
  %v594 = vpop.f32.mrf.mxu0
  %v595 = vadd.f32 %v427, %v594
  %596 = vmatmul.bf16.gmra.mxu0 %v364
  %v597 = vpop.f32.mrf.mxu0
  %v598 = vadd.f32 %v428, %v597
  %v599 = vpop.f32.mrf.mxu0
  %v600 = vadd.f32 %v429, %v599
  %601 = vmatmul.bf16.gmra.mxu0 %v365
  %v602 = vpop.f32.mrf.mxu0
  %v603 = vadd.f32 %v430, %v602
  %v604 = vpop.f32.mrf.mxu0
  %v605 = vadd.f32 %v431, %v604
  %606 = vmatmul.bf16.gmra.mxu0 %v366
  %v607 = vpop.f32.mrf.mxu0
  %v608 = vadd.f32 %v432, %v607
  %v609 = vpop.f32.mrf.mxu0
  %v610 = vadd.f32 %v433, %v609
  %611 = vmatmul.bf16.gmra.mxu0 %v367
  %v612 = vpop.f32.mrf.mxu0
  %v613 = vadd.f32 %v434, %v612
  %v614 = vpop.f32.mrf.mxu0
  %v615 = vadd.f32 %v435, %v614
  %616 = vmatmul.bf16.gmra.mxu0 %v368
  %v617 = vpop.f32.mrf.mxu0
  %v618 = vadd.f32 %v436, %v617
  %v619 = vpop.f32.mrf.mxu0
  %v620 = vadd.f32 %v437, %v619
  %621 = vmatmul.bf16.gmra.mxu0 %v369
  %v622 = vpop.f32.mrf.mxu0
  %v623 = vadd.f32 %v438, %v622
  %v624 = vpop.f32.mrf.mxu0
  %v625 = vadd.f32 %v439, %v624
  %626 = vmatmul.bf16.gmra.mxu0 %v370
  %v627 = vpop.f32.mrf.mxu0
  %v628 = vadd.f32 %v440, %v627
  %v629 = vpop.f32.mrf.mxu0
  %v630 = vadd.f32 %v441, %v629
  %631 = vmatmul.bf16.gmra.mxu0 %v371
  %v632 = vpop.f32.mrf.mxu0
  %v633 = vadd.f32 %v442, %v632
  %v634 = vpop.f32.mrf.mxu0
  %v635 = vadd.f32 %v443, %v634
  %636 = vmatmul.bf16.gmra.mxu0 %v372
  %v637 = vpop.f32.mrf.mxu0
  %v638 = vadd.f32 %v444, %v637
  %v639 = vpop.f32.mrf.mxu0
  %v640 = vadd.f32 %v445, %v639
  %641 = vmatmul.bf16.gmra.mxu0 %v373
  %v642 = vpop.f32.mrf.mxu0
  %v643 = vadd.f32 %v446, %v642
  %v644 = vpop.f32.mrf.mxu0
  %v645 = vadd.f32 %v447, %v644
  %646 = vmatmul.bf16.gmra.mxu0 %v374
  %v647 = vpop.f32.mrf.mxu0
  %v648 = vadd.f32 %v448, %v647
  %v649 = vpop.f32.mrf.mxu0
  %v650 = vadd.f32 %v449, %v649
  %651 = vmatmul.bf16.gmra.mxu0 %v375
  %v652 = vpop.f32.mrf.mxu0
  %v653 = vadd.f32 %v450, %v652
  %v654 = vpop.f32.mrf.mxu0
  %v655 = vadd.f32 %v451, %v654
  %656 = vmatmul.bf16.gmra.mxu0 %v376
  %v657 = vpop.f32.mrf.mxu0
  %v658 = vadd.f32 %v452, %v657
  %v659 = vpop.f32.mrf.mxu0
  %v660 = vadd.f32 %v453, %v659
  %661 = vmatmul.bf16.gmra.mxu0 %v377
  %v662 = vpop.f32.mrf.mxu0
  %v663 = vadd.f32 %v454, %v662
  %v664 = vpop.f32.mrf.mxu0
  %v665 = vadd.f32 %v455, %v664
  %666 = vmatmul.bf16.gmra.mxu0 %v378
  %v667 = vpop.f32.mrf.mxu0
  %v668 = vadd.f32 %v456, %v667
  %v669 = vpop.f32.mrf.mxu0
  %v670 = vadd.f32 %v457, %v669
  %671 = vmatmul.bf16.gmra.mxu0 %v379
  %v672 = vpop.f32.mrf.mxu0
  %v673 = vadd.f32 %v458, %v672
  %v674 = vpop.f32.mrf.mxu0
  %v675 = vadd.f32 %v459, %v674
  %676 = vdwg.mxu0
  %677 = vst [vmem:[%s5] sm:$0xff] %v518
  %678 = vst [vmem:[%s5 + $0x8] sm:$0xff] %v520
  %679 = vst [vmem:[%s5 + $0x10] sm:$0xff] %v523
  %680 = vst [vmem:[%s5 + $0x18] sm:$0xff] %v525
  %681 = vst [vmem:[%s5 + $0x20] sm:$0xff] %v528
  %682 = vst [vmem:[%s5 + $0x28] sm:$0xff] %v530
  %683 = vst [vmem:[%s5 + $0x30] sm:$0xff] %v533
  %684 = vst [vmem:[%s5 + $0x38] sm:$0xff] %v535
  %685 = vst [vmem:[%s5 + $0x40] sm:$0xff] %v538
  %686 = vst [vmem:[%s5 + $0x48] sm:$0xff] %v540
  %687 = vst [vmem:[%s5 + $0x50] sm:$0xff] %v543
  %688 = vst [vmem:[%s5 + $0x58] sm:$0xff] %v545
  %689 = vst [vmem:[%s5 + $0x60] sm:$0xff] %v548
  %690 = vst [vmem:[%s5 + $0x68] sm:$0xff] %v550
  %691 = vst [vmem:[%s5 + $0x70] sm:$0xff] %v553
  %692 = vst [vmem:[%s5 + $0x78] sm:$0xff] %v555
  %693 = vst [vmem:[%s5 + $0x80] sm:$0xff] %v558
  %694 = vst [vmem:[%s5 + $0x88] sm:$0xff] %v560
  %695 = vst [vmem:[%s5 + $0x90] sm:$0xff] %v563
  %696 = vst [vmem:[%s5 + $0x98] sm:$0xff] %v565
  %697 = vst [vmem:[%s5 + $0xa0] sm:$0xff] %v568
  %698 = vst [vmem:[%s5 + $0xa8] sm:$0xff] %v570
  %699 = vst [vmem:[%s5 + $0xb0] sm:$0xff] %v573
  %700 = vst [vmem:[%s5 + $0xb8] sm:$0xff] %v575
  %701 = vst [vmem:[%s5 + $0xc0] sm:$0xff] %v578
  %702 = vst [vmem:[%s5 + $0xc8] sm:$0xff] %v580
  %703 = vst [vmem:[%s5 + $0xd0] sm:$0xff] %v583
  %704 = vst [vmem:[%s5 + $0xd8] sm:$0xff] %v585
  %705 = vst [vmem:[%s5 + $0xe0] sm:$0xff] %v588
  %706 = vst [vmem:[%s5 + $0xe8] sm:$0xff] %v590
  %707 = vst [vmem:[%s5 + $0xf0] sm:$0xff] %v593
  %708 = vst [vmem:[%s5 + $0xf8] sm:$0xff] %v595
  %709 = vst [vmem:[%s5 + $0x100] sm:$0xff] %v598
  %710 = vst [vmem:[%s5 + $0x108] sm:$0xff] %v600
  %711 = vst [vmem:[%s5 + $0x110] sm:$0xff] %v603
  %712 = vst [vmem:[%s5 + $0x118] sm:$0xff] %v605
  %713 = vst [vmem:[%s5 + $0x120] sm:$0xff] %v608
  %714 = vst [vmem:[%s5 + $0x128] sm:$0xff] %v610
  %715 = vst [vmem:[%s5 + $0x130] sm:$0xff] %v613
  %716 = vst [vmem:[%s5 + $0x138] sm:$0xff] %v615
  %717 = vst [vmem:[%s5 + $0x140] sm:$0xff] %v618
  %718 = vst [vmem:[%s5 + $0x148] sm:$0xff] %v620
  %719 = vst [vmem:[%s5 + $0x150] sm:$0xff] %v623
  %720 = vst [vmem:[%s5 + $0x158] sm:$0xff] %v625
  %721 = vst [vmem:[%s5 + $0x160] sm:$0xff] %v628
  %722 = vst [vmem:[%s5 + $0x168] sm:$0xff] %v630
  %723 = vst [vmem:[%s5 + $0x170] sm:$0xff] %v633
  %724 = vst [vmem:[%s5 + $0x178] sm:$0xff] %v635
  %725 = vst [vmem:[%s5 + $0x180] sm:$0xff] %v638
  %726 = vst [vmem:[%s5 + $0x188] sm:$0xff] %v640
  %727 = vst [vmem:[%s5 + $0x190] sm:$0xff] %v643
  %728 = vst [vmem:[%s5 + $0x198] sm:$0xff] %v645
  %729 = vst [vmem:[%s5 + $0x1a0] sm:$0xff] %v648
  %730 = vst [vmem:[%s5 + $0x1a8] sm:$0xff] %v650
  %731 = vst [vmem:[%s5 + $0x1b0] sm:$0xff] %v653
  %732 = vst [vmem:[%s5 + $0x1b8] sm:$0xff] %v655
  %733 = vst [vmem:[%s5 + $0x1c0] sm:$0xff] %v658
  %734 = vst [vmem:[%s5 + $0x1c8] sm:$0xff] %v660
  %735 = vst [vmem:[%s5 + $0x1d0] sm:$0xff] %v663
  %736 = vst [vmem:[%s5 + $0x1d8] sm:$0xff] %v665
  %737 = vst [vmem:[%s5 + $0x1e0] sm:$0xff] %v668
  %738 = vst [vmem:[%s5 + $0x1e8] sm:$0xff] %v670
  %739 = vst [vmem:[%s5 + $0x1f0] sm:$0xff] %v673
  %740 = vst [vmem:[%s5 + $0x1f8] sm:$0xff] %v675
  // Predicated region
  $region22: #{bottleneck_v2_forward.7} parent=0 // pred_check
    _
  $region23: #{bottleneck_v2_forward.7} parent=0 // pred_check_branch
    %742 = sbr.rel (0) target = $region25
  $region24: #{bottleneck_v2_forward.7} parent=0 // pred_region
    _
  $region25: #{bottleneck_v2_forward.7} parent=0 // pred_fallthru
    _
  // Predicated region
  $region26: #{bottleneck_v2_forward.7} parent=0 // pred_check
    _
  $region27: #{bottleneck_v2_forward.7} parent=0 // pred_check_branch
    %744 = sbr.rel (0) target = $region29
  $region28: #{bottleneck_v2_forward.7} parent=0 // pred_region
    _
  $region29: #{bottleneck_v2_forward.7} parent=0 // pred_fallthru
    _

// kernel: bottleneck_v2_forward.6
$region0: #{bottleneck_v2_forward.6}
  #allocation0 [shape = 'u32[]', space=smem, size = 0x4, offset = 0x4, fixed_abs, tag = 'smem constant byte address 0x4 - core index']
  #allocation1 [shape = 'u32[72,128]{1,0:T(1,128)}', space=vmem, size = 0x9000, scoped, tag = 'internal scratch']
  #allocation2 [shape = 'f32[304,128]{1,0:T(8,128)}', space=vmem, size = 0x26000, scoped, tag = 'scratch operand']
  #allocation3 [shape = 'bf16[288,384]{1,0:T(8,128)(2,1)}', space=vmem, size = 0x36000, scoped, tag = 'scratch operand']
  #allocation4 [shape = 'f32[256,128]{1,0:T(8,128)}', space=vmem, size = 0x20000, scoped, tag = 'scratch operand']
  %s0 = inlined_call_operand.vmem [shape: bf16[2,256,128], index: 0, kind: input, shape index: {}]
  %s1 = inlined_call_operand.vmem [shape: f32[1,128], index: 1, kind: input, shape index: {}]
  %s2 = inlined_call_operand.vmem [shape: f32[1,128], index: 2, kind: input, shape index: {}]
  %s3 = inlined_call_operand.vmem [shape: bf16[3,384,128], index: 3, kind: input, shape index: {}]
  %s4 = inlined_call_operand.vmem [shape: bf16[2,256,128], index: 4, kind: output, shape index: {0}]
  %s5 = inlined_call_operand.vmem [shape: f32[2,1,1,128], index: 5, kind: output, shape index: {1}]
  %s6 = inlined_call_operand.vmem [shape: f32[2,1,1,128], index: 6, kind: output, shape index: {2}]
  %7 = xla_tuple %s4, %s5, %s6
  %s8 = sld [smem:[#allocation0]]
  $region65: #{bottleneck_v2_forward.6} parent=0
    _
  %s10 = ssub.s32 1, %s8
  %s11 = scalar_select 0, %s10, %s8
  loop: start=0, step=1, limit=4
  $region2: #{bottleneck_v2_forward.6} parent=0 // loop_pre_header
    _
  $region3: #{bottleneck_v2_forward.6} parent=0 // loop_header
    %s13 = sphi 0, %s17
    %p14 = scmp.ge.s32.totalorder %s13, 4
    %s20 = sphi 0, %s32
    %s21 = sphi 0, %s28
    %s22 = sphi 0, %s20
    %s23 = sphi 0, %s21
    %s24 = sphi 0, %s22
    %s25 = sphi 0, %s23
    %s35 = sphi 0, %s37
    %s38 = sphi 0, %s35
    %s39 = sphi 0, %s38
    %s55 = sphi 0, %s39
    %s59 = sphi 0, %s59
    %s61 = sphi 0, %s59
    %s62 = sphi 0, %s61
    %s76 = sphi 0, %s62
    %s80 = sphi 0, %s80
    %s82 = sphi 0, %s80
    %s83 = sphi 0, %s82
    %s97 = sphi 0, %s83
    %s101 = sphi 0, %s101
    %s103 = sphi 0, %s101
    %s104 = sphi 0, %s103
    %s118 = sphi 0, %s104
    %s126 = sphi 0, %s128
    %s129 = sphi 0, %s126
    %s130 = sphi 0, %s129
    %s146 = sphi 0, %s130
    %s154 = sphi 0, %s156
    %s157 = sphi 0, %s154
    %s158 = sphi 0, %s157
    %s174 = sphi 0, %s158
    %s182 = sphi 0, %s184
    %s185 = sphi 0, %s182
    %s186 = sphi 0, %s185
    %s202 = sphi 0, %s186
  $region4: #{bottleneck_v2_forward.6} parent=0 // loop_header_branch
    %16 = sbr.rel (%p14) target = $region8
  $region5: #{bottleneck_v2_forward.6} parent=0 // loop_body
    %s18 = ssub.s32 %s13, 1
    %s19 = ssub.s32 %s13, 2
    %s26 = sadd.s32 1, %s21
    %p27 = scmp.ge.s32.totalorder %s26, 1
    %s28 = scalar_select %p27, 0, %s26
    %s29 = sadd.s32 1, %s20
    %s30 = scalar_select %p27, %s29, %s20
    %p31 = scmp.ge.s32.totalorder %s30, 2
    %s32 = scalar_select %p31, 0, %s30
    %s33 = ssub.s32 %s20, %s32
    %p34 = scmp.eq.s32.totalorder %s33, 0
    %s36 = sadd.s32 %s35, 1
    %s37 = scalar_select %p34, %s35, %s36
    %p40 = pneg %p34
    %p41 = scmp.eq.s32.totalorder %s13, 1
    %p42 = por %p40, %p41
    %p43 = scmp.ne.s32.totalorder %s35, %s38
    %p44 = scmp.eq.s32.totalorder %s13, 0
    %p45 = por %p43, %p44
    %p46 = scmp.ne.s32.totalorder %s35, %s38
    %p47 = scmp.eq.s32.totalorder %s18, 1
    %p48 = por %p46, %p47
    %p49 = scmp.ne.s32.totalorder %s38, %s39
    %p50 = scmp.eq.s32.totalorder %s18, 0
    %p51 = por %p49, %p50
    %p52 = scmp.ne.s32.totalorder %s38, %s39
    %p53 = scmp.eq.s32.totalorder %s19, 1
    %p54 = por %p52, %p53
    %p56 = scmp.ne.s32.totalorder %s39, %s55
    %p57 = scmp.eq.s32.totalorder %s19, 0
    %p58 = por %p56, %p57
    %s60 = sadd.s32 %s59, 1
    %p63 = scmp.eq.s32.totalorder %s13, 1
    %p64 = scmp.ne.s32.totalorder %s59, %s61
    %p65 = scmp.eq.s32.totalorder %s13, 0
    %p66 = por %p64, %p65
    %p67 = scmp.ne.s32.totalorder %s59, %s61
    %p68 = scmp.eq.s32.totalorder %s18, 1
    %p69 = por %p67, %p68
    %p70 = scmp.ne.s32.totalorder %s61, %s62
    %p71 = scmp.eq.s32.totalorder %s18, 0
    %p72 = por %p70, %p71
    %p73 = scmp.ne.s32.totalorder %s61, %s62
    %p74 = scmp.eq.s32.totalorder %s19, 1
    %p75 = por %p73, %p74
    %p77 = scmp.ne.s32.totalorder %s62, %s76
    %p78 = scmp.eq.s32.totalorder %s19, 0
    %p79 = por %p77, %p78
    %s81 = sadd.s32 %s80, 1
    %p84 = scmp.eq.s32.totalorder %s13, 1
    %p85 = scmp.ne.s32.totalorder %s80, %s82
    %p86 = scmp.eq.s32.totalorder %s13, 0
    %p87 = por %p85, %p86
    %p88 = scmp.ne.s32.totalorder %s80, %s82
    %p89 = scmp.eq.s32.totalorder %s18, 1
    %p90 = por %p88, %p89
    %p91 = scmp.ne.s32.totalorder %s82, %s83
    %p92 = scmp.eq.s32.totalorder %s18, 0
    %p93 = por %p91, %p92
    %p94 = scmp.ne.s32.totalorder %s82, %s83
    %p95 = scmp.eq.s32.totalorder %s19, 1
    %p96 = por %p94, %p95
    %p98 = scmp.ne.s32.totalorder %s83, %s97
    %p99 = scmp.eq.s32.totalorder %s19, 0
    %p100 = por %p98, %p99
    %s102 = sadd.s32 %s101, 1
    %p105 = scmp.eq.s32.totalorder %s13, 1
    %p106 = scmp.ne.s32.totalorder %s101, %s103
    %p107 = scmp.eq.s32.totalorder %s13, 0
    %p108 = por %p106, %p107
    %p109 = scmp.ne.s32.totalorder %s101, %s103
    %p110 = scmp.eq.s32.totalorder %s18, 1
    %p111 = por %p109, %p110
    %p112 = scmp.ne.s32.totalorder %s103, %s104
    %p113 = scmp.eq.s32.totalorder %s18, 0
    %p114 = por %p112, %p113
    %p115 = scmp.ne.s32.totalorder %s103, %s104
    %p116 = scmp.eq.s32.totalorder %s19, 1
    %p117 = por %p115, %p116
    %p119 = scmp.ne.s32.totalorder %s104, %s118
    %p120 = scmp.eq.s32.totalorder %s19, 0
    %p121 = por %p119, %p120
    %s122 = ssub.s32 %s20, %s32
    %s123 = ssub.s32 %s21, %s28
    %s124 = sor.u32 %s122, %s123
    %p125 = scmp.eq.s32.totalorder %s124, 0
    %s127 = sadd.s32 %s126, 1
    %s128 = scalar_select %p125, %s126, %s127
    %p131 = pneg %p125
    %p132 = scmp.eq.s32.totalorder %s13, 1
    %p133 = por %p131, %p132
    %p134 = scmp.ne.s32.totalorder %s126, %s129
    %p135 = scmp.eq.s32.totalorder %s13, 0
    %p136 = por %p134, %p135
    %p137 = scmp.ne.s32.totalorder %s126, %s129
    %p138 = scmp.eq.s32.totalorder %s18, 1
    %p139 = por %p137, %p138
    %p140 = scmp.ne.s32.totalorder %s129, %s130
    %p141 = scmp.eq.s32.totalorder %s18, 0
    %p142 = por %p140, %p141
    %p143 = scmp.ne.s32.totalorder %s129, %s130
    %p144 = scmp.eq.s32.totalorder %s19, 1
    %p145 = por %p143, %p144
    %p147 = scmp.ne.s32.totalorder %s130, %s146
    %p148 = scmp.eq.s32.totalorder %s19, 0
    %p149 = por %p147, %p148
    %s150 = ssub.s32 %s20, %s32
    %s151 = ssub.s32 %s21, %s28
    %s152 = sor.u32 %s150, %s151
    %p153 = scmp.eq.s32.totalorder %s152, 0
    %s155 = sadd.s32 %s154, 1
    %s156 = scalar_select %p153, %s154, %s155
    %p159 = pneg %p153
    %p160 = scmp.eq.s32.totalorder %s13, 1
    %p161 = por %p159, %p160
    %p162 = scmp.ne.s32.totalorder %s154, %s157
    %p163 = scmp.eq.s32.totalorder %s13, 0
    %p164 = por %p162, %p163
    %p165 = scmp.ne.s32.totalorder %s154, %s157
    %p166 = scmp.eq.s32.totalorder %s18, 1
    %p167 = por %p165, %p166
    %p168 = scmp.ne.s32.totalorder %s157, %s158
    %p169 = scmp.eq.s32.totalorder %s18, 0
    %p170 = por %p168, %p169
    %p171 = scmp.ne.s32.totalorder %s157, %s158
    %p172 = scmp.eq.s32.totalorder %s19, 1
    %p173 = por %p171, %p172
    %p175 = scmp.ne.s32.totalorder %s158, %s174
    %p176 = scmp.eq.s32.totalorder %s19, 0
    %p177 = por %p175, %p176
    %s178 = ssub.s32 %s20, %s32
    %s179 = ssub.s32 %s21, %s28
    %s180 = sor.u32 %s178, %s179
    %p181 = scmp.eq.s32.totalorder %s180, 0
    %s183 = sadd.s32 %s182, 1
    %s184 = scalar_select %p181, %s182, %s183
    %p187 = pneg %p181
    %p188 = scmp.eq.s32.totalorder %s13, 1
    %p189 = por %p187, %p188
    %p190 = scmp.ne.s32.totalorder %s182, %s185
    %p191 = scmp.eq.s32.totalorder %s13, 0
    %p192 = por %p190, %p191
    %p193 = scmp.ne.s32.totalorder %s182, %s185
    %p194 = scmp.eq.s32.totalorder %s18, 1
    %p195 = por %p193, %p194
    %p196 = scmp.ne.s32.totalorder %s185, %s186
    %p197 = scmp.eq.s32.totalorder %s18, 0
    %p198 = por %p196, %p197
    %p199 = scmp.ne.s32.totalorder %s185, %s186
    %p200 = scmp.eq.s32.totalorder %s19, 1
    %p201 = por %p199, %p200
    %p203 = scmp.ne.s32.totalorder %s186, %s202
    %p204 = scmp.eq.s32.totalorder %s19, 0
    %p205 = por %p203, %p204
    %p206 = scmp.le.s32.totalorder 1, %s13
    %p207 = scmp.lt.s32.totalorder %s13, 3
    %p208 = pnand %p206, %p207
    %p209 = pneg %p208
    // Predicated region
    $region9: #{bottleneck_v2_forward.6} parent=5 // pred_check
      _
    $region10: #{bottleneck_v2_forward.6} parent=5 // pred_check_branch
      %211 = sbr.rel (%p208) target = $region12
    $region11: #{bottleneck_v2_forward.6} parent=5 // pred_region
      %s212 = ssub.s32 %s13, 1
      // Predicated region
      $region13: #{bottleneck_v2_forward.6} parent=11 // pred_check
        %p213 = pneg %p72
      $region14: #{bottleneck_v2_forward.6} parent=11 // pred_check_branch
        %215 = sbr.rel (%p213) target = $region16
      $region15: #{bottleneck_v2_forward.6} parent=11 // pred_region
        _
      $region16: #{bottleneck_v2_forward.6} parent=11 // pred_fallthru
        _
      // Predicated region
      $region17: #{bottleneck_v2_forward.6} parent=11 // pred_check
        %p216 = pneg %p93
      $region18: #{bottleneck_v2_forward.6} parent=11 // pred_check_branch
        %218 = sbr.rel (%p216) target = $region20
      $region19: #{bottleneck_v2_forward.6} parent=11 // pred_region
        _
      $region20: #{bottleneck_v2_forward.6} parent=11 // pred_fallthru
        _
      // Predicated region
      $region21: #{bottleneck_v2_forward.6} parent=11 // pred_check
        %p219 = pneg %p114
      $region22: #{bottleneck_v2_forward.6} parent=11 // pred_check_branch
        %221 = sbr.rel (%p219) target = $region24
      $region23: #{bottleneck_v2_forward.6} parent=11 // pred_region
        _
      $region24: #{bottleneck_v2_forward.6} parent=11 // pred_fallthru
        _
    $region12: #{bottleneck_v2_forward.6} parent=5 // pred_fallthru
      _
    %p222 = scmp.lt.s32.totalorder %s13, 2
    // Predicated region
    $region25: #{bottleneck_v2_forward.6} parent=5 // pred_check
      %p223 = pneg %p222
    $region26: #{bottleneck_v2_forward.6} parent=5 // pred_check_branch
      %225 = sbr.rel (%p223) target = $region28
    $region27: #{bottleneck_v2_forward.6} parent=5 // pred_region
      // Predicated region
      $region29: #{bottleneck_v2_forward.6} parent=27 // pred_check
        %p226 = pneg %p45
      $region30: #{bottleneck_v2_forward.6} parent=27 // pred_check_branch
        %228 = sbr.rel (%p226) target = $region32
      $region31: #{bottleneck_v2_forward.6} parent=27 // pred_region
        %p229 = scmp.lt.s32.totalorder %s20, 1
        %s230 = scalar_select %p229, %s20, 1
        %s231 = smul.addr %s230, 32
        %s232 = smul.addr %s231, 4
        %s233 = scalar_lea.vmem %s0, %s232
      $region32: #{bottleneck_v2_forward.6} parent=27 // pred_fallthru
        _
    $region28: #{bottleneck_v2_forward.6} parent=5 // pred_fallthru
      _
    %p234 = scmp.le.s32.totalorder 1, %s13
    %p235 = scmp.lt.s32.totalorder %s13, 3
    %p236 = pnand %p234, %p235
    %p237 = pneg %p236
    // Predicated region
    $region33: #{bottleneck_v2_forward.6} parent=5 // pred_check
      _
    $region34: #{bottleneck_v2_forward.6} parent=5 // pred_check_branch
      %239 = sbr.rel (%p236) target = $region36
    $region35: #{bottleneck_v2_forward.6} parent=5 // pred_region
      %s240 = ssub.s32 %s13, 1
      %p241 = scmp.lt.s32.totalorder %s22, 1
      %s242 = scalar_select %p241, %s22, 1
      %s243 = smul.addr %s242, 32
      %s244 = smul.addr %s243, 4
      %s245 = scalar_lea.vmem %s0, %s244
      %p246 = pneg %p51
      %p247 = pneg %p48
      %p248 = pneg %p72
      %p249 = pneg %p69
      %p250 = pneg %p93
      %p251 = pneg %p90
      %p252 = pneg %p114
      %p253 = pneg %p111
      %p254 = pneg %p142
      %p255 = pneg %p139
      %s256 = smul.u32 32, %s23
      %p257 = scmp.lt.s32.totalorder %s22, 1
      %s258 = scalar_select %p257, %s22, 1
      %p259 = scmp.lt.s32.totalorder %s256, 31
      %s260 = scalar_select %p259, %s256, 31
      %s261 = smul.addr %s258, 32
      %s262 = sadd.s32 %s260, %s261
      %s263 = smul.addr %s262, 4
      %s264 = scalar_lea.vmem %s4, %s263
      %p265 = pneg %p170
      %p266 = pneg %p167
      %p267 = scmp.lt.s32.totalorder %s22, 1
      %s268 = scalar_select %p267, %s22, 1
      %p269 = scmp.lt.s32.totalorder %s23, 0
      %s270 = scalar_select %p269, %s23, 0
      %s271 = sadd.s32 %s270, %s268
      %s272 = scalar_lea.vmem %s5, %s271
      %p273 = pneg %p198
      %p274 = pneg %p195
      %p275 = scmp.lt.s32.totalorder %s22, 1
      %s276 = scalar_select %p275, %s22, 1
      %p277 = scmp.lt.s32.totalorder %s23, 0
      %s278 = scalar_select %p277, %s23, 0
      %s279 = sadd.s32 %s278, %s276
      %s280 = scalar_lea.vmem %s6, %s279
      %p281 = scmp.lt.s32.totalorder %s22, 1
      %s282 = scalar_select %p281, %s22, 1
      %s283 = smul.addr %s282, 32
      %s284 = smul.addr %s283, 4
      %s285 = scalar_lea.vmem %s0, %s284
      %s286 = smul.u32 32, %s23
      %p287 = scmp.lt.s32.totalorder %s22, 1
      %s288 = scalar_select %p287, %s22, 1
      %p289 = scmp.lt.s32.totalorder %s286, 31
      %s290 = scalar_select %p289, %s286, 31
      %s291 = smul.addr %s288, 32
      %s292 = sadd.s32 %s290, %s291
      %s293 = smul.addr %s292, 4
      %s294 = scalar_lea.vmem %s4, %s293
      %s295 = smul.u32 32, %s23
      %p296 = scmp.lt.s32.totalorder %s22, 1
      %s297 = scalar_select %p296, %s22, 1
      %p298 = scmp.lt.s32.totalorder %s23, 0
      %s299 = scalar_select %p298, %s23, 0
      %s300 = sadd.s32 %s299, %s297
      %s301 = scalar_lea.vmem %s5, %s300
      %p302 = scmp.lt.s32.totalorder %s22, 1
      %s303 = scalar_select %p302, %s22, 1
      %p304 = scmp.lt.s32.totalorder %s23, 0
      %s305 = scalar_select %p304, %s23, 0
      %s306 = sadd.s32 %s305, %s303
      %s307 = scalar_lea.vmem %s6, %s306
      %s308 = smul.u32 %s23, 16
      %v309 = vld [vmem:[%s1] sm:$0x1]
      %v310 = vld [vmem:[%s2] sm:$0x1]
      %s311 = smul.u32 %s23, 256
      %s312 = ssub.s32 %s308, 1
      %p313 = scmp.gt.s32.totalorder %s312, 0
      %s314 = scalar_select %p313, %s312, 0
      %s315 = smul.u32 %s314, 16
      %s316 = sadd.s32 %s308, 16
      %p317 = scmp.lt.s32.totalorder %s316, 15
      %s318 = scalar_select %p317, %s316, 15
      %s319 = smul.u32 %s318, 16
      %s320 = sshra.s32 %s311, 3
      %s321 = sand.u32 %s311, 7
      %s322 = smul.addr %s320, 4
      %s323 = scalar_lea.vmem %s285, %s322
      %v324 = vld [vmem:[%s323] sm:$0xf]
      %v325 = vld [vmem:[%s323 + $0x4] sm:$0xf]
      %v326 = vld [vmem:[%s323 + $0x8] sm:$0xf]
      %v327 = vld [vmem:[%s323 + $0xc] sm:$0xf]
      %v328 = vld [vmem:[%s323 + $0x10] sm:$0xf]
      %v329 = vld [vmem:[%s323 + $0x14] sm:$0xf]
      %v330 = vld [vmem:[%s323 + $0x18] sm:$0xf]
      %v331 = vld [vmem:[%s323 + $0x1c] sm:$0xf]
      %v332 = vld [vmem:[%s323 + $0x20] sm:$0xf]
      %v333 = vld [vmem:[%s323 + $0x24] sm:$0xf]
      %v334 = vld [vmem:[%s323 + $0x28] sm:$0xf]
      %v335 = vld [vmem:[%s323 + $0x2c] sm:$0xf]
      %v336 = vld [vmem:[%s323 + $0x30] sm:$0xf]
      %v337 = vld [vmem:[%s323 + $0x34] sm:$0xf]
      %v338 = vld [vmem:[%s323 + $0x38] sm:$0xf]
      %v339 = vld [vmem:[%s323 + $0x3c] sm:$0xf]
      %v340 = vld [vmem:[%s323 + $0x40] sm:$0xf]
      %v341 = vld [vmem:[%s323 + $0x44] sm:$0xf]
      %v342 = vld [vmem:[%s323 + $0x48] sm:$0xf]
      %v343 = vld [vmem:[%s323 + $0x4c] sm:$0xf]
      %v344 = vld [vmem:[%s323 + $0x50] sm:$0xf]
      %v345 = vld [vmem:[%s323 + $0x54] sm:$0xf]
      %v346 = vld [vmem:[%s323 + $0x58] sm:$0xf]
      %v347 = vld [vmem:[%s323 + $0x5c] sm:$0xf]
      %v348 = vld [vmem:[%s323 + $0x60] sm:$0xf]
      %v349 = vld [vmem:[%s323 + $0x64] sm:$0xf]
      %v350 = vld [vmem:[%s323 + $0x68] sm:$0xf]
      %v351 = vld [vmem:[%s323 + $0x6c] sm:$0xf]
      %v352 = vld [vmem:[%s323 + $0x70] sm:$0xf]
      %v353 = vld [vmem:[%s323 + $0x74] sm:$0xf]
      %v354 = vld [vmem:[%s323 + $0x78] sm:$0xf]
      %v355 = vld [vmem:[%s323 + $0x7c] sm:$0xf]
      %v356 = vunpack.c.l.bf16 %v324
      %v357 = vunpack.c.l.bf16 %v325
      %v358 = vunpack.c.l.bf16 %v326
      %v359 = vunpack.c.l.bf16 %v327
      %v360 = vunpack.c.l.bf16 %v328
      %v361 = vunpack.c.l.bf16 %v329
      %v362 = vunpack.c.l.bf16 %v330
      %v363 = vunpack.c.l.bf16 %v331
      %v364 = vunpack.c.l.bf16 %v332
      %v365 = vunpack.c.l.bf16 %v333
      %v366 = vunpack.c.l.bf16 %v334
      %v367 = vunpack.c.l.bf16 %v335
      %v368 = vunpack.c.l.bf16 %v336
      %v369 = vunpack.c.l.bf16 %v337
      %v370 = vunpack.c.l.bf16 %v338
      %v371 = vunpack.c.l.bf16 %v339
      %v372 = vunpack.c.l.bf16 %v340
      %v373 = vunpack.c.l.bf16 %v341
      %v374 = vunpack.c.l.bf16 %v342
      %v375 = vunpack.c.l.bf16 %v343
      %v376 = vunpack.c.l.bf16 %v344
      %v377 = vunpack.c.l.bf16 %v345
      %v378 = vunpack.c.l.bf16 %v346
      %v379 = vunpack.c.l.bf16 %v347
      %v380 = vunpack.c.l.bf16 %v348
      %v381 = vunpack.c.l.bf16 %v349
      %v382 = vunpack.c.l.bf16 %v350
      %v383 = vunpack.c.l.bf16 %v351
      %v384 = vunpack.c.l.bf16 %v352
      %v385 = vunpack.c.l.bf16 %v353
      %v386 = vunpack.c.l.bf16 %v354
      %v387 = vunpack.c.l.bf16 %v355
      %v389 = vperm.slane %v309, 0
      %v391 = vmul.f32 %v356, %v389
      %v392 = vmul.f32 %v357, %v389
      %v393 = vmul.f32 %v358, %v389
      %v394 = vmul.f32 %v359, %v389
      %v395 = vmul.f32 %v360, %v389
      %v396 = vmul.f32 %v361, %v389
      %v397 = vmul.f32 %v362, %v389
      %v398 = vmul.f32 %v363, %v389
      %v399 = vmul.f32 %v364, %v389
      %v400 = vmul.f32 %v365, %v389
      %v401 = vmul.f32 %v366, %v389
      %v402 = vmul.f32 %v367, %v389
      %v403 = vmul.f32 %v368, %v389
      %v404 = vmul.f32 %v369, %v389
      %v405 = vmul.f32 %v370, %v389
      %v406 = vmul.f32 %v371, %v389
      %v407 = vmul.f32 %v372, %v389
      %v408 = vmul.f32 %v373, %v389
      %v409 = vmul.f32 %v374, %v389
      %v410 = vmul.f32 %v375, %v389
      %v411 = vmul.f32 %v376, %v389
      %v412 = vmul.f32 %v377, %v389
      %v413 = vmul.f32 %v378, %v389
      %v414 = vmul.f32 %v379, %v389
      %v415 = vmul.f32 %v380, %v389
      %v416 = vmul.f32 %v381, %v389
      %v417 = vmul.f32 %v382, %v389
      %v418 = vmul.f32 %v383, %v389
      %v419 = vmul.f32 %v384, %v389
      %v420 = vmul.f32 %v385, %v389
      %v421 = vmul.f32 %v386, %v389
      %v422 = vmul.f32 %v387, %v389
      %v424 = vperm.slane %v310, 0
      %v426 = vadd.f32 %v391, %v424
      %v427 = vadd.f32 %v392, %v424
      %v428 = vadd.f32 %v393, %v424
      %v429 = vadd.f32 %v394, %v424
      %v430 = vadd.f32 %v395, %v424
      %v431 = vadd.f32 %v396, %v424
      %v432 = vadd.f32 %v397, %v424
      %v433 = vadd.f32 %v398, %v424
      %v434 = vadd.f32 %v399, %v424
      %v435 = vadd.f32 %v400, %v424
      %v436 = vadd.f32 %v401, %v424
      %v437 = vadd.f32 %v402, %v424
      %v438 = vadd.f32 %v403, %v424
      %v439 = vadd.f32 %v404, %v424
      %v440 = vadd.f32 %v405, %v424
      %v441 = vadd.f32 %v406, %v424
      %v442 = vadd.f32 %v407, %v424
      %v443 = vadd.f32 %v408, %v424
      %v444 = vadd.f32 %v409, %v424
      %v445 = vadd.f32 %v410, %v424
      %v446 = vadd.f32 %v411, %v424
      %v447 = vadd.f32 %v412, %v424
      %v448 = vadd.f32 %v413, %v424
      %v449 = vadd.f32 %v414, %v424
      %v450 = vadd.f32 %v415, %v424
      %v451 = vadd.f32 %v416, %v424
      %v452 = vadd.f32 %v417, %v424
      %v453 = vadd.f32 %v418, %v424
      %v454 = vadd.f32 %v419, %v424
      %v455 = vadd.f32 %v420, %v424
      %v456 = vadd.f32 %v421, %v424
      %v457 = vadd.f32 %v422, %v424
      %v458 = vmax.f32 %v426, 0.0
      %v459 = vmax.f32 %v427, 0.0
      %v460 = vmax.f32 %v428, 0.0
      %v461 = vmax.f32 %v429, 0.0
      %v462 = vmax.f32 %v430, 0.0
      %v463 = vmax.f32 %v431, 0.0
      %v464 = vmax.f32 %v432, 0.0
      %v465 = vmax.f32 %v433, 0.0
      %v466 = vmax.f32 %v434, 0.0
      %v467 = vmax.f32 %v435, 0.0
      %v468 = vmax.f32 %v436, 0.0
      %v469 = vmax.f32 %v437, 0.0
      %v470 = vmax.f32 %v438, 0.0
      %v471 = vmax.f32 %v439, 0.0
      %v472 = vmax.f32 %v440, 0.0
      %v473 = vmax.f32 %v441, 0.0
      %v474 = vmax.f32 %v442, 0.0
      %v475 = vmax.f32 %v443, 0.0
      %v476 = vmax.f32 %v444, 0.0
      %v477 = vmax.f32 %v445, 0.0
      %v478 = vmax.f32 %v446, 0.0
      %v479 = vmax.f32 %v447, 0.0
      %v480 = vmax.f32 %v448, 0.0
      %v481 = vmax.f32 %v449, 0.0
      %v482 = vmax.f32 %v450, 0.0
      %v483 = vmax.f32 %v451, 0.0
      %v484 = vmax.f32 %v452, 0.0
      %v485 = vmax.f32 %v453, 0.0
      %v486 = vmax.f32 %v454, 0.0
      %v487 = vmax.f32 %v455, 0.0
      %v488 = vmax.f32 %v456, 0.0
      %v489 = vmax.f32 %v457, 0.0
      %s490 = sshra.s32 %s315, 3
      %s491 = sand.u32 %s315, 7
      %s492 = smul.addr %s490, 4
      %s493 = scalar_lea.vmem %s285, %s492
      %v494 = vld [vmem:[%s493] sm:$0xf]
      %v495 = vld [vmem:[%s493 + $0x4] sm:$0xf]
      %v496 = vunpack.c.l.bf16 %v494
      %v497 = vunpack.c.l.bf16 %v495
      %v498 = vmul.f32 %v496, %v389
      %v499 = vmul.f32 %v497, %v389
      %v500 = vadd.f32 %v498, %v424
      %v501 = vadd.f32 %v499, %v424
      %v502 = vmax.f32 %v500, 0.0
      %v503 = vmax.f32 %v501, 0.0
      %s504 = sshra.s32 %s319, 3
      %s505 = sand.u32 %s319, 7
      %s506 = smul.addr %s504, 4
      %s507 = scalar_lea.vmem %s285, %s506
      %v508 = vld [vmem:[%s507] sm:$0xf]
      %v509 = vld [vmem:[%s507 + $0x4] sm:$0xf]
      %v510 = vunpack.c.l.bf16 %v508
      %v511 = vunpack.c.l.bf16 %v509
      %v512 = vmul.f32 %v510, %v389
      %v513 = vmul.f32 %v511, %v389
      %v514 = vadd.f32 %v512, %v424
      %v515 = vadd.f32 %v513, %v424
      %v516 = vmax.f32 %v514, 0.0
      %v517 = vmax.f32 %v515, 0.0
      %518 = vst [vmem:[#allocation2 + $0x7] sm:$0x1] 0.0
      %519 = vst [vmem:[#allocation2 + $0x128] sm:$0x1] 0.0
      %p520 = scmp.gt.s32.totalorder %s23, 0
      %s521 = scalar_select %p520, 1, 0
      %v522 = vstv %s521
      %vm523 = vcmp.eq.s32.totalorder %v522, 1
      %v524 = vsel %vm523, %v502, 0.0
      %v525 = vsel %vm523, %v503, 0.0
      %526 = vst [vmem:[#allocation2 + $0x8] sm:$0xff] %v524
      %527 = vst [vmem:[#allocation2 + $0x10] sm:$0xff] %v525
      %528 = vst [vmem:[#allocation2 + $0x18] sm:$0xff] %v458
      %529 = vst [vmem:[#allocation2 + $0x20] sm:$0xff] %v459
      %530 = vst [vmem:[#allocation2 + $0x28] sm:$0xff] %v460
      %531 = vst [vmem:[#allocation2 + $0x30] sm:$0xff] %v461
      %532 = vst [vmem:[#allocation2 + $0x38] sm:$0xff] %v462
      %533 = vst [vmem:[#allocation2 + $0x40] sm:$0xff] %v463
      %534 = vst [vmem:[#allocation2 + $0x48] sm:$0xff] %v464
      %535 = vst [vmem:[#allocation2 + $0x50] sm:$0xff] %v465
      %536 = vst [vmem:[#allocation2 + $0x58] sm:$0xff] %v466
      %537 = vst [vmem:[#allocation2 + $0x60] sm:$0xff] %v467
      %538 = vst [vmem:[#allocation2 + $0x68] sm:$0xff] %v468
      %539 = vst [vmem:[#allocation2 + $0x70] sm:$0xff] %v469
      %540 = vst [vmem:[#allocation2 + $0x78] sm:$0xff] %v470
      %541 = vst [vmem:[#allocation2 + $0x80] sm:$0xff] %v471
      %542 = vst [vmem:[#allocation2 + $0x88] sm:$0xff] %v472
      %543 = vst [vmem:[#allocation2 + $0x90] sm:$0xff] %v473
      %544 = vst [vmem:[#allocation2 + $0x98] sm:$0xff] %v474
      %545 = vst [vmem:[#allocation2 + $0xa0] sm:$0xff] %v475
      %546 = vst [vmem:[#allocation2 + $0xa8] sm:$0xff] %v476
      %547 = vst [vmem:[#allocation2 + $0xb0] sm:$0xff] %v477
      %548 = vst [vmem:[#allocation2 + $0xb8] sm:$0xff] %v478
      %549 = vst [vmem:[#allocation2 + $0xc0] sm:$0xff] %v479
      %550 = vst [vmem:[#allocation2 + $0xc8] sm:$0xff] %v480
      %551 = vst [vmem:[#allocation2 + $0xd0] sm:$0xff] %v481
      %552 = vst [vmem:[#allocation2 + $0xd8] sm:$0xff] %v482
      %553 = vst [vmem:[#allocation2 + $0xe0] sm:$0xff] %v483
      %554 = vst [vmem:[#allocation2 + $0xe8] sm:$0xff] %v484
      %555 = vst [vmem:[#allocation2 + $0xf0] sm:$0xff] %v485
      %556 = vst [vmem:[#allocation2 + $0xf8] sm:$0xff] %v486
      %557 = vst [vmem:[#allocation2 + $0x100] sm:$0xff] %v487
      %558 = vst [vmem:[#allocation2 + $0x108] sm:$0xff] %v488
      %559 = vst [vmem:[#allocation2 + $0x110] sm:$0xff] %v489
      %p560 = scmp.lt.s32.totalorder %s23, 0
      %s561 = scalar_select %p560, 1, 0
      %v562 = vstv %s561
      %vm563 = vcmp.eq.s32.totalorder %v562, 1
      %v564 = vsel %vm563, %v516, 0.0
      %v565 = vsel %vm563, %v517, 0.0
      %566 = vst [vmem:[#allocation2 + $0x118] sm:$0xff] %v564
      %567 = vst [vmem:[#allocation2 + $0x120] sm:$0xff] %v565
      %v568 = vlaneseq
      %v569 = vshrl.u32 %v568, 7
      %v570 = vadd.s32 %v569, 8
      %v571 = vadd.s32 %v569, 16
      %v572 = vadd.s32 %v569, 24
      %v573 = vadd.s32 %v569, 32
      %v574 = vadd.s32 %v569, 40
      %v575 = vadd.s32 %v569, 48
      %v576 = vadd.s32 %v569, 56
      %v577 = vadd.s32 %v569, 64
      %v578 = vadd.s32 %v569, 72
      %v579 = vadd.s32 %v569, 80
      %v580 = vadd.s32 %v569, 88
      %v581 = vadd.s32 %v569, 96
      %v582 = vadd.s32 %v569, 104
      %v583 = vadd.s32 %v569, 112
      %v584 = vadd.s32 %v569, 120
      %v585 = vadd.s32 %v569, 128
      %v586 = vadd.s32 %v569, 136
      %v587 = vadd.s32 %v569, 144
      %v588 = vadd.s32 %v569, 152
      %v589 = vadd.s32 %v569, 160
      %v590 = vadd.s32 %v569, 168
      %v591 = vadd.s32 %v569, 176
      %v592 = vadd.s32 %v569, 184
      %v593 = vadd.s32 %v569, 192
      %v594 = vadd.s32 %v569, 200
      %v595 = vadd.s32 %v569, 208
      %v596 = vadd.s32 %v569, 216
      %v597 = vadd.s32 %v569, 224
      %v598 = vadd.s32 %v569, 232
      %v599 = vadd.s32 %v569, 240
      %v600 = vadd.s32 %v569, 248
      %v601 = vadd.s32 %v569, 256
      %v602 = vadd.s32 %v569, 264
      %v603 = vadd.s32 %v569, 272
      %v604 = vadd.s32 %v569, 280
      %vm605 = vcmp.lt.s32.totalorder %v569, 0
      %v606 = vsub.s32 0, %v569
      %v607 = vsel %vm605, %v606, %v569
      %v608 = vshrl.u32 %v607, 4
      %v609 = vand.u32 %v607, 15
      %v610 = vsub.s32 0, %v609
      %v611 = vsel %vm605, %v610, %v609
      %vm612 = vcmp.lt.s32.totalorder %v570, 0
      %v613 = vsub.s32 0, %v570
      %v614 = vsel %vm612, %v613, %v570
      %v615 = vshrl.u32 %v614, 4
      %v616 = vand.u32 %v614, 15
      %v617 = vsub.s32 0, %v616
      %v618 = vsel %vm612, %v617, %v616
      %vm619 = vcmp.lt.s32.totalorder %v571, 0
      %v620 = vsub.s32 0, %v571
      %v621 = vsel %vm619, %v620, %v571
      %v622 = vshrl.u32 %v621, 4
      %v623 = vand.u32 %v621, 15
      %v624 = vsub.s32 0, %v623
      %v625 = vsel %vm619, %v624, %v623
      %vm626 = vcmp.lt.s32.totalorder %v572, 0
      %v627 = vsub.s32 0, %v572
      %v628 = vsel %vm626, %v627, %v572
      %v629 = vshrl.u32 %v628, 4
      %v630 = vand.u32 %v628, 15
      %v631 = vsub.s32 0, %v630
      %v632 = vsel %vm626, %v631, %v630
      %vm633 = vcmp.lt.s32.totalorder %v573, 0
      %v634 = vsub.s32 0, %v573
      %v635 = vsel %vm633, %v634, %v573
      %v636 = vshrl.u32 %v635, 4
      %v637 = vand.u32 %v635, 15
      %v638 = vsub.s32 0, %v637
      %v639 = vsel %vm633, %v638, %v637
      %vm640 = vcmp.lt.s32.totalorder %v574, 0
      %v641 = vsub.s32 0, %v574
      %v642 = vsel %vm640, %v641, %v574
      %v643 = vshrl.u32 %v642, 4
      %v644 = vand.u32 %v642, 15
      %v645 = vsub.s32 0, %v644
      %v646 = vsel %vm640, %v645, %v644
      %vm647 = vcmp.lt.s32.totalorder %v575, 0
      %v648 = vsub.s32 0, %v575
      %v649 = vsel %vm647, %v648, %v575
      %v650 = vshrl.u32 %v649, 4
      %v651 = vand.u32 %v649, 15
      %v652 = vsub.s32 0, %v651
      %v653 = vsel %vm647, %v652, %v651
      %vm654 = vcmp.lt.s32.totalorder %v576, 0
      %v655 = vsub.s32 0, %v576
      %v656 = vsel %vm654, %v655, %v576
      %v657 = vshrl.u32 %v656, 4
      %v658 = vand.u32 %v656, 15
      %v659 = vsub.s32 0, %v658
      %v660 = vsel %vm654, %v659, %v658
      %vm661 = vcmp.lt.s32.totalorder %v577, 0
      %v662 = vsub.s32 0, %v577
      %v663 = vsel %vm661, %v662, %v577
      %v664 = vshrl.u32 %v663, 4
      %v665 = vand.u32 %v663, 15
      %v666 = vsub.s32 0, %v665
      %v667 = vsel %vm661, %v666, %v665
      %vm668 = vcmp.lt.s32.totalorder %v578, 0
      %v669 = vsub.s32 0, %v578
      %v670 = vsel %vm668, %v669, %v578
      %v671 = vshrl.u32 %v670, 4
      %v672 = vand.u32 %v670, 15
      %v673 = vsub.s32 0, %v672
      %v674 = vsel %vm668, %v673, %v672
      %vm675 = vcmp.lt.s32.totalorder %v579, 0
      %v676 = vsub.s32 0, %v579
      %v677 = vsel %vm675, %v676, %v579
      %v678 = vshrl.u32 %v677, 4
      %v679 = vand.u32 %v677, 15
      %v680 = vsub.s32 0, %v679
      %v681 = vsel %vm675, %v680, %v679
      %vm682 = vcmp.lt.s32.totalorder %v580, 0
      %v683 = vsub.s32 0, %v580
      %v684 = vsel %vm682, %v683, %v580
      %v685 = vshrl.u32 %v684, 4
      %v686 = vand.u32 %v684, 15
      %v687 = vsub.s32 0, %v686
      %v688 = vsel %vm682, %v687, %v686
      %vm689 = vcmp.lt.s32.totalorder %v581, 0
      %v690 = vsub.s32 0, %v581
      %v691 = vsel %vm689, %v690, %v581
      %v692 = vshrl.u32 %v691, 4
      %v693 = vand.u32 %v691, 15
      %v694 = vsub.s32 0, %v693
      %v695 = vsel %vm689, %v694, %v693
      %vm696 = vcmp.lt.s32.totalorder %v582, 0
      %v697 = vsub.s32 0, %v582
      %v698 = vsel %vm696, %v697, %v582
      %v699 = vshrl.u32 %v698, 4
      %v700 = vand.u32 %v698, 15
      %v701 = vsub.s32 0, %v700
      %v702 = vsel %vm696, %v701, %v700
      %vm703 = vcmp.lt.s32.totalorder %v583, 0
      %v704 = vsub.s32 0, %v583
      %v705 = vsel %vm703, %v704, %v583
      %v706 = vshrl.u32 %v705, 4
      %v707 = vand.u32 %v705, 15
      %v708 = vsub.s32 0, %v707
      %v709 = vsel %vm703, %v708, %v707
      %vm710 = vcmp.lt.s32.totalorder %v584, 0
      %v711 = vsub.s32 0, %v584
      %v712 = vsel %vm710, %v711, %v584
      %v713 = vshrl.u32 %v712, 4
      %v714 = vand.u32 %v712, 15
      %v715 = vsub.s32 0, %v714
      %v716 = vsel %vm710, %v715, %v714
      %vm717 = vcmp.lt.s32.totalorder %v585, 0
      %v718 = vsub.s32 0, %v585
      %v719 = vsel %vm717, %v718, %v585
      %v720 = vshrl.u32 %v719, 4
      %v721 = vand.u32 %v719, 15
      %v722 = vsub.s32 0, %v721
      %v723 = vsel %vm717, %v722, %v721
      %vm724 = vcmp.lt.s32.totalorder %v586, 0
      %v725 = vsub.s32 0, %v586
      %v726 = vsel %vm724, %v725, %v586
      %v727 = vshrl.u32 %v726, 4
      %v728 = vand.u32 %v726, 15
      %v729 = vsub.s32 0, %v728
      %v730 = vsel %vm724, %v729, %v728
      %vm731 = vcmp.lt.s32.totalorder %v587, 0
      %v732 = vsub.s32 0, %v587
      %v733 = vsel %vm731, %v732, %v587
      %v734 = vshrl.u32 %v733, 4
      %v735 = vand.u32 %v733, 15
      %v736 = vsub.s32 0, %v735
      %v737 = vsel %vm731, %v736, %v735
      %vm738 = vcmp.lt.s32.totalorder %v588, 0
      %v739 = vsub.s32 0, %v588
      %v740 = vsel %vm738, %v739, %v588
      %v741 = vshrl.u32 %v740, 4
      %v742 = vand.u32 %v740, 15
      %v743 = vsub.s32 0, %v742
      %v744 = vsel %vm738, %v743, %v742
      %vm745 = vcmp.lt.s32.totalorder %v589, 0
      %v746 = vsub.s32 0, %v589
      %v747 = vsel %vm745, %v746, %v589
      %v748 = vshrl.u32 %v747, 4
      %v749 = vand.u32 %v747, 15
      %v750 = vsub.s32 0, %v749
      %v751 = vsel %vm745, %v750, %v749
      %vm752 = vcmp.lt.s32.totalorder %v590, 0
      %v753 = vsub.s32 0, %v590
      %v754 = vsel %vm752, %v753, %v590
      %v755 = vshrl.u32 %v754, 4
      %v756 = vand.u32 %v754, 15
      %v757 = vsub.s32 0, %v756
      %v758 = vsel %vm752, %v757, %v756
      %vm759 = vcmp.lt.s32.totalorder %v591, 0
      %v760 = vsub.s32 0, %v591
      %v761 = vsel %vm759, %v760, %v591
      %v762 = vshrl.u32 %v761, 4
      %v763 = vand.u32 %v761, 15
      %v764 = vsub.s32 0, %v763
      %v765 = vsel %vm759, %v764, %v763
      %vm766 = vcmp.lt.s32.totalorder %v592, 0
      %v767 = vsub.s32 0, %v592
      %v768 = vsel %vm766, %v767, %v592
      %v769 = vshrl.u32 %v768, 4
      %v770 = vand.u32 %v768, 15
      %v771 = vsub.s32 0, %v770
      %v772 = vsel %vm766, %v771, %v770
      %vm773 = vcmp.lt.s32.totalorder %v593, 0
      %v774 = vsub.s32 0, %v593
      %v775 = vsel %vm773, %v774, %v593
      %v776 = vshrl.u32 %v775, 4
      %v777 = vand.u32 %v775, 15
      %v778 = vsub.s32 0, %v777
      %v779 = vsel %vm773, %v778, %v777
      %vm780 = vcmp.lt.s32.totalorder %v594, 0
      %v781 = vsub.s32 0, %v594
      %v782 = vsel %vm780, %v781, %v594
      %v783 = vshrl.u32 %v782, 4
      %v784 = vand.u32 %v782, 15
      %v785 = vsub.s32 0, %v784
      %v786 = vsel %vm780, %v785, %v784
      %vm787 = vcmp.lt.s32.totalorder %v595, 0
      %v788 = vsub.s32 0, %v595
      %v789 = vsel %vm787, %v788, %v595
      %v790 = vshrl.u32 %v789, 4
      %v791 = vand.u32 %v789, 15
      %v792 = vsub.s32 0, %v791
      %v793 = vsel %vm787, %v792, %v791
      %vm794 = vcmp.lt.s32.totalorder %v596, 0
      %v795 = vsub.s32 0, %v596
      %v796 = vsel %vm794, %v795, %v596
      %v797 = vshrl.u32 %v796, 4
      %v798 = vand.u32 %v796, 15
      %v799 = vsub.s32 0, %v798
      %v800 = vsel %vm794, %v799, %v798
      %vm801 = vcmp.lt.s32.totalorder %v597, 0
      %v802 = vsub.s32 0, %v597
      %v803 = vsel %vm801, %v802, %v597
      %v804 = vshrl.u32 %v803, 4
      %v805 = vand.u32 %v803, 15
      %v806 = vsub.s32 0, %v805
      %v807 = vsel %vm801, %v806, %v805
      %vm808 = vcmp.lt.s32.totalorder %v598, 0
      %v809 = vsub.s32 0, %v598
      %v810 = vsel %vm808, %v809, %v598
      %v811 = vshrl.u32 %v810, 4
      %v812 = vand.u32 %v810, 15
      %v813 = vsub.s32 0, %v812
      %v814 = vsel %vm808, %v813, %v812
      %vm815 = vcmp.lt.s32.totalorder %v599, 0
      %v816 = vsub.s32 0, %v599
      %v817 = vsel %vm815, %v816, %v599
      %v818 = vshrl.u32 %v817, 4
      %v819 = vand.u32 %v817, 15
      %v820 = vsub.s32 0, %v819
      %v821 = vsel %vm815, %v820, %v819
      %vm822 = vcmp.lt.s32.totalorder %v600, 0
      %v823 = vsub.s32 0, %v600
      %v824 = vsel %vm822, %v823, %v600
      %v825 = vshrl.u32 %v824, 4
      %v826 = vand.u32 %v824, 15
      %v827 = vsub.s32 0, %v826
      %v828 = vsel %vm822, %v827, %v826
      %vm829 = vcmp.lt.s32.totalorder %v601, 0
      %v830 = vsub.s32 0, %v601
      %v831 = vsel %vm829, %v830, %v601
      %v832 = vshrl.u32 %v831, 4
      %v833 = vand.u32 %v831, 15
      %v834 = vsub.s32 0, %v833
      %v835 = vsel %vm829, %v834, %v833
      %vm836 = vcmp.lt.s32.totalorder %v602, 0
      %v837 = vsub.s32 0, %v602
      %v838 = vsel %vm836, %v837, %v602
      %v839 = vshrl.u32 %v838, 4
      %v840 = vand.u32 %v838, 15
      %v841 = vsub.s32 0, %v840
      %v842 = vsel %vm836, %v841, %v840
      %vm843 = vcmp.lt.s32.totalorder %v603, 0
      %v844 = vsub.s32 0, %v603
      %v845 = vsel %vm843, %v844, %v603
      %v846 = vshrl.u32 %v845, 4
      %v847 = vand.u32 %v845, 15
      %v848 = vsub.s32 0, %v847
      %v849 = vsel %vm843, %v848, %v847
      %vm850 = vcmp.lt.s32.totalorder %v604, 0
      %v851 = vsub.s32 0, %v604
      %v852 = vsel %vm850, %v851, %v604
      %v853 = vshrl.u32 %v852, 4
      %v854 = vand.u32 %v852, 15
      %v855 = vsub.s32 0, %v854
      %v856 = vsel %vm850, %v855, %v854
      %vm857 = vcmp.ne.s32.totalorder %v611, 0
      %vm858 = vcmp.ne.s32.totalorder %v618, 0
      %vm859 = vcmp.ne.s32.totalorder %v625, 0
      %vm860 = vcmp.ne.s32.totalorder %v632, 0
      %vm861 = vcmp.ne.s32.totalorder %v639, 0
      %vm862 = vcmp.ne.s32.totalorder %v646, 0
      %vm863 = vcmp.ne.s32.totalorder %v653, 0
      %vm864 = vcmp.ne.s32.totalorder %v660, 0
      %vm865 = vcmp.ne.s32.totalorder %v667, 0
      %vm866 = vcmp.ne.s32.totalorder %v674, 0
      %vm867 = vcmp.ne.s32.totalorder %v681, 0
      %vm868 = vcmp.ne.s32.totalorder %v688, 0
      %vm869 = vcmp.ne.s32.totalorder %v695, 0
      %vm870 = vcmp.ne.s32.totalorder %v702, 0
      %vm871 = vcmp.ne.s32.totalorder %v709, 0
      %vm872 = vcmp.ne.s32.totalorder %v716, 0
      %vm873 = vcmp.ne.s32.totalorder %v723, 0
      %vm874 = vcmp.ne.s32.totalorder %v730, 0
      %vm875 = vcmp.ne.s32.totalorder %v737, 0
      %vm876 = vcmp.ne.s32.totalorder %v744, 0
      %vm877 = vcmp.ne.s32.totalorder %v751, 0
      %vm878 = vcmp.ne.s32.totalorder %v758, 0
      %vm879 = vcmp.ne.s32.totalorder %v765, 0
      %vm880 = vcmp.ne.s32.totalorder %v772, 0
      %vm881 = vcmp.ne.s32.totalorder %v779, 0
      %vm882 = vcmp.ne.s32.totalorder %v786, 0
      %vm883 = vcmp.ne.s32.totalorder %v793, 0
      %vm884 = vcmp.ne.s32.totalorder %v800, 0
      %vm885 = vcmp.ne.s32.totalorder %v807, 0
      %vm886 = vcmp.ne.s32.totalorder %v814, 0
      %vm887 = vcmp.ne.s32.totalorder %v821, 0
      %vm888 = vcmp.ne.s32.totalorder %v828, 0
      %vm889 = vcmp.ne.s32.totalorder %v835, 0
      %vm890 = vcmp.ne.s32.totalorder %v842, 0
      %vm891 = vcmp.ne.s32.totalorder %v849, 0
      %vm892 = vcmp.ne.s32.totalorder %v856, 0
      %vm893 = vcmp.lt.s32.totalorder %v611, 0
      %vm894 = vcmp.lt.s32.totalorder %v618, 0
      %vm895 = vcmp.lt.s32.totalorder %v625, 0
      %vm896 = vcmp.lt.s32.totalorder %v632, 0
      %vm897 = vcmp.lt.s32.totalorder %v639, 0
      %vm898 = vcmp.lt.s32.totalorder %v646, 0
      %vm899 = vcmp.lt.s32.totalorder %v653, 0
      %vm900 = vcmp.lt.s32.totalorder %v660, 0
      %vm901 = vcmp.lt.s32.totalorder %v667, 0
      %vm902 = vcmp.lt.s32.totalorder %v674, 0
      %vm903 = vcmp.lt.s32.totalorder %v681, 0
      %vm904 = vcmp.lt.s32.totalorder %v688, 0
      %vm905 = vcmp.lt.s32.totalorder %v695, 0
      %vm906 = vcmp.lt.s32.totalorder %v702, 0
      %vm907 = vcmp.lt.s32.totalorder %v709, 0
      %vm908 = vcmp.lt.s32.totalorder %v716, 0
      %vm909 = vcmp.lt.s32.totalorder %v723, 0
      %vm910 = vcmp.lt.s32.totalorder %v730, 0
      %vm911 = vcmp.lt.s32.totalorder %v737, 0
      %vm912 = vcmp.lt.s32.totalorder %v744, 0
      %vm913 = vcmp.lt.s32.totalorder %v751, 0
      %vm914 = vcmp.lt.s32.totalorder %v758, 0
      %vm915 = vcmp.lt.s32.totalorder %v765, 0
      %vm916 = vcmp.lt.s32.totalorder %v772, 0
      %vm917 = vcmp.lt.s32.totalorder %v779, 0
      %vm918 = vcmp.lt.s32.totalorder %v786, 0
      %vm919 = vcmp.lt.s32.totalorder %v793, 0
      %vm920 = vcmp.lt.s32.totalorder %v800, 0
      %vm921 = vcmp.lt.s32.totalorder %v807, 0
      %vm922 = vcmp.lt.s32.totalorder %v814, 0
      %vm923 = vcmp.lt.s32.totalorder %v821, 0
      %vm924 = vcmp.lt.s32.totalorder %v828, 0
      %vm925 = vcmp.lt.s32.totalorder %v835, 0
      %vm926 = vcmp.lt.s32.totalorder %v842, 0
      %vm927 = vcmp.lt.s32.totalorder %v849, 0
      %vm928 = vcmp.lt.s32.totalorder %v856, 0
      %vm929 = vmand %vm893, %vm857
      %vm930 = vmand %vm894, %vm858
      %vm931 = vmand %vm895, %vm859
      %vm932 = vmand %vm896, %vm860
      %vm933 = vmand %vm897, %vm861
      %vm934 = vmand %vm898, %vm862
      %vm935 = vmand %vm899, %vm863
      %vm936 = vmand %vm900, %vm864
      %vm937 = vmand %vm901, %vm865
      %vm938 = vmand %vm902, %vm866
      %vm939 = vmand %vm903, %vm867
      %vm940 = vmand %vm904, %vm868
      %vm941 = vmand %vm905, %vm869
      %vm942 = vmand %vm906, %vm870
      %vm943 = vmand %vm907, %vm871
      %vm944 = vmand %vm908, %vm872
      %vm945 = vmand %vm909, %vm873
      %vm946 = vmand %vm910, %vm874
      %vm947 = vmand %vm911, %vm875
      %vm948 = vmand %vm912, %vm876
      %vm949 = vmand %vm913, %vm877
      %vm950 = vmand %vm914, %vm878
      %vm951 = vmand %vm915, %vm879
      %vm952 = vmand %vm916, %vm880
      %vm953 = vmand %vm917, %vm881
      %vm954 = vmand %vm918, %vm882
      %vm955 = vmand %vm919, %vm883
      %vm956 = vmand %vm920, %vm884
      %vm957 = vmand %vm921, %vm885
      %vm958 = vmand %vm922, %vm886
      %vm959 = vmand %vm923, %vm887
      %vm960 = vmand %vm924, %vm888
      %vm961 = vmand %vm925, %vm889
      %vm962 = vmand %vm926, %vm890
      %vm963 = vmand %vm927, %vm891
      %vm964 = vmand %vm928, %vm892
      %v965 = vadd.s32 %v611, 16
      %v966 = vadd.s32 %v618, 16
      %v967 = vadd.s32 %v625, 16
      %v968 = vadd.s32 %v632, 16
      %v969 = vadd.s32 %v639, 16
      %v970 = vadd.s32 %v646, 16
      %v971 = vadd.s32 %v653, 16
      %v972 = vadd.s32 %v660, 16
      %v973 = vadd.s32 %v667, 16
      %v974 = vadd.s32 %v674, 16
      %v975 = vadd.s32 %v681, 16
      %v976 = vadd.s32 %v688, 16
      %v977 = vadd.s32 %v695, 16
      %v978 = vadd.s32 %v702, 16
      %v979 = vadd.s32 %v709, 16
      %v980 = vadd.s32 %v716, 16
      %v981 = vadd.s32 %v723, 16
      %v982 = vadd.s32 %v730, 16
      %v983 = vadd.s32 %v737, 16
      %v984 = vadd.s32 %v744, 16
      %v985 = vadd.s32 %v751, 16
      %v986 = vadd.s32 %v758, 16
      %v987 = vadd.s32 %v765, 16
      %v988 = vadd.s32 %v772, 16
      %v989 = vadd.s32 %v779, 16
      %v990 = vadd.s32 %v786, 16
      %v991 = vadd.s32 %v793, 16
      %v992 = vadd.s32 %v800, 16
      %v993 = vadd.s32 %v807, 16
      %v994 = vadd.s32 %v814, 16
      %v995 = vadd.s32 %v821, 16
      %v996 = vadd.s32 %v828, 16
      %v997 = vadd.s32 %v835, 16
      %v998 = vadd.s32 %v842, 16
      %v999 = vadd.s32 %v849, 16
      %v1000 = vadd.s32 %v856, 16
      %v1001 = vsel %vm929, %v965, %v611
      %v1002 = vsel %vm930, %v966, %v618
      %v1003 = vsel %vm931, %v967, %v625
      %v1004 = vsel %vm932, %v968, %v632
      %v1005 = vsel %vm933, %v969, %v639
      %v1006 = vsel %vm934, %v970, %v646
      %v1007 = vsel %vm935, %v971, %v653
      %v1008 = vsel %vm936, %v972, %v660
      %v1009 = vsel %vm937, %v973, %v667
      %v1010 = vsel %vm938, %v974, %v674
      %v1011 = vsel %vm939, %v975, %v681
      %v1012 = vsel %vm940, %v976, %v688
      %v1013 = vsel %vm941, %v977, %v695
      %v1014 = vsel %vm942, %v978, %v702
      %v1015 = vsel %vm943, %v979, %v709
      %v1016 = vsel %vm944, %v980, %v716
      %v1017 = vsel %vm945, %v981, %v723
      %v1018 = vsel %vm946, %v982, %v730
      %v1019 = vsel %vm947, %v983, %v737
      %v1020 = vsel %vm948, %v984, %v744
      %v1021 = vsel %vm949, %v985, %v751
      %v1022 = vsel %vm950, %v986, %v758
      %v1023 = vsel %vm951, %v987, %v765
      %v1024 = vsel %vm952, %v988, %v772
      %v1025 = vsel %vm953, %v989, %v779
      %v1026 = vsel %vm954, %v990, %v786
      %v1027 = vsel %vm955, %v991, %v793
      %v1028 = vsel %vm956, %v992, %v800
      %v1029 = vsel %vm957, %v993, %v807
      %v1030 = vsel %vm958, %v994, %v814
      %v1031 = vsel %vm959, %v995, %v821
      %v1032 = vsel %vm960, %v996, %v828
      %v1033 = vsel %vm961, %v997, %v835
      %v1034 = vsel %vm962, %v998, %v842
      %v1035 = vsel %vm963, %v999, %v849
      %v1036 = vsel %vm964, %v1000, %v856
      %v1037 = vld [vmem:[#allocation2 + $0x8] sm:$0xff]
      %v1038 = vld [vmem:[#allocation2 + $0x10] sm:$0xff]
      %v1039 = vld [vmem:[#allocation2 + $0x18] sm:$0xff]
      %v1040 = vld [vmem:[#allocation2 + $0x20] sm:$0xff]
      %v1041 = vld [vmem:[#allocation2 + $0x28] sm:$0xff]
      %v1042 = vld [vmem:[#allocation2 + $0x30] sm:$0xff]
      %v1043 = vld [vmem:[#allocation2 + $0x38] sm:$0xff]
      %v1044 = vld [vmem:[#allocation2 + $0x40] sm:$0xff]
      %v1045 = vld [vmem:[#allocation2 + $0x48] sm:$0xff]
      %v1046 = vld [vmem:[#allocation2 + $0x50] sm:$0xff]
      %v1047 = vld [vmem:[#allocation2 + $0x58] sm:$0xff]
      %v1048 = vld [vmem:[#allocation2 + $0x60] sm:$0xff]
      %v1049 = vld [vmem:[#allocation2 + $0x68] sm:$0xff]
      %v1050 = vld [vmem:[#allocation2 + $0x70] sm:$0xff]
      %v1051 = vld [vmem:[#allocation2 + $0x78] sm:$0xff]
      %v1052 = vld [vmem:[#allocation2 + $0x80] sm:$0xff]
      %v1053 = vld [vmem:[#allocation2 + $0x88] sm:$0xff]
      %v1054 = vld [vmem:[#allocation2 + $0x90] sm:$0xff]
      %v1055 = vld [vmem:[#allocation2 + $0x98] sm:$0xff]
      %v1056 = vld [vmem:[#allocation2 + $0xa0] sm:$0xff]
      %v1057 = vld [vmem:[#allocation2 + $0xa8] sm:$0xff]
      %v1058 = vld [vmem:[#allocation2 + $0xb0] sm:$0xff]
      %v1059 = vld [vmem:[#allocation2 + $0xb8] sm:$0xff]
      %v1060 = vld [vmem:[#allocation2 + $0xc0] sm:$0xff]
      %v1061 = vld [vmem:[#allocation2 + $0xc8] sm:$0xff]
      %v1062 = vld [vmem:[#allocation2 + $0xd0] sm:$0xff]
      %v1063 = vld [vmem:[#allocation2 + $0xd8] sm:$0xff]
      %v1064 = vld [vmem:[#allocation2 + $0xe0] sm:$0xff]
      %v1065 = vld [vmem:[#allocation2 + $0xe8] sm:$0xff]
      %v1066 = vld [vmem:[#allocation2 + $0xf0] sm:$0xff]
      %v1067 = vld [vmem:[#allocation2 + $0xf8] sm:$0xff]
      %v1068 = vld [vmem:[#allocation2 + $0x100] sm:$0xff]
      %v1069 = vld [vmem:[#allocation2 + $0x108] sm:$0xff]
      %v1070 = vld [vmem:[#allocation2 + $0x110] sm:$0xff]
      %v1071 = vld [vmem:[#allocation2 + $0x118] sm:$0xff]
      %v1072 = vld [vmem:[#allocation2 + $0x120] sm:$0xff]
      %vm1073 = vcmp.ne.s32.totalorder %v1001, 0
      %vm1074 = vcmp.ne.s32.totalorder %v1002, 0
      %vm1075 = vcmp.ne.s32.totalorder %v1003, 0
      %vm1076 = vcmp.ne.s32.totalorder %v1004, 0
      %vm1077 = vcmp.ne.s32.totalorder %v1005, 0
      %vm1078 = vcmp.ne.s32.totalorder %v1006, 0
      %vm1079 = vcmp.ne.s32.totalorder %v1007, 0
      %vm1080 = vcmp.ne.s32.totalorder %v1008, 0
      %vm1081 = vcmp.ne.s32.totalorder %v1009, 0
      %vm1082 = vcmp.ne.s32.totalorder %v1010, 0
      %vm1083 = vcmp.ne.s32.totalorder %v1011, 0
      %vm1084 = vcmp.ne.s32.totalorder %v1012, 0
      %vm1085 = vcmp.ne.s32.totalorder %v1013, 0
      %vm1086 = vcmp.ne.s32.totalorder %v1014, 0
      %vm1087 = vcmp.ne.s32.totalorder %v1015, 0
      %vm1088 = vcmp.ne.s32.totalorder %v1016, 0
      %vm1089 = vcmp.ne.s32.totalorder %v1017, 0
      %vm1090 = vcmp.ne.s32.totalorder %v1018, 0
      %vm1091 = vcmp.ne.s32.totalorder %v1019, 0
      %vm1092 = vcmp.ne.s32.totalorder %v1020, 0
      %vm1093 = vcmp.ne.s32.totalorder %v1021, 0
      %vm1094 = vcmp.ne.s32.totalorder %v1022, 0
      %vm1095 = vcmp.ne.s32.totalorder %v1023, 0
      %vm1096 = vcmp.ne.s32.totalorder %v1024, 0
      %vm1097 = vcmp.ne.s32.totalorder %v1025, 0
      %vm1098 = vcmp.ne.s32.totalorder %v1026, 0
      %vm1099 = vcmp.ne.s32.totalorder %v1027, 0
      %vm1100 = vcmp.ne.s32.totalorder %v1028, 0
      %vm1101 = vcmp.ne.s32.totalorder %v1029, 0
      %vm1102 = vcmp.ne.s32.totalorder %v1030, 0
      %vm1103 = vcmp.ne.s32.totalorder %v1031, 0
      %vm1104 = vcmp.ne.s32.totalorder %v1032, 0
      %vm1105 = vcmp.ne.s32.totalorder %v1033, 0
      %vm1106 = vcmp.ne.s32.totalorder %v1034, 0
      %vm1107 = vcmp.ne.s32.totalorder %v1035, 0
      %vm1108 = vcmp.ne.s32.totalorder %v1036, 0
      %v1109 = vld [vmem:[#allocation2 + $0x7] sm:$0xff]
      %v1110 = vld [vmem:[#allocation2 + $0xf] sm:$0xff]
      %v1111 = vld [vmem:[#allocation2 + $0x17] sm:$0xff]
      %v1112 = vld [vmem:[#allocation2 + $0x1f] sm:$0xff]
      %v1113 = vld [vmem:[#allocation2 + $0x27] sm:$0xff]
      %v1114 = vld [vmem:[#allocation2 + $0x2f] sm:$0xff]
      %v1115 = vld [vmem:[#allocation2 + $0x37] sm:$0xff]
      %v1116 = vld [vmem:[#allocation2 + $0x3f] sm:$0xff]
      %v1117 = vld [vmem:[#allocation2 + $0x47] sm:$0xff]
      %v1118 = vld [vmem:[#allocation2 + $0x4f] sm:$0xff]
      %v1119 = vld [vmem:[#allocation2 + $0x57] sm:$0xff]
      %v1120 = vld [vmem:[#allocation2 + $0x5f] sm:$0xff]
      %v1121 = vld [vmem:[#allocation2 + $0x67] sm:$0xff]
      %v1122 = vld [vmem:[#allocation2 + $0x6f] sm:$0xff]
      %v1123 = vld [vmem:[#allocation2 + $0x77] sm:$0xff]
      %v1124 = vld [vmem:[#allocation2 + $0x7f] sm:$0xff]
      %v1125 = vld [vmem:[#allocation2 + $0x87] sm:$0xff]
      %v1126 = vld [vmem:[#allocation2 + $0x8f] sm:$0xff]
      %v1127 = vld [vmem:[#allocation2 + $0x97] sm:$0xff]
      %v1128 = vld [vmem:[#allocation2 + $0x9f] sm:$0xff]
      %v1129 = vld [vmem:[#allocation2 + $0xa7] sm:$0xff]
      %v1130 = vld [vmem:[#allocation2 + $0xaf] sm:$0xff]
      %v1131 = vld [vmem:[#allocation2 + $0xb7] sm:$0xff]
      %v1132 = vld [vmem:[#allocation2 + $0xbf] sm:$0xff]
      %v1133 = vld [vmem:[#allocation2 + $0xc7] sm:$0xff]
      %v1134 = vld [vmem:[#allocation2 + $0xcf] sm:$0xff]
      %v1135 = vld [vmem:[#allocation2 + $0xd7] sm:$0xff]
      %v1136 = vld [vmem:[#allocation2 + $0xdf] sm:$0xff]
      %v1137 = vld [vmem:[#allocation2 + $0xe7] sm:$0xff]
      %v1138 = vld [vmem:[#allocation2 + $0xef] sm:$0xff]
      %v1139 = vld [vmem:[#allocation2 + $0xf7] sm:$0xff]
      %v1140 = vld [vmem:[#allocation2 + $0xff] sm:$0xff]
      %v1141 = vld [vmem:[#allocation2 + $0x107] sm:$0xff]
      %v1142 = vld [vmem:[#allocation2 + $0x10f] sm:$0xff]
      %v1143 = vld [vmem:[#allocation2 + $0x117] sm:$0xff]
      %v1144 = vld [vmem:[#allocation2 + $0x11f] sm:$0xff]
      %v1145 = vsel %vm1073, 1, 0
      %v1146 = vsel %vm1074, 1, 0
      %v1147 = vsel %vm1075, 1, 0
      %v1148 = vsel %vm1076, 1, 0
      %v1149 = vsel %vm1077, 1, 0
      %v1150 = vsel %vm1078, 1, 0
      %v1151 = vsel %vm1079, 1, 0
      %v1152 = vsel %vm1080, 1, 0
      %v1153 = vsel %vm1081, 1, 0
      %v1154 = vsel %vm1082, 1, 0
      %v1155 = vsel %vm1083, 1, 0
      %v1156 = vsel %vm1084, 1, 0
      %v1157 = vsel %vm1085, 1, 0
      %v1158 = vsel %vm1086, 1, 0
      %v1159 = vsel %vm1087, 1, 0
      %v1160 = vsel %vm1088, 1, 0
      %v1161 = vsel %vm1089, 1, 0
      %v1162 = vsel %vm1090, 1, 0
      %v1163 = vsel %vm1091, 1, 0
      %v1164 = vsel %vm1092, 1, 0
      %v1165 = vsel %vm1093, 1, 0
      %v1166 = vsel %vm1094, 1, 0
      %v1167 = vsel %vm1095, 1, 0
      %v1168 = vsel %vm1096, 1, 0
      %v1169 = vsel %vm1097, 1, 0
      %v1170 = vsel %vm1098, 1, 0
      %v1171 = vsel %vm1099, 1, 0
      %v1172 = vsel %vm1100, 1, 0
      %v1173 = vsel %vm1101, 1, 0
      %v1174 = vsel %vm1102, 1, 0
      %v1175 = vsel %vm1103, 1, 0
      %v1176 = vsel %vm1104, 1, 0
      %v1177 = vsel %vm1105, 1, 0
      %v1178 = vsel %vm1106, 1, 0
      %v1179 = vsel %vm1107, 1, 0
      %v1180 = vsel %vm1108, 1, 0
      %vm1181 = vcmp.eq.s32.totalorder %v1145, 1
      %vm1182 = vcmp.eq.s32.totalorder %v1146, 1
      %vm1183 = vcmp.eq.s32.totalorder %v1147, 1
      %vm1184 = vcmp.eq.s32.totalorder %v1148, 1
      %vm1185 = vcmp.eq.s32.totalorder %v1149, 1
      %vm1186 = vcmp.eq.s32.totalorder %v1150, 1
      %vm1187 = vcmp.eq.s32.totalorder %v1151, 1
      %vm1188 = vcmp.eq.s32.totalorder %v1152, 1
      %vm1189 = vcmp.eq.s32.totalorder %v1153, 1
      %vm1190 = vcmp.eq.s32.totalorder %v1154, 1
      %vm1191 = vcmp.eq.s32.totalorder %v1155, 1
      %vm1192 = vcmp.eq.s32.totalorder %v1156, 1
      %vm1193 = vcmp.eq.s32.totalorder %v1157, 1
      %vm1194 = vcmp.eq.s32.totalorder %v1158, 1
      %vm1195 = vcmp.eq.s32.totalorder %v1159, 1
      %vm1196 = vcmp.eq.s32.totalorder %v1160, 1
      %vm1197 = vcmp.eq.s32.totalorder %v1161, 1
      %vm1198 = vcmp.eq.s32.totalorder %v1162, 1
      %vm1199 = vcmp.eq.s32.totalorder %v1163, 1
      %vm1200 = vcmp.eq.s32.totalorder %v1164, 1
      %vm1201 = vcmp.eq.s32.totalorder %v1165, 1
      %vm1202 = vcmp.eq.s32.totalorder %v1166, 1
      %vm1203 = vcmp.eq.s32.totalorder %v1167, 1
      %vm1204 = vcmp.eq.s32.totalorder %v1168, 1
      %vm1205 = vcmp.eq.s32.totalorder %v1169, 1
      %vm1206 = vcmp.eq.s32.totalorder %v1170, 1
      %vm1207 = vcmp.eq.s32.totalorder %v1171, 1
      %vm1208 = vcmp.eq.s32.totalorder %v1172, 1
      %vm1209 = vcmp.eq.s32.totalorder %v1173, 1
      %vm1210 = vcmp.eq.s32.totalorder %v1174, 1
      %vm1211 = vcmp.eq.s32.totalorder %v1175, 1
      %vm1212 = vcmp.eq.s32.totalorder %v1176, 1
      %vm1213 = vcmp.eq.s32.totalorder %v1177, 1
      %vm1214 = vcmp.eq.s32.totalorder %v1178, 1
      %vm1215 = vcmp.eq.s32.totalorder %v1179, 1
      %vm1216 = vcmp.eq.s32.totalorder %v1180, 1
      %v1217 = vsel %vm1181, %v1109, 0.0
      %v1218 = vsel %vm1182, %v1110, 0.0
      %v1219 = vsel %vm1183, %v1111, 0.0
      %v1220 = vsel %vm1184, %v1112, 0.0
      %v1221 = vsel %vm1185, %v1113, 0.0
      %v1222 = vsel %vm1186, %v1114, 0.0
      %v1223 = vsel %vm1187, %v1115, 0.0
      %v1224 = vsel %vm1188, %v1116, 0.0
      %v1225 = vsel %vm1189, %v1117, 0.0
      %v1226 = vsel %vm1190, %v1118, 0.0
      %v1227 = vsel %vm1191, %v1119, 0.0
      %v1228 = vsel %vm1192, %v1120, 0.0
      %v1229 = vsel %vm1193, %v1121, 0.0
      %v1230 = vsel %vm1194, %v1122, 0.0
      %v1231 = vsel %vm1195, %v1123, 0.0
      %v1232 = vsel %vm1196, %v1124, 0.0
      %v1233 = vsel %vm1197, %v1125, 0.0
      %v1234 = vsel %vm1198, %v1126, 0.0
      %v1235 = vsel %vm1199, %v1127, 0.0
      %v1236 = vsel %vm1200, %v1128, 0.0
      %v1237 = vsel %vm1201, %v1129, 0.0
      %v1238 = vsel %vm1202, %v1130, 0.0
      %v1239 = vsel %vm1203, %v1131, 0.0
      %v1240 = vsel %vm1204, %v1132, 0.0
      %v1241 = vsel %vm1205, %v1133, 0.0
      %v1242 = vsel %vm1206, %v1134, 0.0
      %v1243 = vsel %vm1207, %v1135, 0.0
      %v1244 = vsel %vm1208, %v1136, 0.0
      %v1245 = vsel %vm1209, %v1137, 0.0
      %v1246 = vsel %vm1210, %v1138, 0.0
      %v1247 = vsel %vm1211, %v1139, 0.0
      %v1248 = vsel %vm1212, %v1140, 0.0
      %v1249 = vsel %vm1213, %v1141, 0.0
      %v1250 = vsel %vm1214, %v1142, 0.0
      %v1251 = vsel %vm1215, %v1143, 0.0
      %v1252 = vsel %vm1216, %v1144, 0.0
      %vm1253 = vcmp.ne.s32.totalorder %v1001, 15
      %vm1254 = vcmp.ne.s32.totalorder %v1002, 15
      %vm1255 = vcmp.ne.s32.totalorder %v1003, 15
      %vm1256 = vcmp.ne.s32.totalorder %v1004, 15
      %vm1257 = vcmp.ne.s32.totalorder %v1005, 15
      %vm1258 = vcmp.ne.s32.totalorder %v1006, 15
      %vm1259 = vcmp.ne.s32.totalorder %v1007, 15
      %vm1260 = vcmp.ne.s32.totalorder %v1008, 15
      %vm1261 = vcmp.ne.s32.totalorder %v1009, 15
      %vm1262 = vcmp.ne.s32.totalorder %v1010, 15
      %vm1263 = vcmp.ne.s32.totalorder %v1011, 15
      %vm1264 = vcmp.ne.s32.totalorder %v1012, 15
      %vm1265 = vcmp.ne.s32.totalorder %v1013, 15
      %vm1266 = vcmp.ne.s32.totalorder %v1014, 15
      %vm1267 = vcmp.ne.s32.totalorder %v1015, 15
      %vm1268 = vcmp.ne.s32.totalorder %v1016, 15
      %vm1269 = vcmp.ne.s32.totalorder %v1017, 15
      %vm1270 = vcmp.ne.s32.totalorder %v1018, 15
      %vm1271 = vcmp.ne.s32.totalorder %v1019, 15
      %vm1272 = vcmp.ne.s32.totalorder %v1020, 15
      %vm1273 = vcmp.ne.s32.totalorder %v1021, 15
      %vm1274 = vcmp.ne.s32.totalorder %v1022, 15
      %vm1275 = vcmp.ne.s32.totalorder %v1023, 15
      %vm1276 = vcmp.ne.s32.totalorder %v1024, 15
      %vm1277 = vcmp.ne.s32.totalorder %v1025, 15
      %vm1278 = vcmp.ne.s32.totalorder %v1026, 15
      %vm1279 = vcmp.ne.s32.totalorder %v1027, 15
      %vm1280 = vcmp.ne.s32.totalorder %v1028, 15
      %vm1281 = vcmp.ne.s32.totalorder %v1029, 15
      %vm1282 = vcmp.ne.s32.totalorder %v1030, 15
      %vm1283 = vcmp.ne.s32.totalorder %v1031, 15
      %vm1284 = vcmp.ne.s32.totalorder %v1032, 15
      %vm1285 = vcmp.ne.s32.totalorder %v1033, 15
      %vm1286 = vcmp.ne.s32.totalorder %v1034, 15
      %vm1287 = vcmp.ne.s32.totalorder %v1035, 15
      %vm1288 = vcmp.ne.s32.totalorder %v1036, 15
      %v1289 = vld [vmem:[#allocation2 + $0x9] sm:$0xff]
      %v1290 = vld [vmem:[#allocation2 + $0x11] sm:$0xff]
      %v1291 = vld [vmem:[#allocation2 + $0x19] sm:$0xff]
      %v1292 = vld [vmem:[#allocation2 + $0x21] sm:$0xff]
      %v1293 = vld [vmem:[#allocation2 + $0x29] sm:$0xff]
      %v1294 = vld [vmem:[#allocation2 + $0x31] sm:$0xff]
      %v1295 = vld [vmem:[#allocation2 + $0x39] sm:$0xff]
      %v1296 = vld [vmem:[#allocation2 + $0x41] sm:$0xff]
      %v1297 = vld [vmem:[#allocation2 + $0x49] sm:$0xff]
      %v1298 = vld [vmem:[#allocation2 + $0x51] sm:$0xff]
      %v1299 = vld [vmem:[#allocation2 + $0x59] sm:$0xff]
      %v1300 = vld [vmem:[#allocation2 + $0x61] sm:$0xff]
      %v1301 = vld [vmem:[#allocation2 + $0x69] sm:$0xff]
      %v1302 = vld [vmem:[#allocation2 + $0x71] sm:$0xff]
      %v1303 = vld [vmem:[#allocation2 + $0x79] sm:$0xff]
      %v1304 = vld [vmem:[#allocation2 + $0x81] sm:$0xff]
      %v1305 = vld [vmem:[#allocation2 + $0x89] sm:$0xff]
      %v1306 = vld [vmem:[#allocation2 + $0x91] sm:$0xff]
      %v1307 = vld [vmem:[#allocation2 + $0x99] sm:$0xff]
      %v1308 = vld [vmem:[#allocation2 + $0xa1] sm:$0xff]
      %v1309 = vld [vmem:[#allocation2 + $0xa9] sm:$0xff]
      %v1310 = vld [vmem:[#allocation2 + $0xb1] sm:$0xff]
      %v1311 = vld [vmem:[#allocation2 + $0xb9] sm:$0xff]
      %v1312 = vld [vmem:[#allocation2 + $0xc1] sm:$0xff]
      %v1313 = vld [vmem:[#allocation2 + $0xc9] sm:$0xff]
      %v1314 = vld [vmem:[#allocation2 + $0xd1] sm:$0xff]
      %v1315 = vld [vmem:[#allocation2 + $0xd9] sm:$0xff]
      %v1316 = vld [vmem:[#allocation2 + $0xe1] sm:$0xff]
      %v1317 = vld [vmem:[#allocation2 + $0xe9] sm:$0xff]
      %v1318 = vld [vmem:[#allocation2 + $0xf1] sm:$0xff]
      %v1319 = vld [vmem:[#allocation2 + $0xf9] sm:$0xff]
      %v1320 = vld [vmem:[#allocation2 + $0x101] sm:$0xff]
      %v1321 = vld [vmem:[#allocation2 + $0x109] sm:$0xff]
      %v1322 = vld [vmem:[#allocation2 + $0x111] sm:$0xff]
      %v1323 = vld [vmem:[#allocation2 + $0x119] sm:$0xff]
      %v1324 = vld [vmem:[#allocation2 + $0x121] sm:$0xff]
      %v1325 = vsel %vm1253, 1, 0
      %v1326 = vsel %vm1254, 1, 0
      %v1327 = vsel %vm1255, 1, 0
      %v1328 = vsel %vm1256, 1, 0
      %v1329 = vsel %vm1257, 1, 0
      %v1330 = vsel %vm1258, 1, 0
      %v1331 = vsel %vm1259, 1, 0
      %v1332 = vsel %vm1260, 1, 0
      %v1333 = vsel %vm1261, 1, 0
      %v1334 = vsel %vm1262, 1, 0
      %v1335 = vsel %vm1263, 1, 0
      %v1336 = vsel %vm1264, 1, 0
      %v1337 = vsel %vm1265, 1, 0
      %v1338 = vsel %vm1266, 1, 0
      %v1339 = vsel %vm1267, 1, 0
      %v1340 = vsel %vm1268, 1, 0
      %v1341 = vsel %vm1269, 1, 0
      %v1342 = vsel %vm1270, 1, 0
      %v1343 = vsel %vm1271, 1, 0
      %v1344 = vsel %vm1272, 1, 0
      %v1345 = vsel %vm1273, 1, 0
      %v1346 = vsel %vm1274, 1, 0
      %v1347 = vsel %vm1275, 1, 0
      %v1348 = vsel %vm1276, 1, 0
      %v1349 = vsel %vm1277, 1, 0
      %v1350 = vsel %vm1278, 1, 0
      %v1351 = vsel %vm1279, 1, 0
      %v1352 = vsel %vm1280, 1, 0
      %v1353 = vsel %vm1281, 1, 0
      %v1354 = vsel %vm1282, 1, 0
      %v1355 = vsel %vm1283, 1, 0
      %v1356 = vsel %vm1284, 1, 0
      %v1357 = vsel %vm1285, 1, 0
      %v1358 = vsel %vm1286, 1, 0
      %v1359 = vsel %vm1287, 1, 0
      %v1360 = vsel %vm1288, 1, 0
      %vm1361 = vcmp.eq.s32.totalorder %v1325, 1
      %vm1362 = vcmp.eq.s32.totalorder %v1326, 1
      %vm1363 = vcmp.eq.s32.totalorder %v1327, 1
      %vm1364 = vcmp.eq.s32.totalorder %v1328, 1
      %vm1365 = vcmp.eq.s32.totalorder %v1329, 1
      %vm1366 = vcmp.eq.s32.totalorder %v1330, 1
      %vm1367 = vcmp.eq.s32.totalorder %v1331, 1
      %vm1368 = vcmp.eq.s32.totalorder %v1332, 1
      %vm1369 = vcmp.eq.s32.totalorder %v1333, 1
      %vm1370 = vcmp.eq.s32.totalorder %v1334, 1
      %vm1371 = vcmp.eq.s32.totalorder %v1335, 1
      %vm1372 = vcmp.eq.s32.totalorder %v1336, 1
      %vm1373 = vcmp.eq.s32.totalorder %v1337, 1
      %vm1374 = vcmp.eq.s32.totalorder %v1338, 1
      %vm1375 = vcmp.eq.s32.totalorder %v1339, 1
      %vm1376 = vcmp.eq.s32.totalorder %v1340, 1
      %vm1377 = vcmp.eq.s32.totalorder %v1341, 1
      %vm1378 = vcmp.eq.s32.totalorder %v1342, 1
      %vm1379 = vcmp.eq.s32.totalorder %v1343, 1
      %vm1380 = vcmp.eq.s32.totalorder %v1344, 1
      %vm1381 = vcmp.eq.s32.totalorder %v1345, 1
      %vm1382 = vcmp.eq.s32.totalorder %v1346, 1
      %vm1383 = vcmp.eq.s32.totalorder %v1347, 1
      %vm1384 = vcmp.eq.s32.totalorder %v1348, 1
      %vm1385 = vcmp.eq.s32.totalorder %v1349, 1
      %vm1386 = vcmp.eq.s32.totalorder %v1350, 1
      %vm1387 = vcmp.eq.s32.totalorder %v1351, 1
      %vm1388 = vcmp.eq.s32.totalorder %v1352, 1
      %vm1389 = vcmp.eq.s32.totalorder %v1353, 1
      %vm1390 = vcmp.eq.s32.totalorder %v1354, 1
      %vm1391 = vcmp.eq.s32.totalorder %v1355, 1
      %vm1392 = vcmp.eq.s32.totalorder %v1356, 1
      %vm1393 = vcmp.eq.s32.totalorder %v1357, 1
      %vm1394 = vcmp.eq.s32.totalorder %v1358, 1
      %vm1395 = vcmp.eq.s32.totalorder %v1359, 1
      %vm1396 = vcmp.eq.s32.totalorder %v1360, 1
      %v1397 = vsel %vm1361, %v1289, 0.0
      %v1398 = vsel %vm1362, %v1290, 0.0
      %v1399 = vsel %vm1363, %v1291, 0.0
      %v1400 = vsel %vm1364, %v1292, 0.0
      %v1401 = vsel %vm1365, %v1293, 0.0
      %v1402 = vsel %vm1366, %v1294, 0.0
      %v1403 = vsel %vm1367, %v1295, 0.0
      %v1404 = vsel %vm1368, %v1296, 0.0
      %v1405 = vsel %vm1369, %v1297, 0.0
      %v1406 = vsel %vm1370, %v1298, 0.0
      %v1407 = vsel %vm1371, %v1299, 0.0
      %v1408 = vsel %vm1372, %v1300, 0.0
      %v1409 = vsel %vm1373, %v1301, 0.0
      %v1410 = vsel %vm1374, %v1302, 0.0
      %v1411 = vsel %vm1375, %v1303, 0.0
      %v1412 = vsel %vm1376, %v1304, 0.0
      %v1413 = vsel %vm1377, %v1305, 0.0
      %v1414 = vsel %vm1378, %v1306, 0.0
      %v1415 = vsel %vm1379, %v1307, 0.0
      %v1416 = vsel %vm1380, %v1308, 0.0
      %v1417 = vsel %vm1381, %v1309, 0.0
      %v1418 = vsel %vm1382, %v1310, 0.0
      %v1419 = vsel %vm1383, %v1311, 0.0
      %v1420 = vsel %vm1384, %v1312, 0.0
      %v1421 = vsel %vm1385, %v1313, 0.0
      %v1422 = vsel %vm1386, %v1314, 0.0
      %v1423 = vsel %vm1387, %v1315, 0.0
      %v1424 = vsel %vm1388, %v1316, 0.0
      %v1425 = vsel %vm1389, %v1317, 0.0
      %v1426 = vsel %vm1390, %v1318, 0.0
      %v1427 = vsel %vm1391, %v1319, 0.0
      %v1428 = vsel %vm1392, %v1320, 0.0
      %v1429 = vsel %vm1393, %v1321, 0.0
      %v1430 = vsel %vm1394, %v1322, 0.0
      %v1431 = vsel %vm1395, %v1323, 0.0
      %v1432 = vsel %vm1396, %v1324, 0.0
      %v1433 = vpack.c.bf16 %v1217, %v1217
      %v1434 = vpack.c.bf16 %v1218, %v1218
      %v1435 = vpack.c.bf16 %v1219, %v1219
      %v1436 = vpack.c.bf16 %v1220, %v1220
      %v1437 = vpack.c.bf16 %v1221, %v1221
      %v1438 = vpack.c.bf16 %v1222, %v1222
      %v1439 = vpack.c.bf16 %v1223, %v1223
      %v1440 = vpack.c.bf16 %v1224, %v1224
      %v1441 = vpack.c.bf16 %v1225, %v1225
      %v1442 = vpack.c.bf16 %v1226, %v1226
      %v1443 = vpack.c.bf16 %v1227, %v1227
      %v1444 = vpack.c.bf16 %v1228, %v1228
      %v1445 = vpack.c.bf16 %v1229, %v1229
      %v1446 = vpack.c.bf16 %v1230, %v1230
      %v1447 = vpack.c.bf16 %v1231, %v1231
      %v1448 = vpack.c.bf16 %v1232, %v1232
      %v1449 = vpack.c.bf16 %v1233, %v1233
      %v1450 = vpack.c.bf16 %v1234, %v1234
      %v1451 = vpack.c.bf16 %v1235, %v1235
      %v1452 = vpack.c.bf16 %v1236, %v1236
      %v1453 = vpack.c.bf16 %v1237, %v1237
      %v1454 = vpack.c.bf16 %v1238, %v1238
      %v1455 = vpack.c.bf16 %v1239, %v1239
      %v1456 = vpack.c.bf16 %v1240, %v1240
      %v1457 = vpack.c.bf16 %v1241, %v1241
      %v1458 = vpack.c.bf16 %v1242, %v1242
      %v1459 = vpack.c.bf16 %v1243, %v1243
      %v1460 = vpack.c.bf16 %v1244, %v1244
      %v1461 = vpack.c.bf16 %v1245, %v1245
      %v1462 = vpack.c.bf16 %v1246, %v1246
      %v1463 = vpack.c.bf16 %v1247, %v1247
      %v1464 = vpack.c.bf16 %v1248, %v1248
      %v1465 = vpack.c.bf16 %v1249, %v1249
      %v1466 = vpack.c.bf16 %v1250, %v1250
      %v1467 = vpack.c.bf16 %v1251, %v1251
      %v1468 = vpack.c.bf16 %v1252, %v1252
      %1469 = vst [vmem:[#allocation3] sm:$0xf] %v1433
      %1470 = vst [vmem:[#allocation3 + $0xc] sm:$0xf] %v1434
      %1471 = vst [vmem:[#allocation3 + $0x18] sm:$0xf] %v1435
      %1472 = vst [vmem:[#allocation3 + $0x24] sm:$0xf] %v1436
      %1473 = vst [vmem:[#allocation3 + $0x30] sm:$0xf] %v1437
      %1474 = vst [vmem:[#allocation3 + $0x3c] sm:$0xf] %v1438
      %1475 = vst [vmem:[#allocation3 + $0x48] sm:$0xf] %v1439
      %1476 = vst [vmem:[#allocation3 + $0x54] sm:$0xf] %v1440
      %1477 = vst [vmem:[#allocation3 + $0x60] sm:$0xf] %v1441
      %1478 = vst [vmem:[#allocation3 + $0x6c] sm:$0xf] %v1442
      %1479 = vst [vmem:[#allocation3 + $0x78] sm:$0xf] %v1443
      %1480 = vst [vmem:[#allocation3 + $0x84] sm:$0xf] %v1444
      %1481 = vst [vmem:[#allocation3 + $0x90] sm:$0xf] %v1445
      %1482 = vst [vmem:[#allocation3 + $0x9c] sm:$0xf] %v1446
      %1483 = vst [vmem:[#allocation3 + $0xa8] sm:$0xf] %v1447
      %1484 = vst [vmem:[#allocation3 + $0xb4] sm:$0xf] %v1448
      %1485 = vst [vmem:[#allocation3 + $0xc0] sm:$0xf] %v1449
      %1486 = vst [vmem:[#allocation3 + $0xcc] sm:$0xf] %v1450
      %1487 = vst [vmem:[#allocation3 + $0xd8] sm:$0xf] %v1451
      %1488 = vst [vmem:[#allocation3 + $0xe4] sm:$0xf] %v1452
      %1489 = vst [vmem:[#allocation3 + $0xf0] sm:$0xf] %v1453
      %1490 = vst [vmem:[#allocation3 + $0xfc] sm:$0xf] %v1454
      %1491 = vst [vmem:[#allocation3 + $0x108] sm:$0xf] %v1455
      %1492 = vst [vmem:[#allocation3 + $0x114] sm:$0xf] %v1456
      %1493 = vst [vmem:[#allocation3 + $0x120] sm:$0xf] %v1457
      %1494 = vst [vmem:[#allocation3 + $0x12c] sm:$0xf] %v1458
      %1495 = vst [vmem:[#allocation3 + $0x138] sm:$0xf] %v1459
      %1496 = vst [vmem:[#allocation3 + $0x144] sm:$0xf] %v1460
      %1497 = vst [vmem:[#allocation3 + $0x150] sm:$0xf] %v1461
      %1498 = vst [vmem:[#allocation3 + $0x15c] sm:$0xf] %v1462
      %1499 = vst [vmem:[#allocation3 + $0x168] sm:$0xf] %v1463
      %1500 = vst [vmem:[#allocation3 + $0x174] sm:$0xf] %v1464
      %1501 = vst [vmem:[#allocation3 + $0x180] sm:$0xf] %v1465
      %1502 = vst [vmem:[#allocation3 + $0x18c] sm:$0xf] %v1466
      %1503 = vst [vmem:[#allocation3 + $0x198] sm:$0xf] %v1467
      %1504 = vst [vmem:[#allocation3 + $0x1a4] sm:$0xf] %v1468
      %v1505 = vpack.c.bf16 %v1037, %v1037
      %v1506 = vpack.c.bf16 %v1038, %v1038
      %v1507 = vpack.c.bf16 %v1039, %v1039
      %v1508 = vpack.c.bf16 %v1040, %v1040
      %v1509 = vpack.c.bf16 %v1041, %v1041
      %v1510 = vpack.c.bf16 %v1042, %v1042
      %v1511 = vpack.c.bf16 %v1043, %v1043
      %v1512 = vpack.c.bf16 %v1044, %v1044
      %v1513 = vpack.c.bf16 %v1045, %v1045
      %v1514 = vpack.c.bf16 %v1046, %v1046
      %v1515 = vpack.c.bf16 %v1047, %v1047
      %v1516 = vpack.c.bf16 %v1048, %v1048
      %v1517 = vpack.c.bf16 %v1049, %v1049
      %v1518 = vpack.c.bf16 %v1050, %v1050
      %v1519 = vpack.c.bf16 %v1051, %v1051
      %v1520 = vpack.c.bf16 %v1052, %v1052
      %v1521 = vpack.c.bf16 %v1053, %v1053
      %v1522 = vpack.c.bf16 %v1054, %v1054
      %v1523 = vpack.c.bf16 %v1055, %v1055
      %v1524 = vpack.c.bf16 %v1056, %v1056
      %v1525 = vpack.c.bf16 %v1057, %v1057
      %v1526 = vpack.c.bf16 %v1058, %v1058
      %v1527 = vpack.c.bf16 %v1059, %v1059
      %v1528 = vpack.c.bf16 %v1060, %v1060
      %v1529 = vpack.c.bf16 %v1061, %v1061
      %v1530 = vpack.c.bf16 %v1062, %v1062
      %v1531 = vpack.c.bf16 %v1063, %v1063
      %v1532 = vpack.c.bf16 %v1064, %v1064
      %v1533 = vpack.c.bf16 %v1065, %v1065
      %v1534 = vpack.c.bf16 %v1066, %v1066
      %v1535 = vpack.c.bf16 %v1067, %v1067
      %v1536 = vpack.c.bf16 %v1068, %v1068
      %v1537 = vpack.c.bf16 %v1069, %v1069
      %v1538 = vpack.c.bf16 %v1070, %v1070
      %v1539 = vpack.c.bf16 %v1071, %v1071
      %v1540 = vpack.c.bf16 %v1072, %v1072
      %1541 = vst [vmem:[#allocation3 + $0x4] sm:$0xf] %v1505
      %1542 = vst [vmem:[#allocation3 + $0x10] sm:$0xf] %v1506
      %1543 = vst [vmem:[#allocation3 + $0x1c] sm:$0xf] %v1507
      %1544 = vst [vmem:[#allocation3 + $0x28] sm:$0xf] %v1508
      %1545 = vst [vmem:[#allocation3 + $0x34] sm:$0xf] %v1509
      %1546 = vst [vmem:[#allocation3 + $0x40] sm:$0xf] %v1510
      %1547 = vst [vmem:[#allocation3 + $0x4c] sm:$0xf] %v1511
      %1548 = vst [vmem:[#allocation3 + $0x58] sm:$0xf] %v1512
      %1549 = vst [vmem:[#allocation3 + $0x64] sm:$0xf] %v1513
      %1550 = vst [vmem:[#allocation3 + $0x70] sm:$0xf] %v1514
      %1551 = vst [vmem:[#allocation3 + $0x7c] sm:$0xf] %v1515
      %1552 = vst [vmem:[#allocation3 + $0x88] sm:$0xf] %v1516
      %1553 = vst [vmem:[#allocation3 + $0x94] sm:$0xf] %v1517
      %1554 = vst [vmem:[#allocation3 + $0xa0] sm:$0xf] %v1518
      %1555 = vst [vmem:[#allocation3 + $0xac] sm:$0xf] %v1519
      %1556 = vst [vmem:[#allocation3 + $0xb8] sm:$0xf] %v1520
      %1557 = vst [vmem:[#allocation3 + $0xc4] sm:$0xf] %v1521
      %1558 = vst [vmem:[#allocation3 + $0xd0] sm:$0xf] %v1522
      %1559 = vst [vmem:[#allocation3 + $0xdc] sm:$0xf] %v1523
      %1560 = vst [vmem:[#allocation3 + $0xe8] sm:$0xf] %v1524
      %1561 = vst [vmem:[#allocation3 + $0xf4] sm:$0xf] %v1525
      %1562 = vst [vmem:[#allocation3 + $0x100] sm:$0xf] %v1526
      %1563 = vst [vmem:[#allocation3 + $0x10c] sm:$0xf] %v1527
      %1564 = vst [vmem:[#allocation3 + $0x118] sm:$0xf] %v1528
      %1565 = vst [vmem:[#allocation3 + $0x124] sm:$0xf] %v1529
      %1566 = vst [vmem:[#allocation3 + $0x130] sm:$0xf] %v1530
      %1567 = vst [vmem:[#allocation3 + $0x13c] sm:$0xf] %v1531
      %1568 = vst [vmem:[#allocation3 + $0x148] sm:$0xf] %v1532
      %1569 = vst [vmem:[#allocation3 + $0x154] sm:$0xf] %v1533
      %1570 = vst [vmem:[#allocation3 + $0x160] sm:$0xf] %v1534
      %1571 = vst [vmem:[#allocation3 + $0x16c] sm:$0xf] %v1535
      %1572 = vst [vmem:[#allocation3 + $0x178] sm:$0xf] %v1536
      %1573 = vst [vmem:[#allocation3 + $0x184] sm:$0xf] %v1537
      %1574 = vst [vmem:[#allocation3 + $0x190] sm:$0xf] %v1538
      %1575 = vst [vmem:[#allocation3 + $0x19c] sm:$0xf] %v1539
      %1576 = vst [vmem:[#allocation3 + $0x1a8] sm:$0xf] %v1540
      %v1577 = vpack.c.bf16 %v1397, %v1397
      %v1578 = vpack.c.bf16 %v1398, %v1398
      %v1579 = vpack.c.bf16 %v1399, %v1399
      %v1580 = vpack.c.bf16 %v1400, %v1400
      %v1581 = vpack.c.bf16 %v1401, %v1401
      %v1582 = vpack.c.bf16 %v1402, %v1402
      %v1583 = vpack.c.bf16 %v1403, %v1403
      %v1584 = vpack.c.bf16 %v1404, %v1404
      %v1585 = vpack.c.bf16 %v1405, %v1405
      %v1586 = vpack.c.bf16 %v1406, %v1406
      %v1587 = vpack.c.bf16 %v1407, %v1407
      %v1588 = vpack.c.bf16 %v1408, %v1408
      %v1589 = vpack.c.bf16 %v1409, %v1409
      %v1590 = vpack.c.bf16 %v1410, %v1410
      %v1591 = vpack.c.bf16 %v1411, %v1411
      %v1592 = vpack.c.bf16 %v1412, %v1412
      %v1593 = vpack.c.bf16 %v1413, %v1413
      %v1594 = vpack.c.bf16 %v1414, %v1414
      %v1595 = vpack.c.bf16 %v1415, %v1415
      %v1596 = vpack.c.bf16 %v1416, %v1416
      %v1597 = vpack.c.bf16 %v1417, %v1417
      %v1598 = vpack.c.bf16 %v1418, %v1418
      %v1599 = vpack.c.bf16 %v1419, %v1419
      %v1600 = vpack.c.bf16 %v1420, %v1420
      %v1601 = vpack.c.bf16 %v1421, %v1421
      %v1602 = vpack.c.bf16 %v1422, %v1422
      %v1603 = vpack.c.bf16 %v1423, %v1423
      %v1604 = vpack.c.bf16 %v1424, %v1424
      %v1605 = vpack.c.bf16 %v1425, %v1425
      %v1606 = vpack.c.bf16 %v1426, %v1426
      %v1607 = vpack.c.bf16 %v1427, %v1427
      %v1608 = vpack.c.bf16 %v1428, %v1428
      %v1609 = vpack.c.bf16 %v1429, %v1429
      %v1610 = vpack.c.bf16 %v1430, %v1430
      %v1611 = vpack.c.bf16 %v1431, %v1431
      %v1612 = vpack.c.bf16 %v1432, %v1432
      %1613 = vst [vmem:[#allocation3 + $0x8] sm:$0xf] %v1577
      %1614 = vst [vmem:[#allocation3 + $0x14] sm:$0xf] %v1578
      %1615 = vst [vmem:[#allocation3 + $0x20] sm:$0xf] %v1579
      %1616 = vst [vmem:[#allocation3 + $0x2c] sm:$0xf] %v1580
      %1617 = vst [vmem:[#allocation3 + $0x38] sm:$0xf] %v1581
      %1618 = vst [vmem:[#allocation3 + $0x44] sm:$0xf] %v1582
      %1619 = vst [vmem:[#allocation3 + $0x50] sm:$0xf] %v1583
      %1620 = vst [vmem:[#allocation3 + $0x5c] sm:$0xf] %v1584
      %1621 = vst [vmem:[#allocation3 + $0x68] sm:$0xf] %v1585
      %1622 = vst [vmem:[#allocation3 + $0x74] sm:$0xf] %v1586
      %1623 = vst [vmem:[#allocation3 + $0x80] sm:$0xf] %v1587
      %1624 = vst [vmem:[#allocation3 + $0x8c] sm:$0xf] %v1588
      %1625 = vst [vmem:[#allocation3 + $0x98] sm:$0xf] %v1589
      %1626 = vst [vmem:[#allocation3 + $0xa4] sm:$0xf] %v1590
      %1627 = vst [vmem:[#allocation3 + $0xb0] sm:$0xf] %v1591
      %1628 = vst [vmem:[#allocation3 + $0xbc] sm:$0xf] %v1592
      %1629 = vst [vmem:[#allocation3 + $0xc8] sm:$0xf] %v1593
      %1630 = vst [vmem:[#allocation3 + $0xd4] sm:$0xf] %v1594
      %1631 = vst [vmem:[#allocation3 + $0xe0] sm:$0xf] %v1595
      %1632 = vst [vmem:[#allocation3 + $0xec] sm:$0xf] %v1596
      %1633 = vst [vmem:[#allocation3 + $0xf8] sm:$0xf] %v1597
      %1634 = vst [vmem:[#allocation3 + $0x104] sm:$0xf] %v1598
      %1635 = vst [vmem:[#allocation3 + $0x110] sm:$0xf] %v1599
      %1636 = vst [vmem:[#allocation3 + $0x11c] sm:$0xf] %v1600
      %1637 = vst [vmem:[#allocation3 + $0x128] sm:$0xf] %v1601
      %1638 = vst [vmem:[#allocation3 + $0x134] sm:$0xf] %v1602
      %1639 = vst [vmem:[#allocation3 + $0x140] sm:$0xf] %v1603
      %1640 = vst [vmem:[#allocation3 + $0x14c] sm:$0xf] %v1604
      %1641 = vst [vmem:[#allocation3 + $0x158] sm:$0xf] %v1605
      %1642 = vst [vmem:[#allocation3 + $0x164] sm:$0xf] %v1606
      %1643 = vst [vmem:[#allocation3 + $0x170] sm:$0xf] %v1607
      %1644 = vst [vmem:[#allocation3 + $0x17c] sm:$0xf] %v1608
      %1645 = vst [vmem:[#allocation3 + $0x188] sm:$0xf] %v1609
      %1646 = vst [vmem:[#allocation3 + $0x194] sm:$0xf] %v1610
      %1647 = vst [vmem:[#allocation3 + $0x1a0] sm:$0xf] %v1611
      %1648 = vst [vmem:[#allocation3 + $0x1ac] sm:$0xf] %v1612
      %v1649 = vld [vmem:[#allocation3] sm:$0xff]
      %v1650 = vld [vmem:[#allocation3 + $0x8] sm:$0xf]
      %v1651 = vld [vmem:[#allocation3 + $0xc] sm:$0xff]
      %v1652 = vld [vmem:[#allocation3 + $0x14] sm:$0xf]
      %v1653 = vld [vmem:[#allocation3 + $0x18] sm:$0xff]
      %v1654 = vld [vmem:[#allocation3 + $0x20] sm:$0xf]
      %v1655 = vld [vmem:[#allocation3 + $0x24] sm:$0xff]
      %v1656 = vld [vmem:[#allocation3 + $0x2c] sm:$0xf]
      %v1657 = vld [vmem:[#allocation3 + $0x30] sm:$0xff]
      %v1658 = vld [vmem:[#allocation3 + $0x38] sm:$0xf]
      %v1659 = vld [vmem:[#allocation3 + $0x3c] sm:$0xff]
      %v1660 = vld [vmem:[#allocation3 + $0x44] sm:$0xf]
      %v1661 = vld [vmem:[#allocation3 + $0x48] sm:$0xff]
      %v1662 = vld [vmem:[#allocation3 + $0x50] sm:$0xf]
      %v1663 = vld [vmem:[#allocation3 + $0x54] sm:$0xff]
      %v1664 = vld [vmem:[#allocation3 + $0x5c] sm:$0xf]
      %v1665 = vld [vmem:[#allocation3 + $0x60] sm:$0xff]
      %v1666 = vld [vmem:[#allocation3 + $0x68] sm:$0xf]
      %v1667 = vld [vmem:[#allocation3 + $0x6c] sm:$0xff]
      %v1668 = vld [vmem:[#allocation3 + $0x74] sm:$0xf]
      %v1669 = vld [vmem:[#allocation3 + $0x78] sm:$0xff]
      %v1670 = vld [vmem:[#allocation3 + $0x80] sm:$0xf]
      %v1671 = vld [vmem:[#allocation3 + $0x84] sm:$0xff]
      %v1672 = vld [vmem:[#allocation3 + $0x8c] sm:$0xf]
      %v1673 = vld [vmem:[#allocation3 + $0x90] sm:$0xff]
      %v1674 = vld [vmem:[#allocation3 + $0x98] sm:$0xf]
      %v1675 = vld [vmem:[#allocation3 + $0x9c] sm:$0xff]
      %v1676 = vld [vmem:[#allocation3 + $0xa4] sm:$0xf]
      %v1677 = vld [vmem:[#allocation3 + $0xa8] sm:$0xff]
      %v1678 = vld [vmem:[#allocation3 + $0xb0] sm:$0xf]
      %v1679 = vld [vmem:[#allocation3 + $0xb4] sm:$0xff]
      %v1680 = vld [vmem:[#allocation3 + $0xbc] sm:$0xf]
      %v1681 = vld [vmem:[#allocation3 + $0xc0] sm:$0xff]
      %v1682 = vld [vmem:[#allocation3 + $0xc8] sm:$0xf]
      %v1683 = vld [vmem:[#allocation3 + $0xcc] sm:$0xff]
      %v1684 = vld [vmem:[#allocation3 + $0xd4] sm:$0xf]
      %v1685 = vld [vmem:[#allocation3 + $0xd8] sm:$0xff]
      %v1686 = vld [vmem:[#allocation3 + $0xe0] sm:$0xf]
      %v1687 = vld [vmem:[#allocation3 + $0xe4] sm:$0xff]
      %v1688 = vld [vmem:[#allocation3 + $0xec] sm:$0xf]
      %v1689 = vld [vmem:[#allocation3 + $0xf0] sm:$0xff]
      %v1690 = vld [vmem:[#allocation3 + $0xf8] sm:$0xf]
      %v1691 = vld [vmem:[#allocation3 + $0xfc] sm:$0xff]
      %v1692 = vld [vmem:[#allocation3 + $0x104] sm:$0xf]
      %v1693 = vld [vmem:[#allocation3 + $0x108] sm:$0xff]
      %v1694 = vld [vmem:[#allocation3 + $0x110] sm:$0xf]
      %v1695 = vld [vmem:[#allocation3 + $0x114] sm:$0xff]
      %v1696 = vld [vmem:[#allocation3 + $0x11c] sm:$0xf]
      %v1697 = vld [vmem:[#allocation3 + $0x120] sm:$0xff]
      %v1698 = vld [vmem:[#allocation3 + $0x128] sm:$0xf]
      %v1699 = vld [vmem:[#allocation3 + $0x12c] sm:$0xff]
      %v1700 = vld [vmem:[#allocation3 + $0x134] sm:$0xf]
      %v1701 = vld [vmem:[#allocation3 + $0x138] sm:$0xff]
      %v1702 = vld [vmem:[#allocation3 + $0x140] sm:$0xf]
      %v1703 = vld [vmem:[#allocation3 + $0x144] sm:$0xff]
      %v1704 = vld [vmem:[#allocation3 + $0x14c] sm:$0xf]
      %v1705 = vld [vmem:[#allocation3 + $0x150] sm:$0xff]
      %v1706 = vld [vmem:[#allocation3 + $0x158] sm:$0xf]
      %v1707 = vld [vmem:[#allocation3 + $0x15c] sm:$0xff]
      %v1708 = vld [vmem:[#allocation3 + $0x164] sm:$0xf]
      %v1709 = vld [vmem:[#allocation3 + $0x168] sm:$0xff]
      %v1710 = vld [vmem:[#allocation3 + $0x170] sm:$0xf]
      %v1711 = vld [vmem:[#allocation3 + $0x174] sm:$0xff]
      %v1712 = vld [vmem:[#allocation3 + $0x17c] sm:$0xf]
      %v1713 = vld [vmem:[%s3] sm:$0xf]
      %v1714 = vld [vmem:[%s3 + $0x4] sm:$0xf]
      %v1715 = vld [vmem:[%s3 + $0x8] sm:$0xf]
      %v1716 = vld [vmem:[%s3 + $0xc] sm:$0xf]
      %v1717 = vld [vmem:[%s3 + $0x10] sm:$0xf]
      %v1718 = vld [vmem:[%s3 + $0x14] sm:$0xf]
      %v1719 = vld [vmem:[%s3 + $0x18] sm:$0xf]
      %v1720 = vld [vmem:[%s3 + $0x1c] sm:$0xf]
      %v1721 = vld [vmem:[%s3 + $0x20] sm:$0xf]
      %v1722 = vld [vmem:[%s3 + $0x24] sm:$0xf]
      %v1723 = vld [vmem:[%s3 + $0x28] sm:$0xf]
      %v1724 = vld [vmem:[%s3 + $0x2c] sm:$0xf]
      %v1725 = vld [vmem:[%s3 + $0x30] sm:$0xf]
      %v1726 = vld [vmem:[%s3 + $0x34] sm:$0xf]
      %v1727 = vld [vmem:[%s3 + $0x38] sm:$0xf]
      %v1728 = vld [vmem:[%s3 + $0x3c] sm:$0xf]
      %v1729 = vld [vmem:[%s3 + $0x40] sm:$0xf]
      %v1730 = vld [vmem:[%s3 + $0x44] sm:$0xf]
      %v1731 = vld [vmem:[%s3 + $0x48] sm:$0xf]
      %v1732 = vld [vmem:[%s3 + $0x4c] sm:$0xf]
      %v1733 = vld [vmem:[%s3 + $0x50] sm:$0xf]
      %v1734 = vld [vmem:[%s3 + $0x54] sm:$0xf]
      %v1735 = vld [vmem:[%s3 + $0x58] sm:$0xf]
      %v1736 = vld [vmem:[%s3 + $0x5c] sm:$0xf]
      %v1737 = vld [vmem:[%s3 + $0x60] sm:$0xf]
      %v1738 = vld [vmem:[%s3 + $0x64] sm:$0xf]
      %v1739 = vld [vmem:[%s3 + $0x68] sm:$0xf]
      %v1740 = vld [vmem:[%s3 + $0x6c] sm:$0xf]
      %v1741 = vld [vmem:[%s3 + $0x70] sm:$0xf]
      %v1742 = vld [vmem:[%s3 + $0x74] sm:$0xf]
      %v1743 = vld [vmem:[%s3 + $0x78] sm:$0xf]
      %v1744 = vld [vmem:[%s3 + $0x7c] sm:$0xf]
      %v1745 = vld [vmem:[%s3 + $0x80] sm:$0xf]
      %v1746 = vld [vmem:[%s3 + $0x84] sm:$0xf]
      %v1747 = vld [vmem:[%s3 + $0x88] sm:$0xf]
      %v1748 = vld [vmem:[%s3 + $0x8c] sm:$0xf]
      %v1749 = vld [vmem:[%s3 + $0x90] sm:$0xf]
      %v1750 = vld [vmem:[%s3 + $0x94] sm:$0xf]
      %v1751 = vld [vmem:[%s3 + $0x98] sm:$0xf]
      %v1752 = vld [vmem:[%s3 + $0x9c] sm:$0xf]
      %v1753 = vld [vmem:[%s3 + $0xa0] sm:$0xf]
      %v1754 = vld [vmem:[%s3 + $0xa4] sm:$0xf]
      %v1755 = vld [vmem:[%s3 + $0xa8] sm:$0xf]
      %v1756 = vld [vmem:[%s3 + $0xac] sm:$0xf]
      %v1757 = vld [vmem:[%s3 + $0xb0] sm:$0xf]
      %v1758 = vld [vmem:[%s3 + $0xb4] sm:$0xf]
      %v1759 = vld [vmem:[%s3 + $0xb8] sm:$0xf]
      %v1760 = vld [vmem:[%s3 + $0xbc] sm:$0xf]
      %v1825 = vunpack.c.l.b16 %v1649
      %v1826 = vunpack.c.h.b16 %v1649
      %v1827 = vunpack.c.l.b16 %v1650
      %v1828 = vunpack.c.l.b16 %v1651
      %v1829 = vunpack.c.h.b16 %v1651
      %v1830 = vunpack.c.l.b16 %v1652
      %v1831 = vunpack.c.l.b16 %v1653
      %v1832 = vunpack.c.h.b16 %v1653
      %v1833 = vunpack.c.l.b16 %v1654
      %v1834 = vunpack.c.l.b16 %v1655
      %v1835 = vunpack.c.h.b16 %v1655
      %v1836 = vunpack.c.l.b16 %v1656
      %v1837 = vunpack.c.l.b16 %v1657
      %v1838 = vunpack.c.h.b16 %v1657
      %v1839 = vunpack.c.l.b16 %v1658
      %v1840 = vunpack.c.l.b16 %v1659
      %v1841 = vunpack.c.h.b16 %v1659
      %v1842 = vunpack.c.l.b16 %v1660
      %v1843 = vunpack.c.l.b16 %v1661
      %v1844 = vunpack.c.h.b16 %v1661
      %v1845 = vunpack.c.l.b16 %v1662
      %v1846 = vunpack.c.l.b16 %v1663
      %v1847 = vunpack.c.h.b16 %v1663
      %v1848 = vunpack.c.l.b16 %v1664
      %v1849 = vunpack.c.l.b16 %v1665
      %v1850 = vunpack.c.h.b16 %v1665
      %v1851 = vunpack.c.l.b16 %v1666
      %v1852 = vunpack.c.l.b16 %v1667
      %v1853 = vunpack.c.h.b16 %v1667
      %v1854 = vunpack.c.l.b16 %v1668
      %v1855 = vunpack.c.l.b16 %v1669
      %v1856 = vunpack.c.h.b16 %v1669
      %v1857 = vunpack.c.l.b16 %v1670
      %v1858 = vunpack.c.l.b16 %v1671
      %v1859 = vunpack.c.h.b16 %v1671
      %v1860 = vunpack.c.l.b16 %v1672
      %v1861 = vunpack.c.l.b16 %v1673
      %v1862 = vunpack.c.h.b16 %v1673
      %v1863 = vunpack.c.l.b16 %v1674
      %v1864 = vunpack.c.l.b16 %v1675
      %v1865 = vunpack.c.h.b16 %v1675
      %v1866 = vunpack.c.l.b16 %v1676
      %v1867 = vunpack.c.l.b16 %v1677
      %v1868 = vunpack.c.h.b16 %v1677
      %v1869 = vunpack.c.l.b16 %v1678
      %v1870 = vunpack.c.l.b16 %v1679
      %v1871 = vunpack.c.h.b16 %v1679
      %v1872 = vunpack.c.l.b16 %v1680
      %v1873 = vunpack.c.l.b16 %v1681
      %v1874 = vunpack.c.h.b16 %v1681
      %v1875 = vunpack.c.l.b16 %v1682
      %v1876 = vunpack.c.l.b16 %v1683
      %v1877 = vunpack.c.h.b16 %v1683
      %v1878 = vunpack.c.l.b16 %v1684
      %v1879 = vunpack.c.l.b16 %v1685
      %v1880 = vunpack.c.h.b16 %v1685
      %v1881 = vunpack.c.l.b16 %v1686
      %v1882 = vunpack.c.l.b16 %v1687
      %v1883 = vunpack.c.h.b16 %v1687
      %v1884 = vunpack.c.l.b16 %v1688
      %v1885 = vunpack.c.l.b16 %v1689
      %v1886 = vunpack.c.h.b16 %v1689
      %v1887 = vunpack.c.l.b16 %v1690
      %v1888 = vunpack.c.l.b16 %v1691
      %v1889 = vunpack.c.h.b16 %v1691
      %v1890 = vunpack.c.l.b16 %v1692
      %v1891 = vunpack.c.l.b16 %v1693
      %v1892 = vunpack.c.h.b16 %v1693
      %v1893 = vunpack.c.l.b16 %v1694
      %v1894 = vunpack.c.l.b16 %v1695
      %v1895 = vunpack.c.h.b16 %v1695
      %v1896 = vunpack.c.l.b16 %v1696
      %v1897 = vunpack.c.l.b16 %v1697
      %v1898 = vunpack.c.h.b16 %v1697
      %v1899 = vunpack.c.l.b16 %v1698
      %v1900 = vunpack.c.l.b16 %v1699
      %v1901 = vunpack.c.h.b16 %v1699
      %v1902 = vunpack.c.l.b16 %v1700
      %v1903 = vunpack.c.l.b16 %v1701
      %v1904 = vunpack.c.h.b16 %v1701
      %v1905 = vunpack.c.l.b16 %v1702
      %v1906 = vunpack.c.l.b16 %v1703
      %v1907 = vunpack.c.h.b16 %v1703
      %v1908 = vunpack.c.l.b16 %v1704
      %v1909 = vunpack.c.l.b16 %v1705
      %v1910 = vunpack.c.h.b16 %v1705
      %v1911 = vunpack.c.l.b16 %v1706
      %v1912 = vunpack.c.l.b16 %v1707
      %v1913 = vunpack.c.h.b16 %v1707
      %v1914 = vunpack.c.l.b16 %v1708
      %v1915 = vunpack.c.l.b16 %v1709
      %v1916 = vunpack.c.h.b16 %v1709
      %v1917 = vunpack.c.l.b16 %v1710
      %v1918 = vunpack.c.l.b16 %v1711
      %v1919 = vunpack.c.h.b16 %v1711
      %v1920 = vunpack.c.l.b16 %v1712
      %v1921 = vpack.c.b16 %v1828, %v1825
      %v1922 = vpack.c.b16 %v1829, %v1826
      %v1923 = vpack.c.b16 %v1830, %v1827
      %v1924 = vpack.c.b16 %v1834, %v1831
      %v1925 = vpack.c.b16 %v1835, %v1832
      %v1926 = vpack.c.b16 %v1836, %v1833
      %v1927 = vpack.c.b16 %v1840, %v1837
      %v1928 = vpack.c.b16 %v1841, %v1838
      %v1929 = vpack.c.b16 %v1842, %v1839
      %v1930 = vpack.c.b16 %v1846, %v1843
      %v1931 = vpack.c.b16 %v1847, %v1844
      %v1932 = vpack.c.b16 %v1848, %v1845
      %v1933 = vpack.c.b16 %v1852, %v1849
      %v1934 = vpack.c.b16 %v1853, %v1850
      %v1935 = vpack.c.b16 %v1854, %v1851
      %v1936 = vpack.c.b16 %v1858, %v1855
      %v1937 = vpack.c.b16 %v1859, %v1856
      %v1938 = vpack.c.b16 %v1860, %v1857
      %v1939 = vpack.c.b16 %v1864, %v1861
      %v1940 = vpack.c.b16 %v1865, %v1862
      %v1941 = vpack.c.b16 %v1866, %v1863
      %v1942 = vpack.c.b16 %v1870, %v1867
      %v1943 = vpack.c.b16 %v1871, %v1868
      %v1944 = vpack.c.b16 %v1872, %v1869
      %v1945 = vpack.c.b16 %v1876, %v1873
      %v1946 = vpack.c.b16 %v1877, %v1874
      %v1947 = vpack.c.b16 %v1878, %v1875
      %v1948 = vpack.c.b16 %v1882, %v1879
      %v1949 = vpack.c.b16 %v1883, %v1880
      %v1950 = vpack.c.b16 %v1884, %v1881
      %v1951 = vpack.c.b16 %v1888, %v1885
      %v1952 = vpack.c.b16 %v1889, %v1886
      %v1953 = vpack.c.b16 %v1890, %v1887
      %v1954 = vpack.c.b16 %v1894, %v1891
      %v1955 = vpack.c.b16 %v1895, %v1892
      %v1956 = vpack.c.b16 %v1896, %v1893
      %v1957 = vpack.c.b16 %v1900, %v1897
      %v1958 = vpack.c.b16 %v1901, %v1898
      %v1959 = vpack.c.b16 %v1902, %v1899
      %v1960 = vpack.c.b16 %v1906, %v1903
      %v1961 = vpack.c.b16 %v1907, %v1904
      %v1962 = vpack.c.b16 %v1908, %v1905
      %v1963 = vpack.c.b16 %v1912, %v1909
      %v1964 = vpack.c.b16 %v1913, %v1910
      %v1965 = vpack.c.b16 %v1914, %v1911
      %v1966 = vpack.c.b16 %v1918, %v1915
      %v1967 = vpack.c.b16 %v1919, %v1916
      %v1968 = vpack.c.b16 %v1920, %v1917
      %v2065 = vunpack.c.l.b16 %v1713
      %v2066 = vunpack.c.l.b16 %v1714
      %v2067 = vunpack.c.l.b16 %v1715
      %v2068 = vunpack.c.l.b16 %v1716
      %v2069 = vunpack.c.l.b16 %v1717
      %v2070 = vunpack.c.l.b16 %v1718
      %v2071 = vunpack.c.l.b16 %v1719
      %v2072 = vunpack.c.l.b16 %v1720
      %v2073 = vunpack.c.l.b16 %v1721
      %v2074 = vunpack.c.l.b16 %v1722
      %v2075 = vunpack.c.l.b16 %v1723
      %v2076 = vunpack.c.l.b16 %v1724
      %v2077 = vunpack.c.l.b16 %v1725
      %v2078 = vunpack.c.l.b16 %v1726
      %v2079 = vunpack.c.l.b16 %v1727
      %v2080 = vunpack.c.l.b16 %v1728
      %v2081 = vunpack.c.l.b16 %v1729
      %v2082 = vunpack.c.l.b16 %v1730
      %v2083 = vunpack.c.l.b16 %v1731
      %v2084 = vunpack.c.l.b16 %v1732
      %v2085 = vunpack.c.l.b16 %v1733
      %v2086 = vunpack.c.l.b16 %v1734
      %v2087 = vunpack.c.l.b16 %v1735
      %v2088 = vunpack.c.l.b16 %v1736
      %v2089 = vunpack.c.l.b16 %v1737
      %v2090 = vunpack.c.l.b16 %v1738
      %v2091 = vunpack.c.l.b16 %v1739
      %v2092 = vunpack.c.l.b16 %v1740
      %v2093 = vunpack.c.l.b16 %v1741
      %v2094 = vunpack.c.l.b16 %v1742
      %v2095 = vunpack.c.l.b16 %v1743
      %v2096 = vunpack.c.l.b16 %v1744
      %v2097 = vunpack.c.l.b16 %v1745
      %v2098 = vunpack.c.l.b16 %v1746
      %v2099 = vunpack.c.l.b16 %v1747
      %v2100 = vunpack.c.l.b16 %v1748
      %v2101 = vunpack.c.l.b16 %v1749
      %v2102 = vunpack.c.l.b16 %v1750
      %v2103 = vunpack.c.l.b16 %v1751
      %v2104 = vunpack.c.l.b16 %v1752
      %v2105 = vunpack.c.l.b16 %v1753
      %v2106 = vunpack.c.l.b16 %v1754
      %v2107 = vunpack.c.l.b16 %v1755
      %v2108 = vunpack.c.l.b16 %v1756
      %v2109 = vunpack.c.l.b16 %v1757
      %v2110 = vunpack.c.l.b16 %v1758
      %v2111 = vunpack.c.l.b16 %v1759
      %v2112 = vunpack.c.l.b16 %v1760
      %v2113 = vpack.c.b16 %v2066, %v2065
      %v2114 = vpack.c.b16 %v2068, %v2067
      %v2115 = vpack.c.b16 %v2070, %v2069
      %v2116 = vpack.c.b16 %v2072, %v2071
      %v2117 = vpack.c.b16 %v2074, %v2073
      %v2118 = vpack.c.b16 %v2076, %v2075
      %v2119 = vpack.c.b16 %v2078, %v2077
      %v2120 = vpack.c.b16 %v2080, %v2079
      %v2121 = vpack.c.b16 %v2082, %v2081
      %v2122 = vpack.c.b16 %v2084, %v2083
      %v2123 = vpack.c.b16 %v2086, %v2085
      %v2124 = vpack.c.b16 %v2088, %v2087
      %v2125 = vpack.c.b16 %v2090, %v2089
      %v2126 = vpack.c.b16 %v2092, %v2091
      %v2127 = vpack.c.b16 %v2094, %v2093
      %v2128 = vpack.c.b16 %v2096, %v2095
      %v2129 = vpack.c.b16 %v2098, %v2097
      %v2130 = vpack.c.b16 %v2100, %v2099
      %v2131 = vpack.c.b16 %v2102, %v2101
      %v2132 = vpack.c.b16 %v2104, %v2103
      %v2133 = vpack.c.b16 %v2106, %v2105
      %v2134 = vpack.c.b16 %v2108, %v2107
      %v2135 = vpack.c.b16 %v2110, %v2109
      %v2136 = vpack.c.b16 %v2112, %v2111
      %2161 = vmatpush.bf16.msra.mxu0 %v2120
      %2162 = vmatpush.bf16.msra.mxu0 %v2119
      %2163 = vmatpush.bf16.msra.mxu0 %v2118
      %2164 = vmatpush.bf16.msra.mxu0 %v2117
      %2165 = vmatpush.bf16.msra.mxu0 %v2116
      %2166 = vmatpush.bf16.msra.mxu0 %v2115
      %2167 = vmatpush.bf16.msra.mxu0 %v2114
      %2168 = vmatpush.bf16.msra.mxu0 %v2113
      %2169 = vmatmul.bf16.gmra.mxu0 %v1921
      %v2170 = vpop.f32.mrf.mxu0
      %v2171 = vadd.f32 0.0, %v2170
      %v2172 = vpop.f32.mrf.mxu0
      %v2173 = vadd.f32 0.0, %v2172
      %2174 = vmatmul.bf16.gmra.mxu0 %v1924
      %v2175 = vpop.f32.mrf.mxu0
      %v2176 = vadd.f32 0.0, %v2175
      %v2177 = vpop.f32.mrf.mxu0
      %v2178 = vadd.f32 0.0, %v2177
      %2179 = vmatmul.bf16.gmra.mxu0 %v1927
      %v2180 = vpop.f32.mrf.mxu0
      %v2181 = vadd.f32 0.0, %v2180
      %v2182 = vpop.f32.mrf.mxu0
      %v2183 = vadd.f32 0.0, %v2182
      %2184 = vmatmul.bf16.gmra.mxu0 %v1930
      %v2185 = vpop.f32.mrf.mxu0
      %v2186 = vadd.f32 0.0, %v2185
      %v2187 = vpop.f32.mrf.mxu0
      %v2188 = vadd.f32 0.0, %v2187
      %2189 = vmatmul.bf16.gmra.mxu0 %v1933
      %v2190 = vpop.f32.mrf.mxu0
      %v2191 = vadd.f32 0.0, %v2190
      %v2192 = vpop.f32.mrf.mxu0
      %v2193 = vadd.f32 0.0, %v2192
      %2194 = vmatmul.bf16.gmra.mxu0 %v1936
      %v2195 = vpop.f32.mrf.mxu0
      %v2196 = vadd.f32 0.0, %v2195
      %v2197 = vpop.f32.mrf.mxu0
      %v2198 = vadd.f32 0.0, %v2197
      %2199 = vmatmul.bf16.gmra.mxu0 %v1939
      %v2200 = vpop.f32.mrf.mxu0
      %v2201 = vadd.f32 0.0, %v2200
      %v2202 = vpop.f32.mrf.mxu0
      %v2203 = vadd.f32 0.0, %v2202
      %2204 = vmatmul.bf16.gmra.mxu0 %v1942
      %v2205 = vpop.f32.mrf.mxu0
      %v2206 = vadd.f32 0.0, %v2205
      %v2207 = vpop.f32.mrf.mxu0
      %v2208 = vadd.f32 0.0, %v2207
      %2209 = vmatmul.bf16.gmra.mxu0 %v1945
      %v2210 = vpop.f32.mrf.mxu0
      %v2211 = vadd.f32 0.0, %v2210
      %v2212 = vpop.f32.mrf.mxu0
      %v2213 = vadd.f32 0.0, %v2212
      %2214 = vmatmul.bf16.gmra.mxu0 %v1948
      %v2215 = vpop.f32.mrf.mxu0
      %v2216 = vadd.f32 0.0, %v2215
      %v2217 = vpop.f32.mrf.mxu0
      %v2218 = vadd.f32 0.0, %v2217
      %2219 = vmatmul.bf16.gmra.mxu0 %v1951
      %v2220 = vpop.f32.mrf.mxu0
      %v2221 = vadd.f32 0.0, %v2220
      %v2222 = vpop.f32.mrf.mxu0
      %v2223 = vadd.f32 0.0, %v2222
      %2224 = vmatmul.bf16.gmra.mxu0 %v1954
      %v2225 = vpop.f32.mrf.mxu0
      %v2226 = vadd.f32 0.0, %v2225
      %v2227 = vpop.f32.mrf.mxu0
      %v2228 = vadd.f32 0.0, %v2227
      %2229 = vmatmul.bf16.gmra.mxu0 %v1957
      %v2230 = vpop.f32.mrf.mxu0
      %v2231 = vadd.f32 0.0, %v2230
      %v2232 = vpop.f32.mrf.mxu0
      %v2233 = vadd.f32 0.0, %v2232
      %2234 = vmatmul.bf16.gmra.mxu0 %v1960
      %v2235 = vpop.f32.mrf.mxu0
      %v2236 = vadd.f32 0.0, %v2235
      %v2237 = vpop.f32.mrf.mxu0
      %v2238 = vadd.f32 0.0, %v2237
      %2239 = vmatmul.bf16.gmra.mxu0 %v1963
      %v2240 = vpop.f32.mrf.mxu0
      %v2241 = vadd.f32 0.0, %v2240
      %v2242 = vpop.f32.mrf.mxu0
      %v2243 = vadd.f32 0.0, %v2242
      %2244 = vmatmul.bf16.gmra.mxu0 %v1966
      %v2245 = vpop.f32.mrf.mxu0
      %v2246 = vadd.f32 0.0, %v2245
      %v2247 = vpop.f32.mrf.mxu0
      %v2248 = vadd.f32 0.0, %v2247
      %2249 = vdwg.mxu0
      %2250 = vmatpush.bf16.msra.mxu0 %v2128
      %2251 = vmatpush.bf16.msra.mxu0 %v2127
      %2252 = vmatpush.bf16.msra.mxu0 %v2126
      %2253 = vmatpush.bf16.msra.mxu0 %v2125
      %2254 = vmatpush.bf16.msra.mxu0 %v2124
      %2255 = vmatpush.bf16.msra.mxu0 %v2123
      %2256 = vmatpush.bf16.msra.mxu0 %v2122
      %2257 = vmatpush.bf16.msra.mxu0 %v2121
      %2258 = vmatmul.bf16.gmra.mxu0 %v1922
      %v2259 = vpop.f32.mrf.mxu0
      %v2260 = vadd.f32 %v2171, %v2259
      %v2261 = vpop.f32.mrf.mxu0
      %v2262 = vadd.f32 %v2173, %v2261
      %2263 = vmatmul.bf16.gmra.mxu0 %v1925
      %v2264 = vpop.f32.mrf.mxu0
      %v2265 = vadd.f32 %v2176, %v2264
      %v2266 = vpop.f32.mrf.mxu0
      %v2267 = vadd.f32 %v2178, %v2266
      %2268 = vmatmul.bf16.gmra.mxu0 %v1928
      %v2269 = vpop.f32.mrf.mxu0
      %v2270 = vadd.f32 %v2181, %v2269
      %v2271 = vpop.f32.mrf.mxu0
      %v2272 = vadd.f32 %v2183, %v2271
      %2273 = vmatmul.bf16.gmra.mxu0 %v1931
      %v2274 = vpop.f32.mrf.mxu0
      %v2275 = vadd.f32 %v2186, %v2274
      %v2276 = vpop.f32.mrf.mxu0
      %v2277 = vadd.f32 %v2188, %v2276
      %2278 = vmatmul.bf16.gmra.mxu0 %v1934
      %v2279 = vpop.f32.mrf.mxu0
      %v2280 = vadd.f32 %v2191, %v2279
      %v2281 = vpop.f32.mrf.mxu0
      %v2282 = vadd.f32 %v2193, %v2281
      %2283 = vmatmul.bf16.gmra.mxu0 %v1937
      %v2284 = vpop.f32.mrf.mxu0
      %v2285 = vadd.f32 %v2196, %v2284
      %v2286 = vpop.f32.mrf.mxu0
      %v2287 = vadd.f32 %v2198, %v2286
      %2288 = vmatmul.bf16.gmra.mxu0 %v1940
      %v2289 = vpop.f32.mrf.mxu0
      %v2290 = vadd.f32 %v2201, %v2289
      %v2291 = vpop.f32.mrf.mxu0
      %v2292 = vadd.f32 %v2203, %v2291
      %2293 = vmatmul.bf16.gmra.mxu0 %v1943
      %v2294 = vpop.f32.mrf.mxu0
      %v2295 = vadd.f32 %v2206, %v2294
      %v2296 = vpop.f32.mrf.mxu0
      %v2297 = vadd.f32 %v2208, %v2296
      %2298 = vmatmul.bf16.gmra.mxu0 %v1946
      %v2299 = vpop.f32.mrf.mxu0
      %v2300 = vadd.f32 %v2211, %v2299
      %v2301 = vpop.f32.mrf.mxu0
      %v2302 = vadd.f32 %v2213, %v2301
      %2303 = vmatmul.bf16.gmra.mxu0 %v1949
      %v2304 = vpop.f32.mrf.mxu0
      %v2305 = vadd.f32 %v2216, %v2304
      %v2306 = vpop.f32.mrf.mxu0
      %v2307 = vadd.f32 %v2218, %v2306
      %2308 = vmatmul.bf16.gmra.mxu0 %v1952
      %v2309 = vpop.f32.mrf.mxu0
      %v2310 = vadd.f32 %v2221, %v2309
      %v2311 = vpop.f32.mrf.mxu0
      %v2312 = vadd.f32 %v2223, %v2311
      %2313 = vmatmul.bf16.gmra.mxu0 %v1955
      %v2314 = vpop.f32.mrf.mxu0
      %v2315 = vadd.f32 %v2226, %v2314
      %v2316 = vpop.f32.mrf.mxu0
      %v2317 = vadd.f32 %v2228, %v2316
      %2318 = vmatmul.bf16.gmra.mxu0 %v1958
      %v2319 = vpop.f32.mrf.mxu0
      %v2320 = vadd.f32 %v2231, %v2319
      %v2321 = vpop.f32.mrf.mxu0
      %v2322 = vadd.f32 %v2233, %v2321
      %2323 = vmatmul.bf16.gmra.mxu0 %v1961
      %v2324 = vpop.f32.mrf.mxu0
      %v2325 = vadd.f32 %v2236, %v2324
      %v2326 = vpop.f32.mrf.mxu0
      %v2327 = vadd.f32 %v2238, %v2326
      %2328 = vmatmul.bf16.gmra.mxu0 %v1964
      %v2329 = vpop.f32.mrf.mxu0
      %v2330 = vadd.f32 %v2241, %v2329
      %v2331 = vpop.f32.mrf.mxu0
      %v2332 = vadd.f32 %v2243, %v2331
      %2333 = vmatmul.bf16.gmra.mxu0 %v1967
      %v2334 = vpop.f32.mrf.mxu0
      %v2335 = vadd.f32 %v2246, %v2334
      %v2336 = vpop.f32.mrf.mxu0
      %v2337 = vadd.f32 %v2248, %v2336
      %2338 = vdwg.mxu0
      %2339 = vmatpush.bf16.msra.mxu0 %v2136
      %2340 = vmatpush.bf16.msra.mxu0 %v2135
      %2341 = vmatpush.bf16.msra.mxu0 %v2134
      %2342 = vmatpush.bf16.msra.mxu0 %v2133
      %2343 = vmatpush.bf16.msra.mxu0 %v2132
      %2344 = vmatpush.bf16.msra.mxu0 %v2131
      %2345 = vmatpush.bf16.msra.mxu0 %v2130
      %2346 = vmatpush.bf16.msra.mxu0 %v2129
      %2347 = vmatmul.bf16.gmra.mxu0 %v1923
      %v2348 = vpop.f32.mrf.mxu0
      %v2349 = vadd.f32 %v2260, %v2348
      %v2350 = vpop.f32.mrf.mxu0
      %v2351 = vadd.f32 %v2262, %v2350
      %2352 = vmatmul.bf16.gmra.mxu0 %v1926
      %v2353 = vpop.f32.mrf.mxu0
      %v2354 = vadd.f32 %v2265, %v2353
      %v2355 = vpop.f32.mrf.mxu0
      %v2356 = vadd.f32 %v2267, %v2355
      %2357 = vmatmul.bf16.gmra.mxu0 %v1929
      %v2358 = vpop.f32.mrf.mxu0
      %v2359 = vadd.f32 %v2270, %v2358
      %v2360 = vpop.f32.mrf.mxu0
      %v2361 = vadd.f32 %v2272, %v2360
      %2362 = vmatmul.bf16.gmra.mxu0 %v1932
      %v2363 = vpop.f32.mrf.mxu0
      %v2364 = vadd.f32 %v2275, %v2363
      %v2365 = vpop.f32.mrf.mxu0
      %v2366 = vadd.f32 %v2277, %v2365
      %2367 = vmatmul.bf16.gmra.mxu0 %v1935
      %v2368 = vpop.f32.mrf.mxu0
      %v2369 = vadd.f32 %v2280, %v2368
      %v2370 = vpop.f32.mrf.mxu0
      %v2371 = vadd.f32 %v2282, %v2370
      %2372 = vmatmul.bf16.gmra.mxu0 %v1938
      %v2373 = vpop.f32.mrf.mxu0
      %v2374 = vadd.f32 %v2285, %v2373
      %v2375 = vpop.f32.mrf.mxu0
      %v2376 = vadd.f32 %v2287, %v2375
      %2377 = vmatmul.bf16.gmra.mxu0 %v1941
      %v2378 = vpop.f32.mrf.mxu0
      %v2379 = vadd.f32 %v2290, %v2378
      %v2380 = vpop.f32.mrf.mxu0
      %v2381 = vadd.f32 %v2292, %v2380
      %2382 = vmatmul.bf16.gmra.mxu0 %v1944
      %v2383 = vpop.f32.mrf.mxu0
      %v2384 = vadd.f32 %v2295, %v2383
      %v2385 = vpop.f32.mrf.mxu0
      %v2386 = vadd.f32 %v2297, %v2385
      %2387 = vmatmul.bf16.gmra.mxu0 %v1947
      %v2388 = vpop.f32.mrf.mxu0
      %v2389 = vadd.f32 %v2300, %v2388
      %v2390 = vpop.f32.mrf.mxu0
      %v2391 = vadd.f32 %v2302, %v2390
      %2392 = vmatmul.bf16.gmra.mxu0 %v1950
      %v2393 = vpop.f32.mrf.mxu0
      %v2394 = vadd.f32 %v2305, %v2393
      %v2395 = vpop.f32.mrf.mxu0
      %v2396 = vadd.f32 %v2307, %v2395
      %2397 = vmatmul.bf16.gmra.mxu0 %v1953
      %v2398 = vpop.f32.mrf.mxu0
      %v2399 = vadd.f32 %v2310, %v2398
      %v2400 = vpop.f32.mrf.mxu0
      %v2401 = vadd.f32 %v2312, %v2400
      %2402 = vmatmul.bf16.gmra.mxu0 %v1956
      %v2403 = vpop.f32.mrf.mxu0
      %v2404 = vadd.f32 %v2315, %v2403
      %v2405 = vpop.f32.mrf.mxu0
      %v2406 = vadd.f32 %v2317, %v2405
      %2407 = vmatmul.bf16.gmra.mxu0 %v1959
      %v2408 = vpop.f32.mrf.mxu0
      %v2409 = vadd.f32 %v2320, %v2408
      %v2410 = vpop.f32.mrf.mxu0
      %v2411 = vadd.f32 %v2322, %v2410
      %2412 = vmatmul.bf16.gmra.mxu0 %v1962
      %v2413 = vpop.f32.mrf.mxu0
      %v2414 = vadd.f32 %v2325, %v2413
      %v2415 = vpop.f32.mrf.mxu0
      %v2416 = vadd.f32 %v2327, %v2415
      %2417 = vmatmul.bf16.gmra.mxu0 %v1965
      %v2418 = vpop.f32.mrf.mxu0
      %v2419 = vadd.f32 %v2330, %v2418
      %v2420 = vpop.f32.mrf.mxu0
      %v2421 = vadd.f32 %v2332, %v2420
      %2422 = vmatmul.bf16.gmra.mxu0 %v1968
      %v2423 = vpop.f32.mrf.mxu0
      %v2424 = vadd.f32 %v2335, %v2423
      %v2425 = vpop.f32.mrf.mxu0
      %v2426 = vadd.f32 %v2337, %v2425
      %2427 = vdwg.mxu0
      %2428 = vst [vmem:[#allocation4] sm:$0xff] %v2349
      %2429 = vst [vmem:[#allocation4 + $0x8] sm:$0xff] %v2351
      %2430 = vst [vmem:[#allocation4 + $0x10] sm:$0xff] %v2354
      %2431 = vst [vmem:[#allocation4 + $0x18] sm:$0xff] %v2356
      %2432 = vst [vmem:[#allocation4 + $0x20] sm:$0xff] %v2359
      %2433 = vst [vmem:[#allocation4 + $0x28] sm:$0xff] %v2361
      %2434 = vst [vmem:[#allocation4 + $0x30] sm:$0xff] %v2364
      %2435 = vst [vmem:[#allocation4 + $0x38] sm:$0xff] %v2366
      %2436 = vst [vmem:[#allocation4 + $0x40] sm:$0xff] %v2369
      %2437 = vst [vmem:[#allocation4 + $0x48] sm:$0xff] %v2371
      %2438 = vst [vmem:[#allocation4 + $0x50] sm:$0xff] %v2374
      %2439 = vst [vmem:[#allocation4 + $0x58] sm:$0xff] %v2376
      %2440 = vst [vmem:[#allocation4 + $0x60] sm:$0xff] %v2379
      %2441 = vst [vmem:[#allocation4 + $0x68] sm:$0xff] %v2381
      %2442 = vst [vmem:[#allocation4 + $0x70] sm:$0xff] %v2384
      %2443 = vst [vmem:[#allocation4 + $0x78] sm:$0xff] %v2386
      %2444 = vst [vmem:[#allocation4 + $0x80] sm:$0xff] %v2389
      %2445 = vst [vmem:[#allocation4 + $0x88] sm:$0xff] %v2391
      %2446 = vst [vmem:[#allocation4 + $0x90] sm:$0xff] %v2394
      %2447 = vst [vmem:[#allocation4 + $0x98] sm:$0xff] %v2396
      %2448 = vst [vmem:[#allocation4 + $0xa0] sm:$0xff] %v2399
      %2449 = vst [vmem:[#allocation4 + $0xa8] sm:$0xff] %v2401
      %2450 = vst [vmem:[#allocation4 + $0xb0] sm:$0xff] %v2404
      %2451 = vst [vmem:[#allocation4 + $0xb8] sm:$0xff] %v2406
      %2452 = vst [vmem:[#allocation4 + $0xc0] sm:$0xff] %v2409
      %2453 = vst [vmem:[#allocation4 + $0xc8] sm:$0xff] %v2411
      %2454 = vst [vmem:[#allocation4 + $0xd0] sm:$0xff] %v2414
      %2455 = vst [vmem:[#allocation4 + $0xd8] sm:$0xff] %v2416
      %2456 = vst [vmem:[#allocation4 + $0xe0] sm:$0xff] %v2419
      %2457 = vst [vmem:[#allocation4 + $0xe8] sm:$0xff] %v2421
      %2458 = vst [vmem:[#allocation4 + $0xf0] sm:$0xff] %v2424
      %2459 = vst [vmem:[#allocation4 + $0xf8] sm:$0xff] %v2426
      %v2460 = vld [vmem:[#allocation3 + $0x18] sm:$0xff]
      %v2461 = vld [vmem:[#allocation3 + $0x20] sm:$0xf]
      %v2462 = vld [vmem:[#allocation3 + $0x24] sm:$0xff]
      %v2463 = vld [vmem:[#allocation3 + $0x2c] sm:$0xf]
      %v2464 = vld [vmem:[#allocation3 + $0x30] sm:$0xff]
      %v2465 = vld [vmem:[#allocation3 + $0x38] sm:$0xf]
      %v2466 = vld [vmem:[#allocation3 + $0x3c] sm:$0xff]
      %v2467 = vld [vmem:[#allocation3 + $0x44] sm:$0xf]
      %v2468 = vld [vmem:[#allocation3 + $0x48] sm:$0xff]
      %v2469 = vld [vmem:[#allocation3 + $0x50] sm:$0xf]
      %v2470 = vld [vmem:[#allocation3 + $0x54] sm:$0xff]
      %v2471 = vld [vmem:[#allocation3 + $0x5c] sm:$0xf]
      %v2472 = vld [vmem:[#allocation3 + $0x60] sm:$0xff]
      %v2473 = vld [vmem:[#allocation3 + $0x68] sm:$0xf]
      %v2474 = vld [vmem:[#allocation3 + $0x6c] sm:$0xff]
      %v2475 = vld [vmem:[#allocation3 + $0x74] sm:$0xf]
      %v2476 = vld [vmem:[#allocation3 + $0x78] sm:$0xff]
      %v2477 = vld [vmem:[#allocation3 + $0x80] sm:$0xf]
      %v2478 = vld [vmem:[#allocation3 + $0x84] sm:$0xff]
      %v2479 = vld [vmem:[#allocation3 + $0x8c] sm:$0xf]
      %v2480 = vld [vmem:[#allocation3 + $0x90] sm:$0xff]
      %v2481 = vld [vmem:[#allocation3 + $0x98] sm:$0xf]
      %v2482 = vld [vmem:[#allocation3 + $0x9c] sm:$0xff]
      %v2483 = vld [vmem:[#allocation3 + $0xa4] sm:$0xf]
      %v2484 = vld [vmem:[#allocation3 + $0xa8] sm:$0xff]
      %v2485 = vld [vmem:[#allocation3 + $0xb0] sm:$0xf]
      %v2486 = vld [vmem:[#allocation3 + $0xb4] sm:$0xff]
      %v2487 = vld [vmem:[#allocation3 + $0xbc] sm:$0xf]
      %v2488 = vld [vmem:[#allocation3 + $0xc0] sm:$0xff]
      %v2489 = vld [vmem:[#allocation3 + $0xc8] sm:$0xf]
      %v2490 = vld [vmem:[#allocation3 + $0xcc] sm:$0xff]
      %v2491 = vld [vmem:[#allocation3 + $0xd4] sm:$0xf]
      %v2492 = vld [vmem:[#allocation3 + $0xd8] sm:$0xff]
      %v2493 = vld [vmem:[#allocation3 + $0xe0] sm:$0xf]
      %v2494 = vld [vmem:[#allocation3 + $0xe4] sm:$0xff]
      %v2495 = vld [vmem:[#allocation3 + $0xec] sm:$0xf]
      %v2496 = vld [vmem:[#allocation3 + $0xf0] sm:$0xff]
      %v2497 = vld [vmem:[#allocation3 + $0xf8] sm:$0xf]
      %v2498 = vld [vmem:[#allocation3 + $0xfc] sm:$0xff]
      %v2499 = vld [vmem:[#allocation3 + $0x104] sm:$0xf]
      %v2500 = vld [vmem:[#allocation3 + $0x108] sm:$0xff]
      %v2501 = vld [vmem:[#allocation3 + $0x110] sm:$0xf]
      %v2502 = vld [vmem:[#allocation3 + $0x114] sm:$0xff]
      %v2503 = vld [vmem:[#allocation3 + $0x11c] sm:$0xf]
      %v2504 = vld [vmem:[#allocation3 + $0x120] sm:$0xff]
      %v2505 = vld [vmem:[#allocation3 + $0x128] sm:$0xf]
      %v2506 = vld [vmem:[#allocation3 + $0x12c] sm:$0xff]
      %v2507 = vld [vmem:[#allocation3 + $0x134] sm:$0xf]
      %v2508 = vld [vmem:[#allocation3 + $0x138] sm:$0xff]
      %v2509 = vld [vmem:[#allocation3 + $0x140] sm:$0xf]
      %v2510 = vld [vmem:[#allocation3 + $0x144] sm:$0xff]
      %v2511 = vld [vmem:[#allocation3 + $0x14c] sm:$0xf]
      %v2512 = vld [vmem:[#allocation3 + $0x150] sm:$0xff]
      %v2513 = vld [vmem:[#allocation3 + $0x158] sm:$0xf]
      %v2514 = vld [vmem:[#allocation3 + $0x15c] sm:$0xff]
      %v2515 = vld [vmem:[#allocation3 + $0x164] sm:$0xf]
      %v2516 = vld [vmem:[#allocation3 + $0x168] sm:$0xff]
      %v2517 = vld [vmem:[#allocation3 + $0x170] sm:$0xf]
      %v2518 = vld [vmem:[#allocation3 + $0x174] sm:$0xff]
      %v2519 = vld [vmem:[#allocation3 + $0x17c] sm:$0xf]
      %v2520 = vld [vmem:[#allocation3 + $0x180] sm:$0xff]
      %v2521 = vld [vmem:[#allocation3 + $0x188] sm:$0xf]
      %v2522 = vld [vmem:[#allocation3 + $0x18c] sm:$0xff]
      %v2523 = vld [vmem:[#allocation3 + $0x194] sm:$0xf]
      %s2524 = scalar_lea.vmem %s3, 192
      %v2525 = vld [vmem:[%s2524] sm:$0xf]
      %v2526 = vld [vmem:[%s2524 + $0x4] sm:$0xf]
      %v2527 = vld [vmem:[%s2524 + $0x8] sm:$0xf]
      %v2528 = vld [vmem:[%s2524 + $0xc] sm:$0xf]
      %v2529 = vld [vmem:[%s2524 + $0x10] sm:$0xf]
      %v2530 = vld [vmem:[%s2524 + $0x14] sm:$0xf]
      %v2531 = vld [vmem:[%s2524 + $0x18] sm:$0xf]
      %v2532 = vld [vmem:[%s2524 + $0x1c] sm:$0xf]
      %v2533 = vld [vmem:[%s2524 + $0x20] sm:$0xf]
      %v2534 = vld [vmem:[%s2524 + $0x24] sm:$0xf]
      %v2535 = vld [vmem:[%s2524 + $0x28] sm:$0xf]
      %v2536 = vld [vmem:[%s2524 + $0x2c] sm:$0xf]
      %v2537 = vld [vmem:[%s2524 + $0x30] sm:$0xf]
      %v2538 = vld [vmem:[%s2524 + $0x34] sm:$0xf]
      %v2539 = vld [vmem:[%s2524 + $0x38] sm:$0xf]
      %v2540 = vld [vmem:[%s2524 + $0x3c] sm:$0xf]
      %v2541 = vld [vmem:[%s2524 + $0x40] sm:$0xf]
      %v2542 = vld [vmem:[%s2524 + $0x44] sm:$0xf]
      %v2543 = vld [vmem:[%s2524 + $0x48] sm:$0xf]
      %v2544 = vld [vmem:[%s2524 + $0x4c] sm:$0xf]
      %v2545 = vld [vmem:[%s2524 + $0x50] sm:$0xf]
      %v2546 = vld [vmem:[%s2524 + $0x54] sm:$0xf]
      %v2547 = vld [vmem:[%s2524 + $0x58] sm:$0xf]
      %v2548 = vld [vmem:[%s2524 + $0x5c] sm:$0xf]
      %v2549 = vld [vmem:[%s2524 + $0x60] sm:$0xf]
      %v2550 = vld [vmem:[%s2524 + $0x64] sm:$0xf]
      %v2551 = vld [vmem:[%s2524 + $0x68] sm:$0xf]
      %v2552 = vld [vmem:[%s2524 + $0x6c] sm:$0xf]
      %v2553 = vld [vmem:[%s2524 + $0x70] sm:$0xf]
      %v2554 = vld [vmem:[%s2524 + $0x74] sm:$0xf]
      %v2555 = vld [vmem:[%s2524 + $0x78] sm:$0xf]
      %v2556 = vld [vmem:[%s2524 + $0x7c] sm:$0xf]
      %v2557 = vld [vmem:[%s2524 + $0x80] sm:$0xf]
      %v2558 = vld [vmem:[%s2524 + $0x84] sm:$0xf]
      %v2559 = vld [vmem:[%s2524 + $0x88] sm:$0xf]
      %v2560 = vld [vmem:[%s2524 + $0x8c] sm:$0xf]
      %v2561 = vld [vmem:[%s2524 + $0x90] sm:$0xf]
      %v2562 = vld [vmem:[%s2524 + $0x94] sm:$0xf]
      %v2563 = vld [vmem:[%s2524 + $0x98] sm:$0xf]
      %v2564 = vld [vmem:[%s2524 + $0x9c] sm:$0xf]
      %v2565 = vld [vmem:[%s2524 + $0xa0] sm:$0xf]
      %v2566 = vld [vmem:[%s2524 + $0xa4] sm:$0xf]
      %v2567 = vld [vmem:[%s2524 + $0xa8] sm:$0xf]
      %v2568 = vld [vmem:[%s2524 + $0xac] sm:$0xf]
      %v2569 = vld [vmem:[%s2524 + $0xb0] sm:$0xf]
      %v2570 = vld [vmem:[%s2524 + $0xb4] sm:$0xf]
      %v2571 = vld [vmem:[%s2524 + $0xb8] sm:$0xf]
      %v2572 = vld [vmem:[%s2524 + $0xbc] sm:$0xf]
      %v2637 = vunpack.c.l.b16 %v2460
      %v2638 = vunpack.c.h.b16 %v2460
      %v2639 = vunpack.c.l.b16 %v2461
      %v2640 = vunpack.c.l.b16 %v2462
      %v2641 = vunpack.c.h.b16 %v2462
      %v2642 = vunpack.c.l.b16 %v2463
      %v2643 = vunpack.c.l.b16 %v2464
      %v2644 = vunpack.c.h.b16 %v2464
      %v2645 = vunpack.c.l.b16 %v2465
      %v2646 = vunpack.c.l.b16 %v2466
      %v2647 = vunpack.c.h.b16 %v2466
      %v2648 = vunpack.c.l.b16 %v2467
      %v2649 = vunpack.c.l.b16 %v2468
      %v2650 = vunpack.c.h.b16 %v2468
      %v2651 = vunpack.c.l.b16 %v2469
      %v2652 = vunpack.c.l.b16 %v2470
      %v2653 = vunpack.c.h.b16 %v2470
      %v2654 = vunpack.c.l.b16 %v2471
      %v2655 = vunpack.c.l.b16 %v2472
      %v2656 = vunpack.c.h.b16 %v2472
      %v2657 = vunpack.c.l.b16 %v2473
      %v2658 = vunpack.c.l.b16 %v2474
      %v2659 = vunpack.c.h.b16 %v2474
      %v2660 = vunpack.c.l.b16 %v2475
      %v2661 = vunpack.c.l.b16 %v2476
      %v2662 = vunpack.c.h.b16 %v2476
      %v2663 = vunpack.c.l.b16 %v2477
      %v2664 = vunpack.c.l.b16 %v2478
      %v2665 = vunpack.c.h.b16 %v2478
      %v2666 = vunpack.c.l.b16 %v2479
      %v2667 = vunpack.c.l.b16 %v2480
      %v2668 = vunpack.c.h.b16 %v2480
      %v2669 = vunpack.c.l.b16 %v2481
      %v2670 = vunpack.c.l.b16 %v2482
      %v2671 = vunpack.c.h.b16 %v2482
      %v2672 = vunpack.c.l.b16 %v2483
      %v2673 = vunpack.c.l.b16 %v2484
      %v2674 = vunpack.c.h.b16 %v2484
      %v2675 = vunpack.c.l.b16 %v2485
      %v2676 = vunpack.c.l.b16 %v2486
      %v2677 = vunpack.c.h.b16 %v2486
      %v2678 = vunpack.c.l.b16 %v2487
      %v2679 = vunpack.c.l.b16 %v2488
      %v2680 = vunpack.c.h.b16 %v2488
      %v2681 = vunpack.c.l.b16 %v2489
      %v2682 = vunpack.c.l.b16 %v2490
      %v2683 = vunpack.c.h.b16 %v2490
      %v2684 = vunpack.c.l.b16 %v2491
      %v2685 = vunpack.c.l.b16 %v2492
      %v2686 = vunpack.c.h.b16 %v2492
      %v2687 = vunpack.c.l.b16 %v2493
      %v2688 = vunpack.c.l.b16 %v2494
      %v2689 = vunpack.c.h.b16 %v2494
      %v2690 = vunpack.c.l.b16 %v2495
      %v2691 = vunpack.c.l.b16 %v2496
      %v2692 = vunpack.c.h.b16 %v2496
      %v2693 = vunpack.c.l.b16 %v2497
      %v2694 = vunpack.c.l.b16 %v2498
      %v2695 = vunpack.c.h.b16 %v2498
      %v2696 = vunpack.c.l.b16 %v2499
      %v2697 = vunpack.c.l.b16 %v2500
      %v2698 = vunpack.c.h.b16 %v2500
      %v2699 = vunpack.c.l.b16 %v2501
      %v2700 = vunpack.c.l.b16 %v2502
      %v2701 = vunpack.c.h.b16 %v2502
      %v2702 = vunpack.c.l.b16 %v2503
      %v2703 = vunpack.c.l.b16 %v2504
      %v2704 = vunpack.c.h.b16 %v2504
      %v2705 = vunpack.c.l.b16 %v2505
      %v2706 = vunpack.c.l.b16 %v2506
      %v2707 = vunpack.c.h.b16 %v2506
      %v2708 = vunpack.c.l.b16 %v2507
      %v2709 = vunpack.c.l.b16 %v2508
      %v2710 = vunpack.c.h.b16 %v2508
      %v2711 = vunpack.c.l.b16 %v2509
      %v2712 = vunpack.c.l.b16 %v2510
      %v2713 = vunpack.c.h.b16 %v2510
      %v2714 = vunpack.c.l.b16 %v2511
      %v2715 = vunpack.c.l.b16 %v2512
      %v2716 = vunpack.c.h.b16 %v2512
      %v2717 = vunpack.c.l.b16 %v2513
      %v2718 = vunpack.c.l.b16 %v2514
      %v2719 = vunpack.c.h.b16 %v2514
      %v2720 = vunpack.c.l.b16 %v2515
      %v2721 = vunpack.c.l.b16 %v2516
      %v2722 = vunpack.c.h.b16 %v2516
      %v2723 = vunpack.c.l.b16 %v2517
      %v2724 = vunpack.c.l.b16 %v2518
      %v2725 = vunpack.c.h.b16 %v2518
      %v2726 = vunpack.c.l.b16 %v2519
      %v2727 = vunpack.c.l.b16 %v2520
      %v2728 = vunpack.c.h.b16 %v2520
      %v2729 = vunpack.c.l.b16 %v2521
      %v2730 = vunpack.c.l.b16 %v2522
      %v2731 = vunpack.c.h.b16 %v2522
      %v2732 = vunpack.c.l.b16 %v2523
      %v2733 = vpack.c.b16 %v2640, %v2637
      %v2734 = vpack.c.b16 %v2641, %v2638
      %v2735 = vpack.c.b16 %v2642, %v2639
      %v2736 = vpack.c.b16 %v2646, %v2643
      %v2737 = vpack.c.b16 %v2647, %v2644
      %v2738 = vpack.c.b16 %v2648, %v2645
      %v2739 = vpack.c.b16 %v2652, %v2649
      %v2740 = vpack.c.b16 %v2653, %v2650
      %v2741 = vpack.c.b16 %v2654, %v2651
      %v2742 = vpack.c.b16 %v2658, %v2655
      %v2743 = vpack.c.b16 %v2659, %v2656
      %v2744 = vpack.c.b16 %v2660, %v2657
      %v2745 = vpack.c.b16 %v2664, %v2661
      %v2746 = vpack.c.b16 %v2665, %v2662
      %v2747 = vpack.c.b16 %v2666, %v2663
      %v2748 = vpack.c.b16 %v2670, %v2667
      %v2749 = vpack.c.b16 %v2671, %v2668
      %v2750 = vpack.c.b16 %v2672, %v2669
      %v2751 = vpack.c.b16 %v2676, %v2673
      %v2752 = vpack.c.b16 %v2677, %v2674
      %v2753 = vpack.c.b16 %v2678, %v2675
      %v2754 = vpack.c.b16 %v2682, %v2679
      %v2755 = vpack.c.b16 %v2683, %v2680
      %v2756 = vpack.c.b16 %v2684, %v2681
      %v2757 = vpack.c.b16 %v2688, %v2685
      %v2758 = vpack.c.b16 %v2689, %v2686
      %v2759 = vpack.c.b16 %v2690, %v2687
      %v2760 = vpack.c.b16 %v2694, %v2691
      %v2761 = vpack.c.b16 %v2695, %v2692
      %v2762 = vpack.c.b16 %v2696, %v2693
      %v2763 = vpack.c.b16 %v2700, %v2697
      %v2764 = vpack.c.b16 %v2701, %v2698
      %v2765 = vpack.c.b16 %v2702, %v2699
      %v2766 = vpack.c.b16 %v2706, %v2703
      %v2767 = vpack.c.b16 %v2707, %v2704
      %v2768 = vpack.c.b16 %v2708, %v2705
      %v2769 = vpack.c.b16 %v2712, %v2709
      %v2770 = vpack.c.b16 %v2713, %v2710
      %v2771 = vpack.c.b16 %v2714, %v2711
      %v2772 = vpack.c.b16 %v2718, %v2715
      %v2773 = vpack.c.b16 %v2719, %v2716
      %v2774 = vpack.c.b16 %v2720, %v2717
      %v2775 = vpack.c.b16 %v2724, %v2721
      %v2776 = vpack.c.b16 %v2725, %v2722
      %v2777 = vpack.c.b16 %v2726, %v2723
      %v2778 = vpack.c.b16 %v2730, %v2727
      %v2779 = vpack.c.b16 %v2731, %v2728
      %v2780 = vpack.c.b16 %v2732, %v2729
      %v2877 = vunpack.c.l.b16 %v2525
      %v2878 = vunpack.c.l.b16 %v2526
      %v2879 = vunpack.c.l.b16 %v2527
      %v2880 = vunpack.c.l.b16 %v2528
      %v2881 = vunpack.c.l.b16 %v2529
      %v2882 = vunpack.c.l.b16 %v2530
      %v2883 = vunpack.c.l.b16 %v2531
      %v2884 = vunpack.c.l.b16 %v2532
      %v2885 = vunpack.c.l.b16 %v2533
      %v2886 = vunpack.c.l.b16 %v2534
      %v2887 = vunpack.c.l.b16 %v2535
      %v2888 = vunpack.c.l.b16 %v2536
      %v2889 = vunpack.c.l.b16 %v2537
      %v2890 = vunpack.c.l.b16 %v2538
      %v2891 = vunpack.c.l.b16 %v2539
      %v2892 = vunpack.c.l.b16 %v2540
      %v2893 = vunpack.c.l.b16 %v2541
      %v2894 = vunpack.c.l.b16 %v2542
      %v2895 = vunpack.c.l.b16 %v2543
      %v2896 = vunpack.c.l.b16 %v2544
      %v2897 = vunpack.c.l.b16 %v2545
      %v2898 = vunpack.c.l.b16 %v2546
      %v2899 = vunpack.c.l.b16 %v2547
      %v2900 = vunpack.c.l.b16 %v2548
      %v2901 = vunpack.c.l.b16 %v2549
      %v2902 = vunpack.c.l.b16 %v2550
      %v2903 = vunpack.c.l.b16 %v2551
      %v2904 = vunpack.c.l.b16 %v2552
      %v2905 = vunpack.c.l.b16 %v2553
      %v2906 = vunpack.c.l.b16 %v2554
      %v2907 = vunpack.c.l.b16 %v2555
      %v2908 = vunpack.c.l.b16 %v2556
      %v2909 = vunpack.c.l.b16 %v2557
      %v2910 = vunpack.c.l.b16 %v2558
      %v2911 = vunpack.c.l.b16 %v2559
      %v2912 = vunpack.c.l.b16 %v2560
      %v2913 = vunpack.c.l.b16 %v2561
      %v2914 = vunpack.c.l.b16 %v2562
      %v2915 = vunpack.c.l.b16 %v2563
      %v2916 = vunpack.c.l.b16 %v2564
      %v2917 = vunpack.c.l.b16 %v2565
      %v2918 = vunpack.c.l.b16 %v2566
      %v2919 = vunpack.c.l.b16 %v2567
      %v2920 = vunpack.c.l.b16 %v2568
      %v2921 = vunpack.c.l.b16 %v2569
      %v2922 = vunpack.c.l.b16 %v2570
      %v2923 = vunpack.c.l.b16 %v2571
      %v2924 = vunpack.c.l.b16 %v2572
      %v2925 = vpack.c.b16 %v2878, %v2877
      %v2926 = vpack.c.b16 %v2880, %v2879
      %v2927 = vpack.c.b16 %v2882, %v2881
      %v2928 = vpack.c.b16 %v2884, %v2883
      %v2929 = vpack.c.b16 %v2886, %v2885
      %v2930 = vpack.c.b16 %v2888, %v2887
      %v2931 = vpack.c.b16 %v2890, %v2889
      %v2932 = vpack.c.b16 %v2892, %v2891
      %v2933 = vpack.c.b16 %v2894, %v2893
      %v2934 = vpack.c.b16 %v2896, %v2895
      %v2935 = vpack.c.b16 %v2898, %v2897
      %v2936 = vpack.c.b16 %v2900, %v2899
      %v2937 = vpack.c.b16 %v2902, %v2901
      %v2938 = vpack.c.b16 %v2904, %v2903
      %v2939 = vpack.c.b16 %v2906, %v2905
      %v2940 = vpack.c.b16 %v2908, %v2907
      %v2941 = vpack.c.b16 %v2910, %v2909
      %v2942 = vpack.c.b16 %v2912, %v2911
      %v2943 = vpack.c.b16 %v2914, %v2913
      %v2944 = vpack.c.b16 %v2916, %v2915
      %v2945 = vpack.c.b16 %v2918, %v2917
      %v2946 = vpack.c.b16 %v2920, %v2919
      %v2947 = vpack.c.b16 %v2922, %v2921
      %v2948 = vpack.c.b16 %v2924, %v2923
      %2973 = vmatpush.bf16.msra.mxu0 %v2932
      %2974 = vmatpush.bf16.msra.mxu0 %v2931
      %2975 = vmatpush.bf16.msra.mxu0 %v2930
      %2976 = vmatpush.bf16.msra.mxu0 %v2929
      %2977 = vmatpush.bf16.msra.mxu0 %v2928
      %2978 = vmatpush.bf16.msra.mxu0 %v2927
      %2979 = vmatpush.bf16.msra.mxu0 %v2926
      %2980 = vmatpush.bf16.msra.mxu0 %v2925
      %2981 = vmatmul.bf16.gmra.mxu0 %v2733
      %v2982 = vpop.f32.mrf.mxu0
      %v2983 = vadd.f32 0.0, %v2982
      %v2984 = vpop.f32.mrf.mxu0
      %v2985 = vadd.f32 0.0, %v2984
      %2986 = vmatmul.bf16.gmra.mxu0 %v2736
      %v2987 = vpop.f32.mrf.mxu0
      %v2988 = vadd.f32 0.0, %v2987
      %v2989 = vpop.f32.mrf.mxu0
      %v2990 = vadd.f32 0.0, %v2989
      %2991 = vmatmul.bf16.gmra.mxu0 %v2739
      %v2992 = vpop.f32.mrf.mxu0
      %v2993 = vadd.f32 0.0, %v2992
      %v2994 = vpop.f32.mrf.mxu0
      %v2995 = vadd.f32 0.0, %v2994
      %2996 = vmatmul.bf16.gmra.mxu0 %v2742
      %v2997 = vpop.f32.mrf.mxu0
      %v2998 = vadd.f32 0.0, %v2997
      %v2999 = vpop.f32.mrf.mxu0
      %v3000 = vadd.f32 0.0, %v2999
      %3001 = vmatmul.bf16.gmra.mxu0 %v2745
      %v3002 = vpop.f32.mrf.mxu0
      %v3003 = vadd.f32 0.0, %v3002
      %v3004 = vpop.f32.mrf.mxu0
      %v3005 = vadd.f32 0.0, %v3004
      %3006 = vmatmul.bf16.gmra.mxu0 %v2748
      %v3007 = vpop.f32.mrf.mxu0
      %v3008 = vadd.f32 0.0, %v3007
      %v3009 = vpop.f32.mrf.mxu0
      %v3010 = vadd.f32 0.0, %v3009
      %3011 = vmatmul.bf16.gmra.mxu0 %v2751
      %v3012 = vpop.f32.mrf.mxu0
      %v3013 = vadd.f32 0.0, %v3012
      %v3014 = vpop.f32.mrf.mxu0
      %v3015 = vadd.f32 0.0, %v3014
      %3016 = vmatmul.bf16.gmra.mxu0 %v2754
      %v3017 = vpop.f32.mrf.mxu0
      %v3018 = vadd.f32 0.0, %v3017
      %v3019 = vpop.f32.mrf.mxu0
      %v3020 = vadd.f32 0.0, %v3019
      %3021 = vmatmul.bf16.gmra.mxu0 %v2757
      %v3022 = vpop.f32.mrf.mxu0
      %v3023 = vadd.f32 0.0, %v3022
      %v3024 = vpop.f32.mrf.mxu0
      %v3025 = vadd.f32 0.0, %v3024
      %3026 = vmatmul.bf16.gmra.mxu0 %v2760
      %v3027 = vpop.f32.mrf.mxu0
      %v3028 = vadd.f32 0.0, %v3027
      %v3029 = vpop.f32.mrf.mxu0
      %v3030 = vadd.f32 0.0, %v3029
      %3031 = vmatmul.bf16.gmra.mxu0 %v2763
      %v3032 = vpop.f32.mrf.mxu0
      %v3033 = vadd.f32 0.0, %v3032
      %v3034 = vpop.f32.mrf.mxu0
      %v3035 = vadd.f32 0.0, %v3034
      %3036 = vmatmul.bf16.gmra.mxu0 %v2766
      %v3037 = vpop.f32.mrf.mxu0
      %v3038 = vadd.f32 0.0, %v3037
      %v3039 = vpop.f32.mrf.mxu0
      %v3040 = vadd.f32 0.0, %v3039
      %3041 = vmatmul.bf16.gmra.mxu0 %v2769
      %v3042 = vpop.f32.mrf.mxu0
      %v3043 = vadd.f32 0.0, %v3042
      %v3044 = vpop.f32.mrf.mxu0
      %v3045 = vadd.f32 0.0, %v3044
      %3046 = vmatmul.bf16.gmra.mxu0 %v2772
      %v3047 = vpop.f32.mrf.mxu0
      %v3048 = vadd.f32 0.0, %v3047
      %v3049 = vpop.f32.mrf.mxu0
      %v3050 = vadd.f32 0.0, %v3049
      %3051 = vmatmul.bf16.gmra.mxu0 %v2775
      %v3052 = vpop.f32.mrf.mxu0
      %v3053 = vadd.f32 0.0, %v3052
      %v3054 = vpop.f32.mrf.mxu0
      %v3055 = vadd.f32 0.0, %v3054
      %3056 = vmatmul.bf16.gmra.mxu0 %v2778
      %v3057 = vpop.f32.mrf.mxu0
      %v3058 = vadd.f32 0.0, %v3057
      %v3059 = vpop.f32.mrf.mxu0
      %v3060 = vadd.f32 0.0, %v3059
      %3061 = vdwg.mxu0
      %3062 = vmatpush.bf16.msra.mxu0 %v2940
      %3063 = vmatpush.bf16.msra.mxu0 %v2939
      %3064 = vmatpush.bf16.msra.mxu0 %v2938
      %3065 = vmatpush.bf16.msra.mxu0 %v2937
      %3066 = vmatpush.bf16.msra.mxu0 %v2936
      %3067 = vmatpush.bf16.msra.mxu0 %v2935
      %3068 = vmatpush.bf16.msra.mxu0 %v2934
      %3069 = vmatpush.bf16.msra.mxu0 %v2933
      %3070 = vmatmul.bf16.gmra.mxu0 %v2734
      %v3071 = vpop.f32.mrf.mxu0
      %v3072 = vadd.f32 %v2983, %v3071
      %v3073 = vpop.f32.mrf.mxu0
      %v3074 = vadd.f32 %v2985, %v3073
      %3075 = vmatmul.bf16.gmra.mxu0 %v2737
      %v3076 = vpop.f32.mrf.mxu0
      %v3077 = vadd.f32 %v2988, %v3076
      %v3078 = vpop.f32.mrf.mxu0
      %v3079 = vadd.f32 %v2990, %v3078
      %3080 = vmatmul.bf16.gmra.mxu0 %v2740
      %v3081 = vpop.f32.mrf.mxu0
      %v3082 = vadd.f32 %v2993, %v3081
      %v3083 = vpop.f32.mrf.mxu0
      %v3084 = vadd.f32 %v2995, %v3083
      %3085 = vmatmul.bf16.gmra.mxu0 %v2743
      %v3086 = vpop.f32.mrf.mxu0
      %v3087 = vadd.f32 %v2998, %v3086
      %v3088 = vpop.f32.mrf.mxu0
      %v3089 = vadd.f32 %v3000, %v3088
      %3090 = vmatmul.bf16.gmra.mxu0 %v2746
      %v3091 = vpop.f32.mrf.mxu0
      %v3092 = vadd.f32 %v3003, %v3091
      %v3093 = vpop.f32.mrf.mxu0
      %v3094 = vadd.f32 %v3005, %v3093
      %3095 = vmatmul.bf16.gmra.mxu0 %v2749
      %v3096 = vpop.f32.mrf.mxu0
      %v3097 = vadd.f32 %v3008, %v3096
      %v3098 = vpop.f32.mrf.mxu0
      %v3099 = vadd.f32 %v3010, %v3098
      %3100 = vmatmul.bf16.gmra.mxu0 %v2752
      %v3101 = vpop.f32.mrf.mxu0
      %v3102 = vadd.f32 %v3013, %v3101
      %v3103 = vpop.f32.mrf.mxu0
      %v3104 = vadd.f32 %v3015, %v3103
      %3105 = vmatmul.bf16.gmra.mxu0 %v2755
      %v3106 = vpop.f32.mrf.mxu0
      %v3107 = vadd.f32 %v3018, %v3106
      %v3108 = vpop.f32.mrf.mxu0
      %v3109 = vadd.f32 %v3020, %v3108
      %3110 = vmatmul.bf16.gmra.mxu0 %v2758
      %v3111 = vpop.f32.mrf.mxu0
      %v3112 = vadd.f32 %v3023, %v3111
      %v3113 = vpop.f32.mrf.mxu0
      %v3114 = vadd.f32 %v3025, %v3113
      %3115 = vmatmul.bf16.gmra.mxu0 %v2761
      %v3116 = vpop.f32.mrf.mxu0
      %v3117 = vadd.f32 %v3028, %v3116
      %v3118 = vpop.f32.mrf.mxu0
      %v3119 = vadd.f32 %v3030, %v3118
      %3120 = vmatmul.bf16.gmra.mxu0 %v2764
      %v3121 = vpop.f32.mrf.mxu0
      %v3122 = vadd.f32 %v3033, %v3121
      %v3123 = vpop.f32.mrf.mxu0
      %v3124 = vadd.f32 %v3035, %v3123
      %3125 = vmatmul.bf16.gmra.mxu0 %v2767
      %v3126 = vpop.f32.mrf.mxu0
      %v3127 = vadd.f32 %v3038, %v3126
      %v3128 = vpop.f32.mrf.mxu0
      %v3129 = vadd.f32 %v3040, %v3128
      %3130 = vmatmul.bf16.gmra.mxu0 %v2770
      %v3131 = vpop.f32.mrf.mxu0
      %v3132 = vadd.f32 %v3043, %v3131
      %v3133 = vpop.f32.mrf.mxu0
      %v3134 = vadd.f32 %v3045, %v3133
      %3135 = vmatmul.bf16.gmra.mxu0 %v2773
      %v3136 = vpop.f32.mrf.mxu0
      %v3137 = vadd.f32 %v3048, %v3136
      %v3138 = vpop.f32.mrf.mxu0
      %v3139 = vadd.f32 %v3050, %v3138
      %3140 = vmatmul.bf16.gmra.mxu0 %v2776
      %v3141 = vpop.f32.mrf.mxu0
      %v3142 = vadd.f32 %v3053, %v3141
      %v3143 = vpop.f32.mrf.mxu0
      %v3144 = vadd.f32 %v3055, %v3143
      %3145 = vmatmul.bf16.gmra.mxu0 %v2779
      %v3146 = vpop.f32.mrf.mxu0
      %v3147 = vadd.f32 %v3058, %v3146
      %v3148 = vpop.f32.mrf.mxu0
      %v3149 = vadd.f32 %v3060, %v3148
      %3150 = vdwg.mxu0
      %3151 = vmatpush.bf16.msra.mxu0 %v2948
      %3152 = vmatpush.bf16.msra.mxu0 %v2947
      %3153 = vmatpush.bf16.msra.mxu0 %v2946
      %3154 = vmatpush.bf16.msra.mxu0 %v2945
      %3155 = vmatpush.bf16.msra.mxu0 %v2944
      %3156 = vmatpush.bf16.msra.mxu0 %v2943
      %3157 = vmatpush.bf16.msra.mxu0 %v2942
      %3158 = vmatpush.bf16.msra.mxu0 %v2941
      %3159 = vmatmul.bf16.gmra.mxu0 %v2735
      %v3160 = vpop.f32.mrf.mxu0
      %v3161 = vadd.f32 %v3072, %v3160
      %v3162 = vpop.f32.mrf.mxu0
      %v3163 = vadd.f32 %v3074, %v3162
      %3164 = vmatmul.bf16.gmra.mxu0 %v2738
      %v3165 = vpop.f32.mrf.mxu0
      %v3166 = vadd.f32 %v3077, %v3165
      %v3167 = vpop.f32.mrf.mxu0
      %v3168 = vadd.f32 %v3079, %v3167
      %3169 = vmatmul.bf16.gmra.mxu0 %v2741
      %v3170 = vpop.f32.mrf.mxu0
      %v3171 = vadd.f32 %v3082, %v3170
      %v3172 = vpop.f32.mrf.mxu0
      %v3173 = vadd.f32 %v3084, %v3172
      %3174 = vmatmul.bf16.gmra.mxu0 %v2744
      %v3175 = vpop.f32.mrf.mxu0
      %v3176 = vadd.f32 %v3087, %v3175
      %v3177 = vpop.f32.mrf.mxu0
      %v3178 = vadd.f32 %v3089, %v3177
      %3179 = vmatmul.bf16.gmra.mxu0 %v2747
      %v3180 = vpop.f32.mrf.mxu0
      %v3181 = vadd.f32 %v3092, %v3180
      %v3182 = vpop.f32.mrf.mxu0
      %v3183 = vadd.f32 %v3094, %v3182
      %3184 = vmatmul.bf16.gmra.mxu0 %v2750
      %v3185 = vpop.f32.mrf.mxu0
      %v3186 = vadd.f32 %v3097, %v3185
      %v3187 = vpop.f32.mrf.mxu0
      %v3188 = vadd.f32 %v3099, %v3187
      %3189 = vmatmul.bf16.gmra.mxu0 %v2753
      %v3190 = vpop.f32.mrf.mxu0
      %v3191 = vadd.f32 %v3102, %v3190
      %v3192 = vpop.f32.mrf.mxu0
      %v3193 = vadd.f32 %v3104, %v3192
      %3194 = vmatmul.bf16.gmra.mxu0 %v2756
      %v3195 = vpop.f32.mrf.mxu0
      %v3196 = vadd.f32 %v3107, %v3195
      %v3197 = vpop.f32.mrf.mxu0
      %v3198 = vadd.f32 %v3109, %v3197
      %3199 = vmatmul.bf16.gmra.mxu0 %v2759
      %v3200 = vpop.f32.mrf.mxu0
      %v3201 = vadd.f32 %v3112, %v3200
      %v3202 = vpop.f32.mrf.mxu0
      %v3203 = vadd.f32 %v3114, %v3202
      %3204 = vmatmul.bf16.gmra.mxu0 %v2762
      %v3205 = vpop.f32.mrf.mxu0
      %v3206 = vadd.f32 %v3117, %v3205
      %v3207 = vpop.f32.mrf.mxu0
      %v3208 = vadd.f32 %v3119, %v3207
      %3209 = vmatmul.bf16.gmra.mxu0 %v2765
      %v3210 = vpop.f32.mrf.mxu0
      %v3211 = vadd.f32 %v3122, %v3210
      %v3212 = vpop.f32.mrf.mxu0
      %v3213 = vadd.f32 %v3124, %v3212
      %3214 = vmatmul.bf16.gmra.mxu0 %v2768
      %v3215 = vpop.f32.mrf.mxu0
      %v3216 = vadd.f32 %v3127, %v3215
      %v3217 = vpop.f32.mrf.mxu0
      %v3218 = vadd.f32 %v3129, %v3217
      %3219 = vmatmul.bf16.gmra.mxu0 %v2771
      %v3220 = vpop.f32.mrf.mxu0
      %v3221 = vadd.f32 %v3132, %v3220
      %v3222 = vpop.f32.mrf.mxu0
      %v3223 = vadd.f32 %v3134, %v3222
      %3224 = vmatmul.bf16.gmra.mxu0 %v2774
      %v3225 = vpop.f32.mrf.mxu0
      %v3226 = vadd.f32 %v3137, %v3225
      %v3227 = vpop.f32.mrf.mxu0
      %v3228 = vadd.f32 %v3139, %v3227
      %3229 = vmatmul.bf16.gmra.mxu0 %v2777
      %v3230 = vpop.f32.mrf.mxu0
      %v3231 = vadd.f32 %v3142, %v3230
      %v3232 = vpop.f32.mrf.mxu0
      %v3233 = vadd.f32 %v3144, %v3232
      %3234 = vmatmul.bf16.gmra.mxu0 %v2780
      %v3235 = vpop.f32.mrf.mxu0
      %v3236 = vadd.f32 %v3147, %v3235
      %v3237 = vpop.f32.mrf.mxu0
      %v3238 = vadd.f32 %v3149, %v3237
      %3239 = vdwg.mxu0
      %v3240 = vld [vmem:[#allocation4] sm:$0xff]
      %v3241 = vld [vmem:[#allocation4 + $0x8] sm:$0xff]
      %v3242 = vld [vmem:[#allocation4 + $0x10] sm:$0xff]
      %v3243 = vld [vmem:[#allocation4 + $0x18] sm:$0xff]
      %v3244 = vld [vmem:[#allocation4 + $0x20] sm:$0xff]
      %v3245 = vld [vmem:[#allocation4 + $0x28] sm:$0xff]
      %v3246 = vld [vmem:[#allocation4 + $0x30] sm:$0xff]
      %v3247 = vld [vmem:[#allocation4 + $0x38] sm:$0xff]
      %v3248 = vld [vmem:[#allocation4 + $0x40] sm:$0xff]
      %v3249 = vld [vmem:[#allocation4 + $0x48] sm:$0xff]
      %v3250 = vld [vmem:[#allocation4 + $0x50] sm:$0xff]
      %v3251 = vld [vmem:[#allocation4 + $0x58] sm:$0xff]
      %v3252 = vld [vmem:[#allocation4 + $0x60] sm:$0xff]
      %v3253 = vld [vmem:[#allocation4 + $0x68] sm:$0xff]
      %v3254 = vld [vmem:[#allocation4 + $0x70] sm:$0xff]
      %v3255 = vld [vmem:[#allocation4 + $0x78] sm:$0xff]
      %v3256 = vld [vmem:[#allocation4 + $0x80] sm:$0xff]
      %v3257 = vld [vmem:[#allocation4 + $0x88] sm:$0xff]
      %v3258 = vld [vmem:[#allocation4 + $0x90] sm:$0xff]
      %v3259 = vld [vmem:[#allocation4 + $0x98] sm:$0xff]
      %v3260 = vld [vmem:[#allocation4 + $0xa0] sm:$0xff]
      %v3261 = vld [vmem:[#allocation4 + $0xa8] sm:$0xff]
      %v3262 = vld [vmem:[#allocation4 + $0xb0] sm:$0xff]
      %v3263 = vld [vmem:[#allocation4 + $0xb8] sm:$0xff]
      %v3264 = vld [vmem:[#allocation4 + $0xc0] sm:$0xff]
      %v3265 = vld [vmem:[#allocation4 + $0xc8] sm:$0xff]
      %v3266 = vld [vmem:[#allocation4 + $0xd0] sm:$0xff]
      %v3267 = vld [vmem:[#allocation4 + $0xd8] sm:$0xff]
      %v3268 = vld [vmem:[#allocation4 + $0xe0] sm:$0xff]
      %v3269 = vld [vmem:[#allocation4 + $0xe8] sm:$0xff]
      %v3270 = vld [vmem:[#allocation4 + $0xf0] sm:$0xff]
      %v3271 = vld [vmem:[#allocation4 + $0xf8] sm:$0xff]
      %v3272 = vadd.f32 %v3240, %v3161
      %v3273 = vadd.f32 %v3241, %v3163
      %v3274 = vadd.f32 %v3242, %v3166
      %v3275 = vadd.f32 %v3243, %v3168
      %v3276 = vadd.f32 %v3244, %v3171
      %v3277 = vadd.f32 %v3245, %v3173
      %v3278 = vadd.f32 %v3246, %v3176
      %v3279 = vadd.f32 %v3247, %v3178
      %v3280 = vadd.f32 %v3248, %v3181
      %v3281 = vadd.f32 %v3249, %v3183
      %v3282 = vadd.f32 %v3250, %v3186
      %v3283 = vadd.f32 %v3251, %v3188
      %v3284 = vadd.f32 %v3252, %v3191
      %v3285 = vadd.f32 %v3253, %v3193
      %v3286 = vadd.f32 %v3254, %v3196
      %v3287 = vadd.f32 %v3255, %v3198
      %v3288 = vadd.f32 %v3256, %v3201
      %v3289 = vadd.f32 %v3257, %v3203
      %v3290 = vadd.f32 %v3258, %v3206
      %v3291 = vadd.f32 %v3259, %v3208
      %v3292 = vadd.f32 %v3260, %v3211
      %v3293 = vadd.f32 %v3261, %v3213
      %v3294 = vadd.f32 %v3262, %v3216
      %v3295 = vadd.f32 %v3263, %v3218
      %v3296 = vadd.f32 %v3264, %v3221
      %v3297 = vadd.f32 %v3265, %v3223
      %v3298 = vadd.f32 %v3266, %v3226
      %v3299 = vadd.f32 %v3267, %v3228
      %v3300 = vadd.f32 %v3268, %v3231
      %v3301 = vadd.f32 %v3269, %v3233
      %v3302 = vadd.f32 %v3270, %v3236
      %v3303 = vadd.f32 %v3271, %v3238
      %3304 = vst [vmem:[#allocation4] sm:$0xff] %v3272
      %3305 = vst [vmem:[#allocation4 + $0x8] sm:$0xff] %v3273
      %3306 = vst [vmem:[#allocation4 + $0x10] sm:$0xff] %v3274
      %3307 = vst [vmem:[#allocation4 + $0x18] sm:$0xff] %v3275
      %3308 = vst [vmem:[#allocation4 + $0x20] sm:$0xff] %v3276
      %3309 = vst [vmem:[#allocation4 + $0x28] sm:$0xff] %v3277
      %3310 = vst [vmem:[#allocation4 + $0x30] sm:$0xff] %v3278
      %3311 = vst [vmem:[#allocation4 + $0x38] sm:$0xff] %v3279
      %3312 = vst [vmem:[#allocation4 + $0x40] sm:$0xff] %v3280
      %3313 = vst [vmem:[#allocation4 + $0x48] sm:$0xff] %v3281
      %3314 = vst [vmem:[#allocation4 + $0x50] sm:$0xff] %v3282
      %3315 = vst [vmem:[#allocation4 + $0x58] sm:$0xff] %v3283
      %3316 = vst [vmem:[#allocation4 + $0x60] sm:$0xff] %v3284
      %3317 = vst [vmem:[#allocation4 + $0x68] sm:$0xff] %v3285
      %3318 = vst [vmem:[#allocation4 + $0x70] sm:$0xff] %v3286
      %3319 = vst [vmem:[#allocation4 + $0x78] sm:$0xff] %v3287
      %3320 = vst [vmem:[#allocation4 + $0x80] sm:$0xff] %v3288
      %3321 = vst [vmem:[#allocation4 + $0x88] sm:$0xff] %v3289
      %3322 = vst [vmem:[#allocation4 + $0x90] sm:$0xff] %v3290
      %3323 = vst [vmem:[#allocation4 + $0x98] sm:$0xff] %v3291
      %3324 = vst [vmem:[#allocation4 + $0xa0] sm:$0xff] %v3292
      %3325 = vst [vmem:[#allocation4 + $0xa8] sm:$0xff] %v3293
      %3326 = vst [vmem:[#allocation4 + $0xb0] sm:$0xff] %v3294
      %3327 = vst [vmem:[#allocation4 + $0xb8] sm:$0xff] %v3295
      %3328 = vst [vmem:[#allocation4 + $0xc0] sm:$0xff] %v3296
      %3329 = vst [vmem:[#allocation4 + $0xc8] sm:$0xff] %v3297
      %3330 = vst [vmem:[#allocation4 + $0xd0] sm:$0xff] %v3298
      %3331 = vst [vmem:[#allocation4 + $0xd8] sm:$0xff] %v3299
      %3332 = vst [vmem:[#allocation4 + $0xe0] sm:$0xff] %v3300
      %3333 = vst [vmem:[#allocation4 + $0xe8] sm:$0xff] %v3301
      %3334 = vst [vmem:[#allocation4 + $0xf0] sm:$0xff] %v3302
      %3335 = vst [vmem:[#allocation4 + $0xf8] sm:$0xff] %v3303
      %v3336 = vld [vmem:[#allocation3 + $0x30] sm:$0xff]
      %v3337 = vld [vmem:[#allocation3 + $0x38] sm:$0xf]
      %v3338 = vld [vmem:[#allocation3 + $0x3c] sm:$0xff]
      %v3339 = vld [vmem:[#allocation3 + $0x44] sm:$0xf]
      %v3340 = vld [vmem:[#allocation3 + $0x48] sm:$0xff]
      %v3341 = vld [vmem:[#allocation3 + $0x50] sm:$0xf]
      %v3342 = vld [vmem:[#allocation3 + $0x54] sm:$0xff]
      %v3343 = vld [vmem:[#allocation3 + $0x5c] sm:$0xf]
      %v3344 = vld [vmem:[#allocation3 + $0x60] sm:$0xff]
      %v3345 = vld [vmem:[#allocation3 + $0x68] sm:$0xf]
      %v3346 = vld [vmem:[#allocation3 + $0x6c] sm:$0xff]
      %v3347 = vld [vmem:[#allocation3 + $0x74] sm:$0xf]
      %v3348 = vld [vmem:[#allocation3 + $0x78] sm:$0xff]
      %v3349 = vld [vmem:[#allocation3 + $0x80] sm:$0xf]
      %v3350 = vld [vmem:[#allocation3 + $0x84] sm:$0xff]
      %v3351 = vld [vmem:[#allocation3 + $0x8c] sm:$0xf]
      %v3352 = vld [vmem:[#allocation3 + $0x90] sm:$0xff]
      %v3353 = vld [vmem:[#allocation3 + $0x98] sm:$0xf]
      %v3354 = vld [vmem:[#allocation3 + $0x9c] sm:$0xff]
      %v3355 = vld [vmem:[#allocation3 + $0xa4] sm:$0xf]
      %v3356 = vld [vmem:[#allocation3 + $0xa8] sm:$0xff]
      %v3357 = vld [vmem:[#allocation3 + $0xb0] sm:$0xf]
      %v3358 = vld [vmem:[#allocation3 + $0xb4] sm:$0xff]
      %v3359 = vld [vmem:[#allocation3 + $0xbc] sm:$0xf]
      %v3360 = vld [vmem:[#allocation3 + $0xc0] sm:$0xff]
      %v3361 = vld [vmem:[#allocation3 + $0xc8] sm:$0xf]
      %v3362 = vld [vmem:[#allocation3 + $0xcc] sm:$0xff]
      %v3363 = vld [vmem:[#allocation3 + $0xd4] sm:$0xf]
      %v3364 = vld [vmem:[#allocation3 + $0xd8] sm:$0xff]
      %v3365 = vld [vmem:[#allocation3 + $0xe0] sm:$0xf]
      %v3366 = vld [vmem:[#allocation3 + $0xe4] sm:$0xff]
      %v3367 = vld [vmem:[#allocation3 + $0xec] sm:$0xf]
      %v3368 = vld [vmem:[#allocation3 + $0xf0] sm:$0xff]
      %v3369 = vld [vmem:[#allocation3 + $0xf8] sm:$0xf]
      %v3370 = vld [vmem:[#allocation3 + $0xfc] sm:$0xff]
      %v3371 = vld [vmem:[#allocation3 + $0x104] sm:$0xf]
      %v3372 = vld [vmem:[#allocation3 + $0x108] sm:$0xff]
      %v3373 = vld [vmem:[#allocation3 + $0x110] sm:$0xf]
      %v3374 = vld [vmem:[#allocation3 + $0x114] sm:$0xff]
      %v3375 = vld [vmem:[#allocation3 + $0x11c] sm:$0xf]
      %v3376 = vld [vmem:[#allocation3 + $0x120] sm:$0xff]
      %v3377 = vld [vmem:[#allocation3 + $0x128] sm:$0xf]
      %v3378 = vld [vmem:[#allocation3 + $0x12c] sm:$0xff]
      %v3379 = vld [vmem:[#allocation3 + $0x134] sm:$0xf]
      %v3380 = vld [vmem:[#allocation3 + $0x138] sm:$0xff]
      %v3381 = vld [vmem:[#allocation3 + $0x140] sm:$0xf]
      %v3382 = vld [vmem:[#allocation3 + $0x144] sm:$0xff]
      %v3383 = vld [vmem:[#allocation3 + $0x14c] sm:$0xf]
      %v3384 = vld [vmem:[#allocation3 + $0x150] sm:$0xff]
      %v3385 = vld [vmem:[#allocation3 + $0x158] sm:$0xf]
      %v3386 = vld [vmem:[#allocation3 + $0x15c] sm:$0xff]
      %v3387 = vld [vmem:[#allocation3 + $0x164] sm:$0xf]
      %v3388 = vld [vmem:[#allocation3 + $0x168] sm:$0xff]
      %v3389 = vld [vmem:[#allocation3 + $0x170] sm:$0xf]
      %v3390 = vld [vmem:[#allocation3 + $0x174] sm:$0xff]
      %v3391 = vld [vmem:[#allocation3 + $0x17c] sm:$0xf]
      %v3392 = vld [vmem:[#allocation3 + $0x180] sm:$0xff]
      %v3393 = vld [vmem:[#allocation3 + $0x188] sm:$0xf]
      %v3394 = vld [vmem:[#allocation3 + $0x18c] sm:$0xff]
      %v3395 = vld [vmem:[#allocation3 + $0x194] sm:$0xf]
      %v3396 = vld [vmem:[#allocation3 + $0x198] sm:$0xff]
      %v3397 = vld [vmem:[#allocation3 + $0x1a0] sm:$0xf]
      %v3398 = vld [vmem:[#allocation3 + $0x1a4] sm:$0xff]
      %v3399 = vld [vmem:[#allocation3 + $0x1ac] sm:$0xf]
      %s3400 = scalar_lea.vmem %s3, 384
      %v3401 = vld [vmem:[%s3400] sm:$0xf]
      %v3402 = vld [vmem:[%s3400 + $0x4] sm:$0xf]
      %v3403 = vld [vmem:[%s3400 + $0x8] sm:$0xf]
      %v3404 = vld [vmem:[%s3400 + $0xc] sm:$0xf]
      %v3405 = vld [vmem:[%s3400 + $0x10] sm:$0xf]
      %v3406 = vld [vmem:[%s3400 + $0x14] sm:$0xf]
      %v3407 = vld [vmem:[%s3400 + $0x18] sm:$0xf]
      %v3408 = vld [vmem:[%s3400 + $0x1c] sm:$0xf]
      %v3409 = vld [vmem:[%s3400 + $0x20] sm:$0xf]
      %v3410 = vld [vmem:[%s3400 + $0x24] sm:$0xf]
      %v3411 = vld [vmem:[%s3400 + $0x28] sm:$0xf]
      %v3412 = vld [vmem:[%s3400 + $0x2c] sm:$0xf]
      %v3413 = vld [vmem:[%s3400 + $0x30] sm:$0xf]
      %v3414 = vld [vmem:[%s3400 + $0x34] sm:$0xf]
      %v3415 = vld [vmem:[%s3400 + $0x38] sm:$0xf]
      %v3416 = vld [vmem:[%s3400 + $0x3c] sm:$0xf]
      %v3417 = vld [vmem:[%s3400 + $0x40] sm:$0xf]
      %v3418 = vld [vmem:[%s3400 + $0x44] sm:$0xf]
      %v3419 = vld [vmem:[%s3400 + $0x48] sm:$0xf]
      %v3420 = vld [vmem:[%s3400 + $0x4c] sm:$0xf]
      %v3421 = vld [vmem:[%s3400 + $0x50] sm:$0xf]
      %v3422 = vld [vmem:[%s3400 + $0x54] sm:$0xf]
      %v3423 = vld [vmem:[%s3400 + $0x58] sm:$0xf]
      %v3424 = vld [vmem:[%s3400 + $0x5c] sm:$0xf]
      %v3425 = vld [vmem:[%s3400 + $0x60] sm:$0xf]
      %v3426 = vld [vmem:[%s3400 + $0x64] sm:$0xf]
      %v3427 = vld [vmem:[%s3400 + $0x68] sm:$0xf]
      %v3428 = vld [vmem:[%s3400 + $0x6c] sm:$0xf]
      %v3429 = vld [vmem:[%s3400 + $0x70] sm:$0xf]
      %v3430 = vld [vmem:[%s3400 + $0x74] sm:$0xf]
      %v3431 = vld [vmem:[%s3400 + $0x78] sm:$0xf]
      %v3432 = vld [vmem:[%s3400 + $0x7c] sm:$0xf]
      %v3433 = vld [vmem:[%s3400 + $0x80] sm:$0xf]
      %v3434 = vld [vmem:[%s3400 + $0x84] sm:$0xf]
      %v3435 = vld [vmem:[%s3400 + $0x88] sm:$0xf]
      %v3436 = vld [vmem:[%s3400 + $0x8c] sm:$0xf]
      %v3437 = vld [vmem:[%s3400 + $0x90] sm:$0xf]
      %v3438 = vld [vmem:[%s3400 + $0x94] sm:$0xf]
      %v3439 = vld [vmem:[%s3400 + $0x98] sm:$0xf]
      %v3440 = vld [vmem:[%s3400 + $0x9c] sm:$0xf]
      %v3441 = vld [vmem:[%s3400 + $0xa0] sm:$0xf]
      %v3442 = vld [vmem:[%s3400 + $0xa4] sm:$0xf]
      %v3443 = vld [vmem:[%s3400 + $0xa8] sm:$0xf]
      %v3444 = vld [vmem:[%s3400 + $0xac] sm:$0xf]
      %v3445 = vld [vmem:[%s3400 + $0xb0] sm:$0xf]
      %v3446 = vld [vmem:[%s3400 + $0xb4] sm:$0xf]
      %v3447 = vld [vmem:[%s3400 + $0xb8] sm:$0xf]
      %v3448 = vld [vmem:[%s3400 + $0xbc] sm:$0xf]
      %v3513 = vunpack.c.l.b16 %v3336
      %v3514 = vunpack.c.h.b16 %v3336
      %v3515 = vunpack.c.l.b16 %v3337
      %v3516 = vunpack.c.l.b16 %v3338
      %v3517 = vunpack.c.h.b16 %v3338
      %v3518 = vunpack.c.l.b16 %v3339
      %v3519 = vunpack.c.l.b16 %v3340
      %v3520 = vunpack.c.h.b16 %v3340
      %v3521 = vunpack.c.l.b16 %v3341
      %v3522 = vunpack.c.l.b16 %v3342
      %v3523 = vunpack.c.h.b16 %v3342
      %v3524 = vunpack.c.l.b16 %v3343
      %v3525 = vunpack.c.l.b16 %v3344
      %v3526 = vunpack.c.h.b16 %v3344
      %v3527 = vunpack.c.l.b16 %v3345
      %v3528 = vunpack.c.l.b16 %v3346
      %v3529 = vunpack.c.h.b16 %v3346
      %v3530 = vunpack.c.l.b16 %v3347
      %v3531 = vunpack.c.l.b16 %v3348
      %v3532 = vunpack.c.h.b16 %v3348
      %v3533 = vunpack.c.l.b16 %v3349
      %v3534 = vunpack.c.l.b16 %v3350
      %v3535 = vunpack.c.h.b16 %v3350
      %v3536 = vunpack.c.l.b16 %v3351
      %v3537 = vunpack.c.l.b16 %v3352
      %v3538 = vunpack.c.h.b16 %v3352
      %v3539 = vunpack.c.l.b16 %v3353
      %v3540 = vunpack.c.l.b16 %v3354
      %v3541 = vunpack.c.h.b16 %v3354
      %v3542 = vunpack.c.l.b16 %v3355
      %v3543 = vunpack.c.l.b16 %v3356
      %v3544 = vunpack.c.h.b16 %v3356
      %v3545 = vunpack.c.l.b16 %v3357
      %v3546 = vunpack.c.l.b16 %v3358
      %v3547 = vunpack.c.h.b16 %v3358
      %v3548 = vunpack.c.l.b16 %v3359
      %v3549 = vunpack.c.l.b16 %v3360
      %v3550 = vunpack.c.h.b16 %v3360
      %v3551 = vunpack.c.l.b16 %v3361
      %v3552 = vunpack.c.l.b16 %v3362
      %v3553 = vunpack.c.h.b16 %v3362
      %v3554 = vunpack.c.l.b16 %v3363
      %v3555 = vunpack.c.l.b16 %v3364
      %v3556 = vunpack.c.h.b16 %v3364
      %v3557 = vunpack.c.l.b16 %v3365
      %v3558 = vunpack.c.l.b16 %v3366
      %v3559 = vunpack.c.h.b16 %v3366
      %v3560 = vunpack.c.l.b16 %v3367
      %v3561 = vunpack.c.l.b16 %v3368
      %v3562 = vunpack.c.h.b16 %v3368
      %v3563 = vunpack.c.l.b16 %v3369
      %v3564 = vunpack.c.l.b16 %v3370
      %v3565 = vunpack.c.h.b16 %v3370
      %v3566 = vunpack.c.l.b16 %v3371
      %v3567 = vunpack.c.l.b16 %v3372
      %v3568 = vunpack.c.h.b16 %v3372
      %v3569 = vunpack.c.l.b16 %v3373
      %v3570 = vunpack.c.l.b16 %v3374
      %v3571 = vunpack.c.h.b16 %v3374
      %v3572 = vunpack.c.l.b16 %v3375
      %v3573 = vunpack.c.l.b16 %v3376
      %v3574 = vunpack.c.h.b16 %v3376
      %v3575 = vunpack.c.l.b16 %v3377
      %v3576 = vunpack.c.l.b16 %v3378
      %v3577 = vunpack.c.h.b16 %v3378
      %v3578 = vunpack.c.l.b16 %v3379
      %v3579 = vunpack.c.l.b16 %v3380
      %v3580 = vunpack.c.h.b16 %v3380
      %v3581 = vunpack.c.l.b16 %v3381
      %v3582 = vunpack.c.l.b16 %v3382
      %v3583 = vunpack.c.h.b16 %v3382
      %v3584 = vunpack.c.l.b16 %v3383
      %v3585 = vunpack.c.l.b16 %v3384
      %v3586 = vunpack.c.h.b16 %v3384
      %v3587 = vunpack.c.l.b16 %v3385
      %v3588 = vunpack.c.l.b16 %v3386
      %v3589 = vunpack.c.h.b16 %v3386
      %v3590 = vunpack.c.l.b16 %v3387
      %v3591 = vunpack.c.l.b16 %v3388
      %v3592 = vunpack.c.h.b16 %v3388
      %v3593 = vunpack.c.l.b16 %v3389
      %v3594 = vunpack.c.l.b16 %v3390
      %v3595 = vunpack.c.h.b16 %v3390
      %v3596 = vunpack.c.l.b16 %v3391
      %v3597 = vunpack.c.l.b16 %v3392
      %v3598 = vunpack.c.h.b16 %v3392
      %v3599 = vunpack.c.l.b16 %v3393
      %v3600 = vunpack.c.l.b16 %v3394
      %v3601 = vunpack.c.h.b16 %v3394
      %v3602 = vunpack.c.l.b16 %v3395
      %v3603 = vunpack.c.l.b16 %v3396
      %v3604 = vunpack.c.h.b16 %v3396
      %v3605 = vunpack.c.l.b16 %v3397
      %v3606 = vunpack.c.l.b16 %v3398
      %v3607 = vunpack.c.h.b16 %v3398
      %v3608 = vunpack.c.l.b16 %v3399
      %v3609 = vpack.c.b16 %v3516, %v3513
      %v3610 = vpack.c.b16 %v3517, %v3514
      %v3611 = vpack.c.b16 %v3518, %v3515
      %v3612 = vpack.c.b16 %v3522, %v3519
      %v3613 = vpack.c.b16 %v3523, %v3520
      %v3614 = vpack.c.b16 %v3524, %v3521
      %v3615 = vpack.c.b16 %v3528, %v3525
      %v3616 = vpack.c.b16 %v3529, %v3526
      %v3617 = vpack.c.b16 %v3530, %v3527
      %v3618 = vpack.c.b16 %v3534, %v3531
      %v3619 = vpack.c.b16 %v3535, %v3532
      %v3620 = vpack.c.b16 %v3536, %v3533
      %v3621 = vpack.c.b16 %v3540, %v3537
      %v3622 = vpack.c.b16 %v3541, %v3538
      %v3623 = vpack.c.b16 %v3542, %v3539
      %v3624 = vpack.c.b16 %v3546, %v3543
      %v3625 = vpack.c.b16 %v3547, %v3544
      %v3626 = vpack.c.b16 %v3548, %v3545
      %v3627 = vpack.c.b16 %v3552, %v3549
      %v3628 = vpack.c.b16 %v3553, %v3550
      %v3629 = vpack.c.b16 %v3554, %v3551
      %v3630 = vpack.c.b16 %v3558, %v3555
      %v3631 = vpack.c.b16 %v3559, %v3556
      %v3632 = vpack.c.b16 %v3560, %v3557
      %v3633 = vpack.c.b16 %v3564, %v3561
      %v3634 = vpack.c.b16 %v3565, %v3562
      %v3635 = vpack.c.b16 %v3566, %v3563
      %v3636 = vpack.c.b16 %v3570, %v3567
      %v3637 = vpack.c.b16 %v3571, %v3568
      %v3638 = vpack.c.b16 %v3572, %v3569
      %v3639 = vpack.c.b16 %v3576, %v3573
      %v3640 = vpack.c.b16 %v3577, %v3574
      %v3641 = vpack.c.b16 %v3578, %v3575
      %v3642 = vpack.c.b16 %v3582, %v3579
      %v3643 = vpack.c.b16 %v3583, %v3580
      %v3644 = vpack.c.b16 %v3584, %v3581
      %v3645 = vpack.c.b16 %v3588, %v3585
      %v3646 = vpack.c.b16 %v3589, %v3586
      %v3647 = vpack.c.b16 %v3590, %v3587
      %v3648 = vpack.c.b16 %v3594, %v3591
      %v3649 = vpack.c.b16 %v3595, %v3592
      %v3650 = vpack.c.b16 %v3596, %v3593
      %v3651 = vpack.c.b16 %v3600, %v3597
      %v3652 = vpack.c.b16 %v3601, %v3598
      %v3653 = vpack.c.b16 %v3602, %v3599
      %v3654 = vpack.c.b16 %v3606, %v3603
      %v3655 = vpack.c.b16 %v3607, %v3604
      %v3656 = vpack.c.b16 %v3608, %v3605
      %v3753 = vunpack.c.l.b16 %v3401
      %v3754 = vunpack.c.l.b16 %v3402
      %v3755 = vunpack.c.l.b16 %v3403
      %v3756 = vunpack.c.l.b16 %v3404
      %v3757 = vunpack.c.l.b16 %v3405
      %v3758 = vunpack.c.l.b16 %v3406
      %v3759 = vunpack.c.l.b16 %v3407
      %v3760 = vunpack.c.l.b16 %v3408
      %v3761 = vunpack.c.l.b16 %v3409
      %v3762 = vunpack.c.l.b16 %v3410
      %v3763 = vunpack.c.l.b16 %v3411
      %v3764 = vunpack.c.l.b16 %v3412
      %v3765 = vunpack.c.l.b16 %v3413
      %v3766 = vunpack.c.l.b16 %v3414
      %v3767 = vunpack.c.l.b16 %v3415
      %v3768 = vunpack.c.l.b16 %v3416
      %v3769 = vunpack.c.l.b16 %v3417
      %v3770 = vunpack.c.l.b16 %v3418
      %v3771 = vunpack.c.l.b16 %v3419
      %v3772 = vunpack.c.l.b16 %v3420
      %v3773 = vunpack.c.l.b16 %v3421
      %v3774 = vunpack.c.l.b16 %v3422
      %v3775 = vunpack.c.l.b16 %v3423
      %v3776 = vunpack.c.l.b16 %v3424
      %v3777 = vunpack.c.l.b16 %v3425
      %v3778 = vunpack.c.l.b16 %v3426
      %v3779 = vunpack.c.l.b16 %v3427
      %v3780 = vunpack.c.l.b16 %v3428
      %v3781 = vunpack.c.l.b16 %v3429
      %v3782 = vunpack.c.l.b16 %v3430
      %v3783 = vunpack.c.l.b16 %v3431
      %v3784 = vunpack.c.l.b16 %v3432
      %v3785 = vunpack.c.l.b16 %v3433
      %v3786 = vunpack.c.l.b16 %v3434
      %v3787 = vunpack.c.l.b16 %v3435
      %v3788 = vunpack.c.l.b16 %v3436
      %v3789 = vunpack.c.l.b16 %v3437
      %v3790 = vunpack.c.l.b16 %v3438
      %v3791 = vunpack.c.l.b16 %v3439
      %v3792 = vunpack.c.l.b16 %v3440
      %v3793 = vunpack.c.l.b16 %v3441
      %v3794 = vunpack.c.l.b16 %v3442
      %v3795 = vunpack.c.l.b16 %v3443
      %v3796 = vunpack.c.l.b16 %v3444
      %v3797 = vunpack.c.l.b16 %v3445
      %v3798 = vunpack.c.l.b16 %v3446
      %v3799 = vunpack.c.l.b16 %v3447
      %v3800 = vunpack.c.l.b16 %v3448
      %v3801 = vpack.c.b16 %v3754, %v3753
      %v3802 = vpack.c.b16 %v3756, %v3755
      %v3803 = vpack.c.b16 %v3758, %v3757
      %v3804 = vpack.c.b16 %v3760, %v3759
      %v3805 = vpack.c.b16 %v3762, %v3761
      %v3806 = vpack.c.b16 %v3764, %v3763
      %v3807 = vpack.c.b16 %v3766, %v3765
      %v3808 = vpack.c.b16 %v3768, %v3767
      %v3809 = vpack.c.b16 %v3770, %v3769
      %v3810 = vpack.c.b16 %v3772, %v3771
      %v3811 = vpack.c.b16 %v3774, %v3773
      %v3812 = vpack.c.b16 %v3776, %v3775
      %v3813 = vpack.c.b16 %v3778, %v3777
      %v3814 = vpack.c.b16 %v3780, %v3779
      %v3815 = vpack.c.b16 %v3782, %v3781
      %v3816 = vpack.c.b16 %v3784, %v3783
      %v3817 = vpack.c.b16 %v3786, %v3785
      %v3818 = vpack.c.b16 %v3788, %v3787
      %v3819 = vpack.c.b16 %v3790, %v3789
      %v3820 = vpack.c.b16 %v3792, %v3791
      %v3821 = vpack.c.b16 %v3794, %v3793
      %v3822 = vpack.c.b16 %v3796, %v3795
      %v3823 = vpack.c.b16 %v3798, %v3797
      %v3824 = vpack.c.b16 %v3800, %v3799
      %3849 = vmatpush.bf16.msra.mxu0 %v3808
      %3850 = vmatpush.bf16.msra.mxu0 %v3807
      %3851 = vmatpush.bf16.msra.mxu0 %v3806
      %3852 = vmatpush.bf16.msra.mxu0 %v3805
      %3853 = vmatpush.bf16.msra.mxu0 %v3804
      %3854 = vmatpush.bf16.msra.mxu0 %v3803
      %3855 = vmatpush.bf16.msra.mxu0 %v3802
      %3856 = vmatpush.bf16.msra.mxu0 %v3801
      %3857 = vmatmul.bf16.gmra.mxu0 %v3609
      %v3858 = vpop.f32.mrf.mxu0
      %v3859 = vadd.f32 0.0, %v3858
      %v3860 = vpop.f32.mrf.mxu0
      %v3861 = vadd.f32 0.0, %v3860
      %3862 = vmatmul.bf16.gmra.mxu0 %v3612
      %v3863 = vpop.f32.mrf.mxu0
      %v3864 = vadd.f32 0.0, %v3863
      %v3865 = vpop.f32.mrf.mxu0
      %v3866 = vadd.f32 0.0, %v3865
      %3867 = vmatmul.bf16.gmra.mxu0 %v3615
      %v3868 = vpop.f32.mrf.mxu0
      %v3869 = vadd.f32 0.0, %v3868
      %v3870 = vpop.f32.mrf.mxu0
      %v3871 = vadd.f32 0.0, %v3870
      %3872 = vmatmul.bf16.gmra.mxu0 %v3618
      %v3873 = vpop.f32.mrf.mxu0
      %v3874 = vadd.f32 0.0, %v3873
      %v3875 = vpop.f32.mrf.mxu0
      %v3876 = vadd.f32 0.0, %v3875
      %3877 = vmatmul.bf16.gmra.mxu0 %v3621
      %v3878 = vpop.f32.mrf.mxu0
      %v3879 = vadd.f32 0.0, %v3878
      %v3880 = vpop.f32.mrf.mxu0
      %v3881 = vadd.f32 0.0, %v3880
      %3882 = vmatmul.bf16.gmra.mxu0 %v3624
      %v3883 = vpop.f32.mrf.mxu0
      %v3884 = vadd.f32 0.0, %v3883
      %v3885 = vpop.f32.mrf.mxu0
      %v3886 = vadd.f32 0.0, %v3885
      %3887 = vmatmul.bf16.gmra.mxu0 %v3627
      %v3888 = vpop.f32.mrf.mxu0
      %v3889 = vadd.f32 0.0, %v3888
      %v3890 = vpop.f32.mrf.mxu0
      %v3891 = vadd.f32 0.0, %v3890
      %3892 = vmatmul.bf16.gmra.mxu0 %v3630
      %v3893 = vpop.f32.mrf.mxu0
      %v3894 = vadd.f32 0.0, %v3893
      %v3895 = vpop.f32.mrf.mxu0
      %v3896 = vadd.f32 0.0, %v3895
      %3897 = vmatmul.bf16.gmra.mxu0 %v3633
      %v3898 = vpop.f32.mrf.mxu0
      %v3899 = vadd.f32 0.0, %v3898
      %v3900 = vpop.f32.mrf.mxu0
      %v3901 = vadd.f32 0.0, %v3900
      %3902 = vmatmul.bf16.gmra.mxu0 %v3636
      %v3903 = vpop.f32.mrf.mxu0
      %v3904 = vadd.f32 0.0, %v3903
      %v3905 = vpop.f32.mrf.mxu0
      %v3906 = vadd.f32 0.0, %v3905
      %3907 = vmatmul.bf16.gmra.mxu0 %v3639
      %v3908 = vpop.f32.mrf.mxu0
      %v3909 = vadd.f32 0.0, %v3908
      %v3910 = vpop.f32.mrf.mxu0
      %v3911 = vadd.f32 0.0, %v3910
      %3912 = vmatmul.bf16.gmra.mxu0 %v3642
      %v3913 = vpop.f32.mrf.mxu0
      %v3914 = vadd.f32 0.0, %v3913
      %v3915 = vpop.f32.mrf.mxu0
      %v3916 = vadd.f32 0.0, %v3915
      %3917 = vmatmul.bf16.gmra.mxu0 %v3645
      %v3918 = vpop.f32.mrf.mxu0
      %v3919 = vadd.f32 0.0, %v3918
      %v3920 = vpop.f32.mrf.mxu0
      %v3921 = vadd.f32 0.0, %v3920
      %3922 = vmatmul.bf16.gmra.mxu0 %v3648
      %v3923 = vpop.f32.mrf.mxu0
      %v3924 = vadd.f32 0.0, %v3923
      %v3925 = vpop.f32.mrf.mxu0
      %v3926 = vadd.f32 0.0, %v3925
      %3927 = vmatmul.bf16.gmra.mxu0 %v3651
      %v3928 = vpop.f32.mrf.mxu0
      %v3929 = vadd.f32 0.0, %v3928
      %v3930 = vpop.f32.mrf.mxu0
      %v3931 = vadd.f32 0.0, %v3930
      %3932 = vmatmul.bf16.gmra.mxu0 %v3654
      %v3933 = vpop.f32.mrf.mxu0
      %v3934 = vadd.f32 0.0, %v3933
      %v3935 = vpop.f32.mrf.mxu0
      %v3936 = vadd.f32 0.0, %v3935
      %3937 = vdwg.mxu0
      %3938 = vmatpush.bf16.msra.mxu0 %v3816
      %3939 = vmatpush.bf16.msra.mxu0 %v3815
      %3940 = vmatpush.bf16.msra.mxu0 %v3814
      %3941 = vmatpush.bf16.msra.mxu0 %v3813
      %3942 = vmatpush.bf16.msra.mxu0 %v3812
      %3943 = vmatpush.bf16.msra.mxu0 %v3811
      %3944 = vmatpush.bf16.msra.mxu0 %v3810
      %3945 = vmatpush.bf16.msra.mxu0 %v3809
      %3946 = vmatmul.bf16.gmra.mxu0 %v3610
      %v3947 = vpop.f32.mrf.mxu0
      %v3948 = vadd.f32 %v3859, %v3947
      %v3949 = vpop.f32.mrf.mxu0
      %v3950 = vadd.f32 %v3861, %v3949
      %3951 = vmatmul.bf16.gmra.mxu0 %v3613
      %v3952 = vpop.f32.mrf.mxu0
      %v3953 = vadd.f32 %v3864, %v3952
      %v3954 = vpop.f32.mrf.mxu0
      %v3955 = vadd.f32 %v3866, %v3954
      %3956 = vmatmul.bf16.gmra.mxu0 %v3616
      %v3957 = vpop.f32.mrf.mxu0
      %v3958 = vadd.f32 %v3869, %v3957
      %v3959 = vpop.f32.mrf.mxu0
      %v3960 = vadd.f32 %v3871, %v3959
      %3961 = vmatmul.bf16.gmra.mxu0 %v3619
      %v3962 = vpop.f32.mrf.mxu0
      %v3963 = vadd.f32 %v3874, %v3962
      %v3964 = vpop.f32.mrf.mxu0
      %v3965 = vadd.f32 %v3876, %v3964
      %3966 = vmatmul.bf16.gmra.mxu0 %v3622
      %v3967 = vpop.f32.mrf.mxu0
      %v3968 = vadd.f32 %v3879, %v3967
      %v3969 = vpop.f32.mrf.mxu0
      %v3970 = vadd.f32 %v3881, %v3969
      %3971 = vmatmul.bf16.gmra.mxu0 %v3625
      %v3972 = vpop.f32.mrf.mxu0
      %v3973 = vadd.f32 %v3884, %v3972
      %v3974 = vpop.f32.mrf.mxu0
      %v3975 = vadd.f32 %v3886, %v3974
      %3976 = vmatmul.bf16.gmra.mxu0 %v3628
      %v3977 = vpop.f32.mrf.mxu0
      %v3978 = vadd.f32 %v3889, %v3977
      %v3979 = vpop.f32.mrf.mxu0
      %v3980 = vadd.f32 %v3891, %v3979
      %3981 = vmatmul.bf16.gmra.mxu0 %v3631
      %v3982 = vpop.f32.mrf.mxu0
      %v3983 = vadd.f32 %v3894, %v3982
      %v3984 = vpop.f32.mrf.mxu0
      %v3985 = vadd.f32 %v3896, %v3984
      %3986 = vmatmul.bf16.gmra.mxu0 %v3634
      %v3987 = vpop.f32.mrf.mxu0
      %v3988 = vadd.f32 %v3899, %v3987
      %v3989 = vpop.f32.mrf.mxu0
      %v3990 = vadd.f32 %v3901, %v3989
      %3991 = vmatmul.bf16.gmra.mxu0 %v3637
      %v3992 = vpop.f32.mrf.mxu0
      %v3993 = vadd.f32 %v3904, %v3992
      %v3994 = vpop.f32.mrf.mxu0
      %v3995 = vadd.f32 %v3906, %v3994
      %3996 = vmatmul.bf16.gmra.mxu0 %v3640
      %v3997 = vpop.f32.mrf.mxu0
      %v3998 = vadd.f32 %v3909, %v3997
      %v3999 = vpop.f32.mrf.mxu0
      %v4000 = vadd.f32 %v3911, %v3999
      %4001 = vmatmul.bf16.gmra.mxu0 %v3643
      %v4002 = vpop.f32.mrf.mxu0
      %v4003 = vadd.f32 %v3914, %v4002
      %v4004 = vpop.f32.mrf.mxu0
      %v4005 = vadd.f32 %v3916, %v4004
      %4006 = vmatmul.bf16.gmra.mxu0 %v3646
      %v4007 = vpop.f32.mrf.mxu0
      %v4008 = vadd.f32 %v3919, %v4007
      %v4009 = vpop.f32.mrf.mxu0
      %v4010 = vadd.f32 %v3921, %v4009
      %4011 = vmatmul.bf16.gmra.mxu0 %v3649
      %v4012 = vpop.f32.mrf.mxu0
      %v4013 = vadd.f32 %v3924, %v4012
      %v4014 = vpop.f32.mrf.mxu0
      %v4015 = vadd.f32 %v3926, %v4014
      %4016 = vmatmul.bf16.gmra.mxu0 %v3652
      %v4017 = vpop.f32.mrf.mxu0
      %v4018 = vadd.f32 %v3929, %v4017
      %v4019 = vpop.f32.mrf.mxu0
      %v4020 = vadd.f32 %v3931, %v4019
      %4021 = vmatmul.bf16.gmra.mxu0 %v3655
      %v4022 = vpop.f32.mrf.mxu0
      %v4023 = vadd.f32 %v3934, %v4022
      %v4024 = vpop.f32.mrf.mxu0
      %v4025 = vadd.f32 %v3936, %v4024
      %4026 = vdwg.mxu0
      %4027 = vmatpush.bf16.msra.mxu0 %v3824
      %4028 = vmatpush.bf16.msra.mxu0 %v3823
      %4029 = vmatpush.bf16.msra.mxu0 %v3822
      %4030 = vmatpush.bf16.msra.mxu0 %v3821
      %4031 = vmatpush.bf16.msra.mxu0 %v3820
      %4032 = vmatpush.bf16.msra.mxu0 %v3819
      %4033 = vmatpush.bf16.msra.mxu0 %v3818
      %4034 = vmatpush.bf16.msra.mxu0 %v3817
      %4035 = vmatmul.bf16.gmra.mxu0 %v3611
      %v4036 = vpop.f32.mrf.mxu0
      %v4037 = vadd.f32 %v3948, %v4036
      %v4038 = vpop.f32.mrf.mxu0
      %v4039 = vadd.f32 %v3950, %v4038
      %4040 = vmatmul.bf16.gmra.mxu0 %v3614
      %v4041 = vpop.f32.mrf.mxu0
      %v4042 = vadd.f32 %v3953, %v4041
      %v4043 = vpop.f32.mrf.mxu0
      %v4044 = vadd.f32 %v3955, %v4043
      %4045 = vmatmul.bf16.gmra.mxu0 %v3617
      %v4046 = vpop.f32.mrf.mxu0
      %v4047 = vadd.f32 %v3958, %v4046
      %v4048 = vpop.f32.mrf.mxu0
      %v4049 = vadd.f32 %v3960, %v4048
      %4050 = vmatmul.bf16.gmra.mxu0 %v3620
      %v4051 = vpop.f32.mrf.mxu0
      %v4052 = vadd.f32 %v3963, %v4051
      %v4053 = vpop.f32.mrf.mxu0
      %v4054 = vadd.f32 %v3965, %v4053
      %4055 = vmatmul.bf16.gmra.mxu0 %v3623
      %v4056 = vpop.f32.mrf.mxu0
      %v4057 = vadd.f32 %v3968, %v4056
      %v4058 = vpop.f32.mrf.mxu0
      %v4059 = vadd.f32 %v3970, %v4058
      %4060 = vmatmul.bf16.gmra.mxu0 %v3626
      %v4061 = vpop.f32.mrf.mxu0
      %v4062 = vadd.f32 %v3973, %v4061
      %v4063 = vpop.f32.mrf.mxu0
      %v4064 = vadd.f32 %v3975, %v4063
      %4065 = vmatmul.bf16.gmra.mxu0 %v3629
      %v4066 = vpop.f32.mrf.mxu0
      %v4067 = vadd.f32 %v3978, %v4066
      %v4068 = vpop.f32.mrf.mxu0
      %v4069 = vadd.f32 %v3980, %v4068
      %4070 = vmatmul.bf16.gmra.mxu0 %v3632
      %v4071 = vpop.f32.mrf.mxu0
      %v4072 = vadd.f32 %v3983, %v4071
      %v4073 = vpop.f32.mrf.mxu0
      %v4074 = vadd.f32 %v3985, %v4073
      %4075 = vmatmul.bf16.gmra.mxu0 %v3635
      %v4076 = vpop.f32.mrf.mxu0
      %v4077 = vadd.f32 %v3988, %v4076
      %v4078 = vpop.f32.mrf.mxu0
      %v4079 = vadd.f32 %v3990, %v4078
      %4080 = vmatmul.bf16.gmra.mxu0 %v3638
      %v4081 = vpop.f32.mrf.mxu0
      %v4082 = vadd.f32 %v3993, %v4081
      %v4083 = vpop.f32.mrf.mxu0
      %v4084 = vadd.f32 %v3995, %v4083
      %4085 = vmatmul.bf16.gmra.mxu0 %v3641
      %v4086 = vpop.f32.mrf.mxu0
      %v4087 = vadd.f32 %v3998, %v4086
      %v4088 = vpop.f32.mrf.mxu0
      %v4089 = vadd.f32 %v4000, %v4088
      %4090 = vmatmul.bf16.gmra.mxu0 %v3644
      %v4091 = vpop.f32.mrf.mxu0
      %v4092 = vadd.f32 %v4003, %v4091
      %v4093 = vpop.f32.mrf.mxu0
      %v4094 = vadd.f32 %v4005, %v4093
      %4095 = vmatmul.bf16.gmra.mxu0 %v3647
      %v4096 = vpop.f32.mrf.mxu0
      %v4097 = vadd.f32 %v4008, %v4096
      %v4098 = vpop.f32.mrf.mxu0
      %v4099 = vadd.f32 %v4010, %v4098
      %4100 = vmatmul.bf16.gmra.mxu0 %v3650
      %v4101 = vpop.f32.mrf.mxu0
      %v4102 = vadd.f32 %v4013, %v4101
      %v4103 = vpop.f32.mrf.mxu0
      %v4104 = vadd.f32 %v4015, %v4103
      %4105 = vmatmul.bf16.gmra.mxu0 %v3653
      %v4106 = vpop.f32.mrf.mxu0
      %v4107 = vadd.f32 %v4018, %v4106
      %v4108 = vpop.f32.mrf.mxu0
      %v4109 = vadd.f32 %v4020, %v4108
      %4110 = vmatmul.bf16.gmra.mxu0 %v3656
      %v4111 = vpop.f32.mrf.mxu0
      %v4112 = vadd.f32 %v4023, %v4111
      %v4113 = vpop.f32.mrf.mxu0
      %v4114 = vadd.f32 %v4025, %v4113
      %4115 = vdwg.mxu0
      %v4116 = vld [vmem:[#allocation4] sm:$0xff]
      %v4117 = vld [vmem:[#allocation4 + $0x8] sm:$0xff]
      %v4118 = vld [vmem:[#allocation4 + $0x10] sm:$0xff]
      %v4119 = vld [vmem:[#allocation4 + $0x18] sm:$0xff]
      %v4120 = vld [vmem:[#allocation4 + $0x20] sm:$0xff]
      %v4121 = vld [vmem:[#allocation4 + $0x28] sm:$0xff]
      %v4122 = vld [vmem:[#allocation4 + $0x30] sm:$0xff]
      %v4123 = vld [vmem:[#allocation4 + $0x38] sm:$0xff]
      %v4124 = vld [vmem:[#allocation4 + $0x40] sm:$0xff]
      %v4125 = vld [vmem:[#allocation4 + $0x48] sm:$0xff]
      %v4126 = vld [vmem:[#allocation4 + $0x50] sm:$0xff]
      %v4127 = vld [vmem:[#allocation4 + $0x58] sm:$0xff]
      %v4128 = vld [vmem:[#allocation4 + $0x60] sm:$0xff]
      %v4129 = vld [vmem:[#allocation4 + $0x68] sm:$0xff]
      %v4130 = vld [vmem:[#allocation4 + $0x70] sm:$0xff]
      %v4131 = vld [vmem:[#allocation4 + $0x78] sm:$0xff]
      %v4132 = vld [vmem:[#allocation4 + $0x80] sm:$0xff]
      %v4133 = vld [vmem:[#allocation4 + $0x88] sm:$0xff]
      %v4134 = vld [vmem:[#allocation4 + $0x90] sm:$0xff]
      %v4135 = vld [vmem:[#allocation4 + $0x98] sm:$0xff]
      %v4136 = vld [vmem:[#allocation4 + $0xa0] sm:$0xff]
      %v4137 = vld [vmem:[#allocation4 + $0xa8] sm:$0xff]
      %v4138 = vld [vmem:[#allocation4 + $0xb0] sm:$0xff]
      %v4139 = vld [vmem:[#allocation4 + $0xb8] sm:$0xff]
      %v4140 = vld [vmem:[#allocation4 + $0xc0] sm:$0xff]
      %v4141 = vld [vmem:[#allocation4 + $0xc8] sm:$0xff]
      %v4142 = vld [vmem:[#allocation4 + $0xd0] sm:$0xff]
      %v4143 = vld [vmem:[#allocation4 + $0xd8] sm:$0xff]
      %v4144 = vld [vmem:[#allocation4 + $0xe0] sm:$0xff]
      %v4145 = vld [vmem:[#allocation4 + $0xe8] sm:$0xff]
      %v4146 = vld [vmem:[#allocation4 + $0xf0] sm:$0xff]
      %v4147 = vld [vmem:[#allocation4 + $0xf8] sm:$0xff]
      %v4148 = vadd.f32 %v4116, %v4037
      %v4149 = vadd.f32 %v4117, %v4039
      %v4150 = vadd.f32 %v4118, %v4042
      %v4151 = vadd.f32 %v4119, %v4044
      %v4152 = vadd.f32 %v4120, %v4047
      %v4153 = vadd.f32 %v4121, %v4049
      %v4154 = vadd.f32 %v4122, %v4052
      %v4155 = vadd.f32 %v4123, %v4054
      %v4156 = vadd.f32 %v4124, %v4057
      %v4157 = vadd.f32 %v4125, %v4059
      %v4158 = vadd.f32 %v4126, %v4062
      %v4159 = vadd.f32 %v4127, %v4064
      %v4160 = vadd.f32 %v4128, %v4067
      %v4161 = vadd.f32 %v4129, %v4069
      %v4162 = vadd.f32 %v4130, %v4072
      %v4163 = vadd.f32 %v4131, %v4074
      %v4164 = vadd.f32 %v4132, %v4077
      %v4165 = vadd.f32 %v4133, %v4079
      %v4166 = vadd.f32 %v4134, %v4082
      %v4167 = vadd.f32 %v4135, %v4084
      %v4168 = vadd.f32 %v4136, %v4087
      %v4169 = vadd.f32 %v4137, %v4089
      %v4170 = vadd.f32 %v4138, %v4092
      %v4171 = vadd.f32 %v4139, %v4094
      %v4172 = vadd.f32 %v4140, %v4097
      %v4173 = vadd.f32 %v4141, %v4099
      %v4174 = vadd.f32 %v4142, %v4102
      %v4175 = vadd.f32 %v4143, %v4104
      %v4176 = vadd.f32 %v4144, %v4107
      %v4177 = vadd.f32 %v4145, %v4109
      %v4178 = vadd.f32 %v4146, %v4112
      %v4179 = vadd.f32 %v4147, %v4114
      %4180 = vst [vmem:[#allocation4] sm:$0xff] %v4148
      %4181 = vst [vmem:[#allocation4 + $0x8] sm:$0xff] %v4149
      %4182 = vst [vmem:[#allocation4 + $0x10] sm:$0xff] %v4150
      %4183 = vst [vmem:[#allocation4 + $0x18] sm:$0xff] %v4151
      %4184 = vst [vmem:[#allocation4 + $0x20] sm:$0xff] %v4152
      %4185 = vst [vmem:[#allocation4 + $0x28] sm:$0xff] %v4153
      %4186 = vst [vmem:[#allocation4 + $0x30] sm:$0xff] %v4154
      %4187 = vst [vmem:[#allocation4 + $0x38] sm:$0xff] %v4155
      %4188 = vst [vmem:[#allocation4 + $0x40] sm:$0xff] %v4156
      %4189 = vst [vmem:[#allocation4 + $0x48] sm:$0xff] %v4157
      %4190 = vst [vmem:[#allocation4 + $0x50] sm:$0xff] %v4158
      %4191 = vst [vmem:[#allocation4 + $0x58] sm:$0xff] %v4159
      %4192 = vst [vmem:[#allocation4 + $0x60] sm:$0xff] %v4160
      %4193 = vst [vmem:[#allocation4 + $0x68] sm:$0xff] %v4161
      %4194 = vst [vmem:[#allocation4 + $0x70] sm:$0xff] %v4162
      %4195 = vst [vmem:[#allocation4 + $0x78] sm:$0xff] %v4163
      %4196 = vst [vmem:[#allocation4 + $0x80] sm:$0xff] %v4164
      %4197 = vst [vmem:[#allocation4 + $0x88] sm:$0xff] %v4165
      %4198 = vst [vmem:[#allocation4 + $0x90] sm:$0xff] %v4166
      %4199 = vst [vmem:[#allocation4 + $0x98] sm:$0xff] %v4167
      %4200 = vst [vmem:[#allocation4 + $0xa0] sm:$0xff] %v4168
      %4201 = vst [vmem:[#allocation4 + $0xa8] sm:$0xff] %v4169
      %4202 = vst [vmem:[#allocation4 + $0xb0] sm:$0xff] %v4170
      %4203 = vst [vmem:[#allocation4 + $0xb8] sm:$0xff] %v4171
      %4204 = vst [vmem:[#allocation4 + $0xc0] sm:$0xff] %v4172
      %4205 = vst [vmem:[#allocation4 + $0xc8] sm:$0xff] %v4173
      %4206 = vst [vmem:[#allocation4 + $0xd0] sm:$0xff] %v4174
      %4207 = vst [vmem:[#allocation4 + $0xd8] sm:$0xff] %v4175
      %4208 = vst [vmem:[#allocation4 + $0xe0] sm:$0xff] %v4176
      %4209 = vst [vmem:[#allocation4 + $0xe8] sm:$0xff] %v4177
      %4210 = vst [vmem:[#allocation4 + $0xf0] sm:$0xff] %v4178
      %4211 = vst [vmem:[#allocation4 + $0xf8] sm:$0xff] %v4179
      %v4212 = vld [vmem:[#allocation4] sm:$0xff]
      %v4213 = vld [vmem:[#allocation4 + $0x8] sm:$0xff]
      %v4214 = vld [vmem:[#allocation4 + $0x10] sm:$0xff]
      %v4215 = vld [vmem:[#allocation4 + $0x18] sm:$0xff]
      %v4216 = vld [vmem:[#allocation4 + $0x20] sm:$0xff]
      %v4217 = vld [vmem:[#allocation4 + $0x28] sm:$0xff]
      %v4218 = vld [vmem:[#allocation4 + $0x30] sm:$0xff]
      %v4219 = vld [vmem:[#allocation4 + $0x38] sm:$0xff]
      %v4220 = vld [vmem:[#allocation4 + $0x40] sm:$0xff]
      %v4221 = vld [vmem:[#allocation4 + $0x48] sm:$0xff]
      %v4222 = vld [vmem:[#allocation4 + $0x50] sm:$0xff]
      %v4223 = vld [vmem:[#allocation4 + $0x58] sm:$0xff]
      %v4224 = vld [vmem:[#allocation4 + $0x60] sm:$0xff]
      %v4225 = vld [vmem:[#allocation4 + $0x68] sm:$0xff]
      %v4226 = vld [vmem:[#allocation4 + $0x70] sm:$0xff]
      %v4227 = vld [vmem:[#allocation4 + $0x78] sm:$0xff]
      %v4228 = vld [vmem:[#allocation4 + $0x80] sm:$0xff]
      %v4229 = vld [vmem:[#allocation4 + $0x88] sm:$0xff]
      %v4230 = vld [vmem:[#allocation4 + $0x90] sm:$0xff]
      %v4231 = vld [vmem:[#allocation4 + $0x98] sm:$0xff]
      %v4232 = vld [vmem:[#allocation4 + $0xa0] sm:$0xff]
      %v4233 = vld [vmem:[#allocation4 + $0xa8] sm:$0xff]
      %v4234 = vld [vmem:[#allocation4 + $0xb0] sm:$0xff]
      %v4235 = vld [vmem:[#allocation4 + $0xb8] sm:$0xff]
      %v4236 = vld [vmem:[#allocation4 + $0xc0] sm:$0xff]
      %v4237 = vld [vmem:[#allocation4 + $0xc8] sm:$0xff]
      %v4238 = vld [vmem:[#allocation4 + $0xd0] sm:$0xff]
      %v4239 = vld [vmem:[#allocation4 + $0xd8] sm:$0xff]
      %v4240 = vld [vmem:[#allocation4 + $0xe0] sm:$0xff]
      %v4241 = vld [vmem:[#allocation4 + $0xe8] sm:$0xff]
      %v4242 = vld [vmem:[#allocation4 + $0xf0] sm:$0xff]
      %v4243 = vld [vmem:[#allocation4 + $0xf8] sm:$0xff]
      %v4244 = vadd.f32 %v4212, %v4213
      %v4245 = vadd.f32 %v4244, %v4214
      %v4246 = vadd.f32 %v4245, %v4215
      %v4247 = vadd.f32 %v4246, %v4216
      %v4248 = vadd.f32 %v4247, %v4217
      %v4249 = vadd.f32 %v4248, %v4218
      %v4250 = vadd.f32 %v4249, %v4219
      %v4251 = vadd.f32 %v4250, %v4220
      %v4252 = vadd.f32 %v4251, %v4221
      %v4253 = vadd.f32 %v4252, %v4222
      %v4254 = vadd.f32 %v4253, %v4223
      %v4255 = vadd.f32 %v4254, %v4224
      %v4256 = vadd.f32 %v4255, %v4225
      %v4257 = vadd.f32 %v4256, %v4226
      %v4258 = vadd.f32 %v4257, %v4227
      %v4259 = vadd.f32 %v4258, %v4228
      %v4260 = vadd.f32 %v4259, %v4229
      %v4261 = vadd.f32 %v4260, %v4230
      %v4262 = vadd.f32 %v4261, %v4231
      %v4263 = vadd.f32 %v4262, %v4232
      %v4264 = vadd.f32 %v4263, %v4233
      %v4265 = vadd.f32 %v4264, %v4234
      %v4266 = vadd.f32 %v4265, %v4235
      %v4267 = vadd.f32 %v4266, %v4236
      %v4268 = vadd.f32 %v4267, %v4237
      %v4269 = vadd.f32 %v4268, %v4238
      %v4270 = vadd.f32 %v4269, %v4239
      %v4271 = vadd.f32 %v4270, %v4240
      %v4272 = vadd.f32 %v4271, %v4241
      %v4273 = vadd.f32 %v4272, %v4242
      %v4274 = vadd.f32 %v4273, %v4243
      %v4275 = vrot.slane %v4274, 4
      %v4276 = vadd.f32 %v4274, %v4275
      %v4277 = vrot.slane %v4276, 2
      %v4278 = vadd.f32 %v4276, %v4277
      %v4279 = vrot.slane %v4278, 1
      %v4280 = vadd.f32 %v4278, %v4279
      %4281 = vst [vmem:[%s301] sm:$0x1] %v4280
      %v4282 = vmul.f32 %v4212, %v4212
      %v4283 = vmul.f32 %v4213, %v4213
      %v4284 = vmul.f32 %v4214, %v4214
      %v4285 = vmul.f32 %v4215, %v4215
      %v4286 = vmul.f32 %v4216, %v4216
      %v4287 = vmul.f32 %v4217, %v4217
      %v4288 = vmul.f32 %v4218, %v4218
      %v4289 = vmul.f32 %v4219, %v4219
      %v4290 = vmul.f32 %v4220, %v4220
      %v4291 = vmul.f32 %v4221, %v4221
      %v4292 = vmul.f32 %v4222, %v4222
      %v4293 = vmul.f32 %v4223, %v4223
      %v4294 = vmul.f32 %v4224, %v4224
      %v4295 = vmul.f32 %v4225, %v4225
      %v4296 = vmul.f32 %v4226, %v4226
      %v4297 = vmul.f32 %v4227, %v4227
      %v4298 = vmul.f32 %v4228, %v4228
      %v4299 = vmul.f32 %v4229, %v4229
      %v4300 = vmul.f32 %v4230, %v4230
      %v4301 = vmul.f32 %v4231, %v4231
      %v4302 = vmul.f32 %v4232, %v4232
      %v4303 = vmul.f32 %v4233, %v4233
      %v4304 = vmul.f32 %v4234, %v4234
      %v4305 = vmul.f32 %v4235, %v4235
      %v4306 = vmul.f32 %v4236, %v4236
      %v4307 = vmul.f32 %v4237, %v4237
      %v4308 = vmul.f32 %v4238, %v4238
      %v4309 = vmul.f32 %v4239, %v4239
      %v4310 = vmul.f32 %v4240, %v4240
      %v4311 = vmul.f32 %v4241, %v4241
      %v4312 = vmul.f32 %v4242, %v4242
      %v4313 = vmul.f32 %v4243, %v4243
      %v4314 = vadd.f32 %v4282, %v4283
      %v4315 = vadd.f32 %v4314, %v4284
      %v4316 = vadd.f32 %v4315, %v4285
      %v4317 = vadd.f32 %v4316, %v4286
      %v4318 = vadd.f32 %v4317, %v4287
      %v4319 = vadd.f32 %v4318, %v4288
      %v4320 = vadd.f32 %v4319, %v4289
      %v4321 = vadd.f32 %v4320, %v4290
      %v4322 = vadd.f32 %v4321, %v4291
      %v4323 = vadd.f32 %v4322, %v4292
      %v4324 = vadd.f32 %v4323, %v4293
      %v4325 = vadd.f32 %v4324, %v4294
      %v4326 = vadd.f32 %v4325, %v4295
      %v4327 = vadd.f32 %v4326, %v4296
      %v4328 = vadd.f32 %v4327, %v4297
      %v4329 = vadd.f32 %v4328, %v4298
      %v4330 = vadd.f32 %v4329, %v4299
      %v4331 = vadd.f32 %v4330, %v4300
      %v4332 = vadd.f32 %v4331, %v4301
      %v4333 = vadd.f32 %v4332, %v4302
      %v4334 = vadd.f32 %v4333, %v4303
      %v4335 = vadd.f32 %v4334, %v4304
      %v4336 = vadd.f32 %v4335, %v4305
      %v4337 = vadd.f32 %v4336, %v4306
      %v4338 = vadd.f32 %v4337, %v4307
      %v4339 = vadd.f32 %v4338, %v4308
      %v4340 = vadd.f32 %v4339, %v4309
      %v4341 = vadd.f32 %v4340, %v4310
      %v4342 = vadd.f32 %v4341, %v4311
      %v4343 = vadd.f32 %v4342, %v4312
      %v4344 = vadd.f32 %v4343, %v4313
      %v4345 = vrot.slane %v4344, 4
      %v4346 = vadd.f32 %v4344, %v4345
      %v4347 = vrot.slane %v4346, 2
      %v4348 = vadd.f32 %v4346, %v4347
      %v4349 = vrot.slane %v4348, 1
      %v4350 = vadd.f32 %v4348, %v4349
      %4351 = vst [vmem:[%s307] sm:$0x1] %v4350
      %v4352 = vpack.c.bf16 %v4212, %v4212
      %v4353 = vpack.c.bf16 %v4213, %v4213
      %v4354 = vpack.c.bf16 %v4214, %v4214
      %v4355 = vpack.c.bf16 %v4215, %v4215
      %v4356 = vpack.c.bf16 %v4216, %v4216
      %v4357 = vpack.c.bf16 %v4217, %v4217
      %v4358 = vpack.c.bf16 %v4218, %v4218
      %v4359 = vpack.c.bf16 %v4219, %v4219
      %v4360 = vpack.c.bf16 %v4220, %v4220
      %v4361 = vpack.c.bf16 %v4221, %v4221
      %v4362 = vpack.c.bf16 %v4222, %v4222
      %v4363 = vpack.c.bf16 %v4223, %v4223
      %v4364 = vpack.c.bf16 %v4224, %v4224
      %v4365 = vpack.c.bf16 %v4225, %v4225
      %v4366 = vpack.c.bf16 %v4226, %v4226
      %v4367 = vpack.c.bf16 %v4227, %v4227
      %v4368 = vpack.c.bf16 %v4228, %v4228
      %v4369 = vpack.c.bf16 %v4229, %v4229
      %v4370 = vpack.c.bf16 %v4230, %v4230
      %v4371 = vpack.c.bf16 %v4231, %v4231
      %v4372 = vpack.c.bf16 %v4232, %v4232
      %v4373 = vpack.c.bf16 %v4233, %v4233
      %v4374 = vpack.c.bf16 %v4234, %v4234
      %v4375 = vpack.c.bf16 %v4235, %v4235
      %v4376 = vpack.c.bf16 %v4236, %v4236
      %v4377 = vpack.c.bf16 %v4237, %v4237
      %v4378 = vpack.c.bf16 %v4238, %v4238
      %v4379 = vpack.c.bf16 %v4239, %v4239
      %v4380 = vpack.c.bf16 %v4240, %v4240
      %v4381 = vpack.c.bf16 %v4241, %v4241
      %v4382 = vpack.c.bf16 %v4242, %v4242
      %v4383 = vpack.c.bf16 %v4243, %v4243
      %4384 = vst [vmem:[%s294] sm:$0xf] %v4352
      %4385 = vst [vmem:[%s294 + $0x4] sm:$0xf] %v4353
      %4386 = vst [vmem:[%s294 + $0x8] sm:$0xf] %v4354
      %4387 = vst [vmem:[%s294 + $0xc] sm:$0xf] %v4355
      %4388 = vst [vmem:[%s294 + $0x10] sm:$0xf] %v4356
      %4389 = vst [vmem:[%s294 + $0x14] sm:$0xf] %v4357
      %4390 = vst [vmem:[%s294 + $0x18] sm:$0xf] %v4358
      %4391 = vst [vmem:[%s294 + $0x1c] sm:$0xf] %v4359
      %4392 = vst [vmem:[%s294 + $0x20] sm:$0xf] %v4360
      %4393 = vst [vmem:[%s294 + $0x24] sm:$0xf] %v4361
      %4394 = vst [vmem:[%s294 + $0x28] sm:$0xf] %v4362
      %4395 = vst [vmem:[%s294 + $0x2c] sm:$0xf] %v4363
      %4396 = vst [vmem:[%s294 + $0x30] sm:$0xf] %v4364
      %4397 = vst [vmem:[%s294 + $0x34] sm:$0xf] %v4365
      %4398 = vst [vmem:[%s294 + $0x38] sm:$0xf] %v4366
      %4399 = vst [vmem:[%s294 + $0x3c] sm:$0xf] %v4367
      %4400 = vst [vmem:[%s294 + $0x40] sm:$0xf] %v4368
      %4401 = vst [vmem:[%s294 + $0x44] sm:$0xf] %v4369
      %4402 = vst [vmem:[%s294 + $0x48] sm:$0xf] %v4370
      %4403 = vst [vmem:[%s294 + $0x4c] sm:$0xf] %v4371
      %4404 = vst [vmem:[%s294 + $0x50] sm:$0xf] %v4372
      %4405 = vst [vmem:[%s294 + $0x54] sm:$0xf] %v4373
      %4406 = vst [vmem:[%s294 + $0x58] sm:$0xf] %v4374
      %4407 = vst [vmem:[%s294 + $0x5c] sm:$0xf] %v4375
      %4408 = vst [vmem:[%s294 + $0x60] sm:$0xf] %v4376
      %4409 = vst [vmem:[%s294 + $0x64] sm:$0xf] %v4377
      %4410 = vst [vmem:[%s294 + $0x68] sm:$0xf] %v4378
      %4411 = vst [vmem:[%s294 + $0x6c] sm:$0xf] %v4379
      %4412 = vst [vmem:[%s294 + $0x70] sm:$0xf] %v4380
      %4413 = vst [vmem:[%s294 + $0x74] sm:$0xf] %v4381
      %4414 = vst [vmem:[%s294 + $0x78] sm:$0xf] %v4382
      %4415 = vst [vmem:[%s294 + $0x7c] sm:$0xf] %v4383
      %s4416 = smul.u32 32, %s23
      %p4417 = scmp.lt.s32.totalorder %s22, 1
      %s4418 = scalar_select %p4417, %s22, 1
      %p4419 = scmp.lt.s32.totalorder %s4416, 31
      %s4420 = scalar_select %p4419, %s4416, 31
      %s4421 = smul.addr %s4418, 32
      %s4422 = sadd.s32 %s4420, %s4421
      %s4423 = smul.addr %s4422, 4
      %s4424 = scalar_lea.vmem %s4, %s4423
      %p4425 = scmp.lt.s32.totalorder %s22, 1
      %s4426 = scalar_select %p4425, %s22, 1
      %p4427 = scmp.lt.s32.totalorder %s23, 0
      %s4428 = scalar_select %p4427, %s23, 0
      %s4429 = sadd.s32 %s4428, %s4426
      %s4430 = scalar_lea.vmem %s5, %s4429
      %p4431 = scmp.lt.s32.totalorder %s22, 1
      %s4432 = scalar_select %p4431, %s22, 1
      %p4433 = scmp.lt.s32.totalorder %s23, 0
      %s4434 = scalar_select %p4433, %s23, 0
      %s4435 = sadd.s32 %s4434, %s4432
      %s4436 = scalar_lea.vmem %s6, %s4435
      // Predicated region
      $region37: #{bottleneck_v2_forward.6} parent=35 // pred_check
        %p4437 = pneg %p139
      $region38: #{bottleneck_v2_forward.6} parent=35 // pred_check_branch
        %4439 = sbr.rel (%p4437) target = $region40
      $region39: #{bottleneck_v2_forward.6} parent=35 // pred_region
        %s4440 = smul.u32 32, %s23
      $region40: #{bottleneck_v2_forward.6} parent=35 // pred_fallthru
        _
      // Predicated region
      $region41: #{bottleneck_v2_forward.6} parent=35 // pred_check
        %p4441 = pneg %p167
      $region42: #{bottleneck_v2_forward.6} parent=35 // pred_check_branch
        %4443 = sbr.rel (%p4441) target = $region44
      $region43: #{bottleneck_v2_forward.6} parent=35 // pred_region
        _
      $region44: #{bottleneck_v2_forward.6} parent=35 // pred_fallthru
        _
      // Predicated region
      $region45: #{bottleneck_v2_forward.6} parent=35 // pred_check
        %p4444 = pneg %p195
      $region46: #{bottleneck_v2_forward.6} parent=35 // pred_check_branch
        %4446 = sbr.rel (%p4444) target = $region48
      $region47: #{bottleneck_v2_forward.6} parent=35 // pred_region
        _
      $region48: #{bottleneck_v2_forward.6} parent=35 // pred_fallthru
        _
    $region36: #{bottleneck_v2_forward.6} parent=5 // pred_fallthru
      _
    %p4447 = scmp.le.s32.totalorder 2, %s13
    // Predicated region
    $region49: #{bottleneck_v2_forward.6} parent=5 // pred_check
      %p4448 = pneg %p4447
    $region50: #{bottleneck_v2_forward.6} parent=5 // pred_check_branch
      %4450 = sbr.rel (%p4448) target = $region52
    $region51: #{bottleneck_v2_forward.6} parent=5 // pred_region
      %s4451 = ssub.s32 %s13, 2
      // Predicated region
      $region53: #{bottleneck_v2_forward.6} parent=51 // pred_check
        %p4452 = pneg %p145
      $region54: #{bottleneck_v2_forward.6} parent=51 // pred_check_branch
        %4454 = sbr.rel (%p4452) target = $region56
      $region55: #{bottleneck_v2_forward.6} parent=51 // pred_region
        %s4455 = smul.u32 32, %s25
        %p4456 = scmp.lt.s32.totalorder %s24, 1
        %s4457 = scalar_select %p4456, %s24, 1
        %p4458 = scmp.lt.s32.totalorder %s4455, 31
        %s4459 = scalar_select %p4458, %s4455, 31
        %s4460 = smul.addr %s4457, 32
        %s4461 = sadd.s32 %s4459, %s4460
        %s4462 = smul.addr %s4461, 4
        %s4463 = scalar_lea.vmem %s4, %s4462
      $region56: #{bottleneck_v2_forward.6} parent=51 // pred_fallthru
        _
      // Predicated region
      $region57: #{bottleneck_v2_forward.6} parent=51 // pred_check
        %p4464 = pneg %p173
      $region58: #{bottleneck_v2_forward.6} parent=51 // pred_check_branch
        %4466 = sbr.rel (%p4464) target = $region60
      $region59: #{bottleneck_v2_forward.6} parent=51 // pred_region
        %p4467 = scmp.lt.s32.totalorder %s24, 1
        %s4468 = scalar_select %p4467, %s24, 1
        %p4469 = scmp.lt.s32.totalorder %s25, 0
        %s4470 = scalar_select %p4469, %s25, 0
        %s4471 = sadd.s32 %s4470, %s4468
        %s4472 = scalar_lea.vmem %s5, %s4471
      $region60: #{bottleneck_v2_forward.6} parent=51 // pred_fallthru
        _
      // Predicated region
      $region61: #{bottleneck_v2_forward.6} parent=51 // pred_check
        %p4473 = pneg %p201
      $region62: #{bottleneck_v2_forward.6} parent=51 // pred_check_branch
        %4475 = sbr.rel (%p4473) target = $region64
      $region63: #{bottleneck_v2_forward.6} parent=51 // pred_region
        %p4476 = scmp.lt.s32.totalorder %s24, 1
        %s4477 = scalar_select %p4476, %s24, 1
        %p4478 = scmp.lt.s32.totalorder %s25, 0
        %s4479 = scalar_select %p4478, %s25, 0
        %s4480 = sadd.s32 %s4479, %s4477
        %s4481 = scalar_lea.vmem %s6, %s4480
      $region64: #{bottleneck_v2_forward.6} parent=51 // pred_fallthru
        _
    $region52: #{bottleneck_v2_forward.6} parent=5 // pred_fallthru
      _
  $region6: #{bottleneck_v2_forward.6} parent=0 // loop_footer
    %s17 = sadd.s32 1, %s13
  $region7: #{bottleneck_v2_forward.6} parent=0 // loop_footer_branch
    %12 = sbr.rel target = $region3
  $region8: #{bottleneck_v2_forward.6} parent=0 // loop_exit
    _

</llo_original>
